<compile_context>
chip_gen: v5e
topology: v5e:2x2
jax: 0.10.0
libtpu: 0.0.40
codegen_flags: <defaults>
</compile_context>

<pallas_src>
import functools

import numpy as np

import jax
import jax.numpy as jnp
from jax.experimental import pallas as pl
from jax.experimental.pallas import tpu as pltpu


# ---------------------------------------------------------------------------
# Wrapper-side helpers: build "banded" weights so a 3-D conv over the (W,C)
# minor dim becomes a plain (rows, W*Cin) @ (W*Cin, W*Cout) matmul per (kd,kh).
# ---------------------------------------------------------------------------
def _conv_band(wt, wo):
    """wt: (K,K,K,Ci,Co) regular conv weight, pad=K//2.  Returns (K,K,wo*Ci,wo*Co)."""
    k, ci, co = wt.shape[0], wt.shape[3], wt.shape[4]
    sel = np.zeros((wo, wo, k), np.float32)
    for wi in range(wo):
        for w in range(wo):
            kw = wi - w + k // 2
            if 0 <= kw < k:
                sel[wi, w, kw] = 1.0
    band = jnp.einsum("xwk,dhkio->dhxiwo", jnp.asarray(sel), wt)
    return band.reshape(k, k, wo * ci, wo * co)


def _deconv_band(w_eq, w_in):
    """w_eq: (4,4,4,Ci,Co) equivalent-regular-conv (flipped) ConvTranspose weight.

    Returns (4,4, w_in*Ci, 2*w_in*Co): for each (kd,kh) kernel index, a band that
    maps an unpadded input W-row directly to the stride-2 upsampled output W-row
    (W-boundary of padding=1 folded in)."""
    ci, co = w_eq.shape[3], w_eq.shape[4]
    sel = np.zeros((w_in, 2 * w_in, 4), np.float32)
    for col in range(2 * w_in):
        w, pw = divmod(col, 2)
        for tw in range(2):
            wi = w + pw + tw - 1
            if 0 <= wi < w_in:
                sel[wi, col, 2 * tw + pw] = 1.0
    band = jnp.einsum("xck,dhkio->dhxico", jnp.asarray(sel), w_eq)
    return band.reshape(4, 4, w_in * ci, 2 * w_in * co)


def _full_spec(shape):
    zeros = (0,) * len(shape)
    return pl.BlockSpec(tuple(shape), lambda i, z=zeros: z)


# ---------------------------------------------------------------------------
# Kernel A: ConvTranspose3d(k=4, s=2, p=1) + bias, 8-phase sub-pixel form.
#   x1p_ref : (1, D+2, H+2, W*Cin)   one sample, D/H zero-padded by 1
#   bup_ref : (4, 4, W*Cin, 2W*Cout) banded weights (W phase handling folded in)
#   bias_ref: (1, 2W*Cout)
#   out_ref : (1, 2, 2, D*H, 2W*Cout) indexed by (pd, ph) output-row phases
# ---------------------------------------------------------------------------
def _upsample_kernel(x1p_ref, bup_ref, bias_ref, out_ref, *, D, H, W, Cin, Cout):
    wc = 2 * W * Cout
    rows = D * H
    for pd in range(2):
        for ph in range(2):
            acc = jnp.zeros((rows, wc), jnp.float32)
            for td in range(2):
                for th in range(2):
                    ud, uh = pd + td, ph + th
                    slab = x1p_ref[0, ud:ud + D, uh:uh + H, :].reshape(rows, W * Cin)
                    acc = acc + jnp.dot(
                        slab, bup_ref[2 * td + pd, 2 * th + ph],
                        preferred_element_type=jnp.float32)
            out_ref[0, pd, ph] = acc + bias_ref[...]


# ---------------------------------------------------------------------------
# Kernel B: fused [ConvBlock, ConvBlock, conv1(concat), ConvBlock] chain.
# Whole batch stays resident in VMEM (needed anyway for BatchNorm batch stats);
# intermediates never touch HBM.  Channel concat -> two partial banded matmuls.
# ---------------------------------------------------------------------------
def _convblocks_kernel(hp_ref, x2p_ref, bca1_ref, bca2_ref, bc1h_ref, bc1x_ref,
                       bc2_ref, bng_ref, bnb_ref, m_ref, mt_ref,
                       out_ref, pad_ref, *, N, Do, Ho, Wo, C,
                       eps=1e-5, alpha=0.2):
    wc = Wo * C
    rows = N * Do * Ho
    cnt = float(rows * Wo)           # elements per channel for the BN statistics

    # Zero the reusable padded scratch once; interiors are fully overwritten below,
    # so the zero border (spatial padding=1) persists across all three reuses.
    pad_ref[...] = jnp.zeros_like(pad_ref)

    def conv_banded(src_ref, band_ref):
        acc = jnp.zeros((rows, wc), jnp.float32)
        for kd in range(3):
            for kh in range(3):
                slab = src_ref[:, kd:kd + Do, kh:kh + Ho, :].reshape(rows, wc)
                acc = acc + jnp.dot(slab, band_ref[kd, kh],
                                    preferred_element_type=jnp.float32)
        return acc

    def bn_leaky(y, i):
        # y: (rows, Wo*C); columns are (w, c).  Per-channel stats via the 0/1
        # channel-selector matmuls m (Wo*C, C) / mt (C, Wo*C).
        m = m_ref[...]
        mt = mt_ref[...]
        mean_c = jnp.dot(jnp.sum(y, axis=0, keepdims=True), m,
                         preferred_element_type=jnp.float32) / cnt          # (1, C)
        cent = y - jnp.dot(mean_c, mt, preferred_element_type=jnp.float32)
        var_c = jnp.dot(jnp.sum(cent * cent, axis=0, keepdims=True), m,
                        preferred_element_type=jnp.float32) / cnt           # biased var
        scale_c = bng_ref[i] * jax.lax.rsqrt(var_c + eps)                   # (1, C)
        shift_c = bnb_ref[i] - mean_c * scale_c
        z = (y * jnp.dot(scale_c, mt, preferred_element_type=jnp.float32)
             + jnp.dot(shift_c, mt, preferred_element_type=jnp.float32))
        return jnp.where(z >= 0, z, alpha * z)

    def write_padded(v):
        pad_ref[:, 1:Do + 1, 1:Ho + 1, :] = v.reshape(N, Do, Ho, wc)

    # Upsample.conv_after: two ConvBlocks
    h = bn_leaky(conv_banded(hp_ref, bca1_ref), 0)
    write_padded(h)
    h = bn_leaky(conv_banded(pad_ref, bca2_ref), 1)
    write_padded(h)
    # conv1 on concat([h, x2]): accumulate the two halves, no concat materialized
    y = conv_banded(pad_ref, bc1h_ref) + conv_banded(x2p_ref, bc1x_ref)
    c = bn_leaky(y, 2)
    write_padded(c)
    # conv2
    out_ref[...] = bn_leaky(conv_banded(pad_ref, bc2_ref), 3)


# ---------------------------------------------------------------------------
# Full Upblock forward.  Inputs/outputs in PyTorch NCDHW layout; params in the
# native PyTorch parameter layouts.
# ---------------------------------------------------------------------------
def upblock_forward(params, x1, x2):
    N, Cin, D, H, W = x1.shape
    C = params["up_b"].shape[0]
    Do, Ho, Wo = 2 * D, 2 * H, 2 * W
    wc = Wo * C

    # NCDHW -> channels-last, then fold (W, C) into the minor (lane) dim and
    # zero-pad D/H by 1 (the W padding is folded into the banded weights).
    x1p = jnp.transpose(x1, (0, 2, 3, 4, 1)).reshape(N, D, H, W * Cin)
    x1p = jnp.pad(x1p, ((0, 0), (1, 1), (1, 1), (0, 0)))
    x2p = jnp.transpose(x2, (0, 2, 3, 4, 1)).reshape(N, Do, Ho, wc)
    x2p = jnp.pad(x2p, ((0, 0), (1, 1), (1, 1), (0, 0)))

    # ConvTranspose3d weight (Cin, Cout, 4,4,4) -> equivalent regular-conv weight
    # (flip spatial dims) -> banded phase weights.
    w_eq = jnp.transpose(params["up_w"][:, :, ::-1, ::-1, ::-1], (2, 3, 4, 0, 1))
    b_up = _deconv_band(w_eq, W)
    bias_row = jnp.tile(params["up_b"], Wo).reshape(1, wc)

    def torch_conv_w(w):  # (Cout, Cin, kd, kh, kw) -> (kd, kh, kw, Cin, Cout)
        return jnp.transpose(w, (2, 3, 4, 1, 0))

    b_ca1 = _conv_band(torch_conv_w(params["ca1_w"]), Wo)
    b_ca2 = _conv_band(torch_conv_w(params["ca2_w"]), Wo)
    w_c1 = torch_conv_w(params["c1_w"])                  # (3,3,3, 2C, C)
    b_c1h = _conv_band(w_c1[:, :, :, :C, :], Wo)         # concat order: [upsampled, x2]
    b_c1x = _conv_band(w_c1[:, :, :, C:, :], Wo)
    b_c2 = _conv_band(torch_conv_w(params["c2_w"]), Wo)

    bn_g = jnp.stack([params["ca1_g"], params["ca2_g"],
                      params["c1_g"], params["c2_g"]]).reshape(4, 1, C)
    bn_b = jnp.stack([params["ca1_b"], params["ca2_b"],
                      params["c1_b"], params["c2_b"]]).reshape(4, 1, C)

    # 0/1 selectors for the per-channel BN reductions / broadcasts.
    m_sel = jnp.asarray(np.tile(np.eye(C, dtype=np.float32), (Wo, 1)))   # (Wo*C, C)
    mt_sel = jnp.asarray(np.tile(np.eye(C, dtype=np.float32), (1, Wo)))  # (C, Wo*C)

    # ---- kernel A: fused ConvTranspose3d (8-phase, banded, bias folded in) ----
    out_a = pl.pallas_call(
        functools.partial(_upsample_kernel, D=D, H=H, W=W, Cin=Cin, Cout=C),
        out_shape=jax.ShapeDtypeStruct((N, 2, 2, D * H, wc), jnp.float32),
        grid=(N,),
        in_specs=[
            pl.BlockSpec((1, D + 2, H + 2, W * Cin), lambda n: (n, 0, 0, 0)),
            pl.BlockSpec((4, 4, W * Cin, wc), lambda n: (0, 0, 0, 0)),
            pl.BlockSpec((1, wc), lambda n: (0, 0)),
        ],
        out_specs=pl.BlockSpec((1, 2, 2, D * H, wc), lambda n: (n, 0, 0, 0, 0)),
        compiler_params=pltpu.CompilerParams(
            dimension_semantics=("parallel",),
            vmem_limit_bytes=32 * 1024 * 1024),
    )(x1p, b_up, bias_row)

    # XLA glue (tiny): interleave the (pd, ph) phases into the 2x-resolution
    # volume and pad D/H by 1 for the first ConvBlock.
    h = out_a.reshape(N, 2, 2, D, H, Wo, C)
    h = jnp.transpose(h, (0, 3, 1, 4, 2, 5, 6)).reshape(N, Do, Ho, wc)
    hp = jnp.pad(h, ((0, 0), (1, 1), (1, 1), (0, 0)))

    # ---- kernel B: fused ConvBlock chain (conv + BN stats + BN + LeakyReLU) ----
    # TODO(synk): for production-scale volumes (e.g. 64^3 x 128ch) this whole-batch
    # resident design must be re-tiled with depth halos / two-pass BN stats
    # (v7x has only 64 MiB VMEM); at these shapes everything fits comfortably.
    rows = N * Do * Ho
    args = (hp, x2p, b_ca1, b_ca2, b_c1h, b_c1x, b_c2, bn_g, bn_b, m_sel, mt_sel)
    out_b = pl.pallas_call(
        functools.partial(_convblocks_kernel, N=N, Do=Do, Ho=Ho, Wo=Wo, C=C),
        out_shape=jax.ShapeDtypeStruct((rows, wc), jnp.float32),
        grid=(1,),
        in_specs=[_full_spec(a.shape) for a in args],
        out_specs=_full_spec((rows, wc)),
        scratch_shapes=[pltpu.VMEM((N, Do + 2, Ho + 2, wc), jnp.float32)],
        compiler_params=pltpu.CompilerParams(
            dimension_semantics=("arbitrary",),
            vmem_limit_bytes=32 * 1024 * 1024),
    )(*args)

    out = out_b.reshape(N, Do, Ho, Wo, C)
    return jnp.transpose(out, (0, 4, 1, 2, 3))  # NDHWC -> NCDHW


if __name__ == "__main__":
    key = jax.random.PRNGKey(0)
    N = 2
    in_features, out_features = 8, 4
    concat_features = out_features * 2
    D = H = W = 4

    ks = jax.random.split(key, 8)
    f32 = jnp.float32
    params = {
        # PyTorch layouts:
        # ConvTranspose3d(in, out, 4, stride=2, padding=1): weight (in, out, 4,4,4)
        "up_w": 0.1 * jax.random.normal(ks[0], (in_features, out_features, 4, 4, 4), f32),
        "up_b": 0.1 * jax.random.normal(ks[1], (out_features,), f32),
        # Conv3d(out, out, 3): weight (out, in, 3,3,3); BatchNorm3d gamma/beta (out,)
        "ca1_w": 0.1 * jax.random.normal(ks[2], (out_features, out_features, 3, 3, 3), f32),
        "ca1_g": jnp.ones((out_features,), f32),
        "ca1_b": jnp.zeros((out_features,), f32),
        "ca2_w": 0.1 * jax.random.normal(ks[3], (out_features, out_features, 3, 3, 3), f32),
        "ca2_g": jnp.ones((out_features,), f32),
        "ca2_b": jnp.zeros((out_features,), f32),
        "c1_w": 0.1 * jax.random.normal(ks[4], (out_features, concat_features, 3, 3, 3), f32),
        "c1_g": jnp.ones((out_features,), f32),
        "c1_b": jnp.zeros((out_features,), f32),
        "c2_w": 0.1 * jax.random.normal(ks[5], (out_features, out_features, 3, 3, 3), f32),
        "c2_g": jnp.ones((out_features,), f32),
        "c2_b": jnp.zeros((out_features,), f32),
    }

    # x1: low-res feature map; x2: skip connection at 2x resolution (NCDHW).
    x1 = jax.random.normal(ks[6], (N, in_features, D, H, W), f32)
    x2 = jax.random.normal(ks[7], (N, out_features, 2 * D, 2 * H, 2 * W), f32)

    out = jax.jit(upblock_forward)(params, x1, x2)
    out = jax.block_until_ready(out)
    assert out.shape == (N, out_features, 2 * D, 2 * H, 2 * W), out.shape
    assert bool(jnp.all(jnp.isfinite(out)))
    print("KERNEL_OK")
</pallas_src>

<mosaic_0001>
module attributes {stable_mosaic.version = 11 : i64} {
  func.func @_upsample_kernel(%arg0: i32, %arg1: memref<1x6x6x32xf32, #tpu.memory_space<vmem>>, %arg2: memref<4x4x32x32xf32, #tpu.memory_space<vmem>>, %arg3: memref<1x32xf32, #tpu.memory_space<vmem>>, %arg4: memref<1x2x2x16x32xf32, #tpu.memory_space<vmem>>) attributes {dimension_semantics = [#tpu.dimension_semantics<parallel>], iteration_bounds = array<i64: 2>, scalar_prefetch = 0 : i64, scratch_operands = 0 : i64, tpu.core_type = #tpu.core_type<tc>, window_params = [{transform_indices = @transform_0, window_bounds = array<i64: 1, 6, 6, 32>}, {pipeline_mode = #tpu.pipeline_mode<synchronous>, transform_indices = @transform_1, window_bounds = array<i64: 4, 4, 32, 32>}, {pipeline_mode = #tpu.pipeline_mode<synchronous>, transform_indices = @transform_2, window_bounds = array<i64: 1, 32>}, {transform_indices = @transform_3, window_bounds = array<i64: 1, 2, 2, 16, 32>}]} {
    %cst = arith.constant 0.000000e+00 : f32
    %0 = vector.broadcast %cst : f32 to vector<16x32xf32>
    %c0 = arith.constant 0 : index
    %c0_0 = arith.constant 0 : index
    %c0_1 = arith.constant 0 : index
    %c0_2 = arith.constant 0 : index
    %1 = vector.load %arg1[%c0, %c0_0, %c0_1, %c0_2] : memref<1x6x6x32xf32, #tpu.memory_space<vmem>>, vector<1x4x4x32xf32>
    %2 = vector.shape_cast %1 : vector<1x4x4x32xf32> to vector<4x4x32xf32>
    %3 = vector.shape_cast %2 : vector<4x4x32xf32> to vector<16x32xf32>
    %c0_3 = arith.constant 0 : index
    %c0_4 = arith.constant 0 : index
    %c0_5 = arith.constant 0 : index
    %c0_6 = arith.constant 0 : index
    %4 = vector.load %arg2[%c0_3, %c0_4, %c0_5, %c0_6] : memref<4x4x32x32xf32, #tpu.memory_space<vmem>>, vector<1x1x32x32xf32>
    %5 = vector.shape_cast %4 : vector<1x1x32x32xf32> to vector<32x32xf32>
    %cst_7 = arith.constant dense<0.000000e+00> : vector<16x32xf32>
    %6 = tpu.matmul %3, %5, %cst_7 {dimension_numbers = #tpu.dot_dimension_numbers<[1], [0], [0], [1], [0, 0, 1, 1], [], []>} : vector<16x32xf32>, vector<32x32xf32>, vector<16x32xf32> -> vector<16x32xf32>
    %7 = arith.addf %0, %6 : vector<16x32xf32>
    %c0_8 = arith.constant 0 : index
    %c0_9 = arith.constant 0 : index
    %c1 = arith.constant 1 : index
    %c0_10 = arith.constant 0 : index
    %8 = vector.load %arg1[%c0_8, %c0_9, %c1, %c0_10] : memref<1x6x6x32xf32, #tpu.memory_space<vmem>>, vector<1x4x4x32xf32>
    %9 = vector.shape_cast %8 : vector<1x4x4x32xf32> to vector<4x4x32xf32>
    %10 = vector.shape_cast %9 : vector<4x4x32xf32> to vector<16x32xf32>
    %c0_11 = arith.constant 0 : index
    %c2 = arith.constant 2 : index
    %c0_12 = arith.constant 0 : index
    %c0_13 = arith.constant 0 : index
    %11 = vector.load %arg2[%c0_11, %c2, %c0_12, %c0_13] : memref<4x4x32x32xf32, #tpu.memory_space<vmem>>, vector<1x1x32x32xf32>
    %12 = vector.shape_cast %11 : vector<1x1x32x32xf32> to vector<32x32xf32>
    %cst_14 = arith.constant dense<0.000000e+00> : vector<16x32xf32>
    %13 = tpu.matmul %10, %12, %cst_14 {dimension_numbers = #tpu.dot_dimension_numbers<[1], [0], [0], [1], [0, 0, 1, 1], [], []>} : vector<16x32xf32>, vector<32x32xf32>, vector<16x32xf32> -> vector<16x32xf32>
    %14 = arith.addf %7, %13 : vector<16x32xf32>
    %c0_15 = arith.constant 0 : index
    %c1_16 = arith.constant 1 : index
    %c0_17 = arith.constant 0 : index
    %c0_18 = arith.constant 0 : index
    %15 = vector.load %arg1[%c0_15, %c1_16, %c0_17, %c0_18] : memref<1x6x6x32xf32, #tpu.memory_space<vmem>>, vector<1x4x4x32xf32>
    %16 = vector.shape_cast %15 : vector<1x4x4x32xf32> to vector<4x4x32xf32>
    %17 = vector.shape_cast %16 : vector<4x4x32xf32> to vector<16x32xf32>
    %c2_19 = arith.constant 2 : index
    %c0_20 = arith.constant 0 : index
    %c0_21 = arith.constant 0 : index
    %c0_22 = arith.constant 0 : index
    %18 = vector.load %arg2[%c2_19, %c0_20, %c0_21, %c0_22] : memref<4x4x32x32xf32, #tpu.memory_space<vmem>>, vector<1x1x32x32xf32>
    %19 = vector.shape_cast %18 : vector<1x1x32x32xf32> to vector<32x32xf32>
    %cst_23 = arith.constant dense<0.000000e+00> : vector<16x32xf32>
    %20 = tpu.matmul %17, %19, %cst_23 {dimension_numbers = #tpu.dot_dimension_numbers<[1], [0], [0], [1], [0, 0, 1, 1], [], []>} : vector<16x32xf32>, vector<32x32xf32>, vector<16x32xf32> -> vector<16x32xf32>
    %21 = arith.addf %14, %20 : vector<16x32xf32>
    %c0_24 = arith.constant 0 : index
    %c1_25 = arith.constant 1 : index
    %c1_26 = arith.constant 1 : index
    %c0_27 = arith.constant 0 : index
    %22 = vector.load %arg1[%c0_24, %c1_25, %c1_26, %c0_27] : memref<1x6x6x32xf32, #tpu.memory_space<vmem>>, vector<1x4x4x32xf32>
    %23 = vector.shape_cast %22 : vector<1x4x4x32xf32> to vector<4x4x32xf32>
    %24 = vector.shape_cast %23 : vector<4x4x32xf32> to vector<16x32xf32>
    %c2_28 = arith.constant 2 : index
    %c2_29 = arith.constant 2 : index
    %c0_30 = arith.constant 0 : index
    %c0_31 = arith.constant 0 : index
    %25 = vector.load %arg2[%c2_28, %c2_29, %c0_30, %c0_31] : memref<4x4x32x32xf32, #tpu.memory_space<vmem>>, vector<1x1x32x32xf32>
    %26 = vector.shape_cast %25 : vector<1x1x32x32xf32> to vector<32x32xf32>
    %cst_32 = arith.constant dense<0.000000e+00> : vector<16x32xf32>
    %27 = tpu.matmul %24, %26, %cst_32 {dimension_numbers = #tpu.dot_dimension_numbers<[1], [0], [0], [1], [0, 0, 1, 1], [], []>} : vector<16x32xf32>, vector<32x32xf32>, vector<16x32xf32> -> vector<16x32xf32>
    %28 = arith.addf %21, %27 : vector<16x32xf32>
    %c0_33 = arith.constant 0 : index
    %c0_34 = arith.constant 0 : index
    %29 = vector.load %arg3[%c0_33, %c0_34] : memref<1x32xf32, #tpu.memory_space<vmem>>, vector<1x32xf32>
    %30 = vector.broadcast %29 : vector<1x32xf32> to vector<16x32xf32>
    %31 = arith.addf %28, %30 : vector<16x32xf32>
    %c0_35 = arith.constant 0 : index
    %c0_36 = arith.constant 0 : index
    %c0_37 = arith.constant 0 : index
    %c0_38 = arith.constant 0 : index
    %c0_39 = arith.constant 0 : index
    %32 = vector.load %arg4[%c0_35, %c0_36, %c0_37, %c0_38, %c0_39] : memref<1x2x2x16x32xf32, #tpu.memory_space<vmem>>, vector<1x1x1x16x32xf32>
    %33 = vector.shape_cast %32 : vector<1x1x1x16x32xf32> to vector<16x32xf32>
    %34 = vector.shape_cast %31 : vector<16x32xf32> to vector<1x1x1x16x32xf32>
    tpu.vector_store %arg4[%c0_35, %c0_36, %c0_37, %c0_38, %c0_39], %34 {strides = array<i32>} : memref<1x2x2x16x32xf32, #tpu.memory_space<vmem>>, vector<1x1x1x16x32xf32>,
    %cst_40 = arith.constant 0.000000e+00 : f32
    %35 = vector.broadcast %cst_40 : f32 to vector<16x32xf32>
    %c0_41 = arith.constant 0 : index
    %c0_42 = arith.constant 0 : index
    %c1_43 = arith.constant 1 : index
    %c0_44 = arith.constant 0 : index
    %36 = vector.load %arg1[%c0_41, %c0_42, %c1_43, %c0_44] : memref<1x6x6x32xf32, #tpu.memory_space<vmem>>, vector<1x4x4x32xf32>
    %37 = vector.shape_cast %36 : vector<1x4x4x32xf32> to vector<4x4x32xf32>
    %38 = vector.shape_cast %37 : vector<4x4x32xf32> to vector<16x32xf32>
    %c0_45 = arith.constant 0 : index
    %c1_46 = arith.constant 1 : index
    %c0_47 = arith.constant 0 : index
    %c0_48 = arith.constant 0 : index
    %39 = vector.load %arg2[%c0_45, %c1_46, %c0_47, %c0_48] : memref<4x4x32x32xf32, #tpu.memory_space<vmem>>, vector<1x1x32x32xf32>
    %40 = vector.shape_cast %39 : vector<1x1x32x32xf32> to vector<32x32xf32>
    %cst_49 = arith.constant dense<0.000000e+00> : vector<16x32xf32>
    %41 = tpu.matmul %38, %40, %cst_49 {dimension_numbers = #tpu.dot_dimension_numbers<[1], [0], [0], [1], [0, 0, 1, 1], [], []>} : vector<16x32xf32>, vector<32x32xf32>, vector<16x32xf32> -> vector<16x32xf32>
    %42 = arith.addf %35, %41 : vector<16x32xf32>
    %c0_50 = arith.constant 0 : index
    %c0_51 = arith.constant 0 : index
    %c2_52 = arith.constant 2 : index
    %c0_53 = arith.constant 0 : index
    %43 = vector.load %arg1[%c0_50, %c0_51, %c2_52, %c0_53] : memref<1x6x6x32xf32, #tpu.memory_space<vmem>>, vector<1x4x4x32xf32>
    %44 = vector.shape_cast %43 : vector<1x4x4x32xf32> to vector<4x4x32xf32>
    %45 = vector.shape_cast %44 : vector<4x4x32xf32> to vector<16x32xf32>
    %c0_54 = arith.constant 0 : index
    %c3 = arith.constant 3 : index
    %c0_55 = arith.constant 0 : index
    %c0_56 = arith.constant 0 : index
    %46 = vector.load %arg2[%c0_54, %c3, %c0_55, %c0_56] : memref<4x4x32x32xf32, #tpu.memory_space<vmem>>, vector<1x1x32x32xf32>
    %47 = vector.shape_cast %46 : vector<1x1x32x32xf32> to vector<32x32xf32>
    %cst_57 = arith.constant dense<0.000000e+00> : vector<16x32xf32>
    %48 = tpu.matmul %45, %47, %cst_57 {dimension_numbers = #tpu.dot_dimension_numbers<[1], [0], [0], [1], [0, 0, 1, 1], [], []>} : vector<16x32xf32>, vector<32x32xf32>, vector<16x32xf32> -> vector<16x32xf32>
    %49 = arith.addf %42, %48 : vector<16x32xf32>
    %c0_58 = arith.constant 0 : index
    %c1_59 = arith.constant 1 : index
    %c1_60 = arith.constant 1 : index
    %c0_61 = arith.constant 0 : index
    %50 = vector.load %arg1[%c0_58, %c1_59, %c1_60, %c0_61] : memref<1x6x6x32xf32, #tpu.memory_space<vmem>>, vector<1x4x4x32xf32>
    %51 = vector.shape_cast %50 : vector<1x4x4x32xf32> to vector<4x4x32xf32>
    %52 = vector.shape_cast %51 : vector<4x4x32xf32> to vector<16x32xf32>
    %c2_62 = arith.constant 2 : index
    %c1_63 = arith.constant 1 : index
    %c0_64 = arith.constant 0 : index
    %c0_65 = arith.constant 0 : index
    %53 = vector.load %arg2[%c2_62, %c1_63, %c0_64, %c0_65] : memref<4x4x32x32xf32, #tpu.memory_space<vmem>>, vector<1x1x32x32xf32>
    %54 = vector.shape_cast %53 : vector<1x1x32x32xf32> to vector<32x32xf32>
    %cst_66 = arith.constant dense<0.000000e+00> : vector<16x32xf32>
    %55 = tpu.matmul %52, %54, %cst_66 {dimension_numbers = #tpu.dot_dimension_numbers<[1], [0], [0], [1], [0, 0, 1, 1], [], []>} : vector<16x32xf32>, vector<32x32xf32>, vector<16x32xf32> -> vector<16x32xf32>
    %56 = arith.addf %49, %55 : vector<16x32xf32>
    %c0_67 = arith.constant 0 : index
    %c1_68 = arith.constant 1 : index
    %c2_69 = arith.constant 2 : index
    %c0_70 = arith.constant 0 : index
    %57 = vector.load %arg1[%c0_67, %c1_68, %c2_69, %c0_70] : memref<1x6x6x32xf32, #tpu.memory_space<vmem>>, vector<1x4x4x32xf32>
    %58 = vector.shape_cast %57 : vector<1x4x4x32xf32> to vector<4x4x32xf32>
    %59 = vector.shape_cast %58 : vector<4x4x32xf32> to vector<16x32xf32>
    %c2_71 = arith.constant 2 : index
    %c3_72 = arith.constant 3 : index
    %c0_73 = arith.constant 0 : index
    %c0_74 = arith.constant 0 : index
    %60 = vector.load %arg2[%c2_71, %c3_72, %c0_73, %c0_74] : memref<4x4x32x32xf32, #tpu.memory_space<vmem>>, vector<1x1x32x32xf32>
    %61 = vector.shape_cast %60 : vector<1x1x32x32xf32> to vector<32x32xf32>
    %cst_75 = arith.constant dense<0.000000e+00> : vector<16x32xf32>
    %62 = tpu.matmul %59, %61, %cst_75 {dimension_numbers = #tpu.dot_dimension_numbers<[1], [0], [0], [1], [0, 0, 1, 1], [], []>} : vector<16x32xf32>, vector<32x32xf32>, vector<16x32xf32> -> vector<16x32xf32>
    %63 = arith.addf %56, %62 : vector<16x32xf32>
    %c0_76 = arith.constant 0 : index
    %c0_77 = arith.constant 0 : index
    %64 = vector.load %arg3[%c0_76, %c0_77] : memref<1x32xf32, #tpu.memory_space<vmem>>, vector<1x32xf32>
    %65 = vector.broadcast %64 : vector<1x32xf32> to vector<16x32xf32>
    %66 = arith.addf %63, %65 : vector<16x32xf32>
    %c0_78 = arith.constant 0 : index
    %c0_79 = arith.constant 0 : index
    %c1_80 = arith.constant 1 : index
    %c0_81 = arith.constant 0 : index
    %c0_82 = arith.constant 0 : index
    %67 = vector.load %arg4[%c0_78, %c0_79, %c1_80, %c0_81, %c0_82] : memref<1x2x2x16x32xf32, #tpu.memory_space<vmem>>, vector<1x1x1x16x32xf32>
    %68 = vector.shape_cast %67 : vector<1x1x1x16x32xf32> to vector<16x32xf32>
    %69 = vector.shape_cast %66 : vector<16x32xf32> to vector<1x1x1x16x32xf32>
    tpu.vector_store %arg4[%c0_78, %c0_79, %c1_80, %c0_81, %c0_82], %69 {strides = array<i32>} : memref<1x2x2x16x32xf32, #tpu.memory_space<vmem>>, vector<1x1x1x16x32xf32>,
    %cst_83 = arith.constant 0.000000e+00 : f32
    %70 = vector.broadcast %cst_83 : f32 to vector<16x32xf32>
    %c0_84 = arith.constant 0 : index
    %c1_85 = arith.constant 1 : index
    %c0_86 = arith.constant 0 : index
    %c0_87 = arith.constant 0 : index
    %71 = vector.load %arg1[%c0_84, %c1_85, %c0_86, %c0_87] : memref<1x6x6x32xf32, #tpu.memory_space<vmem>>, vector<1x4x4x32xf32>
    %72 = vector.shape_cast %71 : vector<1x4x4x32xf32> to vector<4x4x32xf32>
    %73 = vector.shape_cast %72 : vector<4x4x32xf32> to vector<16x32xf32>
    %c1_88 = arith.constant 1 : index
    %c0_89 = arith.constant 0 : index
    %c0_90 = arith.constant 0 : index
    %c0_91 = arith.constant 0 : index
    %74 = vector.load %arg2[%c1_88, %c0_89, %c0_90, %c0_91] : memref<4x4x32x32xf32, #tpu.memory_space<vmem>>, vector<1x1x32x32xf32>
    %75 = vector.shape_cast %74 : vector<1x1x32x32xf32> to vector<32x32xf32>
    %cst_92 = arith.constant dense<0.000000e+00> : vector<16x32xf32>
    %76 = tpu.matmul %73, %75, %cst_92 {dimension_numbers = #tpu.dot_dimension_numbers<[1], [0], [0], [1], [0, 0, 1, 1], [], []>} : vector<16x32xf32>, vector<32x32xf32>, vector<16x32xf32> -> vector<16x32xf32>
    %77 = arith.addf %70, %76 : vector<16x32xf32>
    %c0_93 = arith.constant 0 : index
    %c1_94 = arith.constant 1 : index
    %c1_95 = arith.constant 1 : index
    %c0_96 = arith.constant 0 : index
    %78 = vector.load %arg1[%c0_93, %c1_94, %c1_95, %c0_96] : memref<1x6x6x32xf32, #tpu.memory_space<vmem>>, vector<1x4x4x32xf32>
    %79 = vector.shape_cast %78 : vector<1x4x4x32xf32> to vector<4x4x32xf32>
    %80 = vector.shape_cast %79 : vector<4x4x32xf32> to vector<16x32xf32>
    %c1_97 = arith.constant 1 : index
    %c2_98 = arith.constant 2 : index
    %c0_99 = arith.constant 0 : index
    %c0_100 = arith.constant 0 : index
    %81 = vector.load %arg2[%c1_97, %c2_98, %c0_99, %c0_100] : memref<4x4x32x32xf32, #tpu.memory_space<vmem>>, vector<1x1x32x32xf32>
    %82 = vector.shape_cast %81 : vector<1x1x32x32xf32> to vector<32x32xf32>
    %cst_101 = arith.constant dense<0.000000e+00> : vector<16x32xf32>
    %83 = tpu.matmul %80, %82, %cst_101 {dimension_numbers = #tpu.dot_dimension_numbers<[1], [0], [0], [1], [0, 0, 1, 1], [], []>} : vector<16x32xf32>, vector<32x32xf32>, vector<16x32xf32> -> vector<16x32xf32>
    %84 = arith.addf %77, %83 : vector<16x32xf32>
    %c0_102 = arith.constant 0 : index
    %c2_103 = arith.constant 2 : index
    %c0_104 = arith.constant 0 : index
    %c0_105 = arith.constant 0 : index
    %85 = vector.load %arg1[%c0_102, %c2_103, %c0_104, %c0_105] : memref<1x6x6x32xf32, #tpu.memory_space<vmem>>, vector<1x4x4x32xf32>
    %86 = vector.shape_cast %85 : vector<1x4x4x32xf32> to vector<4x4x32xf32>
    %87 = vector.shape_cast %86 : vector<4x4x32xf32> to vector<16x32xf32>
    %c3_106 = arith.constant 3 : index
    %c0_107 = arith.constant 0 : index
    %c0_108 = arith.constant 0 : index
    %c0_109 = arith.constant 0 : index
    %88 = vector.load %arg2[%c3_106, %c0_107, %c0_108, %c0_109] : memref<4x4x32x32xf32, #tpu.memory_space<vmem>>, vector<1x1x32x32xf32>
    %89 = vector.shape_cast %88 : vector<1x1x32x32xf32> to vector<32x32xf32>
    %cst_110 = arith.constant dense<0.000000e+00> : vector<16x32xf32>
    %90 = tpu.matmul %87, %89, %cst_110 {dimension_numbers = #tpu.dot_dimension_numbers<[1], [0], [0], [1], [0, 0, 1, 1], [], []>} : vector<16x32xf32>, vector<32x32xf32>, vector<16x32xf32> -> vector<16x32xf32>
    %91 = arith.addf %84, %90 : vector<16x32xf32>
    %c0_111 = arith.constant 0 : index
    %c2_112 = arith.constant 2 : index
    %c1_113 = arith.constant 1 : index
    %c0_114 = arith.constant 0 : index
    %92 = vector.load %arg1[%c0_111, %c2_112, %c1_113, %c0_114] : memref<1x6x6x32xf32, #tpu.memory_space<vmem>>, vector<1x4x4x32xf32>
    %93 = vector.shape_cast %92 : vector<1x4x4x32xf32> to vector<4x4x32xf32>
    %94 = vector.shape_cast %93 : vector<4x4x32xf32> to vector<16x32xf32>
    %c3_115 = arith.constant 3 : index
    %c2_116 = arith.constant 2 : index
    %c0_117 = arith.constant 0 : index
    %c0_118 = arith.constant 0 : index
    %95 = vector.load %arg2[%c3_115, %c2_116, %c0_117, %c0_118] : memref<4x4x32x32xf32, #tpu.memory_space<vmem>>, vector<1x1x32x32xf32>
    %96 = vector.shape_cast %95 : vector<1x1x32x32xf32> to vector<32x32xf32>
    %cst_119 = arith.constant dense<0.000000e+00> : vector<16x32xf32>
    %97 = tpu.matmul %94, %96, %cst_119 {dimension_numbers = #tpu.dot_dimension_numbers<[1], [0], [0], [1], [0, 0, 1, 1], [], []>} : vector<16x32xf32>, vector<32x32xf32>, vector<16x32xf32> -> vector<16x32xf32>
    %98 = arith.addf %91, %97 : vector<16x32xf32>
    %c0_120 = arith.constant 0 : index
    %c0_121 = arith.constant 0 : index
    %99 = vector.load %arg3[%c0_120, %c0_121] : memref<1x32xf32, #tpu.memory_space<vmem>>, vector<1x32xf32>
    %100 = vector.broadcast %99 : vector<1x32xf32> to vector<16x32xf32>
    %101 = arith.addf %98, %100 : vector<16x32xf32>
    %c0_122 = arith.constant 0 : index
    %c1_123 = arith.constant 1 : index
    %c0_124 = arith.constant 0 : index
    %c0_125 = arith.constant 0 : index
    %c0_126 = arith.constant 0 : index
    %102 = vector.load %arg4[%c0_122, %c1_123, %c0_124, %c0_125, %c0_126] : memref<1x2x2x16x32xf32, #tpu.memory_space<vmem>>, vector<1x1x1x16x32xf32>
    %103 = vector.shape_cast %102 : vector<1x1x1x16x32xf32> to vector<16x32xf32>
    %104 = vector.shape_cast %101 : vector<16x32xf32> to vector<1x1x1x16x32xf32>
    tpu.vector_store %arg4[%c0_122, %c1_123, %c0_124, %c0_125, %c0_126], %104 {strides = array<i32>} : memref<1x2x2x16x32xf32, #tpu.memory_space<vmem>>, vector<1x1x1x16x32xf32>,
    %cst_127 = arith.constant 0.000000e+00 : f32
    %105 = vector.broadcast %cst_127 : f32 to vector<16x32xf32>
    %c0_128 = arith.constant 0 : index
    %c1_129 = arith.constant 1 : index
    %c1_130 = arith.constant 1 : index
    %c0_131 = arith.constant 0 : index
    %106 = vector.load %arg1[%c0_128, %c1_129, %c1_130, %c0_131] : memref<1x6x6x32xf32, #tpu.memory_space<vmem>>, vector<1x4x4x32xf32>
    %107 = vector.shape_cast %106 : vector<1x4x4x32xf32> to vector<4x4x32xf32>
    %108 = vector.shape_cast %107 : vector<4x4x32xf32> to vector<16x32xf32>
    %c1_132 = arith.constant 1 : index
    %c1_133 = arith.constant 1 : index
    %c0_134 = arith.constant 0 : index
    %c0_135 = arith.constant 0 : index
    %109 = vector.load %arg2[%c1_132, %c1_133, %c0_134, %c0_135] : memref<4x4x32x32xf32, #tpu.memory_space<vmem>>, vector<1x1x32x32xf32>
    %110 = vector.shape_cast %109 : vector<1x1x32x32xf32> to vector<32x32xf32>
    %cst_136 = arith.constant dense<0.000000e+00> : vector<16x32xf32>
    %111 = tpu.matmul %108, %110, %cst_136 {dimension_numbers = #tpu.dot_dimension_numbers<[1], [0], [0], [1], [0, 0, 1, 1], [], []>} : vector<16x32xf32>, vector<32x32xf32>, vector<16x32xf32> -> vector<16x32xf32>
    %112 = arith.addf %105, %111 : vector<16x32xf32>
    %c0_137 = arith.constant 0 : index
    %c1_138 = arith.constant 1 : index
    %c2_139 = arith.constant 2 : index
    %c0_140 = arith.constant 0 : index
    %113 = vector.load %arg1[%c0_137, %c1_138, %c2_139, %c0_140] : memref<1x6x6x32xf32, #tpu.memory_space<vmem>>, vector<1x4x4x32xf32>
    %114 = vector.shape_cast %113 : vector<1x4x4x32xf32> to vector<4x4x32xf32>
    %115 = vector.shape_cast %114 : vector<4x4x32xf32> to vector<16x32xf32>
    %c1_141 = arith.constant 1 : index
    %c3_142 = arith.constant 3 : index
    %c0_143 = arith.constant 0 : index
    %c0_144 = arith.constant 0 : index
    %116 = vector.load %arg2[%c1_141, %c3_142, %c0_143, %c0_144] : memref<4x4x32x32xf32, #tpu.memory_space<vmem>>, vector<1x1x32x32xf32>
    %117 = vector.shape_cast %116 : vector<1x1x32x32xf32> to vector<32x32xf32>
    %cst_145 = arith.constant dense<0.000000e+00> : vector<16x32xf32>
    %118 = tpu.matmul %115, %117, %cst_145 {dimension_numbers = #tpu.dot_dimension_numbers<[1], [0], [0], [1], [0, 0, 1, 1], [], []>} : vector<16x32xf32>, vector<32x32xf32>, vector<16x32xf32> -> vector<16x32xf32>
    %119 = arith.addf %112, %118 : vector<16x32xf32>
    %c0_146 = arith.constant 0 : index
    %c2_147 = arith.constant 2 : index
    %c1_148 = arith.constant 1 : index
    %c0_149 = arith.constant 0 : index
    %120 = vector.load %arg1[%c0_146, %c2_147, %c1_148, %c0_149] : memref<1x6x6x32xf32, #tpu.memory_space<vmem>>, vector<1x4x4x32xf32>
    %121 = vector.shape_cast %120 : vector<1x4x4x32xf32> to vector<4x4x32xf32>
    %122 = vector.shape_cast %121 : vector<4x4x32xf32> to vector<16x32xf32>
    %c3_150 = arith.constant 3 : index
    %c1_151 = arith.constant 1 : index
    %c0_152 = arith.constant 0 : index
    %c0_153 = arith.constant 0 : index
    %123 = vector.load %arg2[%c3_150, %c1_151, %c0_152, %c0_153] : memref<4x4x32x32xf32, #tpu.memory_space<vmem>>, vector<1x1x32x32xf32>
    %124 = vector.shape_cast %123 : vector<1x1x32x32xf32> to vector<32x32xf32>
    %cst_154 = arith.constant dense<0.000000e+00> : vector<16x32xf32>
    %125 = tpu.matmul %122, %124, %cst_154 {dimension_numbers = #tpu.dot_dimension_numbers<[1], [0], [0], [1], [0, 0, 1, 1], [], []>} : vector<16x32xf32>, vector<32x32xf32>, vector<16x32xf32> -> vector<16x32xf32>
    %126 = arith.addf %119, %125 : vector<16x32xf32>
    %c0_155 = arith.constant 0 : index
    %c2_156 = arith.constant 2 : index
    %c2_157 = arith.constant 2 : index
    %c0_158 = arith.constant 0 : index
    %127 = vector.load %arg1[%c0_155, %c2_156, %c2_157, %c0_158] : memref<1x6x6x32xf32, #tpu.memory_space<vmem>>, vector<1x4x4x32xf32>
    %128 = vector.shape_cast %127 : vector<1x4x4x32xf32> to vector<4x4x32xf32>
    %129 = vector.shape_cast %128 : vector<4x4x32xf32> to vector<16x32xf32>
    %c3_159 = arith.constant 3 : index
    %c3_160 = arith.constant 3 : index
    %c0_161 = arith.constant 0 : index
    %c0_162 = arith.constant 0 : index
    %130 = vector.load %arg2[%c3_159, %c3_160, %c0_161, %c0_162] : memref<4x4x32x32xf32, #tpu.memory_space<vmem>>, vector<1x1x32x32xf32>
    %131 = vector.shape_cast %130 : vector<1x1x32x32xf32> to vector<32x32xf32>
    %cst_163 = arith.constant dense<0.000000e+00> : vector<16x32xf32>
    %132 = tpu.matmul %129, %131, %cst_163 {dimension_numbers = #tpu.dot_dimension_numbers<[1], [0], [0], [1], [0, 0, 1, 1], [], []>} : vector<16x32xf32>, vector<32x32xf32>, vector<16x32xf32> -> vector<16x32xf32>
    %133 = arith.addf %126, %132 : vector<16x32xf32>
    %c0_164 = arith.constant 0 : index
    %c0_165 = arith.constant 0 : index
    %134 = vector.load %arg3[%c0_164, %c0_165] : memref<1x32xf32, #tpu.memory_space<vmem>>, vector<1x32xf32>
    %135 = vector.broadcast %134 : vector<1x32xf32> to vector<16x32xf32>
    %136 = arith.addf %133, %135 : vector<16x32xf32>
    %c0_166 = arith.constant 0 : index
    %c1_167 = arith.constant 1 : index
    %c1_168 = arith.constant 1 : index
    %c0_169 = arith.constant 0 : index
    %c0_170 = arith.constant 0 : index
    %137 = vector.load %arg4[%c0_166, %c1_167, %c1_168, %c0_169, %c0_170] : memref<1x2x2x16x32xf32, #tpu.memory_space<vmem>>, vector<1x1x1x16x32xf32>
    %138 = vector.shape_cast %137 : vector<1x1x1x16x32xf32> to vector<16x32xf32>
    %139 = vector.shape_cast %136 : vector<16x32xf32> to vector<1x1x1x16x32xf32>
    tpu.vector_store %arg4[%c0_166, %c1_167, %c1_168, %c0_169, %c0_170], %139 {strides = array<i32>} : memref<1x2x2x16x32xf32, #tpu.memory_space<vmem>>, vector<1x1x1x16x32xf32>,
    return
  }
  func.func @transform_0(%arg0: i32) -> (i32, i32, i32, i32) {
    %c0_i32 = arith.constant 0 : i32
    %c0_i32_0 = arith.constant 0 : i32
    %c0_i32_1 = arith.constant 0 : i32
    %c0_i32_2 = arith.constant 0 : i32
    return %arg0, %c0_i32, %c0_i32_0, %c0_i32_1 : i32, i32, i32, i32
  }
  func.func @transform_1(%arg0: i32) -> (i32, i32, i32, i32) {
    %c0_i32 = arith.constant 0 : i32
    %c0_i32_0 = arith.constant 0 : i32
    %c0_i32_1 = arith.constant 0 : i32
    %c0_i32_2 = arith.constant 0 : i32
    %c0_i32_3 = arith.constant 0 : i32
    return %c0_i32, %c0_i32_0, %c0_i32_1, %c0_i32_2 : i32, i32, i32, i32
  }
  func.func @transform_2(%arg0: i32) -> (i32, i32) {
    %c0_i32 = arith.constant 0 : i32
    %c0_i32_0 = arith.constant 0 : i32
    %c0_i32_1 = arith.constant 0 : i32
    return %c0_i32, %c0_i32_0 : i32, i32
  }
  func.func @transform_3(%arg0: i32) -> (i32, i32, i32, i32, i32) {
    %c0_i32 = arith.constant 0 : i32
    %c0_i32_0 = arith.constant 0 : i32
    %c0_i32_1 = arith.constant 0 : i32
    %c0_i32_2 = arith.constant 0 : i32
    %c0_i32_3 = arith.constant 0 : i32
    return %arg0, %c0_i32, %c0_i32_0, %c0_i32_1, %c0_i32_2 : i32, i32, i32, i32, i32
  }
}

module attributes {stable_mosaic.version = 11 : i64} {
  func.func @_convblocks_kernel(%arg0: i32, %arg1: memref<2x10x10x32xf32, #tpu.memory_space<vmem>>, %arg2: memref<2x10x10x32xf32, #tpu.memory_space<vmem>>, %arg3: memref<3x3x32x32xf32, #tpu.memory_space<vmem>>, %arg4: memref<3x3x32x32xf32, #tpu.memory_space<vmem>>, %arg5: memref<3x3x32x32xf32, #tpu.memory_space<vmem>>, %arg6: memref<3x3x32x32xf32, #tpu.memory_space<vmem>>, %arg7: memref<3x3x32x32xf32, #tpu.memory_space<vmem>>, %arg8: memref<4x1x4xf32, #tpu.memory_space<vmem>>, %arg9: memref<4x1x4xf32, #tpu.memory_space<vmem>>, %arg10: memref<32x4xf32, #tpu.memory_space<vmem>>, %arg11: memref<4x32xf32, #tpu.memory_space<vmem>>, %arg12: memref<128x32xf32, #tpu.memory_space<vmem>>, %arg13: memref<2x10x10x32xf32, #tpu.memory_space<vmem>>) attributes {dimension_semantics = [#tpu.dimension_semantics<arbitrary>], iteration_bounds = array<i64: 1>, scalar_prefetch = 0 : i64, scratch_operands = 1 : i64, tpu.core_type = #tpu.core_type<tc>, window_params = [{pipeline_mode = #tpu.pipeline_mode<synchronous>, transform_indices = @transform_0, window_bounds = array<i64: 2, 10, 10, 32>}, {pipeline_mode = #tpu.pipeline_mode<synchronous>, transform_indices = @transform_1, window_bounds = array<i64: 2, 10, 10, 32>}, {pipeline_mode = #tpu.pipeline_mode<synchronous>, transform_indices = @transform_2, window_bounds = array<i64: 3, 3, 32, 32>}, {pipeline_mode = #tpu.pipeline_mode<synchronous>, transform_indices = @transform_3, window_bounds = array<i64: 3, 3, 32, 32>}, {pipeline_mode = #tpu.pipeline_mode<synchronous>, transform_indices = @transform_4, window_bounds = array<i64: 3, 3, 32, 32>}, {pipeline_mode = #tpu.pipeline_mode<synchronous>, transform_indices = @transform_5, window_bounds = array<i64: 3, 3, 32, 32>}, {pipeline_mode = #tpu.pipeline_mode<synchronous>, transform_indices = @transform_6, window_bounds = array<i64: 3, 3, 32, 32>}, {pipeline_mode = #tpu.pipeline_mode<synchronous>, transform_indices = @transform_7, window_bounds = array<i64: 4, 1, 4>}, {pipeline_mode = #tpu.pipeline_mode<synchronous>, transform_indices = @transform_8, window_bounds = array<i64: 4, 1, 4>}, {pipeline_mode = #tpu.pipeline_mode<synchronous>, transform_indices = @transform_9, window_bounds = array<i64: 32, 4>}, {pipeline_mode = #tpu.pipeline_mode<synchronous>, transform_indices = @transform_10, window_bounds = array<i64: 4, 32>}, {pipeline_mode = #tpu.pipeline_mode<synchronous>, transform_indices = @transform_11, window_bounds = array<i64: 128, 32>}]} {
    %cst = arith.constant 0.000000e+00 : f32
    %0 = vector.broadcast %cst : f32 to vector<2x10x10x32xf32>
    %c0 = arith.constant 0 : index
    %c0_0 = arith.constant 0 : index
    %c0_1 = arith.constant 0 : index
    %c0_2 = arith.constant 0 : index
    %1 = vector.load %arg13[%c0, %c0_0, %c0_1, %c0_2] : memref<2x10x10x32xf32, #tpu.memory_space<vmem>>, vector<2x10x10x32xf32>
    tpu.vector_store %arg13[%c0, %c0_0, %c0_1, %c0_2], %0 {strides = array<i32>} : memref<2x10x10x32xf32, #tpu.memory_space<vmem>>, vector<2x10x10x32xf32>,
    %cst_3 = arith.constant 0.000000e+00 : f32
    %2 = vector.broadcast %cst_3 : f32 to vector<128x32xf32>
    %c0_4 = arith.constant 0 : index
    %c0_5 = arith.constant 0 : index
    %c0_6 = arith.constant 0 : index
    %c0_7 = arith.constant 0 : index
    %3 = vector.load %arg1[%c0_4, %c0_5, %c0_6, %c0_7] : memref<2x10x10x32xf32, #tpu.memory_space<vmem>>, vector<2x8x8x32xf32>
    %4 = vector.shape_cast %3 : vector<2x8x8x32xf32> to vector<128x32xf32>
    %c0_8 = arith.constant 0 : index
    %c0_9 = arith.constant 0 : index
    %c0_10 = arith.constant 0 : index
    %c0_11 = arith.constant 0 : index
    %5 = vector.load %arg3[%c0_8, %c0_9, %c0_10, %c0_11] : memref<3x3x32x32xf32, #tpu.memory_space<vmem>>, vector<1x1x32x32xf32>
    %6 = vector.shape_cast %5 : vector<1x1x32x32xf32> to vector<32x32xf32>
    %cst_12 = arith.constant dense<0.000000e+00> : vector<128x32xf32>
    %7 = tpu.matmul %4, %6, %cst_12 {dimension_numbers = #tpu.dot_dimension_numbers<[1], [0], [0], [1], [0, 0, 1, 1], [], []>} : vector<128x32xf32>, vector<32x32xf32>, vector<128x32xf32> -> vector<128x32xf32>
    %8 = arith.addf %2, %7 : vector<128x32xf32>
    %c0_13 = arith.constant 0 : index
    %c0_14 = arith.constant 0 : index
    %c1 = arith.constant 1 : index
    %c0_15 = arith.constant 0 : index
    %9 = vector.load %arg1[%c0_13, %c0_14, %c1, %c0_15] : memref<2x10x10x32xf32, #tpu.memory_space<vmem>>, vector<2x8x8x32xf32>
    %10 = vector.shape_cast %9 : vector<2x8x8x32xf32> to vector<128x32xf32>
    %c0_16 = arith.constant 0 : index
    %c1_17 = arith.constant 1 : index
    %c0_18 = arith.constant 0 : index
    %c0_19 = arith.constant 0 : index
    %11 = vector.load %arg3[%c0_16, %c1_17, %c0_18, %c0_19] : memref<3x3x32x32xf32, #tpu.memory_space<vmem>>, vector<1x1x32x32xf32>
    %12 = vector.shape_cast %11 : vector<1x1x32x32xf32> to vector<32x32xf32>
    %cst_20 = arith.constant dense<0.000000e+00> : vector<128x32xf32>
    %13 = tpu.matmul %10, %12, %cst_20 {dimension_numbers = #tpu.dot_dimension_numbers<[1], [0], [0], [1], [0, 0, 1, 1], [], []>} : vector<128x32xf32>, vector<32x32xf32>, vector<128x32xf32> -> vector<128x32xf32>
    %14 = arith.addf %8, %13 : vector<128x32xf32>
    %c0_21 = arith.constant 0 : index
    %c0_22 = arith.constant 0 : index
    %c2 = arith.constant 2 : index
    %c0_23 = arith.constant 0 : index
    %15 = vector.load %arg1[%c0_21, %c0_22, %c2, %c0_23] : memref<2x10x10x32xf32, #tpu.memory_space<vmem>>, vector<2x8x8x32xf32>
    %16 = vector.shape_cast %15 : vector<2x8x8x32xf32> to vector<128x32xf32>
    %c0_24 = arith.constant 0 : index
    %c2_25 = arith.constant 2 : index
    %c0_26 = arith.constant 0 : index
    %c0_27 = arith.constant 0 : index
    %17 = vector.load %arg3[%c0_24, %c2_25, %c0_26, %c0_27] : memref<3x3x32x32xf32, #tpu.memory_space<vmem>>, vector<1x1x32x32xf32>
    %18 = vector.shape_cast %17 : vector<1x1x32x32xf32> to vector<32x32xf32>
    %cst_28 = arith.constant dense<0.000000e+00> : vector<128x32xf32>
    %19 = tpu.matmul %16, %18, %cst_28 {dimension_numbers = #tpu.dot_dimension_numbers<[1], [0], [0], [1], [0, 0, 1, 1], [], []>} : vector<128x32xf32>, vector<32x32xf32>, vector<128x32xf32> -> vector<128x32xf32>
    %20 = arith.addf %14, %19 : vector<128x32xf32>
    %c0_29 = arith.constant 0 : index
    %c1_30 = arith.constant 1 : index
    %c0_31 = arith.constant 0 : index
    %c0_32 = arith.constant 0 : index
    %21 = vector.load %arg1[%c0_29, %c1_30, %c0_31, %c0_32] : memref<2x10x10x32xf32, #tpu.memory_space<vmem>>, vector<2x8x8x32xf32>
    %22 = vector.shape_cast %21 : vector<2x8x8x32xf32> to vector<128x32xf32>
    %c1_33 = arith.constant 1 : index
    %c0_34 = arith.constant 0 : index
    %c0_35 = arith.constant 0 : index
    %c0_36 = arith.constant 0 : index
    %23 = vector.load %arg3[%c1_33, %c0_34, %c0_35, %c0_36] : memref<3x3x32x32xf32, #tpu.memory_space<vmem>>, vector<1x1x32x32xf32>
    %24 = vector.shape_cast %23 : vector<1x1x32x32xf32> to vector<32x32xf32>
    %cst_37 = arith.constant dense<0.000000e+00> : vector<128x32xf32>
    %25 = tpu.matmul %22, %24, %cst_37 {dimension_numbers = #tpu.dot_dimension_numbers<[1], [0], [0], [1], [0, 0, 1, 1], [], []>} : vector<128x32xf32>, vector<32x32xf32>, vector<128x32xf32> -> vector<128x32xf32>
    %26 = arith.addf %20, %25 : vector<128x32xf32>
    %c0_38 = arith.constant 0 : index
    %c1_39 = arith.constant 1 : index
    %c1_40 = arith.constant 1 : index
    %c0_41 = arith.constant 0 : index
    %27 = vector.load %arg1[%c0_38, %c1_39, %c1_40, %c0_41] : memref<2x10x10x32xf32, #tpu.memory_space<vmem>>, vector<2x8x8x32xf32>
    %28 = vector.shape_cast %27 : vector<2x8x8x32xf32> to vector<128x32xf32>
    %c1_42 = arith.constant 1 : index
    %c1_43 = arith.constant 1 : index
    %c0_44 = arith.constant 0 : index
    %c0_45 = arith.constant 0 : index
    %29 = vector.load %arg3[%c1_42, %c1_43, %c0_44, %c0_45] : memref<3x3x32x32xf32, #tpu.memory_space<vmem>>, vector<1x1x32x32xf32>
    %30 = vector.shape_cast %29 : vector<1x1x32x32xf32> to vector<32x32xf32>
    %cst_46 = arith.constant dense<0.000000e+00> : vector<128x32xf32>
    %31 = tpu.matmul %28, %30, %cst_46 {dimension_numbers = #tpu.dot_dimension_numbers<[1], [0], [0], [1], [0, 0, 1, 1], [], []>} : vector<128x32xf32>, vector<32x32xf32>, vector<128x32xf32> -> vector<128x32xf32>
    %32 = arith.addf %26, %31 : vector<128x32xf32>
    %c0_47 = arith.constant 0 : index
    %c1_48 = arith.constant 1 : index
    %c2_49 = arith.constant 2 : index
    %c0_50 = arith.constant 0 : index
    %33 = vector.load %arg1[%c0_47, %c1_48, %c2_49, %c0_50] : memref<2x10x10x32xf32, #tpu.memory_space<vmem>>, vector<2x8x8x32xf32>
    %34 = vector.shape_cast %33 : vector<2x8x8x32xf32> to vector<128x32xf32>
    %c1_51 = arith.constant 1 : index
    %c2_52 = arith.constant 2 : index
    %c0_53 = arith.constant 0 : index
    %c0_54 = arith.constant 0 : index
    %35 = vector.load %arg3[%c1_51, %c2_52, %c0_53, %c0_54] : memref<3x3x32x32xf32, #tpu.memory_space<vmem>>, vector<1x1x32x32xf32>
    %36 = vector.shape_cast %35 : vector<1x1x32x32xf32> to vector<32x32xf32>
    %cst_55 = arith.constant dense<0.000000e+00> : vector<128x32xf32>
    %37 = tpu.matmul %34, %36, %cst_55 {dimension_numbers = #tpu.dot_dimension_numbers<[1], [0], [0], [1], [0, 0, 1, 1], [], []>} : vector<128x32xf32>, vector<32x32xf32>, vector<128x32xf32> -> vector<128x32xf32>
    %38 = arith.addf %32, %37 : vector<128x32xf32>
    %c0_56 = arith.constant 0 : index
    %c2_57 = arith.constant 2 : index
    %c0_58 = arith.constant 0 : index
    %c0_59 = arith.constant 0 : index
    %39 = vector.load %arg1[%c0_56, %c2_57, %c0_58, %c0_59] : memref<2x10x10x32xf32, #tpu.memory_space<vmem>>, vector<2x8x8x32xf32>
    %40 = vector.shape_cast %39 : vector<2x8x8x32xf32> to vector<128x32xf32>
    %c2_60 = arith.constant 2 : index
    %c0_61 = arith.constant 0 : index
    %c0_62 = arith.constant 0 : index
    %c0_63 = arith.constant 0 : index
    %41 = vector.load %arg3[%c2_60, %c0_61, %c0_62, %c0_63] : memref<3x3x32x32xf32, #tpu.memory_space<vmem>>, vector<1x1x32x32xf32>
    %42 = vector.shape_cast %41 : vector<1x1x32x32xf32> to vector<32x32xf32>
    %cst_64 = arith.constant dense<0.000000e+00> : vector<128x32xf32>
    %43 = tpu.matmul %40, %42, %cst_64 {dimension_numbers = #tpu.dot_dimension_numbers<[1], [0], [0], [1], [0, 0, 1, 1], [], []>} : vector<128x32xf32>, vector<32x32xf32>, vector<128x32xf32> -> vector<128x32xf32>
    %44 = arith.addf %38, %43 : vector<128x32xf32>
    %c0_65 = arith.constant 0 : index
    %c2_66 = arith.constant 2 : index
    %c1_67 = arith.constant 1 : index
    %c0_68 = arith.constant 0 : index
    %45 = vector.load %arg1[%c0_65, %c2_66, %c1_67, %c0_68] : memref<2x10x10x32xf32, #tpu.memory_space<vmem>>, vector<2x8x8x32xf32>
    %46 = vector.shape_cast %45 : vector<2x8x8x32xf32> to vector<128x32xf32>
    %c2_69 = arith.constant 2 : index
    %c1_70 = arith.constant 1 : index
    %c0_71 = arith.constant 0 : index
    %c0_72 = arith.constant 0 : index
    %47 = vector.load %arg3[%c2_69, %c1_70, %c0_71, %c0_72] : memref<3x3x32x32xf32, #tpu.memory_space<vmem>>, vector<1x1x32x32xf32>
    %48 = vector.shape_cast %47 : vector<1x1x32x32xf32> to vector<32x32xf32>
    %cst_73 = arith.constant dense<0.000000e+00> : vector<128x32xf32>
    %49 = tpu.matmul %46, %48, %cst_73 {dimension_numbers = #tpu.dot_dimension_numbers<[1], [0], [0], [1], [0, 0, 1, 1], [], []>} : vector<128x32xf32>, vector<32x32xf32>, vector<128x32xf32> -> vector<128x32xf32>
    %50 = arith.addf %44, %49 : vector<128x32xf32>
    %c0_74 = arith.constant 0 : index
    %c2_75 = arith.constant 2 : index
    %c2_76 = arith.constant 2 : index
    %c0_77 = arith.constant 0 : index
    %51 = vector.load %arg1[%c0_74, %c2_75, %c2_76, %c0_77] : memref<2x10x10x32xf32, #tpu.memory_space<vmem>>, vector<2x8x8x32xf32>
    %52 = vector.shape_cast %51 : vector<2x8x8x32xf32> to vector<128x32xf32>
    %c2_78 = arith.constant 2 : index
    %c2_79 = arith.constant 2 : index
    %c0_80 = arith.constant 0 : index
    %c0_81 = arith.constant 0 : index
    %53 = vector.load %arg3[%c2_78, %c2_79, %c0_80, %c0_81] : memref<3x3x32x32xf32, #tpu.memory_space<vmem>>, vector<1x1x32x32xf32>
    %54 = vector.shape_cast %53 : vector<1x1x32x32xf32> to vector<32x32xf32>
    %cst_82 = arith.constant dense<0.000000e+00> : vector<128x32xf32>
    %55 = tpu.matmul %52, %54, %cst_82 {dimension_numbers = #tpu.dot_dimension_numbers<[1], [0], [0], [1], [0, 0, 1, 1], [], []>} : vector<128x32xf32>, vector<32x32xf32>, vector<128x32xf32> -> vector<128x32xf32>
    %56 = arith.addf %50, %55 : vector<128x32xf32>
    %c0_83 = arith.constant 0 : index
    %c0_84 = arith.constant 0 : index
    %57 = vector.load %arg10[%c0_83, %c0_84] : memref<32x4xf32, #tpu.memory_space<vmem>>, vector<32x4xf32>
    %c0_85 = arith.constant 0 : index
    %c0_86 = arith.constant 0 : index
    %58 = vector.load %arg11[%c0_85, %c0_86] : memref<4x32xf32, #tpu.memory_space<vmem>>, vector<4x32xf32>
    %cst_87 = arith.constant dense<0.000000e+00> : vector<32xf32>
    %59 = vector.multi_reduction <add>, %56, %cst_87 [0] : vector<128x32xf32> to vector<32xf32>
    %60 = vector.shape_cast %59 : vector<32xf32> to vector<1x32xf32>
    %cst_88 = arith.constant dense<0.000000e+00> : vector<1x4xf32>
    %61 = tpu.matmul %60, %57, %cst_88 {dimension_numbers = #tpu.dot_dimension_numbers<[1], [0], [0], [1], [0, 0, 1, 1], [], []>} : vector<1x32xf32>, vector<32x4xf32>, vector<1x4xf32> -> vector<1x4xf32>
    %cst_89 = arith.constant 1.024000e+03 : f32
    %62 = vector.broadcast %cst_89 : f32 to vector<1x4xf32>
    %63 = arith.divf %61, %62 : vector<1x4xf32>
    %cst_90 = arith.constant dense<0.000000e+00> : vector<1x32xf32>
    %64 = tpu.matmul %63, %58, %cst_90 {dimension_numbers = #tpu.dot_dimension_numbers<[1], [0], [0], [1], [0, 0, 1, 1], [], []>} : vector<1x4xf32>, vector<4x32xf32>, vector<1x32xf32> -> vector<1x32xf32>
    %65 = vector.broadcast %64 : vector<1x32xf32> to vector<128x32xf32>
    %66 = arith.subf %56, %65 : vector<128x32xf32>
    %67 = arith.mulf %66, %66 : vector<128x32xf32>
    %cst_91 = arith.constant dense<0.000000e+00> : vector<32xf32>
    %68 = vector.multi_reduction <add>, %67, %cst_91 [0] : vector<128x32xf32> to vector<32xf32>
    %69 = vector.shape_cast %68 : vector<32xf32> to vector<1x32xf32>
    %cst_92 = arith.constant dense<0.000000e+00> : vector<1x4xf32>
    %70 = tpu.matmul %69, %57, %cst_92 {dimension_numbers = #tpu.dot_dimension_numbers<[1], [0], [0], [1], [0, 0, 1, 1], [], []>} : vector<1x32xf32>, vector<32x4xf32>, vector<1x4xf32> -> vector<1x4xf32>
    %cst_93 = arith.constant 1.024000e+03 : f32
    %71 = vector.broadcast %cst_93 : f32 to vector<1x4xf32>
    %72 = arith.divf %70, %71 : vector<1x4xf32>
    %c0_94 = arith.constant 0 : index
    %c0_95 = arith.constant 0 : index
    %c0_96 = arith.constant 0 : index
    %73 = vector.load %arg8[%c0_94, %c0_95, %c0_96] : memref<4x1x4xf32, #tpu.memory_space<vmem>>, vector<1x1x4xf32>
    %74 = vector.shape_cast %73 : vector<1x1x4xf32> to vector<1x4xf32>
    %cst_97 = arith.constant 9.99999974E-6 : f32
    %75 = vector.broadcast %cst_97 : f32 to vector<1x4xf32>
    %76 = arith.addf %72, %75 : vector<1x4xf32>
    %77 = math.rsqrt %76 : vector<1x4xf32>
    %78 = arith.mulf %74, %77 : vector<1x4xf32>
    %c0_98 = arith.constant 0 : index
    %c0_99 = arith.constant 0 : index
    %c0_100 = arith.constant 0 : index
    %79 = vector.load %arg9[%c0_98, %c0_99, %c0_100] : memref<4x1x4xf32, #tpu.memory_space<vmem>>, vector<1x1x4xf32>
    %80 = vector.shape_cast %79 : vector<1x1x4xf32> to vector<1x4xf32>
    %81 = arith.mulf %63, %78 : vector<1x4xf32>
    %82 = arith.subf %80, %81 : vector<1x4xf32>
    %cst_101 = arith.constant dense<0.000000e+00> : vector<1x32xf32>
    %83 = tpu.matmul %78, %58, %cst_101 {dimension_numbers = #tpu.dot_dimension_numbers<[1], [0], [0], [1], [0, 0, 1, 1], [], []>} : vector<1x4xf32>, vector<4x32xf32>, vector<1x32xf32> -> vector<1x32xf32>
    %84 = vector.broadcast %83 : vector<1x32xf32> to vector<128x32xf32>
    %85 = arith.mulf %56, %84 : vector<128x32xf32>
    %cst_102 = arith.constant dense<0.000000e+00> : vector<1x32xf32>
    %86 = tpu.matmul %82, %58, %cst_102 {dimension_numbers = #tpu.dot_dimension_numbers<[1], [0], [0], [1], [0, 0, 1, 1], [], []>} : vector<1x4xf32>, vector<4x32xf32>, vector<1x32xf32> -> vector<1x32xf32>
    %87 = vector.broadcast %86 : vector<1x32xf32> to vector<128x32xf32>
    %88 = arith.addf %85, %87 : vector<128x32xf32>
    %cst_103 = arith.constant 0.000000e+00 : f32
    %89 = vector.broadcast %cst_103 : f32 to vector<128x32xf32>
    %90 = arith.cmpf oge, %88, %89 : vector<128x32xf32>
    %cst_104 = arith.constant 2.000000e-01 : f32
    %91 = vector.broadcast %cst_104 : f32 to vector<128x32xf32>
    %92 = arith.mulf %91, %88 : vector<128x32xf32>
    %93 = arith.select %90, %88, %92 : vector<128x32xi1>, vector<128x32xf32>
    %94 = vector.shape_cast %93 : vector<128x32xf32> to vector<2x8x8x32xf32>
    %c0_105 = arith.constant 0 : index
    %c1_106 = arith.constant 1 : index
    %c1_107 = arith.constant 1 : index
    %c0_108 = arith.constant 0 : index
    %95 = vector.load %arg13[%c0_105, %c1_106, %c1_107, %c0_108] : memref<2x10x10x32xf32, #tpu.memory_space<vmem>>, vector<2x8x8x32xf32>
    tpu.vector_store %arg13[%c0_105, %c1_106, %c1_107, %c0_108], %94 {strides = array<i32>} : memref<2x10x10x32xf32, #tpu.memory_space<vmem>>, vector<2x8x8x32xf32>,
    %cst_109 = arith.constant 0.000000e+00 : f32
    %96 = vector.broadcast %cst_109 : f32 to vector<128x32xf32>
    %c0_110 = arith.constant 0 : index
    %c0_111 = arith.constant 0 : index
    %c0_112 = arith.constant 0 : index
    %c0_113 = arith.constant 0 : index
    %97 = vector.load %arg13[%c0_110, %c0_111, %c0_112, %c0_113] : memref<2x10x10x32xf32, #tpu.memory_space<vmem>>, vector<2x8x8x32xf32>
    %98 = vector.shape_cast %97 : vector<2x8x8x32xf32> to vector<128x32xf32>
    %c0_114 = arith.constant 0 : index
    %c0_115 = arith.constant 0 : index
    %c0_116 = arith.constant 0 : index
    %c0_117 = arith.constant 0 : index
    %99 = vector.load %arg4[%c0_114, %c0_115, %c0_116, %c0_117] : memref<3x3x32x32xf32, #tpu.memory_space<vmem>>, vector<1x1x32x32xf32>
    %100 = vector.shape_cast %99 : vector<1x1x32x32xf32> to vector<32x32xf32>
    %cst_118 = arith.constant dense<0.000000e+00> : vector<128x32xf32>
    %101 = tpu.matmul %98, %100, %cst_118 {dimension_numbers = #tpu.dot_dimension_numbers<[1], [0], [0], [1], [0, 0, 1, 1], [], []>} : vector<128x32xf32>, vector<32x32xf32>, vector<128x32xf32> -> vector<128x32xf32>
    %102 = arith.addf %96, %101 : vector<128x32xf32>
    %c0_119 = arith.constant 0 : index
    %c0_120 = arith.constant 0 : index
    %c1_121 = arith.constant 1 : index
    %c0_122 = arith.constant 0 : index
    %103 = vector.load %arg13[%c0_119, %c0_120, %c1_121, %c0_122] : memref<2x10x10x32xf32, #tpu.memory_space<vmem>>, vector<2x8x8x32xf32>
    %104 = vector.shape_cast %103 : vector<2x8x8x32xf32> to vector<128x32xf32>
    %c0_123 = arith.constant 0 : index
    %c1_124 = arith.constant 1 : index
    %c0_125 = arith.constant 0 : index
    %c0_126 = arith.constant 0 : index
    %105 = vector.load %arg4[%c0_123, %c1_124, %c0_125, %c0_126] : memref<3x3x32x32xf32, #tpu.memory_space<vmem>>, vector<1x1x32x32xf32>
    %106 = vector.shape_cast %105 : vector<1x1x32x32xf32> to vector<32x32xf32>
    %cst_127 = arith.constant dense<0.000000e+00> : vector<128x32xf32>
    %107 = tpu.matmul %104, %106, %cst_127 {dimension_numbers = #tpu.dot_dimension_numbers<[1], [0], [0], [1], [0, 0, 1, 1], [], []>} : vector<128x32xf32>, vector<32x32xf32>, vector<128x32xf32> -> vector<128x32xf32>
    %108 = arith.addf %102, %107 : vector<128x32xf32>
    %c0_128 = arith.constant 0 : index
    %c0_129 = arith.constant 0 : index
    %c2_130 = arith.constant 2 : index
    %c0_131 = arith.constant 0 : index
    %109 = vector.load %arg13[%c0_128, %c0_129, %c2_130, %c0_131] : memref<2x10x10x32xf32, #tpu.memory_space<vmem>>, vector<2x8x8x32xf32>
    %110 = vector.shape_cast %109 : vector<2x8x8x32xf32> to vector<128x32xf32>
    %c0_132 = arith.constant 0 : index
    %c2_133 = arith.constant 2 : index
    %c0_134 = arith.constant 0 : index
    %c0_135 = arith.constant 0 : index
    %111 = vector.load %arg4[%c0_132, %c2_133, %c0_134, %c0_135] : memref<3x3x32x32xf32, #tpu.memory_space<vmem>>, vector<1x1x32x32xf32>
    %112 = vector.shape_cast %111 : vector<1x1x32x32xf32> to vector<32x32xf32>
    %cst_136 = arith.constant dense<0.000000e+00> : vector<128x32xf32>
    %113 = tpu.matmul %110, %112, %cst_136 {dimension_numbers = #tpu.dot_dimension_numbers<[1], [0], [0], [1], [0, 0, 1, 1], [], []>} : vector<128x32xf32>, vector<32x32xf32>, vector<128x32xf32> -> vector<128x32xf32>
    %114 = arith.addf %108, %113 : vector<128x32xf32>
    %c0_137 = arith.constant 0 : index
    %c1_138 = arith.constant 1 : index
    %c0_139 = arith.constant 0 : index
    %c0_140 = arith.constant 0 : index
    %115 = vector.load %arg13[%c0_137, %c1_138, %c0_139, %c0_140] : memref<2x10x10x32xf32, #tpu.memory_space<vmem>>, vector<2x8x8x32xf32>
    %116 = vector.shape_cast %115 : vector<2x8x8x32xf32> to vector<128x32xf32>
    %c1_141 = arith.constant 1 : index
    %c0_142 = arith.constant 0 : index
    %c0_143 = arith.constant 0 : index
    %c0_144 = arith.constant 0 : index
    %117 = vector.load %arg4[%c1_141, %c0_142, %c0_143, %c0_144] : memref<3x3x32x32xf32, #tpu.memory_space<vmem>>, vector<1x1x32x32xf32>
    %118 = vector.shape_cast %117 : vector<1x1x32x32xf32> to vector<32x32xf32>
    %cst_145 = arith.constant dense<0.000000e+00> : vector<128x32xf32>
    %119 = tpu.matmul %116, %118, %cst_145 {dimension_numbers = #tpu.dot_dimension_numbers<[1], [0], [0], [1], [0, 0, 1, 1], [], []>} : vector<128x32xf32>, vector<32x32xf32>, vector<128x32xf32> -> vector<128x32xf32>
    %120 = arith.addf %114, %119 : vector<128x32xf32>
    %c0_146 = arith.constant 0 : index
    %c1_147 = arith.constant 1 : index
    %c1_148 = arith.constant 1 : index
    %c0_149 = arith.constant 0 : index
    %121 = vector.load %arg13[%c0_146, %c1_147, %c1_148, %c0_149] : memref<2x10x10x32xf32, #tpu.memory_space<vmem>>, vector<2x8x8x32xf32>
    %122 = vector.shape_cast %121 : vector<2x8x8x32xf32> to vector<128x32xf32>
    %c1_150 = arith.constant 1 : index
    %c1_151 = arith.constant 1 : index
    %c0_152 = arith.constant 0 : index
    %c0_153 = arith.constant 0 : index
    %123 = vector.load %arg4[%c1_150, %c1_151, %c0_152, %c0_153] : memref<3x3x32x32xf32, #tpu.memory_space<vmem>>, vector<1x1x32x32xf32>
    %124 = vector.shape_cast %123 : vector<1x1x32x32xf32> to vector<32x32xf32>
    %cst_154 = arith.constant dense<0.000000e+00> : vector<128x32xf32>
    %125 = tpu.matmul %122, %124, %cst_154 {dimension_numbers = #tpu.dot_dimension_numbers<[1], [0], [0], [1], [0, 0, 1, 1], [], []>} : vector<128x32xf32>, vector<32x32xf32>, vector<128x32xf32> -> vector<128x32xf32>
    %126 = arith.addf %120, %125 : vector<128x32xf32>
    %c0_155 = arith.constant 0 : index
    %c1_156 = arith.constant 1 : index
    %c2_157 = arith.constant 2 : index
    %c0_158 = arith.constant 0 : index
    %127 = vector.load %arg13[%c0_155, %c1_156, %c2_157, %c0_158] : memref<2x10x10x32xf32, #tpu.memory_space<vmem>>, vector<2x8x8x32xf32>
    %128 = vector.shape_cast %127 : vector<2x8x8x32xf32> to vector<128x32xf32>
    %c1_159 = arith.constant 1 : index
    %c2_160 = arith.constant 2 : index
    %c0_161 = arith.constant 0 : index
    %c0_162 = arith.constant 0 : index
    %129 = vector.load %arg4[%c1_159, %c2_160, %c0_161, %c0_162] : memref<3x3x32x32xf32, #tpu.memory_space<vmem>>, vector<1x1x32x32xf32>
    %130 = vector.shape_cast %129 : vector<1x1x32x32xf32> to vector<32x32xf32>
    %cst_163 = arith.constant dense<0.000000e+00> : vector<128x32xf32>
    %131 = tpu.matmul %128, %130, %cst_163 {dimension_numbers = #tpu.dot_dimension_numbers<[1], [0], [0], [1], [0, 0, 1, 1], [], []>} : vector<128x32xf32>, vector<32x32xf32>, vector<128x32xf32> -> vector<128x32xf32>
    %132 = arith.addf %126, %131 : vector<128x32xf32>
    %c0_164 = arith.constant 0 : index
    %c2_165 = arith.constant 2 : index
    %c0_166 = arith.constant 0 : index
    %c0_167 = arith.constant 0 : index
    %133 = vector.load %arg13[%c0_164, %c2_165, %c0_166, %c0_167] : memref<2x10x10x32xf32, #tpu.memory_space<vmem>>, vector<2x8x8x32xf32>
    %134 = vector.shape_cast %133 : vector<2x8x8x32xf32> to vector<128x32xf32>
    %c2_168 = arith.constant 2 : index
    %c0_169 = arith.constant 0 : index
    %c0_170 = arith.constant 0 : index
    %c0_171 = arith.constant 0 : index
    %135 = vector.load %arg4[%c2_168, %c0_169, %c0_170, %c0_171] : memref<3x3x32x32xf32, #tpu.memory_space<vmem>>, vector<1x1x32x32xf32>
    %136 = vector.shape_cast %135 : vector<1x1x32x32xf32> to vector<32x32xf32>
    %cst_172 = arith.constant dense<0.000000e+00> : vector<128x32xf32>
    %137 = tpu.matmul %134, %136, %cst_172 {dimension_numbers = #tpu.dot_dimension_numbers<[1], [0], [0], [1], [0, 0, 1, 1], [], []>} : vector<128x32xf32>, vector<32x32xf32>, vector<128x32xf32> -> vector<128x32xf32>
    %138 = arith.addf %132, %137 : vector<128x32xf32>
    %c0_173 = arith.constant 0 : index
    %c2_174 = arith.constant 2 : index
    %c1_175 = arith.constant 1 : index
    %c0_176 = arith.constant 0 : index
    %139 = vector.load %arg13[%c0_173, %c2_174, %c1_175, %c0_176] : memref<2x10x10x32xf32, #tpu.memory_space<vmem>>, vector<2x8x8x32xf32>
    %140 = vector.shape_cast %139 : vector<2x8x8x32xf32> to vector<128x32xf32>
    %c2_177 = arith.constant 2 : index
    %c1_178 = arith.constant 1 : index
    %c0_179 = arith.constant 0 : index
    %c0_180 = arith.constant 0 : index
    %141 = vector.load %arg4[%c2_177, %c1_178, %c0_179, %c0_180] : memref<3x3x32x32xf32, #tpu.memory_space<vmem>>, vector<1x1x32x32xf32>
    %142 = vector.shape_cast %141 : vector<1x1x32x32xf32> to vector<32x32xf32>
    %cst_181 = arith.constant dense<0.000000e+00> : vector<128x32xf32>
    %143 = tpu.matmul %140, %142, %cst_181 {dimension_numbers = #tpu.dot_dimension_numbers<[1], [0], [0], [1], [0, 0, 1, 1], [], []>} : vector<128x32xf32>, vector<32x32xf32>, vector<128x32xf32> -> vector<128x32xf32>
    %144 = arith.addf %138, %143 : vector<128x32xf32>
    %c0_182 = arith.constant 0 : index
    %c2_183 = arith.constant 2 : index
    %c2_184 = arith.constant 2 : index
    %c0_185 = arith.constant 0 : index
    %145 = vector.load %arg13[%c0_182, %c2_183, %c2_184, %c0_185] : memref<2x10x10x32xf32, #tpu.memory_space<vmem>>, vector<2x8x8x32xf32>
    %146 = vector.shape_cast %145 : vector<2x8x8x32xf32> to vector<128x32xf32>
    %c2_186 = arith.constant 2 : index
    %c2_187 = arith.constant 2 : index
    %c0_188 = arith.constant 0 : index
    %c0_189 = arith.constant 0 : index
    %147 = vector.load %arg4[%c2_186, %c2_187, %c0_188, %c0_189] : memref<3x3x32x32xf32, #tpu.memory_space<vmem>>, vector<1x1x32x32xf32>
    %148 = vector.shape_cast %147 : vector<1x1x32x32xf32> to vector<32x32xf32>
    %cst_190 = arith.constant dense<0.000000e+00> : vector<128x32xf32>
    %149 = tpu.matmul %146, %148, %cst_190 {dimension_numbers = #tpu.dot_dimension_numbers<[1], [0], [0], [1], [0, 0, 1, 1], [], []>} : vector<128x32xf32>, vector<32x32xf32>, vector<128x32xf32> -> vector<128x32xf32>
    %150 = arith.addf %144, %149 : vector<128x32xf32>
    %c0_191 = arith.constant 0 : index
    %c0_192 = arith.constant 0 : index
    %151 = vector.load %arg10[%c0_191, %c0_192] : memref<32x4xf32, #tpu.memory_space<vmem>>, vector<32x4xf32>
    %c0_193 = arith.constant 0 : index
    %c0_194 = arith.constant 0 : index
    %152 = vector.load %arg11[%c0_193, %c0_194] : memref<4x32xf32, #tpu.memory_space<vmem>>, vector<4x32xf32>
    %cst_195 = arith.constant dense<0.000000e+00> : vector<32xf32>
    %153 = vector.multi_reduction <add>, %150, %cst_195 [0] : vector<128x32xf32> to vector<32xf32>
    %154 = vector.shape_cast %153 : vector<32xf32> to vector<1x32xf32>
    %cst_196 = arith.constant dense<0.000000e+00> : vector<1x4xf32>
    %155 = tpu.matmul %154, %151, %cst_196 {dimension_numbers = #tpu.dot_dimension_numbers<[1], [0], [0], [1], [0, 0, 1, 1], [], []>} : vector<1x32xf32>, vector<32x4xf32>, vector<1x4xf32> -> vector<1x4xf32>
    %cst_197 = arith.constant 1.024000e+03 : f32
    %156 = vector.broadcast %cst_197 : f32 to vector<1x4xf32>
    %157 = arith.divf %155, %156 : vector<1x4xf32>
    %cst_198 = arith.constant dense<0.000000e+00> : vector<1x32xf32>
    %158 = tpu.matmul %157, %152, %cst_198 {dimension_numbers = #tpu.dot_dimension_numbers<[1], [0], [0], [1], [0, 0, 1, 1], [], []>} : vector<1x4xf32>, vector<4x32xf32>, vector<1x32xf32> -> vector<1x32xf32>
    %159 = vector.broadcast %158 : vector<1x32xf32> to vector<128x32xf32>
    %160 = arith.subf %150, %159 : vector<128x32xf32>
    %161 = arith.mulf %160, %160 : vector<128x32xf32>
    %cst_199 = arith.constant dense<0.000000e+00> : vector<32xf32>
    %162 = vector.multi_reduction <add>, %161, %cst_199 [0] : vector<128x32xf32> to vector<32xf32>
    %163 = vector.shape_cast %162 : vector<32xf32> to vector<1x32xf32>
    %cst_200 = arith.constant dense<0.000000e+00> : vector<1x4xf32>
    %164 = tpu.matmul %163, %151, %cst_200 {dimension_numbers = #tpu.dot_dimension_numbers<[1], [0], [0], [1], [0, 0, 1, 1], [], []>} : vector<1x32xf32>, vector<32x4xf32>, vector<1x4xf32> -> vector<1x4xf32>
    %cst_201 = arith.constant 1.024000e+03 : f32
    %165 = vector.broadcast %cst_201 : f32 to vector<1x4xf32>
    %166 = arith.divf %164, %165 : vector<1x4xf32>
    %c1_202 = arith.constant 1 : index
    %c0_203 = arith.constant 0 : index
    %c0_204 = arith.constant 0 : index
    %167 = vector.load %arg8[%c1_202, %c0_203, %c0_204] : memref<4x1x4xf32, #tpu.memory_space<vmem>>, vector<1x1x4xf32>
    %168 = vector.shape_cast %167 : vector<1x1x4xf32> to vector<1x4xf32>
    %cst_205 = arith.constant 9.99999974E-6 : f32
    %169 = vector.broadcast %cst_205 : f32 to vector<1x4xf32>
    %170 = arith.addf %166, %169 : vector<1x4xf32>
    %171 = math.rsqrt %170 : vector<1x4xf32>
    %172 = arith.mulf %168, %171 : vector<1x4xf32>
    %c1_206 = arith.constant 1 : index
    %c0_207 = arith.constant 0 : index
    %c0_208 = arith.constant 0 : index
    %173 = vector.load %arg9[%c1_206, %c0_207, %c0_208] : memref<4x1x4xf32, #tpu.memory_space<vmem>>, vector<1x1x4xf32>
    %174 = vector.shape_cast %173 : vector<1x1x4xf32> to vector<1x4xf32>
    %175 = arith.mulf %157, %172 : vector<1x4xf32>
    %176 = arith.subf %174, %175 : vector<1x4xf32>
    %cst_209 = arith.constant dense<0.000000e+00> : vector<1x32xf32>
    %177 = tpu.matmul %172, %152, %cst_209 {dimension_numbers = #tpu.dot_dimension_numbers<[1], [0], [0], [1], [0, 0, 1, 1], [], []>} : vector<1x4xf32>, vector<4x32xf32>, vector<1x32xf32> -> vector<1x32xf32>
    %178 = vector.broadcast %177 : vector<1x32xf32> to vector<128x32xf32>
    %179 = arith.mulf %150, %178 : vector<128x32xf32>
    %cst_210 = arith.constant dense<0.000000e+00> : vector<1x32xf32>
    %180 = tpu.matmul %176, %152, %cst_210 {dimension_numbers = #tpu.dot_dimension_numbers<[1], [0], [0], [1], [0, 0, 1, 1], [], []>} : vector<1x4xf32>, vector<4x32xf32>, vector<1x32xf32> -> vector<1x32xf32>
    %181 = vector.broadcast %180 : vector<1x32xf32> to vector<128x32xf32>
    %182 = arith.addf %179, %181 : vector<128x32xf32>
    %cst_211 = arith.constant 0.000000e+00 : f32
    %183 = vector.broadcast %cst_211 : f32 to vector<128x32xf32>
    %184 = arith.cmpf oge, %182, %183 : vector<128x32xf32>
    %cst_212 = arith.constant 2.000000e-01 : f32
    %185 = vector.broadcast %cst_212 : f32 to vector<128x32xf32>
    %186 = arith.mulf %185, %182 : vector<128x32xf32>
    %187 = arith.select %184, %182, %186 : vector<128x32xi1>, vector<128x32xf32>
    %188 = vector.shape_cast %187 : vector<128x32xf32> to vector<2x8x8x32xf32>
    %c0_213 = arith.constant 0 : index
    %c1_214 = arith.constant 1 : index
    %c1_215 = arith.constant 1 : index
    %c0_216 = arith.constant 0 : index
    %189 = vector.load %arg13[%c0_213, %c1_214, %c1_215, %c0_216] : memref<2x10x10x32xf32, #tpu.memory_space<vmem>>, vector<2x8x8x32xf32>
    tpu.vector_store %arg13[%c0_213, %c1_214, %c1_215, %c0_216], %188 {strides = array<i32>} : memref<2x10x10x32xf32, #tpu.memory_space<vmem>>, vector<2x8x8x32xf32>,
    %cst_217 = arith.constant 0.000000e+00 : f32
    %190 = vector.broadcast %cst_217 : f32 to vector<128x32xf32>
    %c0_218 = arith.constant 0 : index
    %c0_219 = arith.constant 0 : index
    %c0_220 = arith.constant 0 : index
    %c0_221 = arith.constant 0 : index
    %191 = vector.load %arg13[%c0_218, %c0_219, %c0_220, %c0_221] : memref<2x10x10x32xf32, #tpu.memory_space<vmem>>, vector<2x8x8x32xf32>
    %192 = vector.shape_cast %191 : vector<2x8x8x32xf32> to vector<128x32xf32>
    %c0_222 = arith.constant 0 : index
    %c0_223 = arith.constant 0 : index
    %c0_224 = arith.constant 0 : index
    %c0_225 = arith.constant 0 : index
    %193 = vector.load %arg5[%c0_222, %c0_223, %c0_224, %c0_225] : memref<3x3x32x32xf32, #tpu.memory_space<vmem>>, vector<1x1x32x32xf32>
    %194 = vector.shape_cast %193 : vector<1x1x32x32xf32> to vector<32x32xf32>
    %cst_226 = arith.constant dense<0.000000e+00> : vector<128x32xf32>
    %195 = tpu.matmul %192, %194, %cst_226 {dimension_numbers = #tpu.dot_dimension_numbers<[1], [0], [0], [1], [0, 0, 1, 1], [], []>} : vector<128x32xf32>, vector<32x32xf32>, vector<128x32xf32> -> vector<128x32xf32>
    %196 = arith.addf %190, %195 : vector<128x32xf32>
    %c0_227 = arith.constant 0 : index
    %c0_228 = arith.constant 0 : index
    %c1_229 = arith.constant 1 : index
    %c0_230 = arith.constant 0 : index
    %197 = vector.load %arg13[%c0_227, %c0_228, %c1_229, %c0_230] : memref<2x10x10x32xf32, #tpu.memory_space<vmem>>, vector<2x8x8x32xf32>
    %198 = vector.shape_cast %197 : vector<2x8x8x32xf32> to vector<128x32xf32>
    %c0_231 = arith.constant 0 : index
    %c1_232 = arith.constant 1 : index
    %c0_233 = arith.constant 0 : index
    %c0_234 = arith.constant 0 : index
    %199 = vector.load %arg5[%c0_231, %c1_232, %c0_233, %c0_234] : memref<3x3x32x32xf32, #tpu.memory_space<vmem>>, vector<1x1x32x32xf32>
    %200 = vector.shape_cast %199 : vector<1x1x32x32xf32> to vector<32x32xf32>
    %cst_235 = arith.constant dense<0.000000e+00> : vector<128x32xf32>
    %201 = tpu.matmul %198, %200, %cst_235 {dimension_numbers = #tpu.dot_dimension_numbers<[1], [0], [0], [1], [0, 0, 1, 1], [], []>} : vector<128x32xf32>, vector<32x32xf32>, vector<128x32xf32> -> vector<128x32xf32>
    %202 = arith.addf %196, %201 : vector<128x32xf32>
    %c0_236 = arith.constant 0 : index
    %c0_237 = arith.constant 0 : index
    %c2_238 = arith.constant 2 : index
    %c0_239 = arith.constant 0 : index
    %203 = vector.load %arg13[%c0_236, %c0_237, %c2_238, %c0_239] : memref<2x10x10x32xf32, #tpu.memory_space<vmem>>, vector<2x8x8x32xf32>
    %204 = vector.shape_cast %203 : vector<2x8x8x32xf32> to vector<128x32xf32>
    %c0_240 = arith.constant 0 : index
    %c2_241 = arith.constant 2 : index
    %c0_242 = arith.constant 0 : index
    %c0_243 = arith.constant 0 : index
    %205 = vector.load %arg5[%c0_240, %c2_241, %c0_242, %c0_243] : memref<3x3x32x32xf32, #tpu.memory_space<vmem>>, vector<1x1x32x32xf32>
    %206 = vector.shape_cast %205 : vector<1x1x32x32xf32> to vector<32x32xf32>
    %cst_244 = arith.constant dense<0.000000e+00> : vector<128x32xf32>
    %207 = tpu.matmul %204, %206, %cst_244 {dimension_numbers = #tpu.dot_dimension_numbers<[1], [0], [0], [1], [0, 0, 1, 1], [], []>} : vector<128x32xf32>, vector<32x32xf32>, vector<128x32xf32> -> vector<128x32xf32>
    %208 = arith.addf %202, %207 : vector<128x32xf32>
    %c0_245 = arith.constant 0 : index
    %c1_246 = arith.constant 1 : index
    %c0_247 = arith.constant 0 : index
    %c0_248 = arith.constant 0 : index
    %209 = vector.load %arg13[%c0_245, %c1_246, %c0_247, %c0_248] : memref<2x10x10x32xf32, #tpu.memory_space<vmem>>, vector<2x8x8x32xf32>
    %210 = vector.shape_cast %209 : vector<2x8x8x32xf32> to vector<128x32xf32>
    %c1_249 = arith.constant 1 : index
    %c0_250 = arith.constant 0 : index
    %c0_251 = arith.constant 0 : index
    %c0_252 = arith.constant 0 : index
    %211 = vector.load %arg5[%c1_249, %c0_250, %c0_251, %c0_252] : memref<3x3x32x32xf32, #tpu.memory_space<vmem>>, vector<1x1x32x32xf32>
    %212 = vector.shape_cast %211 : vector<1x1x32x32xf32> to vector<32x32xf32>
    %cst_253 = arith.constant dense<0.000000e+00> : vector<128x32xf32>
    %213 = tpu.matmul %210, %212, %cst_253 {dimension_numbers = #tpu.dot_dimension_numbers<[1], [0], [0], [1], [0, 0, 1, 1], [], []>} : vector<128x32xf32>, vector<32x32xf32>, vector<128x32xf32> -> vector<128x32xf32>
    %214 = arith.addf %208, %213 : vector<128x32xf32>
    %c0_254 = arith.constant 0 : index
    %c1_255 = arith.constant 1 : index
    %c1_256 = arith.constant 1 : index
    %c0_257 = arith.constant 0 : index
    %215 = vector.load %arg13[%c0_254, %c1_255, %c1_256, %c0_257] : memref<2x10x10x32xf32, #tpu.memory_space<vmem>>, vector<2x8x8x32xf32>
    %216 = vector.shape_cast %215 : vector<2x8x8x32xf32> to vector<128x32xf32>
    %c1_258 = arith.constant 1 : index
    %c1_259 = arith.constant 1 : index
    %c0_260 = arith.constant 0 : index
    %c0_261 = arith.constant 0 : index
    %217 = vector.load %arg5[%c1_258, %c1_259, %c0_260, %c0_261] : memref<3x3x32x32xf32, #tpu.memory_space<vmem>>, vector<1x1x32x32xf32>
    %218 = vector.shape_cast %217 : vector<1x1x32x32xf32> to vector<32x32xf32>
    %cst_262 = arith.constant dense<0.000000e+00> : vector<128x32xf32>
    %219 = tpu.matmul %216, %218, %cst_262 {dimension_numbers = #tpu.dot_dimension_numbers<[1], [0], [0], [1], [0, 0, 1, 1], [], []>} : vector<128x32xf32>, vector<32x32xf32>, vector<128x32xf32> -> vector<128x32xf32>
    %220 = arith.addf %214, %219 : vector<128x32xf32>
    %c0_263 = arith.constant 0 : index
    %c1_264 = arith.constant 1 : index
    %c2_265 = arith.constant 2 : index
    %c0_266 = arith.constant 0 : index
    %221 = vector.load %arg13[%c0_263, %c1_264, %c2_265, %c0_266] : memref<2x10x10x32xf32, #tpu.memory_space<vmem>>, vector<2x8x8x32xf32>
    %222 = vector.shape_cast %221 : vector<2x8x8x32xf32> to vector<128x32xf32>
    %c1_267 = arith.constant 1 : index
    %c2_268 = arith.constant 2 : index
    %c0_269 = arith.constant 0 : index
    %c0_270 = arith.constant 0 : index
    %223 = vector.load %arg5[%c1_267, %c2_268, %c0_269, %c0_270] : memref<3x3x32x32xf32, #tpu.memory_space<vmem>>, vector<1x1x32x32xf32>
    %224 = vector.shape_cast %223 : vector<1x1x32x32xf32> to vector<32x32xf32>
    %cst_271 = arith.constant dense<0.000000e+00> : vector<128x32xf32>
    %225 = tpu.matmul %222, %224, %cst_271 {dimension_numbers = #tpu.dot_dimension_numbers<[1], [0], [0], [1], [0, 0, 1, 1], [], []>} : vector<128x32xf32>, vector<32x32xf32>, vector<128x32xf32> -> vector<128x32xf32>
    %226 = arith.addf %220, %225 : vector<128x32xf32>
    %c0_272 = arith.constant 0 : index
    %c2_273 = arith.constant 2 : index
    %c0_274 = arith.constant 0 : index
    %c0_275 = arith.constant 0 : index
    %227 = vector.load %arg13[%c0_272, %c2_273, %c0_274, %c0_275] : memref<2x10x10x32xf32, #tpu.memory_space<vmem>>, vector<2x8x8x32xf32>
    %228 = vector.shape_cast %227 : vector<2x8x8x32xf32> to vector<128x32xf32>
    %c2_276 = arith.constant 2 : index
    %c0_277 = arith.constant 0 : index
    %c0_278 = arith.constant 0 : index
    %c0_279 = arith.constant 0 : index
    %229 = vector.load %arg5[%c2_276, %c0_277, %c0_278, %c0_279] : memref<3x3x32x32xf32, #tpu.memory_space<vmem>>, vector<1x1x32x32xf32>
    %230 = vector.shape_cast %229 : vector<1x1x32x32xf32> to vector<32x32xf32>
    %cst_280 = arith.constant dense<0.000000e+00> : vector<128x32xf32>
    %231 = tpu.matmul %228, %230, %cst_280 {dimension_numbers = #tpu.dot_dimension_numbers<[1], [0], [0], [1], [0, 0, 1, 1], [], []>} : vector<128x32xf32>, vector<32x32xf32>, vector<128x32xf32> -> vector<128x32xf32>
    %232 = arith.addf %226, %231 : vector<128x32xf32>
    %c0_281 = arith.constant 0 : index
    %c2_282 = arith.constant 2 : index
    %c1_283 = arith.constant 1 : index
    %c0_284 = arith.constant 0 : index
    %233 = vector.load %arg13[%c0_281, %c2_282, %c1_283, %c0_284] : memref<2x10x10x32xf32, #tpu.memory_space<vmem>>, vector<2x8x8x32xf32>
    %234 = vector.shape_cast %233 : vector<2x8x8x32xf32> to vector<128x32xf32>
    %c2_285 = arith.constant 2 : index
    %c1_286 = arith.constant 1 : index
    %c0_287 = arith.constant 0 : index
    %c0_288 = arith.constant 0 : index
    %235 = vector.load %arg5[%c2_285, %c1_286, %c0_287, %c0_288] : memref<3x3x32x32xf32, #tpu.memory_space<vmem>>, vector<1x1x32x32xf32>
    %236 = vector.shape_cast %235 : vector<1x1x32x32xf32> to vector<32x32xf32>
    %cst_289 = arith.constant dense<0.000000e+00> : vector<128x32xf32>
    %237 = tpu.matmul %234, %236, %cst_289 {dimension_numbers = #tpu.dot_dimension_numbers<[1], [0], [0], [1], [0, 0, 1, 1], [], []>} : vector<128x32xf32>, vector<32x32xf32>, vector<128x32xf32> -> vector<128x32xf32>
    %238 = arith.addf %232, %237 : vector<128x32xf32>
    %c0_290 = arith.constant 0 : index
    %c2_291 = arith.constant 2 : index
    %c2_292 = arith.constant 2 : index
    %c0_293 = arith.constant 0 : index
    %239 = vector.load %arg13[%c0_290, %c2_291, %c2_292, %c0_293] : memref<2x10x10x32xf32, #tpu.memory_space<vmem>>, vector<2x8x8x32xf32>
    %240 = vector.shape_cast %239 : vector<2x8x8x32xf32> to vector<128x32xf32>
    %c2_294 = arith.constant 2 : index
    %c2_295 = arith.constant 2 : index
    %c0_296 = arith.constant 0 : index
    %c0_297 = arith.constant 0 : index
    %241 = vector.load %arg5[%c2_294, %c2_295, %c0_296, %c0_297] : memref<3x3x32x32xf32, #tpu.memory_space<vmem>>, vector<1x1x32x32xf32>
    %242 = vector.shape_cast %241 : vector<1x1x32x32xf32> to vector<32x32xf32>
    %cst_298 = arith.constant dense<0.000000e+00> : vector<128x32xf32>
    %243 = tpu.matmul %240, %242, %cst_298 {dimension_numbers = #tpu.dot_dimension_numbers<[1], [0], [0], [1], [0, 0, 1, 1], [], []>} : vector<128x32xf32>, vector<32x32xf32>, vector<128x32xf32> -> vector<128x32xf32>
    %244 = arith.addf %238, %243 : vector<128x32xf32>
    %cst_299 = arith.constant 0.000000e+00 : f32
    %245 = vector.broadcast %cst_299 : f32 to vector<128x32xf32>
    %c0_300 = arith.constant 0 : index
    %c0_301 = arith.constant 0 : index
    %c0_302 = arith.constant 0 : index
    %c0_303 = arith.constant 0 : index
    %246 = vector.load %arg2[%c0_300, %c0_301, %c0_302, %c0_303] : memref<2x10x10x32xf32, #tpu.memory_space<vmem>>, vector<2x8x8x32xf32>
    %247 = vector.shape_cast %246 : vector<2x8x8x32xf32> to vector<128x32xf32>
    %c0_304 = arith.constant 0 : index
    %c0_305 = arith.constant 0 : index
    %c0_306 = arith.constant 0 : index
    %c0_307 = arith.constant 0 : index
    %248 = vector.load %arg6[%c0_304, %c0_305, %c0_306, %c0_307] : memref<3x3x32x32xf32, #tpu.memory_space<vmem>>, vector<1x1x32x32xf32>
    %249 = vector.shape_cast %248 : vector<1x1x32x32xf32> to vector<32x32xf32>
    %cst_308 = arith.constant dense<0.000000e+00> : vector<128x32xf32>
    %250 = tpu.matmul %247, %249, %cst_308 {dimension_numbers = #tpu.dot_dimension_numbers<[1], [0], [0], [1], [0, 0, 1, 1], [], []>} : vector<128x32xf32>, vector<32x32xf32>, vector<128x32xf32> -> vector<128x32xf32>
    %251 = arith.addf %245, %250 : vector<128x32xf32>
    %c0_309 = arith.constant 0 : index
    %c0_310 = arith.constant 0 : index
    %c1_311 = arith.constant 1 : index
    %c0_312 = arith.constant 0 : index
    %252 = vector.load %arg2[%c0_309, %c0_310, %c1_311, %c0_312] : memref<2x10x10x32xf32, #tpu.memory_space<vmem>>, vector<2x8x8x32xf32>
    %253 = vector.shape_cast %252 : vector<2x8x8x32xf32> to vector<128x32xf32>
    %c0_313 = arith.constant 0 : index
    %c1_314 = arith.constant 1 : index
    %c0_315 = arith.constant 0 : index
    %c0_316 = arith.constant 0 : index
    %254 = vector.load %arg6[%c0_313, %c1_314, %c0_315, %c0_316] : memref<3x3x32x32xf32, #tpu.memory_space<vmem>>, vector<1x1x32x32xf32>
    %255 = vector.shape_cast %254 : vector<1x1x32x32xf32> to vector<32x32xf32>
    %cst_317 = arith.constant dense<0.000000e+00> : vector<128x32xf32>
    %256 = tpu.matmul %253, %255, %cst_317 {dimension_numbers = #tpu.dot_dimension_numbers<[1], [0], [0], [1], [0, 0, 1, 1], [], []>} : vector<128x32xf32>, vector<32x32xf32>, vector<128x32xf32> -> vector<128x32xf32>
    %257 = arith.addf %251, %256 : vector<128x32xf32>
    %c0_318 = arith.constant 0 : index
    %c0_319 = arith.constant 0 : index
    %c2_320 = arith.constant 2 : index
    %c0_321 = arith.constant 0 : index
    %258 = vector.load %arg2[%c0_318, %c0_319, %c2_320, %c0_321] : memref<2x10x10x32xf32, #tpu.memory_space<vmem>>, vector<2x8x8x32xf32>
    %259 = vector.shape_cast %258 : vector<2x8x8x32xf32> to vector<128x32xf32>
    %c0_322 = arith.constant 0 : index
    %c2_323 = arith.constant 2 : index
    %c0_324 = arith.constant 0 : index
    %c0_325 = arith.constant 0 : index
    %260 = vector.load %arg6[%c0_322, %c2_323, %c0_324, %c0_325] : memref<3x3x32x32xf32, #tpu.memory_space<vmem>>, vector<1x1x32x32xf32>
    %261 = vector.shape_cast %260 : vector<1x1x32x32xf32> to vector<32x32xf32>
    %cst_326 = arith.constant dense<0.000000e+00> : vector<128x32xf32>
    %262 = tpu.matmul %259, %261, %cst_326 {dimension_numbers = #tpu.dot_dimension_numbers<[1], [0], [0], [1], [0, 0, 1, 1], [], []>} : vector<128x32xf32>, vector<32x32xf32>, vector<128x32xf32> -> vector<128x32xf32>
    %263 = arith.addf %257, %262 : vector<128x32xf32>
    %c0_327 = arith.constant 0 : index
    %c1_328 = arith.constant 1 : index
    %c0_329 = arith.constant 0 : index
    %c0_330 = arith.constant 0 : index
    %264 = vector.load %arg2[%c0_327, %c1_328, %c0_329, %c0_330] : memref<2x10x10x32xf32, #tpu.memory_space<vmem>>, vector<2x8x8x32xf32>
    %265 = vector.shape_cast %264 : vector<2x8x8x32xf32> to vector<128x32xf32>
    %c1_331 = arith.constant 1 : index
    %c0_332 = arith.constant 0 : index
    %c0_333 = arith.constant 0 : index
    %c0_334 = arith.constant 0 : index
    %266 = vector.load %arg6[%c1_331, %c0_332, %c0_333, %c0_334] : memref<3x3x32x32xf32, #tpu.memory_space<vmem>>, vector<1x1x32x32xf32>
    %267 = vector.shape_cast %266 : vector<1x1x32x32xf32> to vector<32x32xf32>
    %cst_335 = arith.constant dense<0.000000e+00> : vector<128x32xf32>
    %268 = tpu.matmul %265, %267, %cst_335 {dimension_numbers = #tpu.dot_dimension_numbers<[1], [0], [0], [1], [0, 0, 1, 1], [], []>} : vector<128x32xf32>, vector<32x32xf32>, vector<128x32xf32> -> vector<128x32xf32>
    %269 = arith.addf %263, %268 : vector<128x32xf32>
    %c0_336 = arith.constant 0 : index
    %c1_337 = arith.constant 1 : index
    %c1_338 = arith.constant 1 : index
    %c0_339 = arith.constant 0 : index
    %270 = vector.load %arg2[%c0_336, %c1_337, %c1_338, %c0_339] : memref<2x10x10x32xf32, #tpu.memory_space<vmem>>, vector<2x8x8x32xf32>
    %271 = vector.shape_cast %270 : vector<2x8x8x32xf32> to vector<128x32xf32>
    %c1_340 = arith.constant 1 : index
    %c1_341 = arith.constant 1 : index
    %c0_342 = arith.constant 0 : index
    %c0_343 = arith.constant 0 : index
    %272 = vector.load %arg6[%c1_340, %c1_341, %c0_342, %c0_343] : memref<3x3x32x32xf32, #tpu.memory_space<vmem>>, vector<1x1x32x32xf32>
    %273 = vector.shape_cast %272 : vector<1x1x32x32xf32> to vector<32x32xf32>
    %cst_344 = arith.constant dense<0.000000e+00> : vector<128x32xf32>
    %274 = tpu.matmul %271, %273, %cst_344 {dimension_numbers = #tpu.dot_dimension_numbers<[1], [0], [0], [1], [0, 0, 1, 1], [], []>} : vector<128x32xf32>, vector<32x32xf32>, vector<128x32xf32> -> vector<128x32xf32>
    %275 = arith.addf %269, %274 : vector<128x32xf32>
    %c0_345 = arith.constant 0 : index
    %c1_346 = arith.constant 1 : index
    %c2_347 = arith.constant 2 : index
    %c0_348 = arith.constant 0 : index
    %276 = vector.load %arg2[%c0_345, %c1_346, %c2_347, %c0_348] : memref<2x10x10x32xf32, #tpu.memory_space<vmem>>, vector<2x8x8x32xf32>
    %277 = vector.shape_cast %276 : vector<2x8x8x32xf32> to vector<128x32xf32>
    %c1_349 = arith.constant 1 : index
    %c2_350 = arith.constant 2 : index
    %c0_351 = arith.constant 0 : index
    %c0_352 = arith.constant 0 : index
    %278 = vector.load %arg6[%c1_349, %c2_350, %c0_351, %c0_352] : memref<3x3x32x32xf32, #tpu.memory_space<vmem>>, vector<1x1x32x32xf32>
    %279 = vector.shape_cast %278 : vector<1x1x32x32xf32> to vector<32x32xf32>
    %cst_353 = arith.constant dense<0.000000e+00> : vector<128x32xf32>
    %280 = tpu.matmul %277, %279, %cst_353 {dimension_numbers = #tpu.dot_dimension_numbers<[1], [0], [0], [1], [0, 0, 1, 1], [], []>} : vector<128x32xf32>, vector<32x32xf32>, vector<128x32xf32> -> vector<128x32xf32>
    %281 = arith.addf %275, %280 : vector<128x32xf32>
    %c0_354 = arith.constant 0 : index
    %c2_355 = arith.constant 2 : index
    %c0_356 = arith.constant 0 : index
    %c0_357 = arith.constant 0 : index
    %282 = vector.load %arg2[%c0_354, %c2_355, %c0_356, %c0_357] : memref<2x10x10x32xf32, #tpu.memory_space<vmem>>, vector<2x8x8x32xf32>
    %283 = vector.shape_cast %282 : vector<2x8x8x32xf32> to vector<128x32xf32>
    %c2_358 = arith.constant 2 : index
    %c0_359 = arith.constant 0 : index
    %c0_360 = arith.constant 0 : index
    %c0_361 = arith.constant 0 : index
    %284 = vector.load %arg6[%c2_358, %c0_359, %c0_360, %c0_361] : memref<3x3x32x32xf32, #tpu.memory_space<vmem>>, vector<1x1x32x32xf32>
    %285 = vector.shape_cast %284 : vector<1x1x32x32xf32> to vector<32x32xf32>
    %cst_362 = arith.constant dense<0.000000e+00> : vector<128x32xf32>
    %286 = tpu.matmul %283, %285, %cst_362 {dimension_numbers = #tpu.dot_dimension_numbers<[1], [0], [0], [1], [0, 0, 1, 1], [], []>} : vector<128x32xf32>, vector<32x32xf32>, vector<128x32xf32> -> vector<128x32xf32>
    %287 = arith.addf %281, %286 : vector<128x32xf32>
    %c0_363 = arith.constant 0 : index
    %c2_364 = arith.constant 2 : index
    %c1_365 = arith.constant 1 : index
    %c0_366 = arith.constant 0 : index
    %288 = vector.load %arg2[%c0_363, %c2_364, %c1_365, %c0_366] : memref<2x10x10x32xf32, #tpu.memory_space<vmem>>, vector<2x8x8x32xf32>
    %289 = vector.shape_cast %288 : vector<2x8x8x32xf32> to vector<128x32xf32>
    %c2_367 = arith.constant 2 : index
    %c1_368 = arith.constant 1 : index
    %c0_369 = arith.constant 0 : index
    %c0_370 = arith.constant 0 : index
    %290 = vector.load %arg6[%c2_367, %c1_368, %c0_369, %c0_370] : memref<3x3x32x32xf32, #tpu.memory_space<vmem>>, vector<1x1x32x32xf32>
    %291 = vector.shape_cast %290 : vector<1x1x32x32xf32> to vector<32x32xf32>
    %cst_371 = arith.constant dense<0.000000e+00> : vector<128x32xf32>
    %292 = tpu.matmul %289, %291, %cst_371 {dimension_numbers = #tpu.dot_dimension_numbers<[1], [0], [0], [1], [0, 0, 1, 1], [], []>} : vector<128x32xf32>, vector<32x32xf32>, vector<128x32xf32> -> vector<128x32xf32>
    %293 = arith.addf %287, %292 : vector<128x32xf32>
    %c0_372 = arith.constant 0 : index
    %c2_373 = arith.constant 2 : index
    %c2_374 = arith.constant 2 : index
    %c0_375 = arith.constant 0 : index
    %294 = vector.load %arg2[%c0_372, %c2_373, %c2_374, %c0_375] : memref<2x10x10x32xf32, #tpu.memory_space<vmem>>, vector<2x8x8x32xf32>
    %295 = vector.shape_cast %294 : vector<2x8x8x32xf32> to vector<128x32xf32>
    %c2_376 = arith.constant 2 : index
    %c2_377 = arith.constant 2 : index
    %c0_378 = arith.constant 0 : index
    %c0_379 = arith.constant 0 : index
    %296 = vector.load %arg6[%c2_376, %c2_377, %c0_378, %c0_379] : memref<3x3x32x32xf32, #tpu.memory_space<vmem>>, vector<1x1x32x32xf32>
    %297 = vector.shape_cast %296 : vector<1x1x32x32xf32> to vector<32x32xf32>
    %cst_380 = arith.constant dense<0.000000e+00> : vector<128x32xf32>
    %298 = tpu.matmul %295, %297, %cst_380 {dimension_numbers = #tpu.dot_dimension_numbers<[1], [0], [0], [1], [0, 0, 1, 1], [], []>} : vector<128x32xf32>, vector<32x32xf32>, vector<128x32xf32> -> vector<128x32xf32>
    %299 = arith.addf %293, %298 : vector<128x32xf32>
    %300 = arith.addf %244, %299 : vector<128x32xf32>
    %c0_381 = arith.constant 0 : index
    %c0_382 = arith.constant 0 : index
    %301 = vector.load %arg10[%c0_381, %c0_382] : memref<32x4xf32, #tpu.memory_space<vmem>>, vector<32x4xf32>
    %c0_383 = arith.constant 0 : index
    %c0_384 = arith.constant 0 : index
    %302 = vector.load %arg11[%c0_383, %c0_384] : memref<4x32xf32, #tpu.memory_space<vmem>>, vector<4x32xf32>
    %cst_385 = arith.constant dense<0.000000e+00> : vector<32xf32>
    %303 = vector.multi_reduction <add>, %300, %cst_385 [0] : vector<128x32xf32> to vector<32xf32>
    %304 = vector.shape_cast %303 : vector<32xf32> to vector<1x32xf32>
    %cst_386 = arith.constant dense<0.000000e+00> : vector<1x4xf32>
    %305 = tpu.matmul %304, %301, %cst_386 {dimension_numbers = #tpu.dot_dimension_numbers<[1], [0], [0], [1], [0, 0, 1, 1], [], []>} : vector<1x32xf32>, vector<32x4xf32>, vector<1x4xf32> -> vector<1x4xf32>
    %cst_387 = arith.constant 1.024000e+03 : f32
    %306 = vector.broadcast %cst_387 : f32 to vector<1x4xf32>
    %307 = arith.divf %305, %306 : vector<1x4xf32>
    %cst_388 = arith.constant dense<0.000000e+00> : vector<1x32xf32>
    %308 = tpu.matmul %307, %302, %cst_388 {dimension_numbers = #tpu.dot_dimension_numbers<[1], [0], [0], [1], [0, 0, 1, 1], [], []>} : vector<1x4xf32>, vector<4x32xf32>, vector<1x32xf32> -> vector<1x32xf32>
    %309 = vector.broadcast %308 : vector<1x32xf32> to vector<128x32xf32>
    %310 = arith.subf %300, %309 : vector<128x32xf32>
    %311 = arith.mulf %310, %310 : vector<128x32xf32>
    %cst_389 = arith.constant dense<0.000000e+00> : vector<32xf32>
    %312 = vector.multi_reduction <add>, %311, %cst_389 [0] : vector<128x32xf32> to vector<32xf32>
    %313 = vector.shape_cast %312 : vector<32xf32> to vector<1x32xf32>
    %cst_390 = arith.constant dense<0.000000e+00> : vector<1x4xf32>
    %314 = tpu.matmul %313, %301, %cst_390 {dimension_numbers = #tpu.dot_dimension_numbers<[1], [0], [0], [1], [0, 0, 1, 1], [], []>} : vector<1x32xf32>, vector<32x4xf32>, vector<1x4xf32> -> vector<1x4xf32>
    %cst_391 = arith.constant 1.024000e+03 : f32
    %315 = vector.broadcast %cst_391 : f32 to vector<1x4xf32>
    %316 = arith.divf %314, %315 : vector<1x4xf32>
    %c2_392 = arith.constant 2 : index
    %c0_393 = arith.constant 0 : index
    %c0_394 = arith.constant 0 : index
    %317 = vector.load %arg8[%c2_392, %c0_393, %c0_394] : memref<4x1x4xf32, #tpu.memory_space<vmem>>, vector<1x1x4xf32>
    %318 = vector.shape_cast %317 : vector<1x1x4xf32> to vector<1x4xf32>
    %cst_395 = arith.constant 9.99999974E-6 : f32
    %319 = vector.broadcast %cst_395 : f32 to vector<1x4xf32>
    %320 = arith.addf %316, %319 : vector<1x4xf32>
    %321 = math.rsqrt %320 : vector<1x4xf32>
    %322 = arith.mulf %318, %321 : vector<1x4xf32>
    %c2_396 = arith.constant 2 : index
    %c0_397 = arith.constant 0 : index
    %c0_398 = arith.constant 0 : index
    %323 = vector.load %arg9[%c2_396, %c0_397, %c0_398] : memref<4x1x4xf32, #tpu.memory_space<vmem>>, vector<1x1x4xf32>
    %324 = vector.shape_cast %323 : vector<1x1x4xf32> to vector<1x4xf32>
    %325 = arith.mulf %307, %322 : vector<1x4xf32>
    %326 = arith.subf %324, %325 : vector<1x4xf32>
    %cst_399 = arith.constant dense<0.000000e+00> : vector<1x32xf32>
    %327 = tpu.matmul %322, %302, %cst_399 {dimension_numbers = #tpu.dot_dimension_numbers<[1], [0], [0], [1], [0, 0, 1, 1], [], []>} : vector<1x4xf32>, vector<4x32xf32>, vector<1x32xf32> -> vector<1x32xf32>
    %328 = vector.broadcast %327 : vector<1x32xf32> to vector<128x32xf32>
    %329 = arith.mulf %300, %328 : vector<128x32xf32>
    %cst_400 = arith.constant dense<0.000000e+00> : vector<1x32xf32>
    %330 = tpu.matmul %326, %302, %cst_400 {dimension_numbers = #tpu.dot_dimension_numbers<[1], [0], [0], [1], [0, 0, 1, 1], [], []>} : vector<1x4xf32>, vector<4x32xf32>, vector<1x32xf32> -> vector<1x32xf32>
    %331 = vector.broadcast %330 : vector<1x32xf32> to vector<128x32xf32>
    %332 = arith.addf %329, %331 : vector<128x32xf32>
    %cst_401 = arith.constant 0.000000e+00 : f32
    %333 = vector.broadcast %cst_401 : f32 to vector<128x32xf32>
    %334 = arith.cmpf oge, %332, %333 : vector<128x32xf32>
    %cst_402 = arith.constant 2.000000e-01 : f32
    %335 = vector.broadcast %cst_402 : f32 to vector<128x32xf32>
    %336 = arith.mulf %335, %332 : vector<128x32xf32>
    %337 = arith.select %334, %332, %336 : vector<128x32xi1>, vector<128x32xf32>
    %338 = vector.shape_cast %337 : vector<128x32xf32> to vector<2x8x8x32xf32>
    %c0_403 = arith.constant 0 : index
    %c1_404 = arith.constant 1 : index
    %c1_405 = arith.constant 1 : index
    %c0_406 = arith.constant 0 : index
    %339 = vector.load %arg13[%c0_403, %c1_404, %c1_405, %c0_406] : memref<2x10x10x32xf32, #tpu.memory_space<vmem>>, vector<2x8x8x32xf32>
    tpu.vector_store %arg13[%c0_403, %c1_404, %c1_405, %c0_406], %338 {strides = array<i32>} : memref<2x10x10x32xf32, #tpu.memory_space<vmem>>, vector<2x8x8x32xf32>,
    %cst_407 = arith.constant 0.000000e+00 : f32
    %340 = vector.broadcast %cst_407 : f32 to vector<128x32xf32>
    %c0_408 = arith.constant 0 : index
    %c0_409 = arith.constant 0 : index
    %c0_410 = arith.constant 0 : index
    %c0_411 = arith.constant 0 : index
    %341 = vector.load %arg13[%c0_408, %c0_409, %c0_410, %c0_411] : memref<2x10x10x32xf32, #tpu.memory_space<vmem>>, vector<2x8x8x32xf32>
    %342 = vector.shape_cast %341 : vector<2x8x8x32xf32> to vector<128x32xf32>
    %c0_412 = arith.constant 0 : index
    %c0_413 = arith.constant 0 : index
    %c0_414 = arith.constant 0 : index
    %c0_415 = arith.constant 0 : index
    %343 = vector.load %arg7[%c0_412, %c0_413, %c0_414, %c0_415] : memref<3x3x32x32xf32, #tpu.memory_space<vmem>>, vector<1x1x32x32xf32>
    %344 = vector.shape_cast %343 : vector<1x1x32x32xf32> to vector<32x32xf32>
    %cst_416 = arith.constant dense<0.000000e+00> : vector<128x32xf32>
    %345 = tpu.matmul %342, %344, %cst_416 {dimension_numbers = #tpu.dot_dimension_numbers<[1], [0], [0], [1], [0, 0, 1, 1], [], []>} : vector<128x32xf32>, vector<32x32xf32>, vector<128x32xf32> -> vector<128x32xf32>
    %346 = arith.addf %340, %345 : vector<128x32xf32>
    %c0_417 = arith.constant 0 : index
    %c0_418 = arith.constant 0 : index
    %c1_419 = arith.constant 1 : index
    %c0_420 = arith.constant 0 : index
    %347 = vector.load %arg13[%c0_417, %c0_418, %c1_419, %c0_420] : memref<2x10x10x32xf32, #tpu.memory_space<vmem>>, vector<2x8x8x32xf32>
    %348 = vector.shape_cast %347 : vector<2x8x8x32xf32> to vector<128x32xf32>
    %c0_421 = arith.constant 0 : index
    %c1_422 = arith.constant 1 : index
    %c0_423 = arith.constant 0 : index
    %c0_424 = arith.constant 0 : index
    %349 = vector.load %arg7[%c0_421, %c1_422, %c0_423, %c0_424] : memref<3x3x32x32xf32, #tpu.memory_space<vmem>>, vector<1x1x32x32xf32>
    %350 = vector.shape_cast %349 : vector<1x1x32x32xf32> to vector<32x32xf32>
    %cst_425 = arith.constant dense<0.000000e+00> : vector<128x32xf32>
    %351 = tpu.matmul %348, %350, %cst_425 {dimension_numbers = #tpu.dot_dimension_numbers<[1], [0], [0], [1], [0, 0, 1, 1], [], []>} : vector<128x32xf32>, vector<32x32xf32>, vector<128x32xf32> -> vector<128x32xf32>
    %352 = arith.addf %346, %351 : vector<128x32xf32>
    %c0_426 = arith.constant 0 : index
    %c0_427 = arith.constant 0 : index
    %c2_428 = arith.constant 2 : index
    %c0_429 = arith.constant 0 : index
    %353 = vector.load %arg13[%c0_426, %c0_427, %c2_428, %c0_429] : memref<2x10x10x32xf32, #tpu.memory_space<vmem>>, vector<2x8x8x32xf32>
    %354 = vector.shape_cast %353 : vector<2x8x8x32xf32> to vector<128x32xf32>
    %c0_430 = arith.constant 0 : index
    %c2_431 = arith.constant 2 : index
    %c0_432 = arith.constant 0 : index
    %c0_433 = arith.constant 0 : index
    %355 = vector.load %arg7[%c0_430, %c2_431, %c0_432, %c0_433] : memref<3x3x32x32xf32, #tpu.memory_space<vmem>>, vector<1x1x32x32xf32>
    %356 = vector.shape_cast %355 : vector<1x1x32x32xf32> to vector<32x32xf32>
    %cst_434 = arith.constant dense<0.000000e+00> : vector<128x32xf32>
    %357 = tpu.matmul %354, %356, %cst_434 {dimension_numbers = #tpu.dot_dimension_numbers<[1], [0], [0], [1], [0, 0, 1, 1], [], []>} : vector<128x32xf32>, vector<32x32xf32>, vector<128x32xf32> -> vector<128x32xf32>
    %358 = arith.addf %352, %357 : vector<128x32xf32>
    %c0_435 = arith.constant 0 : index
    %c1_436 = arith.constant 1 : index
    %c0_437 = arith.constant 0 : index
    %c0_438 = arith.constant 0 : index
    %359 = vector.load %arg13[%c0_435, %c1_436, %c0_437, %c0_438] : memref<2x10x10x32xf32, #tpu.memory_space<vmem>>, vector<2x8x8x32xf32>
    %360 = vector.shape_cast %359 : vector<2x8x8x32xf32> to vector<128x32xf32>
    %c1_439 = arith.constant 1 : index
    %c0_440 = arith.constant 0 : index
    %c0_441 = arith.constant 0 : index
    %c0_442 = arith.constant 0 : index
    %361 = vector.load %arg7[%c1_439, %c0_440, %c0_441, %c0_442] : memref<3x3x32x32xf32, #tpu.memory_space<vmem>>, vector<1x1x32x32xf32>
    %362 = vector.shape_cast %361 : vector<1x1x32x32xf32> to vector<32x32xf32>
    %cst_443 = arith.constant dense<0.000000e+00> : vector<128x32xf32>
    %363 = tpu.matmul %360, %362, %cst_443 {dimension_numbers = #tpu.dot_dimension_numbers<[1], [0], [0], [1], [0, 0, 1, 1], [], []>} : vector<128x32xf32>, vector<32x32xf32>, vector<128x32xf32> -> vector<128x32xf32>
    %364 = arith.addf %358, %363 : vector<128x32xf32>
    %c0_444 = arith.constant 0 : index
    %c1_445 = arith.constant 1 : index
    %c1_446 = arith.constant 1 : index
    %c0_447 = arith.constant 0 : index
    %365 = vector.load %arg13[%c0_444, %c1_445, %c1_446, %c0_447] : memref<2x10x10x32xf32, #tpu.memory_space<vmem>>, vector<2x8x8x32xf32>
    %366 = vector.shape_cast %365 : vector<2x8x8x32xf32> to vector<128x32xf32>
    %c1_448 = arith.constant 1 : index
    %c1_449 = arith.constant 1 : index
    %c0_450 = arith.constant 0 : index
    %c0_451 = arith.constant 0 : index
    %367 = vector.load %arg7[%c1_448, %c1_449, %c0_450, %c0_451] : memref<3x3x32x32xf32, #tpu.memory_space<vmem>>, vector<1x1x32x32xf32>
    %368 = vector.shape_cast %367 : vector<1x1x32x32xf32> to vector<32x32xf32>
    %cst_452 = arith.constant dense<0.000000e+00> : vector<128x32xf32>
    %369 = tpu.matmul %366, %368, %cst_452 {dimension_numbers = #tpu.dot_dimension_numbers<[1], [0], [0], [1], [0, 0, 1, 1], [], []>} : vector<128x32xf32>, vector<32x32xf32>, vector<128x32xf32> -> vector<128x32xf32>
    %370 = arith.addf %364, %369 : vector<128x32xf32>
    %c0_453 = arith.constant 0 : index
    %c1_454 = arith.constant 1 : index
    %c2_455 = arith.constant 2 : index
    %c0_456 = arith.constant 0 : index
    %371 = vector.load %arg13[%c0_453, %c1_454, %c2_455, %c0_456] : memref<2x10x10x32xf32, #tpu.memory_space<vmem>>, vector<2x8x8x32xf32>
    %372 = vector.shape_cast %371 : vector<2x8x8x32xf32> to vector<128x32xf32>
    %c1_457 = arith.constant 1 : index
    %c2_458 = arith.constant 2 : index
    %c0_459 = arith.constant 0 : index
    %c0_460 = arith.constant 0 : index
    %373 = vector.load %arg7[%c1_457, %c2_458, %c0_459, %c0_460] : memref<3x3x32x32xf32, #tpu.memory_space<vmem>>, vector<1x1x32x32xf32>
    %374 = vector.shape_cast %373 : vector<1x1x32x32xf32> to vector<32x32xf32>
    %cst_461 = arith.constant dense<0.000000e+00> : vector<128x32xf32>
    %375 = tpu.matmul %372, %374, %cst_461 {dimension_numbers = #tpu.dot_dimension_numbers<[1], [0], [0], [1], [0, 0, 1, 1], [], []>} : vector<128x32xf32>, vector<32x32xf32>, vector<128x32xf32> -> vector<128x32xf32>
    %376 = arith.addf %370, %375 : vector<128x32xf32>
    %c0_462 = arith.constant 0 : index
    %c2_463 = arith.constant 2 : index
    %c0_464 = arith.constant 0 : index
    %c0_465 = arith.constant 0 : index
    %377 = vector.load %arg13[%c0_462, %c2_463, %c0_464, %c0_465] : memref<2x10x10x32xf32, #tpu.memory_space<vmem>>, vector<2x8x8x32xf32>
    %378 = vector.shape_cast %377 : vector<2x8x8x32xf32> to vector<128x32xf32>
    %c2_466 = arith.constant 2 : index
    %c0_467 = arith.constant 0 : index
    %c0_468 = arith.constant 0 : index
    %c0_469 = arith.constant 0 : index
    %379 = vector.load %arg7[%c2_466, %c0_467, %c0_468, %c0_469] : memref<3x3x32x32xf32, #tpu.memory_space<vmem>>, vector<1x1x32x32xf32>
    %380 = vector.shape_cast %379 : vector<1x1x32x32xf32> to vector<32x32xf32>
    %cst_470 = arith.constant dense<0.000000e+00> : vector<128x32xf32>
    %381 = tpu.matmul %378, %380, %cst_470 {dimension_numbers = #tpu.dot_dimension_numbers<[1], [0], [0], [1], [0, 0, 1, 1], [], []>} : vector<128x32xf32>, vector<32x32xf32>, vector<128x32xf32> -> vector<128x32xf32>
    %382 = arith.addf %376, %381 : vector<128x32xf32>
    %c0_471 = arith.constant 0 : index
    %c2_472 = arith.constant 2 : index
    %c1_473 = arith.constant 1 : index
    %c0_474 = arith.constant 0 : index
    %383 = vector.load %arg13[%c0_471, %c2_472, %c1_473, %c0_474] : memref<2x10x10x32xf32, #tpu.memory_space<vmem>>, vector<2x8x8x32xf32>
    %384 = vector.shape_cast %383 : vector<2x8x8x32xf32> to vector<128x32xf32>
    %c2_475 = arith.constant 2 : index
    %c1_476 = arith.constant 1 : index
    %c0_477 = arith.constant 0 : index
    %c0_478 = arith.constant 0 : index
    %385 = vector.load %arg7[%c2_475, %c1_476, %c0_477, %c0_478] : memref<3x3x32x32xf32, #tpu.memory_space<vmem>>, vector<1x1x32x32xf32>
    %386 = vector.shape_cast %385 : vector<1x1x32x32xf32> to vector<32x32xf32>
    %cst_479 = arith.constant dense<0.000000e+00> : vector<128x32xf32>
    %387 = tpu.matmul %384, %386, %cst_479 {dimension_numbers = #tpu.dot_dimension_numbers<[1], [0], [0], [1], [0, 0, 1, 1], [], []>} : vector<128x32xf32>, vector<32x32xf32>, vector<128x32xf32> -> vector<128x32xf32>
    %388 = arith.addf %382, %387 : vector<128x32xf32>
    %c0_480 = arith.constant 0 : index
    %c2_481 = arith.constant 2 : index
    %c2_482 = arith.constant 2 : index
    %c0_483 = arith.constant 0 : index
    %389 = vector.load %arg13[%c0_480, %c2_481, %c2_482, %c0_483] : memref<2x10x10x32xf32, #tpu.memory_space<vmem>>, vector<2x8x8x32xf32>
    %390 = vector.shape_cast %389 : vector<2x8x8x32xf32> to vector<128x32xf32>
    %c2_484 = arith.constant 2 : index
    %c2_485 = arith.constant 2 : index
    %c0_486 = arith.constant 0 : index
    %c0_487 = arith.constant 0 : index
    %391 = vector.load %arg7[%c2_484, %c2_485, %c0_486, %c0_487] : memref<3x3x32x32xf32, #tpu.memory_space<vmem>>, vector<1x1x32x32xf32>
    %392 = vector.shape_cast %391 : vector<1x1x32x32xf32> to vector<32x32xf32>
    %cst_488 = arith.constant dense<0.000000e+00> : vector<128x32xf32>
    %393 = tpu.matmul %390, %392, %cst_488 {dimension_numbers = #tpu.dot_dimension_numbers<[1], [0], [0], [1], [0, 0, 1, 1], [], []>} : vector<128x32xf32>, vector<32x32xf32>, vector<128x32xf32> -> vector<128x32xf32>
    %394 = arith.addf %388, %393 : vector<128x32xf32>
    %c0_489 = arith.constant 0 : index
    %c0_490 = arith.constant 0 : index
    %395 = vector.load %arg10[%c0_489, %c0_490] : memref<32x4xf32, #tpu.memory_space<vmem>>, vector<32x4xf32>
    %c0_491 = arith.constant 0 : index
    %c0_492 = arith.constant 0 : index
    %396 = vector.load %arg11[%c0_491, %c0_492] : memref<4x32xf32, #tpu.memory_space<vmem>>, vector<4x32xf32>
    %cst_493 = arith.constant dense<0.000000e+00> : vector<32xf32>
    %397 = vector.multi_reduction <add>, %394, %cst_493 [0] : vector<128x32xf32> to vector<32xf32>
    %398 = vector.shape_cast %397 : vector<32xf32> to vector<1x32xf32>
    %cst_494 = arith.constant dense<0.000000e+00> : vector<1x4xf32>
    %399 = tpu.matmul %398, %395, %cst_494 {dimension_numbers = #tpu.dot_dimension_numbers<[1], [0], [0], [1], [0, 0, 1, 1], [], []>} : vector<1x32xf32>, vector<32x4xf32>, vector<1x4xf32> -> vector<1x4xf32>
    %cst_495 = arith.constant 1.024000e+03 : f32
    %400 = vector.broadcast %cst_495 : f32 to vector<1x4xf32>
    %401 = arith.divf %399, %400 : vector<1x4xf32>
    %cst_496 = arith.constant dense<0.000000e+00> : vector<1x32xf32>
    %402 = tpu.matmul %401, %396, %cst_496 {dimension_numbers = #tpu.dot_dimension_numbers<[1], [0], [0], [1], [0, 0, 1, 1], [], []>} : vector<1x4xf32>, vector<4x32xf32>, vector<1x32xf32> -> vector<1x32xf32>
    %403 = vector.broadcast %402 : vector<1x32xf32> to vector<128x32xf32>
    %404 = arith.subf %394, %403 : vector<128x32xf32>
    %405 = arith.mulf %404, %404 : vector<128x32xf32>
    %cst_497 = arith.constant dense<0.000000e+00> : vector<32xf32>
    %406 = vector.multi_reduction <add>, %405, %cst_497 [0] : vector<128x32xf32> to vector<32xf32>
    %407 = vector.shape_cast %406 : vector<32xf32> to vector<1x32xf32>
    %cst_498 = arith.constant dense<0.000000e+00> : vector<1x4xf32>
    %408 = tpu.matmul %407, %395, %cst_498 {dimension_numbers = #tpu.dot_dimension_numbers<[1], [0], [0], [1], [0, 0, 1, 1], [], []>} : vector<1x32xf32>, vector<32x4xf32>, vector<1x4xf32> -> vector<1x4xf32>
    %cst_499 = arith.constant 1.024000e+03 : f32
    %409 = vector.broadcast %cst_499 : f32 to vector<1x4xf32>
    %410 = arith.divf %408, %409 : vector<1x4xf32>
    %c3 = arith.constant 3 : index
    %c0_500 = arith.constant 0 : index
    %c0_501 = arith.constant 0 : index
    %411 = vector.load %arg8[%c3, %c0_500, %c0_501] : memref<4x1x4xf32, #tpu.memory_space<vmem>>, vector<1x1x4xf32>
    %412 = vector.shape_cast %411 : vector<1x1x4xf32> to vector<1x4xf32>
    %cst_502 = arith.constant 9.99999974E-6 : f32
    %413 = vector.broadcast %cst_502 : f32 to vector<1x4xf32>
    %414 = arith.addf %410, %413 : vector<1x4xf32>
    %415 = math.rsqrt %414 : vector<1x4xf32>
    %416 = arith.mulf %412, %415 : vector<1x4xf32>
    %c3_503 = arith.constant 3 : index
    %c0_504 = arith.constant 0 : index
    %c0_505 = arith.constant 0 : index
    %417 = vector.load %arg9[%c3_503, %c0_504, %c0_505] : memref<4x1x4xf32, #tpu.memory_space<vmem>>, vector<1x1x4xf32>
    %418 = vector.shape_cast %417 : vector<1x1x4xf32> to vector<1x4xf32>
    %419 = arith.mulf %401, %416 : vector<1x4xf32>
    %420 = arith.subf %418, %419 : vector<1x4xf32>
    %cst_506 = arith.constant dense<0.000000e+00> : vector<1x32xf32>
    %421 = tpu.matmul %416, %396, %cst_506 {dimension_numbers = #tpu.dot_dimension_numbers<[1], [0], [0], [1], [0, 0, 1, 1], [], []>} : vector<1x4xf32>, vector<4x32xf32>, vector<1x32xf32> -> vector<1x32xf32>
    %422 = vector.broadcast %421 : vector<1x32xf32> to vector<128x32xf32>
    %423 = arith.mulf %394, %422 : vector<128x32xf32>
    %cst_507 = arith.constant dense<0.000000e+00> : vector<1x32xf32>
    %424 = tpu.matmul %420, %396, %cst_507 {dimension_numbers = #tpu.dot_dimension_numbers<[1], [0], [0], [1], [0, 0, 1, 1], [], []>} : vector<1x4xf32>, vector<4x32xf32>, vector<1x32xf32> -> vector<1x32xf32>
    %425 = vector.broadcast %424 : vector<1x32xf32> to vector<128x32xf32>
    %426 = arith.addf %423, %425 : vector<128x32xf32>
    %cst_508 = arith.constant 0.000000e+00 : f32
    %427 = vector.broadcast %cst_508 : f32 to vector<128x32xf32>
    %428 = arith.cmpf oge, %426, %427 : vector<128x32xf32>
    %cst_509 = arith.constant 2.000000e-01 : f32
    %429 = vector.broadcast %cst_509 : f32 to vector<128x32xf32>
    %430 = arith.mulf %429, %426 : vector<128x32xf32>
    %431 = arith.select %428, %426, %430 : vector<128x32xi1>, vector<128x32xf32>
    %c0_510 = arith.constant 0 : index
    %c0_511 = arith.constant 0 : index
    %432 = vector.load %arg12[%c0_510, %c0_511] : memref<128x32xf32, #tpu.memory_space<vmem>>, vector<128x32xf32>
    tpu.vector_store %arg12[%c0_510, %c0_511], %431 {strides = array<i32>} : memref<128x32xf32, #tpu.memory_space<vmem>>, vector<128x32xf32>,
    return
  }
  func.func @transform_0(%arg0: i32) -> (i32, i32, i32, i32) {
    %c0_i32 = arith.constant 0 : i32
    %c0_i32_0 = arith.constant 0 : i32
    %c0_i32_1 = arith.constant 0 : i32
    %c0_i32_2 = arith.constant 0 : i32
    %c0_i32_3 = arith.constant 0 : i32
    return %c0_i32, %c0_i32_0, %c0_i32_1, %c0_i32_2 : i32, i32, i32, i32
  }
  func.func @transform_1(%arg0: i32) -> (i32, i32, i32, i32) {
    %c0_i32 = arith.constant 0 : i32
    %c0_i32_0 = arith.constant 0 : i32
    %c0_i32_1 = arith.constant 0 : i32
    %c0_i32_2 = arith.constant 0 : i32
    %c0_i32_3 = arith.constant 0 : i32
    return %c0_i32, %c0_i32_0, %c0_i32_1, %c0_i32_2 : i32, i32, i32, i32
  }
  func.func @transform_2(%arg0: i32) -> (i32, i32, i32, i32) {
    %c0_i32 = arith.constant 0 : i32
    %c0_i32_0 = arith.constant 0 : i32
    %c0_i32_1 = arith.constant 0 : i32
    %c0_i32_2 = arith.constant 0 : i32
    %c0_i32_3 = arith.constant 0 : i32
    return %c0_i32, %c0_i32_0, %c0_i32_1, %c0_i32_2 : i32, i32, i32, i32
  }
  func.func @transform_3(%arg0: i32) -> (i32, i32, i32, i32) {
    %c0_i32 = arith.constant 0 : i32
    %c0_i32_0 = arith.constant 0 : i32
    %c0_i32_1 = arith.constant 0 : i32
    %c0_i32_2 = arith.constant 0 : i32
    %c0_i32_3 = arith.constant 0 : i32
    return %c0_i32, %c0_i32_0, %c0_i32_1, %c0_i32_2 : i32, i32, i32, i32
  }
  func.func @transform_4(%arg0: i32) -> (i32, i32, i32, i32) {
    %c0_i32 = arith.constant 0 : i32
    %c0_i32_0 = arith.constant 0 : i32
    %c0_i32_1 = arith.constant 0 : i32
    %c0_i32_2 = arith.constant 0 : i32
    %c0_i32_3 = arith.constant 0 : i32
    return %c0_i32, %c0_i32_0, %c0_i32_1, %c0_i32_2 : i32, i32, i32, i32
  }
  func.func @transform_5(%arg0: i32) -> (i32, i32, i32, i32) {
    %c0_i32 = arith.constant 0 : i32
    %c0_i32_0 = arith.constant 0 : i32
    %c0_i32_1 = arith.constant 0 : i32
    %c0_i32_2 = arith.constant 0 : i32
    %c0_i32_3 = arith.constant 0 : i32
    return %c0_i32, %c0_i32_0, %c0_i32_1, %c0_i32_2 : i32, i32, i32, i32
  }
  func.func @transform_6(%arg0: i32) -> (i32, i32, i32, i32) {
    %c0_i32 = arith.constant 0 : i32
    %c0_i32_0 = arith.constant 0 : i32
    %c0_i32_1 = arith.constant 0 : i32
    %c0_i32_2 = arith.constant 0 : i32
    %c0_i32_3 = arith.constant 0 : i32
    return %c0_i32, %c0_i32_0, %c0_i32_1, %c0_i32_2 : i32, i32, i32, i32
  }
  func.func @transform_7(%arg0: i32) -> (i32, i32, i32) {
    %c0_i32 = arith.constant 0 : i32
    %c0_i32_0 = arith.constant 0 : i32
    %c0_i32_1 = arith.constant 0 : i32
    %c0_i32_2 = arith.constant 0 : i32
    return %c0_i32, %c0_i32_0, %c0_i32_1 : i32, i32, i32
  }
  func.func @transform_8(%arg0: i32) -> (i32, i32, i32) {
    %c0_i32 = arith.constant 0 : i32
    %c0_i32_0 = arith.constant 0 : i32
    %c0_i32_1 = arith.constant 0 : i32
    %c0_i32_2 = arith.constant 0 : i32
    return %c0_i32, %c0_i32_0, %c0_i32_1 : i32, i32, i32
  }
  func.func @transform_9(%arg0: i32) -> (i32, i32) {
    %c0_i32 = arith.constant 0 : i32
    %c0_i32_0 = arith.constant 0 : i32
    %c0_i32_1 = arith.constant 0 : i32
    return %c0_i32, %c0_i32_0 : i32, i32
  }
  func.func @transform_10(%arg0: i32) -> (i32, i32) {
    %c0_i32 = arith.constant 0 : i32
    %c0_i32_0 = arith.constant 0 : i32
    %c0_i32_1 = arith.constant 0 : i32
    return %c0_i32, %c0_i32_0 : i32, i32
  }
  func.func @transform_11(%arg0: i32) -> (i32, i32) {
    %c0_i32 = arith.constant 0 : i32
    %c0_i32_0 = arith.constant 0 : i32
    %c0_i32_1 = arith.constant 0 : i32
    return %c0_i32, %c0_i32_0 : i32, i32
  }
}

</mosaic_0001>

<llo_original>
// kernel: tile.8
$region0: #{tile.8}
  #allocation0 [shape = 's32[1]{0}', space=sflag, size = 0x4, scoped, tag = 'scoped memory for tile.8']
  %s0 = inlined_call_operand.vmem [shape: f32[4], index: 0, kind: input, shape index: {}]
  %s1 = inlined_call_operand.vmem [shape: f32[8,4], index: 1, kind: output, shape index: {}]
  // Predicated region
  $region2: #{tile.8} parent=0 // pred_check
    _
  $region3: #{tile.8} parent=0 // pred_check_branch
    %3 = sbr.rel (0) target = $region5
  $region4: #{tile.8} parent=0 // pred_region
    _
  $region5: #{tile.8} parent=0 // pred_fallthru
    _
  %v4 = vld [vmem:[%s0] ss:$0 sm:$0xff]
  %5 = vst [vmem:[%s1] sm:$0xff] %v4

// kernel: tile.9
$region0: #{tile.9}
  %s0 = inlined_call_operand.vmem [shape: f32[8,4], index: 0, kind: input, shape index: {}]
  %s1 = inlined_call_operand.vmem [shape: f32[1,32], index: 1, kind: output, shape index: {}]
  $region1: #{tile.9} parent=0
    #allocation0 [shape = 'u8[4096]{0}', space=vmem, size = 0x1000, scoped, tag = 'scoped mem for output reshape']
    %v2 = vld [vmem:[%s0] sm:$0x1]
    %vm3 = vcmask 31744
    %4 = vst.msk [vmem:[#allocation0] sm:$0x1] %vm3, %v2
    %s5 = scalar_lea.vmem %s0, 7
    %v6 = vld [vmem:[%s5] sm:$0x1]
    %7 = vrot.lane.b32.xlu0 %v6, 28
    %v8 = vpop.permute.xlu0 %7
    %vm9 = vcmask 261344
    %10 = vst.msk [vmem:[#allocation0] sm:$0x1] %vm9, %v8
    %s11 = scalar_lea.vmem %s0, 6
    %v12 = vld [vmem:[%s11] sm:$0x1]
    %13 = vrot.lane.b32.xlu0 %v12, 24
    %v14 = vpop.permute.xlu0 %13
    %vm15 = vcmask 228544
    %16 = vst.msk [vmem:[#allocation0] sm:$0x1] %vm15, %v14
    %s17 = scalar_lea.vmem %s0, 5
    %v18 = vld [vmem:[%s17] sm:$0x1]
    %19 = vrot.lane.b32.xlu0 %v18, 20
    %v20 = vpop.permute.xlu0 %19
    %vm21 = vcmask 195744
    %22 = vst.msk [vmem:[#allocation0] sm:$0x1] %vm21, %v20
    %s23 = scalar_lea.vmem %s0, 4
    %v24 = vld [vmem:[%s23] sm:$0x1]
    %25 = vrot.lane.b32.xlu0 %v24, 16
    %v26 = vpop.permute.xlu0 %25
    %vm27 = vcmask 162944
    %28 = vst.msk [vmem:[#allocation0] sm:$0x1] %vm27, %v26
    %s29 = scalar_lea.vmem %s0, 3
    %v30 = vld [vmem:[%s29] sm:$0x1]
    %31 = vrot.lane.b32.xlu0 %v30, 12
    %v32 = vpop.permute.xlu0 %31
    %vm33 = vcmask 130144
    %34 = vst.msk [vmem:[#allocation0] sm:$0x1] %vm33, %v32
    %s35 = scalar_lea.vmem %s0, 2
    %v36 = vld [vmem:[%s35] sm:$0x1]
    %37 = vrot.lane.b32.xlu0 %v36, 8
    %v38 = vpop.permute.xlu0 %37
    %vm39 = vcmask 97344
    %40 = vst.msk [vmem:[#allocation0] sm:$0x1] %vm39, %v38
    %s41 = scalar_lea.vmem %s0, 1
    %v42 = vld [vmem:[%s41] sm:$0x1]
    %43 = vrot.lane.b32.xlu0 %v42, 4
    %v44 = vpop.permute.xlu0 %43
    %vm45 = vcmask 64544
    %46 = vst.msk [vmem:[#allocation0] sm:$0x1] %vm45, %v44
    %s48 = ssub.s32 2, 1
    %v49 = vld [vmem:[#allocation0] sm:%s48]
    %s51 = ssub.s32 2, 1
    %52 = vst [vmem:[%s1] sm:%s51] %v49

// kernel: upblock_forward.2
$region0: #{upblock_forward.2}
  #allocation0 [shape = 'u32[]', space=smem, size = 0x4, offset = 0x4, fixed_abs, tag = 'smem constant byte address 0x4 - core index']
  #allocation1 [shape = 'u32[72,128]{1,0:T(1,128)}', space=vmem, size = 0x9000, scoped, tag = 'internal scratch']
  %s0 = inlined_call_operand.vmem [shape: f32[2,6,6,32], index: 0, kind: input, shape index: {}]
  %s1 = inlined_call_operand.vmem [shape: f32[4,4,32,32], index: 1, kind: input, shape index: {}]
  %s2 = inlined_call_operand.vmem [shape: f32[1,32], index: 2, kind: input, shape index: {}]
  %s3 = inlined_call_operand.vmem [shape: f32[2,2,2,16,32], index: 3, kind: output, shape index: {}]
  %s4 = sld [smem:[#allocation0]]
  $region45: #{upblock_forward.2} parent=0
    _
  %s6 = ssub.s32 1, %s4
  %s7 = scalar_select 0, %s6, %s4
  loop: start=0, step=1, limit=4
  $region2: #{upblock_forward.2} parent=0 // loop_pre_header
    _
  $region3: #{upblock_forward.2} parent=0 // loop_header
    %s9 = sphi 0, %s13
    %p10 = scmp.ge.s32.totalorder %s9, 4
    %s19 = sphi 0, %s21
    %s22 = sphi 0, %s19
    %s23 = sphi 0, %s22
    %s39 = sphi 0, %s23
    %s43 = sphi 0, %s43
    %s45 = sphi 0, %s43
    %s46 = sphi 0, %s45
    %s60 = sphi 0, %s46
    %s64 = sphi 0, %s64
    %s66 = sphi 0, %s64
    %s67 = sphi 0, %s66
    %s81 = sphi 0, %s67
    %s87 = sphi 0, %s89
    %s90 = sphi 0, %s87
    %s91 = sphi 0, %s90
    %s107 = sphi 0, %s91
  $region4: #{upblock_forward.2} parent=0 // loop_header_branch
    %12 = sbr.rel (%p10) target = $region8
  $region5: #{upblock_forward.2} parent=0 // loop_body
    %s14 = ssub.s32 %s9, 1
    %s15 = ssub.s32 %s9, 2
    %s16 = sadd.s32 %s9, 1
    %s17 = ssub.s32 %s9, %s16
    %p18 = scmp.eq.s32.totalorder %s17, 0
    %s20 = sadd.s32 %s19, 1
    %s21 = scalar_select %p18, %s19, %s20
    %p24 = pneg %p18
    %p25 = scmp.eq.s32.totalorder %s9, 1
    %p26 = por %p24, %p25
    %p27 = scmp.ne.s32.totalorder %s19, %s22
    %p28 = scmp.eq.s32.totalorder %s9, 0
    %p29 = por %p27, %p28
    %p30 = scmp.ne.s32.totalorder %s19, %s22
    %p31 = scmp.eq.s32.totalorder %s14, 1
    %p32 = por %p30, %p31
    %p33 = scmp.ne.s32.totalorder %s22, %s23
    %p34 = scmp.eq.s32.totalorder %s14, 0
    %p35 = por %p33, %p34
    %p36 = scmp.ne.s32.totalorder %s22, %s23
    %p37 = scmp.eq.s32.totalorder %s15, 1
    %p38 = por %p36, %p37
    %p40 = scmp.ne.s32.totalorder %s23, %s39
    %p41 = scmp.eq.s32.totalorder %s15, 0
    %p42 = por %p40, %p41
    %s44 = sadd.s32 %s43, 1
    %p47 = scmp.eq.s32.totalorder %s9, 1
    %p48 = scmp.ne.s32.totalorder %s43, %s45
    %p49 = scmp.eq.s32.totalorder %s9, 0
    %p50 = por %p48, %p49
    %p51 = scmp.ne.s32.totalorder %s43, %s45
    %p52 = scmp.eq.s32.totalorder %s14, 1
    %p53 = por %p51, %p52
    %p54 = scmp.ne.s32.totalorder %s45, %s46
    %p55 = scmp.eq.s32.totalorder %s14, 0
    %p56 = por %p54, %p55
    %p57 = scmp.ne.s32.totalorder %s45, %s46
    %p58 = scmp.eq.s32.totalorder %s15, 1
    %p59 = por %p57, %p58
    %p61 = scmp.ne.s32.totalorder %s46, %s60
    %p62 = scmp.eq.s32.totalorder %s15, 0
    %p63 = por %p61, %p62
    %s65 = sadd.s32 %s64, 1
    %p68 = scmp.eq.s32.totalorder %s9, 1
    %p69 = scmp.ne.s32.totalorder %s64, %s66
    %p70 = scmp.eq.s32.totalorder %s9, 0
    %p71 = por %p69, %p70
    %p72 = scmp.ne.s32.totalorder %s64, %s66
    %p73 = scmp.eq.s32.totalorder %s14, 1
    %p74 = por %p72, %p73
    %p75 = scmp.ne.s32.totalorder %s66, %s67
    %p76 = scmp.eq.s32.totalorder %s14, 0
    %p77 = por %p75, %p76
    %p78 = scmp.ne.s32.totalorder %s66, %s67
    %p79 = scmp.eq.s32.totalorder %s15, 1
    %p80 = por %p78, %p79
    %p82 = scmp.ne.s32.totalorder %s67, %s81
    %p83 = scmp.eq.s32.totalorder %s15, 0
    %p84 = por %p82, %p83
    %s85 = ssub.s32 %s9, %s16
    %p86 = scmp.eq.s32.totalorder %s85, 0
    %s88 = sadd.s32 %s87, 1
    %s89 = scalar_select %p86, %s87, %s88
    %p92 = pneg %p86
    %p93 = scmp.eq.s32.totalorder %s9, 1
    %p94 = por %p92, %p93
    %p95 = scmp.ne.s32.totalorder %s87, %s90
    %p96 = scmp.eq.s32.totalorder %s9, 0
    %p97 = por %p95, %p96
    %p98 = scmp.ne.s32.totalorder %s87, %s90
    %p99 = scmp.eq.s32.totalorder %s14, 1
    %p100 = por %p98, %p99
    %p101 = scmp.ne.s32.totalorder %s90, %s91
    %p102 = scmp.eq.s32.totalorder %s14, 0
    %p103 = por %p101, %p102
    %p104 = scmp.ne.s32.totalorder %s90, %s91
    %p105 = scmp.eq.s32.totalorder %s15, 1
    %p106 = por %p104, %p105
    %p108 = scmp.ne.s32.totalorder %s91, %s107
    %p109 = scmp.eq.s32.totalorder %s15, 0
    %p110 = por %p108, %p109
    %p111 = scmp.le.s32.totalorder 1, %s9
    %p112 = scmp.lt.s32.totalorder %s9, 3
    %p113 = pnand %p111, %p112
    %p114 = pneg %p113
    // Predicated region
    $region9: #{upblock_forward.2} parent=5 // pred_check
      _
    $region10: #{upblock_forward.2} parent=5 // pred_check_branch
      %116 = sbr.rel (%p113) target = $region12
    $region11: #{upblock_forward.2} parent=5 // pred_region
      %s117 = ssub.s32 %s9, 1
      // Predicated region
      $region13: #{upblock_forward.2} parent=11 // pred_check
        %p118 = pneg %p56
      $region14: #{upblock_forward.2} parent=11 // pred_check_branch
        %120 = sbr.rel (%p118) target = $region16
      $region15: #{upblock_forward.2} parent=11 // pred_region
        _
      $region16: #{upblock_forward.2} parent=11 // pred_fallthru
        _
      // Predicated region
      $region17: #{upblock_forward.2} parent=11 // pred_check
        %p121 = pneg %p77
      $region18: #{upblock_forward.2} parent=11 // pred_check_branch
        %123 = sbr.rel (%p121) target = $region20
      $region19: #{upblock_forward.2} parent=11 // pred_region
        _
      $region20: #{upblock_forward.2} parent=11 // pred_fallthru
        _
    $region12: #{upblock_forward.2} parent=5 // pred_fallthru
      _
    %p124 = scmp.lt.s32.totalorder %s9, 2
    // Predicated region
    $region21: #{upblock_forward.2} parent=5 // pred_check
      %p125 = pneg %p124
    $region22: #{upblock_forward.2} parent=5 // pred_check_branch
      %127 = sbr.rel (%p125) target = $region24
    $region23: #{upblock_forward.2} parent=5 // pred_region
      // Predicated region
      $region25: #{upblock_forward.2} parent=23 // pred_check
        %p128 = pneg %p29
      $region26: #{upblock_forward.2} parent=23 // pred_check_branch
        %130 = sbr.rel (%p128) target = $region28
      $region27: #{upblock_forward.2} parent=23 // pred_region
        %p131 = scmp.lt.s32.totalorder %s9, 1
        %s132 = scalar_select %p131, %s9, 1
        %s133 = smul.addr %s132, 6
        %s134 = smul.addr %s133, 8
        %s135 = scalar_lea.vmem %s0, %s134
      $region28: #{upblock_forward.2} parent=23 // pred_fallthru
        _
    $region24: #{upblock_forward.2} parent=5 // pred_fallthru
      _
    %p136 = scmp.le.s32.totalorder 1, %s9
    %p137 = scmp.lt.s32.totalorder %s9, 3
    %p138 = pnand %p136, %p137
    %p139 = pneg %p138
    // Predicated region
    $region29: #{upblock_forward.2} parent=5 // pred_check
      _
    $region30: #{upblock_forward.2} parent=5 // pred_check_branch
      %141 = sbr.rel (%p138) target = $region32
    $region31: #{upblock_forward.2} parent=5 // pred_region
      %s142 = ssub.s32 %s9, 1
      %p143 = scmp.lt.s32.totalorder %s14, 1
      %s144 = scalar_select %p143, %s14, 1
      %s145 = smul.addr %s144, 6
      %s146 = smul.addr %s145, 8
      %s147 = scalar_lea.vmem %s0, %s146
      %p148 = pneg %p35
      %p149 = pneg %p32
      %p150 = pneg %p56
      %p151 = pneg %p53
      %p152 = pneg %p77
      %p153 = pneg %p74
      %p154 = pneg %p103
      %p155 = pneg %p100
      %p156 = scmp.lt.s32.totalorder %s14, 1
      %s157 = scalar_select %p156, %s14, 1
      %s158 = smul.addr %s157, 8
      %s159 = smul.addr %s158, 8
      %s160 = scalar_lea.vmem %s3, %s159
      %p161 = scmp.lt.s32.totalorder %s14, 1
      %s162 = scalar_select %p161, %s14, 1
      %s163 = smul.addr %s162, 6
      %s164 = smul.addr %s163, 8
      %s165 = scalar_lea.vmem %s0, %s164
      %p166 = scmp.lt.s32.totalorder %s14, 1
      %s167 = scalar_select %p166, %s14, 1
      %s168 = smul.addr %s167, 8
      %s169 = smul.addr %s168, 8
      %s170 = scalar_lea.vmem %s3, %s169
      %v171 = vld [vmem:[%s165] sm:$0xf]
      %v172 = vld [vmem:[%s165 + $0x8] sm:$0xf]
      %v173 = vld [vmem:[%s165 + $0x10] sm:$0xf]
      %v174 = vld [vmem:[%s165 + $0x18] sm:$0xf]
      %v175 = vld [vmem:[%s1] sm:$0xff]
      %v176 = vld [vmem:[%s1 + $0x8] sm:$0xff]
      %v177 = vld [vmem:[%s1 + $0x10] sm:$0xff]
      %v178 = vld [vmem:[%s1 + $0x18] sm:$0xff]
      %v179 = vld [vmem:[%s165 + $0x1] sm:$0xf]
      %v180 = vld [vmem:[%s165 + $0x9] sm:$0xf]
      %v181 = vld [vmem:[%s165 + $0x11] sm:$0xf]
      %v182 = vld [vmem:[%s165 + $0x19] sm:$0xf]
      %s183 = scalar_lea.vmem %s1, 64
      %v184 = vld [vmem:[%s183] sm:$0xff]
      %v185 = vld [vmem:[%s183 + $0x8] sm:$0xff]
      %v186 = vld [vmem:[%s183 + $0x10] sm:$0xff]
      %v187 = vld [vmem:[%s183 + $0x18] sm:$0xff]
      %192 = vst [vmem:[#allocation1] ss:$2 sm:$0xff] %v179
      %s193 = scalar_lea.vmem [#allocation1], 1
      %194 = vst [vmem:[%s193] ss:$2 sm:$0xff] %v180
      %s195 = scalar_lea.vmem [#allocation1], 16
      %196 = vst [vmem:[%s195] ss:$2 sm:$0xff] %v181
      %s197 = scalar_lea.vmem [#allocation1], 17
      %198 = vst [vmem:[%s197] ss:$2 sm:$0xff] %v182
      %v199 = vld.sshfl [vmem:[#allocation1] sm:$0xff pattern:$0x75316420]
      %v200 = vld.sshfl [vmem:[#allocation1 + $0x10] sm:$0xff pattern:$0x75316420]
      %vm201 = vcmask 261120
      %v202 = vsel %vm201, %v199, 0
      %v204 = vsel %vm201, %v200, 0
      %206 = vmatpush.msra.mxu0 0.0
      %207 = vmatpush.msra.mxu0 0.0
      %208 = vmatpush.msra.mxu0 0.0
      %209 = vmatpush.msra.mxu0 0.0
      %210 = vmatpush.msra.mxu0 0.0
      %211 = vmatpush.msra.mxu0 0.0
      %212 = vmatpush.msra.mxu0 0.0
      %213 = vmatpush.msra.mxu0 0.0
      %214 = vmatpush.msra.mxu0 0.0
      %215 = vmatpush.msra.mxu0 0.0
      %216 = vmatpush.msra.mxu0 0.0
      %217 = vmatpush.msra.mxu0 0.0
      %218 = vmatpush.msra.mxu0 %v187
      %219 = vmatpush.msra.mxu0 %v186
      %220 = vmatpush.msra.mxu0 %v185
      %221 = vmatpush.msra.mxu0 %v184
      %222 = vmatmul.f32.gmra.mxu0 %v202
      %v223 = vpop.f32.mrf.mxu0
      %v224 = vadd.f32 0.0, %v223
      %225 = vmatmul.f32.gmra.mxu0 %v204
      %v226 = vpop.f32.mrf.mxu0
      %v227 = vadd.f32 0.0, %v226
      %228 = vdwg.mxu0
      %233 = vst [vmem:[#allocation1] ss:$2 sm:$0xff] %v171
      %s234 = scalar_lea.vmem [#allocation1], 1
      %235 = vst [vmem:[%s234] ss:$2 sm:$0xff] %v172
      %s236 = scalar_lea.vmem [#allocation1], 16
      %237 = vst [vmem:[%s236] ss:$2 sm:$0xff] %v173
      %s238 = scalar_lea.vmem [#allocation1], 17
      %239 = vst [vmem:[%s238] ss:$2 sm:$0xff] %v174
      %v240 = vld.sshfl [vmem:[#allocation1] sm:$0xff pattern:$0x75316420]
      %v241 = vld.sshfl [vmem:[#allocation1 + $0x10] sm:$0xff pattern:$0x75316420]
      %v242 = vsel %vm201, %v240, 0
      %v244 = vsel %vm201, %v241, 0
      %246 = vmatpush.msra.mxu0 0.0
      %247 = vmatpush.msra.mxu0 0.0
      %248 = vmatpush.msra.mxu0 0.0
      %249 = vmatpush.msra.mxu0 0.0
      %250 = vmatpush.msra.mxu0 0.0
      %251 = vmatpush.msra.mxu0 0.0
      %252 = vmatpush.msra.mxu0 0.0
      %253 = vmatpush.msra.mxu0 0.0
      %254 = vmatpush.msra.mxu0 0.0
      %255 = vmatpush.msra.mxu0 0.0
      %256 = vmatpush.msra.mxu0 0.0
      %257 = vmatpush.msra.mxu0 0.0
      %258 = vmatpush.msra.mxu0 %v178
      %259 = vmatpush.msra.mxu0 %v177
      %260 = vmatpush.msra.mxu0 %v176
      %261 = vmatpush.msra.mxu0 %v175
      %262 = vmatmul.f32.gmra.mxu0 %v242
      %v263 = vpop.f32.mrf.mxu0
      %v264 = vadd.f32 %v224, %v263
      %265 = vmatmul.f32.gmra.mxu0 %v244
      %v266 = vpop.f32.mrf.mxu0
      %v267 = vadd.f32 %v227, %v266
      %268 = vdwg.mxu0
      %s269 = scalar_lea.vmem %s165, 8
      %v270 = vld [vmem:[%s269] sm:$0xf]
      %v271 = vld [vmem:[%s269 + $0x8] sm:$0xf]
      %v272 = vld [vmem:[%s269 + $0x10] sm:$0xf]
      %v273 = vld [vmem:[%s269 + $0x18] sm:$0xf]
      %s274 = scalar_lea.vmem %s1, 256
      %v275 = vld [vmem:[%s274] sm:$0xff]
      %v276 = vld [vmem:[%s274 + $0x8] sm:$0xff]
      %v277 = vld [vmem:[%s274 + $0x10] sm:$0xff]
      %v278 = vld [vmem:[%s274 + $0x18] sm:$0xff]
      %283 = vst [vmem:[#allocation1] ss:$2 sm:$0xff] %v270
      %s284 = scalar_lea.vmem [#allocation1], 1
      %285 = vst [vmem:[%s284] ss:$2 sm:$0xff] %v271
      %s286 = scalar_lea.vmem [#allocation1], 16
      %287 = vst [vmem:[%s286] ss:$2 sm:$0xff] %v272
      %s288 = scalar_lea.vmem [#allocation1], 17
      %289 = vst [vmem:[%s288] ss:$2 sm:$0xff] %v273
      %v290 = vld.sshfl [vmem:[#allocation1] sm:$0xff pattern:$0x75316420]
      %v291 = vld.sshfl [vmem:[#allocation1 + $0x10] sm:$0xff pattern:$0x75316420]
      %v292 = vsel %vm201, %v290, 0
      %v294 = vsel %vm201, %v291, 0
      %296 = vmatpush.msra.mxu0 0.0
      %297 = vmatpush.msra.mxu0 0.0
      %298 = vmatpush.msra.mxu0 0.0
      %299 = vmatpush.msra.mxu0 0.0
      %300 = vmatpush.msra.mxu0 0.0
      %301 = vmatpush.msra.mxu0 0.0
      %302 = vmatpush.msra.mxu0 0.0
      %303 = vmatpush.msra.mxu0 0.0
      %304 = vmatpush.msra.mxu0 0.0
      %305 = vmatpush.msra.mxu0 0.0
      %306 = vmatpush.msra.mxu0 0.0
      %307 = vmatpush.msra.mxu0 0.0
      %308 = vmatpush.msra.mxu0 %v278
      %309 = vmatpush.msra.mxu0 %v277
      %310 = vmatpush.msra.mxu0 %v276
      %311 = vmatpush.msra.mxu0 %v275
      %312 = vmatmul.f32.gmra.mxu0 %v292
      %v313 = vpop.f32.mrf.mxu0
      %v314 = vadd.f32 0.0, %v313
      %315 = vmatmul.f32.gmra.mxu0 %v294
      %v316 = vpop.f32.mrf.mxu0
      %v317 = vadd.f32 0.0, %v316
      %318 = vdwg.mxu0
      %v319 = vadd.f32 %v264, %v314
      %v320 = vadd.f32 %v267, %v317
      %v321 = vld [vmem:[%s269 + $0x1] sm:$0xf]
      %v322 = vld [vmem:[%s269 + $0x9] sm:$0xf]
      %v323 = vld [vmem:[%s269 + $0x11] sm:$0xf]
      %v324 = vld [vmem:[%s269 + $0x19] sm:$0xf]
      %s325 = scalar_lea.vmem %s1, 320
      %v326 = vld [vmem:[%s325] sm:$0xff]
      %v327 = vld [vmem:[%s325 + $0x8] sm:$0xff]
      %v328 = vld [vmem:[%s325 + $0x10] sm:$0xff]
      %v329 = vld [vmem:[%s325 + $0x18] sm:$0xff]
      %334 = vst [vmem:[#allocation1] ss:$2 sm:$0xff] %v321
      %s335 = scalar_lea.vmem [#allocation1], 1
      %336 = vst [vmem:[%s335] ss:$2 sm:$0xff] %v322
      %s337 = scalar_lea.vmem [#allocation1], 16
      %338 = vst [vmem:[%s337] ss:$2 sm:$0xff] %v323
      %s339 = scalar_lea.vmem [#allocation1], 17
      %340 = vst [vmem:[%s339] ss:$2 sm:$0xff] %v324
      %v341 = vld.sshfl [vmem:[#allocation1] sm:$0xff pattern:$0x75316420]
      %v342 = vld.sshfl [vmem:[#allocation1 + $0x10] sm:$0xff pattern:$0x75316420]
      %v343 = vsel %vm201, %v341, 0
      %v345 = vsel %vm201, %v342, 0
      %347 = vmatpush.msra.mxu0 0.0
      %348 = vmatpush.msra.mxu0 0.0
      %349 = vmatpush.msra.mxu0 0.0
      %350 = vmatpush.msra.mxu0 0.0
      %351 = vmatpush.msra.mxu0 0.0
      %352 = vmatpush.msra.mxu0 0.0
      %353 = vmatpush.msra.mxu0 0.0
      %354 = vmatpush.msra.mxu0 0.0
      %355 = vmatpush.msra.mxu0 0.0
      %356 = vmatpush.msra.mxu0 0.0
      %357 = vmatpush.msra.mxu0 0.0
      %358 = vmatpush.msra.mxu0 0.0
      %359 = vmatpush.msra.mxu0 %v329
      %360 = vmatpush.msra.mxu0 %v328
      %361 = vmatpush.msra.mxu0 %v327
      %362 = vmatpush.msra.mxu0 %v326
      %363 = vmatmul.f32.gmra.mxu0 %v343
      %v364 = vpop.f32.mrf.mxu0
      %v365 = vadd.f32 0.0, %v364
      %366 = vmatmul.f32.gmra.mxu0 %v345
      %v367 = vpop.f32.mrf.mxu0
      %v368 = vadd.f32 0.0, %v367
      %369 = vdwg.mxu0
      %v370 = vadd.f32 %v319, %v365
      %v371 = vadd.f32 %v320, %v368
      %v372 = vld [vmem:[%s2] sm:$0x1]
      %v374 = vperm.slane %v372, 0
      %v376 = vadd.f32 %v370, %v374
      %v377 = vadd.f32 %v371, %v374
      %378 = vst.msk [vmem:[%s170] sm:$0xff] %vm201, %v376
      %379 = vst.msk [vmem:[%s170 + $0x8] sm:$0xff] %vm201, %v377
      %v380 = vld [vmem:[%s165 + $0x1] sm:$0xf]
      %v381 = vld [vmem:[%s165 + $0x9] sm:$0xf]
      %v382 = vld [vmem:[%s165 + $0x11] sm:$0xf]
      %v383 = vld [vmem:[%s165 + $0x19] sm:$0xf]
      %s384 = scalar_lea.vmem %s1, 32
      %v385 = vld [vmem:[%s384] sm:$0xff]
      %v386 = vld [vmem:[%s384 + $0x8] sm:$0xff]
      %v387 = vld [vmem:[%s384 + $0x10] sm:$0xff]
      %v388 = vld [vmem:[%s384 + $0x18] sm:$0xff]
      %v389 = vld [vmem:[%s165 + $0x2] sm:$0xf]
      %v390 = vld [vmem:[%s165 + $0xa] sm:$0xf]
      %v391 = vld [vmem:[%s165 + $0x12] sm:$0xf]
      %v392 = vld [vmem:[%s165 + $0x1a] sm:$0xf]
      %s393 = scalar_lea.vmem %s1, 96
      %v394 = vld [vmem:[%s393] sm:$0xff]
      %v395 = vld [vmem:[%s393 + $0x8] sm:$0xff]
      %v396 = vld [vmem:[%s393 + $0x10] sm:$0xff]
      %v397 = vld [vmem:[%s393 + $0x18] sm:$0xff]
      %402 = vst [vmem:[#allocation1] ss:$2 sm:$0xff] %v389
      %s403 = scalar_lea.vmem [#allocation1], 1
      %404 = vst [vmem:[%s403] ss:$2 sm:$0xff] %v390
      %s405 = scalar_lea.vmem [#allocation1], 16
      %406 = vst [vmem:[%s405] ss:$2 sm:$0xff] %v391
      %s407 = scalar_lea.vmem [#allocation1], 17
      %408 = vst [vmem:[%s407] ss:$2 sm:$0xff] %v392
      %v409 = vld.sshfl [vmem:[#allocation1] sm:$0xff pattern:$0x75316420]
      %v410 = vld.sshfl [vmem:[#allocation1 + $0x10] sm:$0xff pattern:$0x75316420]
      %v411 = vsel %vm201, %v409, 0
      %v413 = vsel %vm201, %v410, 0
      %415 = vmatpush.msra.mxu0 0.0
      %416 = vmatpush.msra.mxu0 0.0
      %417 = vmatpush.msra.mxu0 0.0
      %418 = vmatpush.msra.mxu0 0.0
      %419 = vmatpush.msra.mxu0 0.0
      %420 = vmatpush.msra.mxu0 0.0
      %421 = vmatpush.msra.mxu0 0.0
      %422 = vmatpush.msra.mxu0 0.0
      %423 = vmatpush.msra.mxu0 0.0
      %424 = vmatpush.msra.mxu0 0.0
      %425 = vmatpush.msra.mxu0 0.0
      %426 = vmatpush.msra.mxu0 0.0
      %427 = vmatpush.msra.mxu0 %v397
      %428 = vmatpush.msra.mxu0 %v396
      %429 = vmatpush.msra.mxu0 %v395
      %430 = vmatpush.msra.mxu0 %v394
      %431 = vmatmul.f32.gmra.mxu0 %v411
      %v432 = vpop.f32.mrf.mxu0
      %v433 = vadd.f32 0.0, %v432
      %434 = vmatmul.f32.gmra.mxu0 %v413
      %v435 = vpop.f32.mrf.mxu0
      %v436 = vadd.f32 0.0, %v435
      %437 = vdwg.mxu0
      %442 = vst [vmem:[#allocation1] ss:$2 sm:$0xff] %v380
      %s443 = scalar_lea.vmem [#allocation1], 1
      %444 = vst [vmem:[%s443] ss:$2 sm:$0xff] %v381
      %s445 = scalar_lea.vmem [#allocation1], 16
      %446 = vst [vmem:[%s445] ss:$2 sm:$0xff] %v382
      %s447 = scalar_lea.vmem [#allocation1], 17
      %448 = vst [vmem:[%s447] ss:$2 sm:$0xff] %v383
      %v449 = vld.sshfl [vmem:[#allocation1] sm:$0xff pattern:$0x75316420]
      %v450 = vld.sshfl [vmem:[#allocation1 + $0x10] sm:$0xff pattern:$0x75316420]
      %v451 = vsel %vm201, %v449, 0
      %v453 = vsel %vm201, %v450, 0
      %455 = vmatpush.msra.mxu0 0.0
      %456 = vmatpush.msra.mxu0 0.0
      %457 = vmatpush.msra.mxu0 0.0
      %458 = vmatpush.msra.mxu0 0.0
      %459 = vmatpush.msra.mxu0 0.0
      %460 = vmatpush.msra.mxu0 0.0
      %461 = vmatpush.msra.mxu0 0.0
      %462 = vmatpush.msra.mxu0 0.0
      %463 = vmatpush.msra.mxu0 0.0
      %464 = vmatpush.msra.mxu0 0.0
      %465 = vmatpush.msra.mxu0 0.0
      %466 = vmatpush.msra.mxu0 0.0
      %467 = vmatpush.msra.mxu0 %v388
      %468 = vmatpush.msra.mxu0 %v387
      %469 = vmatpush.msra.mxu0 %v386
      %470 = vmatpush.msra.mxu0 %v385
      %471 = vmatmul.f32.gmra.mxu0 %v451
      %v472 = vpop.f32.mrf.mxu0
      %v473 = vadd.f32 %v433, %v472
      %474 = vmatmul.f32.gmra.mxu0 %v453
      %v475 = vpop.f32.mrf.mxu0
      %v476 = vadd.f32 %v436, %v475
      %477 = vdwg.mxu0
      %v478 = vld [vmem:[%s269 + $0x1] sm:$0xf]
      %v479 = vld [vmem:[%s269 + $0x9] sm:$0xf]
      %v480 = vld [vmem:[%s269 + $0x11] sm:$0xf]
      %v481 = vld [vmem:[%s269 + $0x19] sm:$0xf]
      %s482 = scalar_lea.vmem %s1, 288
      %v483 = vld [vmem:[%s482] sm:$0xff]
      %v484 = vld [vmem:[%s482 + $0x8] sm:$0xff]
      %v485 = vld [vmem:[%s482 + $0x10] sm:$0xff]
      %v486 = vld [vmem:[%s482 + $0x18] sm:$0xff]
      %491 = vst [vmem:[#allocation1] ss:$2 sm:$0xff] %v478
      %s492 = scalar_lea.vmem [#allocation1], 1
      %493 = vst [vmem:[%s492] ss:$2 sm:$0xff] %v479
      %s494 = scalar_lea.vmem [#allocation1], 16
      %495 = vst [vmem:[%s494] ss:$2 sm:$0xff] %v480
      %s496 = scalar_lea.vmem [#allocation1], 17
      %497 = vst [vmem:[%s496] ss:$2 sm:$0xff] %v481
      %v498 = vld.sshfl [vmem:[#allocation1] sm:$0xff pattern:$0x75316420]
      %v499 = vld.sshfl [vmem:[#allocation1 + $0x10] sm:$0xff pattern:$0x75316420]
      %v500 = vsel %vm201, %v498, 0
      %v502 = vsel %vm201, %v499, 0
      %504 = vmatpush.msra.mxu0 0.0
      %505 = vmatpush.msra.mxu0 0.0
      %506 = vmatpush.msra.mxu0 0.0
      %507 = vmatpush.msra.mxu0 0.0
      %508 = vmatpush.msra.mxu0 0.0
      %509 = vmatpush.msra.mxu0 0.0
      %510 = vmatpush.msra.mxu0 0.0
      %511 = vmatpush.msra.mxu0 0.0
      %512 = vmatpush.msra.mxu0 0.0
      %513 = vmatpush.msra.mxu0 0.0
      %514 = vmatpush.msra.mxu0 0.0
      %515 = vmatpush.msra.mxu0 0.0
      %516 = vmatpush.msra.mxu0 %v486
      %517 = vmatpush.msra.mxu0 %v485
      %518 = vmatpush.msra.mxu0 %v484
      %519 = vmatpush.msra.mxu0 %v483
      %520 = vmatmul.f32.gmra.mxu0 %v500
      %v521 = vpop.f32.mrf.mxu0
      %v522 = vadd.f32 0.0, %v521
      %523 = vmatmul.f32.gmra.mxu0 %v502
      %v524 = vpop.f32.mrf.mxu0
      %v525 = vadd.f32 0.0, %v524
      %526 = vdwg.mxu0
      %v527 = vadd.f32 %v473, %v522
      %v528 = vadd.f32 %v476, %v525
      %v529 = vld [vmem:[%s269 + $0x2] sm:$0xf]
      %v530 = vld [vmem:[%s269 + $0xa] sm:$0xf]
      %v531 = vld [vmem:[%s269 + $0x12] sm:$0xf]
      %v532 = vld [vmem:[%s269 + $0x1a] sm:$0xf]
      %s533 = scalar_lea.vmem %s1, 352
      %v534 = vld [vmem:[%s533] sm:$0xff]
      %v535 = vld [vmem:[%s533 + $0x8] sm:$0xff]
      %v536 = vld [vmem:[%s533 + $0x10] sm:$0xff]
      %v537 = vld [vmem:[%s533 + $0x18] sm:$0xff]
      %542 = vst [vmem:[#allocation1] ss:$2 sm:$0xff] %v529
      %s543 = scalar_lea.vmem [#allocation1], 1
      %544 = vst [vmem:[%s543] ss:$2 sm:$0xff] %v530
      %s545 = scalar_lea.vmem [#allocation1], 16
      %546 = vst [vmem:[%s545] ss:$2 sm:$0xff] %v531
      %s547 = scalar_lea.vmem [#allocation1], 17
      %548 = vst [vmem:[%s547] ss:$2 sm:$0xff] %v532
      %v549 = vld.sshfl [vmem:[#allocation1] sm:$0xff pattern:$0x75316420]
      %v550 = vld.sshfl [vmem:[#allocation1 + $0x10] sm:$0xff pattern:$0x75316420]
      %v551 = vsel %vm201, %v549, 0
      %v553 = vsel %vm201, %v550, 0
      %555 = vmatpush.msra.mxu0 0.0
      %556 = vmatpush.msra.mxu0 0.0
      %557 = vmatpush.msra.mxu0 0.0
      %558 = vmatpush.msra.mxu0 0.0
      %559 = vmatpush.msra.mxu0 0.0
      %560 = vmatpush.msra.mxu0 0.0
      %561 = vmatpush.msra.mxu0 0.0
      %562 = vmatpush.msra.mxu0 0.0
      %563 = vmatpush.msra.mxu0 0.0
      %564 = vmatpush.msra.mxu0 0.0
      %565 = vmatpush.msra.mxu0 0.0
      %566 = vmatpush.msra.mxu0 0.0
      %567 = vmatpush.msra.mxu0 %v537
      %568 = vmatpush.msra.mxu0 %v536
      %569 = vmatpush.msra.mxu0 %v535
      %570 = vmatpush.msra.mxu0 %v534
      %571 = vmatmul.f32.gmra.mxu0 %v551
      %v572 = vpop.f32.mrf.mxu0
      %v573 = vadd.f32 0.0, %v572
      %574 = vmatmul.f32.gmra.mxu0 %v553
      %v575 = vpop.f32.mrf.mxu0
      %v576 = vadd.f32 0.0, %v575
      %577 = vdwg.mxu0
      %v578 = vadd.f32 %v527, %v573
      %v579 = vadd.f32 %v528, %v576
      %v580 = vld [vmem:[%s2] sm:$0x1]
      %v582 = vperm.slane %v580, 0
      %v584 = vadd.f32 %v578, %v582
      %v585 = vadd.f32 %v579, %v582
      %s586 = scalar_lea.vmem %s170, 16
      %587 = vst.msk [vmem:[%s586] sm:$0xff] %vm201, %v584
      %588 = vst.msk [vmem:[%s586 + $0x8] sm:$0xff] %vm201, %v585
      %v589 = vld [vmem:[%s269] sm:$0xf]
      %v590 = vld [vmem:[%s269 + $0x8] sm:$0xf]
      %v591 = vld [vmem:[%s269 + $0x10] sm:$0xf]
      %v592 = vld [vmem:[%s269 + $0x18] sm:$0xf]
      %s593 = scalar_lea.vmem %s1, 128
      %v594 = vld [vmem:[%s593] sm:$0xff]
      %v595 = vld [vmem:[%s593 + $0x8] sm:$0xff]
      %v596 = vld [vmem:[%s593 + $0x10] sm:$0xff]
      %v597 = vld [vmem:[%s593 + $0x18] sm:$0xff]
      %v598 = vld [vmem:[%s269 + $0x1] sm:$0xf]
      %v599 = vld [vmem:[%s269 + $0x9] sm:$0xf]
      %v600 = vld [vmem:[%s269 + $0x11] sm:$0xf]
      %v601 = vld [vmem:[%s269 + $0x19] sm:$0xf]
      %s602 = scalar_lea.vmem %s1, 192
      %v603 = vld [vmem:[%s602] sm:$0xff]
      %v604 = vld [vmem:[%s602 + $0x8] sm:$0xff]
      %v605 = vld [vmem:[%s602 + $0x10] sm:$0xff]
      %v606 = vld [vmem:[%s602 + $0x18] sm:$0xff]
      %611 = vst [vmem:[#allocation1] ss:$2 sm:$0xff] %v598
      %s612 = scalar_lea.vmem [#allocation1], 1
      %613 = vst [vmem:[%s612] ss:$2 sm:$0xff] %v599
      %s614 = scalar_lea.vmem [#allocation1], 16
      %615 = vst [vmem:[%s614] ss:$2 sm:$0xff] %v600
      %s616 = scalar_lea.vmem [#allocation1], 17
      %617 = vst [vmem:[%s616] ss:$2 sm:$0xff] %v601
      %v618 = vld.sshfl [vmem:[#allocation1] sm:$0xff pattern:$0x75316420]
      %v619 = vld.sshfl [vmem:[#allocation1 + $0x10] sm:$0xff pattern:$0x75316420]
      %v620 = vsel %vm201, %v618, 0
      %v622 = vsel %vm201, %v619, 0
      %624 = vmatpush.msra.mxu0 0.0
      %625 = vmatpush.msra.mxu0 0.0
      %626 = vmatpush.msra.mxu0 0.0
      %627 = vmatpush.msra.mxu0 0.0
      %628 = vmatpush.msra.mxu0 0.0
      %629 = vmatpush.msra.mxu0 0.0
      %630 = vmatpush.msra.mxu0 0.0
      %631 = vmatpush.msra.mxu0 0.0
      %632 = vmatpush.msra.mxu0 0.0
      %633 = vmatpush.msra.mxu0 0.0
      %634 = vmatpush.msra.mxu0 0.0
      %635 = vmatpush.msra.mxu0 0.0
      %636 = vmatpush.msra.mxu0 %v606
      %637 = vmatpush.msra.mxu0 %v605
      %638 = vmatpush.msra.mxu0 %v604
      %639 = vmatpush.msra.mxu0 %v603
      %640 = vmatmul.f32.gmra.mxu0 %v620
      %v641 = vpop.f32.mrf.mxu0
      %v642 = vadd.f32 0.0, %v641
      %643 = vmatmul.f32.gmra.mxu0 %v622
      %v644 = vpop.f32.mrf.mxu0
      %v645 = vadd.f32 0.0, %v644
      %646 = vdwg.mxu0
      %651 = vst [vmem:[#allocation1] ss:$2 sm:$0xff] %v589
      %s652 = scalar_lea.vmem [#allocation1], 1
      %653 = vst [vmem:[%s652] ss:$2 sm:$0xff] %v590
      %s654 = scalar_lea.vmem [#allocation1], 16
      %655 = vst [vmem:[%s654] ss:$2 sm:$0xff] %v591
      %s656 = scalar_lea.vmem [#allocation1], 17
      %657 = vst [vmem:[%s656] ss:$2 sm:$0xff] %v592
      %v658 = vld.sshfl [vmem:[#allocation1] sm:$0xff pattern:$0x75316420]
      %v659 = vld.sshfl [vmem:[#allocation1 + $0x10] sm:$0xff pattern:$0x75316420]
      %v660 = vsel %vm201, %v658, 0
      %v662 = vsel %vm201, %v659, 0
      %664 = vmatpush.msra.mxu0 0.0
      %665 = vmatpush.msra.mxu0 0.0
      %666 = vmatpush.msra.mxu0 0.0
      %667 = vmatpush.msra.mxu0 0.0
      %668 = vmatpush.msra.mxu0 0.0
      %669 = vmatpush.msra.mxu0 0.0
      %670 = vmatpush.msra.mxu0 0.0
      %671 = vmatpush.msra.mxu0 0.0
      %672 = vmatpush.msra.mxu0 0.0
      %673 = vmatpush.msra.mxu0 0.0
      %674 = vmatpush.msra.mxu0 0.0
      %675 = vmatpush.msra.mxu0 0.0
      %676 = vmatpush.msra.mxu0 %v597
      %677 = vmatpush.msra.mxu0 %v596
      %678 = vmatpush.msra.mxu0 %v595
      %679 = vmatpush.msra.mxu0 %v594
      %680 = vmatmul.f32.gmra.mxu0 %v660
      %v681 = vpop.f32.mrf.mxu0
      %v682 = vadd.f32 %v642, %v681
      %683 = vmatmul.f32.gmra.mxu0 %v662
      %v684 = vpop.f32.mrf.mxu0
      %v685 = vadd.f32 %v645, %v684
      %686 = vdwg.mxu0
      %s687 = scalar_lea.vmem %s165, 16
      %v688 = vld [vmem:[%s687] sm:$0xf]
      %v689 = vld [vmem:[%s687 + $0x8] sm:$0xf]
      %v690 = vld [vmem:[%s687 + $0x10] sm:$0xf]
      %v691 = vld [vmem:[%s687 + $0x18] sm:$0xf]
      %s692 = scalar_lea.vmem %s1, 384
      %v693 = vld [vmem:[%s692] sm:$0xff]
      %v694 = vld [vmem:[%s692 + $0x8] sm:$0xff]
      %v695 = vld [vmem:[%s692 + $0x10] sm:$0xff]
      %v696 = vld [vmem:[%s692 + $0x18] sm:$0xff]
      %701 = vst [vmem:[#allocation1] ss:$2 sm:$0xff] %v688
      %s702 = scalar_lea.vmem [#allocation1], 1
      %703 = vst [vmem:[%s702] ss:$2 sm:$0xff] %v689
      %s704 = scalar_lea.vmem [#allocation1], 16
      %705 = vst [vmem:[%s704] ss:$2 sm:$0xff] %v690
      %s706 = scalar_lea.vmem [#allocation1], 17
      %707 = vst [vmem:[%s706] ss:$2 sm:$0xff] %v691
      %v708 = vld.sshfl [vmem:[#allocation1] sm:$0xff pattern:$0x75316420]
      %v709 = vld.sshfl [vmem:[#allocation1 + $0x10] sm:$0xff pattern:$0x75316420]
      %v710 = vsel %vm201, %v708, 0
      %v712 = vsel %vm201, %v709, 0
      %714 = vmatpush.msra.mxu0 0.0
      %715 = vmatpush.msra.mxu0 0.0
      %716 = vmatpush.msra.mxu0 0.0
      %717 = vmatpush.msra.mxu0 0.0
      %718 = vmatpush.msra.mxu0 0.0
      %719 = vmatpush.msra.mxu0 0.0
      %720 = vmatpush.msra.mxu0 0.0
      %721 = vmatpush.msra.mxu0 0.0
      %722 = vmatpush.msra.mxu0 0.0
      %723 = vmatpush.msra.mxu0 0.0
      %724 = vmatpush.msra.mxu0 0.0
      %725 = vmatpush.msra.mxu0 0.0
      %726 = vmatpush.msra.mxu0 %v696
      %727 = vmatpush.msra.mxu0 %v695
      %728 = vmatpush.msra.mxu0 %v694
      %729 = vmatpush.msra.mxu0 %v693
      %730 = vmatmul.f32.gmra.mxu0 %v710
      %v731 = vpop.f32.mrf.mxu0
      %v732 = vadd.f32 0.0, %v731
      %733 = vmatmul.f32.gmra.mxu0 %v712
      %v734 = vpop.f32.mrf.mxu0
      %v735 = vadd.f32 0.0, %v734
      %736 = vdwg.mxu0
      %v737 = vadd.f32 %v682, %v732
      %v738 = vadd.f32 %v685, %v735
      %v739 = vld [vmem:[%s687 + $0x1] sm:$0xf]
      %v740 = vld [vmem:[%s687 + $0x9] sm:$0xf]
      %v741 = vld [vmem:[%s687 + $0x11] sm:$0xf]
      %v742 = vld [vmem:[%s687 + $0x19] sm:$0xf]
      %s743 = scalar_lea.vmem %s1, 448
      %v744 = vld [vmem:[%s743] sm:$0xff]
      %v745 = vld [vmem:[%s743 + $0x8] sm:$0xff]
      %v746 = vld [vmem:[%s743 + $0x10] sm:$0xff]
      %v747 = vld [vmem:[%s743 + $0x18] sm:$0xff]
      %752 = vst [vmem:[#allocation1] ss:$2 sm:$0xff] %v739
      %s753 = scalar_lea.vmem [#allocation1], 1
      %754 = vst [vmem:[%s753] ss:$2 sm:$0xff] %v740
      %s755 = scalar_lea.vmem [#allocation1], 16
      %756 = vst [vmem:[%s755] ss:$2 sm:$0xff] %v741
      %s757 = scalar_lea.vmem [#allocation1], 17
      %758 = vst [vmem:[%s757] ss:$2 sm:$0xff] %v742
      %v759 = vld.sshfl [vmem:[#allocation1] sm:$0xff pattern:$0x75316420]
      %v760 = vld.sshfl [vmem:[#allocation1 + $0x10] sm:$0xff pattern:$0x75316420]
      %v761 = vsel %vm201, %v759, 0
      %v763 = vsel %vm201, %v760, 0
      %765 = vmatpush.msra.mxu0 0.0
      %766 = vmatpush.msra.mxu0 0.0
      %767 = vmatpush.msra.mxu0 0.0
      %768 = vmatpush.msra.mxu0 0.0
      %769 = vmatpush.msra.mxu0 0.0
      %770 = vmatpush.msra.mxu0 0.0
      %771 = vmatpush.msra.mxu0 0.0
      %772 = vmatpush.msra.mxu0 0.0
      %773 = vmatpush.msra.mxu0 0.0
      %774 = vmatpush.msra.mxu0 0.0
      %775 = vmatpush.msra.mxu0 0.0
      %776 = vmatpush.msra.mxu0 0.0
      %777 = vmatpush.msra.mxu0 %v747
      %778 = vmatpush.msra.mxu0 %v746
      %779 = vmatpush.msra.mxu0 %v745
      %780 = vmatpush.msra.mxu0 %v744
      %781 = vmatmul.f32.gmra.mxu0 %v761
      %v782 = vpop.f32.mrf.mxu0
      %v783 = vadd.f32 0.0, %v782
      %784 = vmatmul.f32.gmra.mxu0 %v763
      %v785 = vpop.f32.mrf.mxu0
      %v786 = vadd.f32 0.0, %v785
      %787 = vdwg.mxu0
      %v788 = vadd.f32 %v737, %v783
      %v789 = vadd.f32 %v738, %v786
      %v790 = vld [vmem:[%s2] sm:$0x1]
      %v792 = vperm.slane %v790, 0
      %v794 = vadd.f32 %v788, %v792
      %v795 = vadd.f32 %v789, %v792
      %s796 = scalar_lea.vmem %s170, 32
      %797 = vst.msk [vmem:[%s796] sm:$0xff] %vm201, %v794
      %798 = vst.msk [vmem:[%s796 + $0x8] sm:$0xff] %vm201, %v795
      %v799 = vld [vmem:[%s269 + $0x1] sm:$0xf]
      %v800 = vld [vmem:[%s269 + $0x9] sm:$0xf]
      %v801 = vld [vmem:[%s269 + $0x11] sm:$0xf]
      %v802 = vld [vmem:[%s269 + $0x19] sm:$0xf]
      %s803 = scalar_lea.vmem %s1, 160
      %v804 = vld [vmem:[%s803] sm:$0xff]
      %v805 = vld [vmem:[%s803 + $0x8] sm:$0xff]
      %v806 = vld [vmem:[%s803 + $0x10] sm:$0xff]
      %v807 = vld [vmem:[%s803 + $0x18] sm:$0xff]
      %v808 = vld [vmem:[%s269 + $0x2] sm:$0xf]
      %v809 = vld [vmem:[%s269 + $0xa] sm:$0xf]
      %v810 = vld [vmem:[%s269 + $0x12] sm:$0xf]
      %v811 = vld [vmem:[%s269 + $0x1a] sm:$0xf]
      %s812 = scalar_lea.vmem %s1, 224
      %v813 = vld [vmem:[%s812] sm:$0xff]
      %v814 = vld [vmem:[%s812 + $0x8] sm:$0xff]
      %v815 = vld [vmem:[%s812 + $0x10] sm:$0xff]
      %v816 = vld [vmem:[%s812 + $0x18] sm:$0xff]
      %821 = vst [vmem:[#allocation1] ss:$2 sm:$0xff] %v808
      %s822 = scalar_lea.vmem [#allocation1], 1
      %823 = vst [vmem:[%s822] ss:$2 sm:$0xff] %v809
      %s824 = scalar_lea.vmem [#allocation1], 16
      %825 = vst [vmem:[%s824] ss:$2 sm:$0xff] %v810
      %s826 = scalar_lea.vmem [#allocation1], 17
      %827 = vst [vmem:[%s826] ss:$2 sm:$0xff] %v811
      %v828 = vld.sshfl [vmem:[#allocation1] sm:$0xff pattern:$0x75316420]
      %v829 = vld.sshfl [vmem:[#allocation1 + $0x10] sm:$0xff pattern:$0x75316420]
      %v830 = vsel %vm201, %v828, 0
      %v832 = vsel %vm201, %v829, 0
      %834 = vmatpush.msra.mxu0 0.0
      %835 = vmatpush.msra.mxu0 0.0
      %836 = vmatpush.msra.mxu0 0.0
      %837 = vmatpush.msra.mxu0 0.0
      %838 = vmatpush.msra.mxu0 0.0
      %839 = vmatpush.msra.mxu0 0.0
      %840 = vmatpush.msra.mxu0 0.0
      %841 = vmatpush.msra.mxu0 0.0
      %842 = vmatpush.msra.mxu0 0.0
      %843 = vmatpush.msra.mxu0 0.0
      %844 = vmatpush.msra.mxu0 0.0
      %845 = vmatpush.msra.mxu0 0.0
      %846 = vmatpush.msra.mxu0 %v816
      %847 = vmatpush.msra.mxu0 %v815
      %848 = vmatpush.msra.mxu0 %v814
      %849 = vmatpush.msra.mxu0 %v813
      %850 = vmatmul.f32.gmra.mxu0 %v830
      %v851 = vpop.f32.mrf.mxu0
      %v852 = vadd.f32 0.0, %v851
      %853 = vmatmul.f32.gmra.mxu0 %v832
      %v854 = vpop.f32.mrf.mxu0
      %v855 = vadd.f32 0.0, %v854
      %856 = vdwg.mxu0
      %861 = vst [vmem:[#allocation1] ss:$2 sm:$0xff] %v799
      %s862 = scalar_lea.vmem [#allocation1], 1
      %863 = vst [vmem:[%s862] ss:$2 sm:$0xff] %v800
      %s864 = scalar_lea.vmem [#allocation1], 16
      %865 = vst [vmem:[%s864] ss:$2 sm:$0xff] %v801
      %s866 = scalar_lea.vmem [#allocation1], 17
      %867 = vst [vmem:[%s866] ss:$2 sm:$0xff] %v802
      %v868 = vld.sshfl [vmem:[#allocation1] sm:$0xff pattern:$0x75316420]
      %v869 = vld.sshfl [vmem:[#allocation1 + $0x10] sm:$0xff pattern:$0x75316420]
      %v870 = vsel %vm201, %v868, 0
      %v872 = vsel %vm201, %v869, 0
      %874 = vmatpush.msra.mxu0 0.0
      %875 = vmatpush.msra.mxu0 0.0
      %876 = vmatpush.msra.mxu0 0.0
      %877 = vmatpush.msra.mxu0 0.0
      %878 = vmatpush.msra.mxu0 0.0
      %879 = vmatpush.msra.mxu0 0.0
      %880 = vmatpush.msra.mxu0 0.0
      %881 = vmatpush.msra.mxu0 0.0
      %882 = vmatpush.msra.mxu0 0.0
      %883 = vmatpush.msra.mxu0 0.0
      %884 = vmatpush.msra.mxu0 0.0
      %885 = vmatpush.msra.mxu0 0.0
      %886 = vmatpush.msra.mxu0 %v807
      %887 = vmatpush.msra.mxu0 %v806
      %888 = vmatpush.msra.mxu0 %v805
      %889 = vmatpush.msra.mxu0 %v804
      %890 = vmatmul.f32.gmra.mxu0 %v870
      %v891 = vpop.f32.mrf.mxu0
      %v892 = vadd.f32 %v852, %v891
      %893 = vmatmul.f32.gmra.mxu0 %v872
      %v894 = vpop.f32.mrf.mxu0
      %v895 = vadd.f32 %v855, %v894
      %896 = vdwg.mxu0
      %v897 = vld [vmem:[%s687 + $0x1] sm:$0xf]
      %v898 = vld [vmem:[%s687 + $0x9] sm:$0xf]
      %v899 = vld [vmem:[%s687 + $0x11] sm:$0xf]
      %v900 = vld [vmem:[%s687 + $0x19] sm:$0xf]
      %s901 = scalar_lea.vmem %s1, 416
      %v902 = vld [vmem:[%s901] sm:$0xff]
      %v903 = vld [vmem:[%s901 + $0x8] sm:$0xff]
      %v904 = vld [vmem:[%s901 + $0x10] sm:$0xff]
      %v905 = vld [vmem:[%s901 + $0x18] sm:$0xff]
      %910 = vst [vmem:[#allocation1] ss:$2 sm:$0xff] %v897
      %s911 = scalar_lea.vmem [#allocation1], 1
      %912 = vst [vmem:[%s911] ss:$2 sm:$0xff] %v898
      %s913 = scalar_lea.vmem [#allocation1], 16
      %914 = vst [vmem:[%s913] ss:$2 sm:$0xff] %v899
      %s915 = scalar_lea.vmem [#allocation1], 17
      %916 = vst [vmem:[%s915] ss:$2 sm:$0xff] %v900
      %v917 = vld.sshfl [vmem:[#allocation1] sm:$0xff pattern:$0x75316420]
      %v918 = vld.sshfl [vmem:[#allocation1 + $0x10] sm:$0xff pattern:$0x75316420]
      %v919 = vsel %vm201, %v917, 0
      %v921 = vsel %vm201, %v918, 0
      %923 = vmatpush.msra.mxu0 0.0
      %924 = vmatpush.msra.mxu0 0.0
      %925 = vmatpush.msra.mxu0 0.0
      %926 = vmatpush.msra.mxu0 0.0
      %927 = vmatpush.msra.mxu0 0.0
      %928 = vmatpush.msra.mxu0 0.0
      %929 = vmatpush.msra.mxu0 0.0
      %930 = vmatpush.msra.mxu0 0.0
      %931 = vmatpush.msra.mxu0 0.0
      %932 = vmatpush.msra.mxu0 0.0
      %933 = vmatpush.msra.mxu0 0.0
      %934 = vmatpush.msra.mxu0 0.0
      %935 = vmatpush.msra.mxu0 %v905
      %936 = vmatpush.msra.mxu0 %v904
      %937 = vmatpush.msra.mxu0 %v903
      %938 = vmatpush.msra.mxu0 %v902
      %939 = vmatmul.f32.gmra.mxu0 %v919
      %v940 = vpop.f32.mrf.mxu0
      %v941 = vadd.f32 0.0, %v940
      %942 = vmatmul.f32.gmra.mxu0 %v921
      %v943 = vpop.f32.mrf.mxu0
      %v944 = vadd.f32 0.0, %v943
      %945 = vdwg.mxu0
      %v946 = vadd.f32 %v892, %v941
      %v947 = vadd.f32 %v895, %v944
      %v948 = vld [vmem:[%s687 + $0x2] sm:$0xf]
      %v949 = vld [vmem:[%s687 + $0xa] sm:$0xf]
      %v950 = vld [vmem:[%s687 + $0x12] sm:$0xf]
      %v951 = vld [vmem:[%s687 + $0x1a] sm:$0xf]
      %s952 = scalar_lea.vmem %s1, 480
      %v953 = vld [vmem:[%s952] sm:$0xff]
      %v954 = vld [vmem:[%s952 + $0x8] sm:$0xff]
      %v955 = vld [vmem:[%s952 + $0x10] sm:$0xff]
      %v956 = vld [vmem:[%s952 + $0x18] sm:$0xff]
      %961 = vst [vmem:[#allocation1] ss:$2 sm:$0xff] %v948
      %s962 = scalar_lea.vmem [#allocation1], 1
      %963 = vst [vmem:[%s962] ss:$2 sm:$0xff] %v949
      %s964 = scalar_lea.vmem [#allocation1], 16
      %965 = vst [vmem:[%s964] ss:$2 sm:$0xff] %v950
      %s966 = scalar_lea.vmem [#allocation1], 17
      %967 = vst [vmem:[%s966] ss:$2 sm:$0xff] %v951
      %v968 = vld.sshfl [vmem:[#allocation1] sm:$0xff pattern:$0x75316420]
      %v969 = vld.sshfl [vmem:[#allocation1 + $0x10] sm:$0xff pattern:$0x75316420]
      %v970 = vsel %vm201, %v968, 0
      %v972 = vsel %vm201, %v969, 0
      %974 = vmatpush.msra.mxu0 0.0
      %975 = vmatpush.msra.mxu0 0.0
      %976 = vmatpush.msra.mxu0 0.0
      %977 = vmatpush.msra.mxu0 0.0
      %978 = vmatpush.msra.mxu0 0.0
      %979 = vmatpush.msra.mxu0 0.0
      %980 = vmatpush.msra.mxu0 0.0
      %981 = vmatpush.msra.mxu0 0.0
      %982 = vmatpush.msra.mxu0 0.0
      %983 = vmatpush.msra.mxu0 0.0
      %984 = vmatpush.msra.mxu0 0.0
      %985 = vmatpush.msra.mxu0 0.0
      %986 = vmatpush.msra.mxu0 %v956
      %987 = vmatpush.msra.mxu0 %v955
      %988 = vmatpush.msra.mxu0 %v954
      %989 = vmatpush.msra.mxu0 %v953
      %990 = vmatmul.f32.gmra.mxu0 %v970
      %v991 = vpop.f32.mrf.mxu0
      %v992 = vadd.f32 0.0, %v991
      %993 = vmatmul.f32.gmra.mxu0 %v972
      %v994 = vpop.f32.mrf.mxu0
      %v995 = vadd.f32 0.0, %v994
      %996 = vdwg.mxu0
      %v997 = vadd.f32 %v946, %v992
      %v998 = vadd.f32 %v947, %v995
      %v999 = vld [vmem:[%s2] sm:$0x1]
      %v1001 = vperm.slane %v999, 0
      %v1003 = vadd.f32 %v997, %v1001
      %v1004 = vadd.f32 %v998, %v1001
      %s1005 = scalar_lea.vmem %s170, 48
      %1006 = vst.msk [vmem:[%s1005] sm:$0xff] %vm201, %v1003
      %1007 = vst.msk [vmem:[%s1005 + $0x8] sm:$0xff] %vm201, %v1004
      %p1008 = scmp.lt.s32.totalorder %s14, 1
      %s1009 = scalar_select %p1008, %s14, 1
      %s1010 = smul.addr %s1009, 8
      %s1011 = smul.addr %s1010, 8
      %s1012 = scalar_lea.vmem %s3, %s1011
      // Predicated region
      $region33: #{upblock_forward.2} parent=31 // pred_check
        %p1013 = pneg %p100
      $region34: #{upblock_forward.2} parent=31 // pred_check_branch
        %1015 = sbr.rel (%p1013) target = $region36
      $region35: #{upblock_forward.2} parent=31 // pred_region
        _
      $region36: #{upblock_forward.2} parent=31 // pred_fallthru
        _
    $region32: #{upblock_forward.2} parent=5 // pred_fallthru
      _
    %p1016 = scmp.le.s32.totalorder 2, %s9
    // Predicated region
    $region37: #{upblock_forward.2} parent=5 // pred_check
      %p1017 = pneg %p1016
    $region38: #{upblock_forward.2} parent=5 // pred_check_branch
      %1019 = sbr.rel (%p1017) target = $region40
    $region39: #{upblock_forward.2} parent=5 // pred_region
      %s1020 = ssub.s32 %s9, 2
      // Predicated region
      $region41: #{upblock_forward.2} parent=39 // pred_check
        %p1021 = pneg %p106
      $region42: #{upblock_forward.2} parent=39 // pred_check_branch
        %1023 = sbr.rel (%p1021) target = $region44
      $region43: #{upblock_forward.2} parent=39 // pred_region
        %p1024 = scmp.lt.s32.totalorder %s15, 1
        %s1025 = scalar_select %p1024, %s15, 1
        %s1026 = smul.addr %s1025, 8
        %s1027 = smul.addr %s1026, 8
        %s1028 = scalar_lea.vmem %s3, %s1027
      $region44: #{upblock_forward.2} parent=39 // pred_fallthru
        _
    $region40: #{upblock_forward.2} parent=5 // pred_fallthru
      _
  $region6: #{upblock_forward.2} parent=0 // loop_footer
    %s13 = sadd.s32 1, %s9
  $region7: #{upblock_forward.2} parent=0 // loop_footer_branch
    %8 = sbr.rel target = $region3
  $region8: #{upblock_forward.2} parent=0 // loop_exit
    _

// kernel: upblock_forward.3
$region0: #{upblock_forward.3}
  #allocation0 [shape = 'u32[]', space=smem, size = 0x4, offset = 0x4, fixed_abs, tag = 'smem constant byte address 0x4 - core index']
  #allocation1 [shape = 'u32[72,128]{1,0:T(1,128)}', space=vmem, size = 0x9000, scoped, tag = 'internal scratch']
  #allocation2 [shape = 'f32[2,10,10,32]{3,2,1,0:T(8,128)}', space=vmem, size = 0x28000, scoped, tag = 'scratch operand']
  %s0 = inlined_call_operand.vmem [shape: f32[2,10,10,32], index: 0, kind: input, shape index: {}]
  %s1 = inlined_call_operand.vmem [shape: f32[2,10,10,32], index: 1, kind: input, shape index: {}]
  %s2 = inlined_call_operand.vmem [shape: f32[3,3,32,32], index: 2, kind: input, shape index: {}]
  %s3 = inlined_call_operand.vmem [shape: f32[3,3,32,32], index: 3, kind: input, shape index: {}]
  %s4 = inlined_call_operand.vmem [shape: f32[3,3,32,32], index: 4, kind: input, shape index: {}]
  %s5 = inlined_call_operand.vmem [shape: f32[3,3,32,32], index: 5, kind: input, shape index: {}]
  %s6 = inlined_call_operand.vmem [shape: f32[3,3,32,32], index: 6, kind: input, shape index: {}]
  %s7 = inlined_call_operand.vmem [shape: f32[4,1,4], index: 7, kind: input, shape index: {}]
  %s8 = inlined_call_operand.vmem [shape: f32[4,1,4], index: 8, kind: input, shape index: {}]
  %s9 = inlined_call_operand.vmem [shape: f32[32,4], index: 9, kind: input, shape index: {}]
  %s10 = inlined_call_operand.vmem [shape: f32[4,32], index: 10, kind: input, shape index: {}]
  %s11 = inlined_call_operand.vmem [shape: f32[128,32], index: 11, kind: output, shape index: {}]
  %s12 = sld [smem:[#allocation0]]
  $region54: #{upblock_forward.3} parent=0
    _
  %s14 = ssub.s32 1, %s12
  %s15 = scalar_select 0, %s14, %s12
  // Predicated region
  $region2: #{upblock_forward.3} parent=0 // pred_check
    _
  $region3: #{upblock_forward.3} parent=0 // pred_check_branch
    %17 = sbr.rel (0) target = $region5
  $region4: #{upblock_forward.3} parent=0 // pred_region
    _
  $region5: #{upblock_forward.3} parent=0 // pred_fallthru
    _
  // Predicated region
  $region6: #{upblock_forward.3} parent=0 // pred_check
    _
  $region7: #{upblock_forward.3} parent=0 // pred_check_branch
    %19 = sbr.rel (0) target = $region9
  $region8: #{upblock_forward.3} parent=0 // pred_region
    _
  $region9: #{upblock_forward.3} parent=0 // pred_fallthru
    _
  // Predicated region
  $region10: #{upblock_forward.3} parent=0 // pred_check
    _
  $region11: #{upblock_forward.3} parent=0 // pred_check_branch
    %21 = sbr.rel (0) target = $region13
  $region12: #{upblock_forward.3} parent=0 // pred_region
    _
  $region13: #{upblock_forward.3} parent=0 // pred_fallthru
    _
  // Predicated region
  $region14: #{upblock_forward.3} parent=0 // pred_check
    _
  $region15: #{upblock_forward.3} parent=0 // pred_check_branch
    %23 = sbr.rel (0) target = $region17
  $region16: #{upblock_forward.3} parent=0 // pred_region
    _
  $region17: #{upblock_forward.3} parent=0 // pred_fallthru
    _
  // Predicated region
  $region18: #{upblock_forward.3} parent=0 // pred_check
    _
  $region19: #{upblock_forward.3} parent=0 // pred_check_branch
    %25 = sbr.rel (0) target = $region21
  $region20: #{upblock_forward.3} parent=0 // pred_region
    _
  $region21: #{upblock_forward.3} parent=0 // pred_fallthru
    _
  // Predicated region
  $region22: #{upblock_forward.3} parent=0 // pred_check
    _
  $region23: #{upblock_forward.3} parent=0 // pred_check_branch
    %27 = sbr.rel (0) target = $region25
  $region24: #{upblock_forward.3} parent=0 // pred_region
    _
  $region25: #{upblock_forward.3} parent=0 // pred_fallthru
    _
  // Predicated region
  $region26: #{upblock_forward.3} parent=0 // pred_check
    _
  $region27: #{upblock_forward.3} parent=0 // pred_check_branch
    %29 = sbr.rel (0) target = $region29
  $region28: #{upblock_forward.3} parent=0 // pred_region
    _
  $region29: #{upblock_forward.3} parent=0 // pred_fallthru
    _
  // Predicated region
  $region30: #{upblock_forward.3} parent=0 // pred_check
    _
  $region31: #{upblock_forward.3} parent=0 // pred_check_branch
    %31 = sbr.rel (0) target = $region33
  $region32: #{upblock_forward.3} parent=0 // pred_region
    _
  $region33: #{upblock_forward.3} parent=0 // pred_fallthru
    _
  // Predicated region
  $region34: #{upblock_forward.3} parent=0 // pred_check
    _
  $region35: #{upblock_forward.3} parent=0 // pred_check_branch
    %33 = sbr.rel (0) target = $region37
  $region36: #{upblock_forward.3} parent=0 // pred_region
    _
  $region37: #{upblock_forward.3} parent=0 // pred_fallthru
    _
  // Predicated region
  $region38: #{upblock_forward.3} parent=0 // pred_check
    _
  $region39: #{upblock_forward.3} parent=0 // pred_check_branch
    %35 = sbr.rel (0) target = $region41
  $region40: #{upblock_forward.3} parent=0 // pred_region
    _
  $region41: #{upblock_forward.3} parent=0 // pred_fallthru
    _
  // Predicated region
  $region42: #{upblock_forward.3} parent=0 // pred_check
    _
  $region43: #{upblock_forward.3} parent=0 // pred_check_branch
    %37 = sbr.rel (0) target = $region45
  $region44: #{upblock_forward.3} parent=0 // pred_region
    _
  $region45: #{upblock_forward.3} parent=0 // pred_fallthru
    _
  %vm38 = vcmask 261120
  %39 = vst.msk [vmem:[#allocation2] sm:$0xff] %vm38, 0.0
  %vm40 = vcmask 254976
  %41 = vst.msk [vmem:[#allocation2 + $0x8] sm:$0x3] %vm40, 0.0
  %42 = vst.msk [vmem:[#allocation2 + $0x10] sm:$0xff] %vm38, 0.0
  %43 = vst.msk [vmem:[#allocation2 + $0x18] sm:$0x3] %vm40, 0.0
  %44 = vst.msk [vmem:[#allocation2 + $0x20] sm:$0xff] %vm38, 0.0
  %45 = vst.msk [vmem:[#allocation2 + $0x28] sm:$0x3] %vm40, 0.0
  %46 = vst.msk [vmem:[#allocation2 + $0x30] sm:$0xff] %vm38, 0.0
  %47 = vst.msk [vmem:[#allocation2 + $0x38] sm:$0x3] %vm40, 0.0
  %48 = vst.msk [vmem:[#allocation2 + $0x40] sm:$0xff] %vm38, 0.0
  %49 = vst.msk [vmem:[#allocation2 + $0x48] sm:$0x3] %vm40, 0.0
  %50 = vst.msk [vmem:[#allocation2 + $0x50] sm:$0xff] %vm38, 0.0
  %51 = vst.msk [vmem:[#allocation2 + $0x58] sm:$0x3] %vm40, 0.0
  %52 = vst.msk [vmem:[#allocation2 + $0x60] sm:$0xff] %vm38, 0.0
  %53 = vst.msk [vmem:[#allocation2 + $0x68] sm:$0x3] %vm40, 0.0
  %54 = vst.msk [vmem:[#allocation2 + $0x70] sm:$0xff] %vm38, 0.0
  %55 = vst.msk [vmem:[#allocation2 + $0x78] sm:$0x3] %vm40, 0.0
  %56 = vst.msk [vmem:[#allocation2 + $0x80] sm:$0xff] %vm38, 0.0
  %57 = vst.msk [vmem:[#allocation2 + $0x88] sm:$0x3] %vm40, 0.0
  %58 = vst.msk [vmem:[#allocation2 + $0x90] sm:$0xff] %vm38, 0.0
  %59 = vst.msk [vmem:[#allocation2 + $0x98] sm:$0x3] %vm40, 0.0
  %60 = vst.msk [vmem:[#allocation2 + $0xa0] sm:$0xff] %vm38, 0.0
  %61 = vst.msk [vmem:[#allocation2 + $0xa8] sm:$0x3] %vm40, 0.0
  %62 = vst.msk [vmem:[#allocation2 + $0xb0] sm:$0xff] %vm38, 0.0
  %63 = vst.msk [vmem:[#allocation2 + $0xb8] sm:$0x3] %vm40, 0.0
  %64 = vst.msk [vmem:[#allocation2 + $0xc0] sm:$0xff] %vm38, 0.0
  %65 = vst.msk [vmem:[#allocation2 + $0xc8] sm:$0x3] %vm40, 0.0
  %66 = vst.msk [vmem:[#allocation2 + $0xd0] sm:$0xff] %vm38, 0.0
  %67 = vst.msk [vmem:[#allocation2 + $0xd8] sm:$0x3] %vm40, 0.0
  %68 = vst.msk [vmem:[#allocation2 + $0xe0] sm:$0xff] %vm38, 0.0
  %69 = vst.msk [vmem:[#allocation2 + $0xe8] sm:$0x3] %vm40, 0.0
  %70 = vst.msk [vmem:[#allocation2 + $0xf0] sm:$0xff] %vm38, 0.0
  %71 = vst.msk [vmem:[#allocation2 + $0xf8] sm:$0x3] %vm40, 0.0
  %72 = vst.msk [vmem:[#allocation2 + $0x100] sm:$0xff] %vm38, 0.0
  %73 = vst.msk [vmem:[#allocation2 + $0x108] sm:$0x3] %vm40, 0.0
  %74 = vst.msk [vmem:[#allocation2 + $0x110] sm:$0xff] %vm38, 0.0
  %75 = vst.msk [vmem:[#allocation2 + $0x118] sm:$0x3] %vm40, 0.0
  %76 = vst.msk [vmem:[#allocation2 + $0x120] sm:$0xff] %vm38, 0.0
  %77 = vst.msk [vmem:[#allocation2 + $0x128] sm:$0x3] %vm40, 0.0
  %78 = vst.msk [vmem:[#allocation2 + $0x130] sm:$0xff] %vm38, 0.0
  %79 = vst.msk [vmem:[#allocation2 + $0x138] sm:$0x3] %vm40, 0.0
  %v80 = vld [vmem:[%s0] sm:$0xff]
  %v81 = vld [vmem:[%s0 + $0x10] sm:$0xff]
  %v82 = vld [vmem:[%s0 + $0x20] sm:$0xff]
  %v83 = vld [vmem:[%s0 + $0x30] sm:$0xff]
  %v84 = vld [vmem:[%s0 + $0x40] sm:$0xff]
  %v85 = vld [vmem:[%s0 + $0x50] sm:$0xff]
  %v86 = vld [vmem:[%s0 + $0x60] sm:$0xff]
  %v87 = vld [vmem:[%s0 + $0x70] sm:$0xff]
  %v88 = vld [vmem:[%s0 + $0xa0] sm:$0xff]
  %v89 = vld [vmem:[%s0 + $0xb0] sm:$0xff]
  %v90 = vld [vmem:[%s0 + $0xc0] sm:$0xff]
  %v91 = vld [vmem:[%s0 + $0xd0] sm:$0xff]
  %v92 = vld [vmem:[%s0 + $0xe0] sm:$0xff]
  %v93 = vld [vmem:[%s0 + $0xf0] sm:$0xff]
  %v94 = vld [vmem:[%s0 + $0x100] sm:$0xff]
  %v95 = vld [vmem:[%s0 + $0x110] sm:$0xff]
  %v96 = vld [vmem:[%s2] sm:$0xff]
  %v97 = vld [vmem:[%s2 + $0x8] sm:$0xff]
  %v98 = vld [vmem:[%s2 + $0x10] sm:$0xff]
  %v99 = vld [vmem:[%s2 + $0x18] sm:$0xff]
  %v100 = vld [vmem:[%s0 + $0x1] sm:$0xff]
  %v101 = vld [vmem:[%s0 + $0x11] sm:$0xff]
  %v102 = vld [vmem:[%s0 + $0x21] sm:$0xff]
  %v103 = vld [vmem:[%s0 + $0x31] sm:$0xff]
  %v104 = vld [vmem:[%s0 + $0x41] sm:$0xff]
  %v105 = vld [vmem:[%s0 + $0x51] sm:$0xff]
  %v106 = vld [vmem:[%s0 + $0x61] sm:$0xff]
  %v107 = vld [vmem:[%s0 + $0x71] sm:$0xff]
  %v108 = vld [vmem:[%s0 + $0xa1] sm:$0xff]
  %v109 = vld [vmem:[%s0 + $0xb1] sm:$0xff]
  %v110 = vld [vmem:[%s0 + $0xc1] sm:$0xff]
  %v111 = vld [vmem:[%s0 + $0xd1] sm:$0xff]
  %v112 = vld [vmem:[%s0 + $0xe1] sm:$0xff]
  %v113 = vld [vmem:[%s0 + $0xf1] sm:$0xff]
  %v114 = vld [vmem:[%s0 + $0x101] sm:$0xff]
  %v115 = vld [vmem:[%s0 + $0x111] sm:$0xff]
  %s116 = scalar_lea.vmem %s2, 32
  %v117 = vld [vmem:[%s116] sm:$0xff]
  %v118 = vld [vmem:[%s116 + $0x8] sm:$0xff]
  %v119 = vld [vmem:[%s116 + $0x10] sm:$0xff]
  %v120 = vld [vmem:[%s116 + $0x18] sm:$0xff]
  %v122 = vsel %vm38, %v100, 0
  %v125 = vsel %vm38, %v101, 0
  %v128 = vsel %vm38, %v102, 0
  %v131 = vsel %vm38, %v103, 0
  %v134 = vsel %vm38, %v104, 0
  %v137 = vsel %vm38, %v105, 0
  %v140 = vsel %vm38, %v106, 0
  %v143 = vsel %vm38, %v107, 0
  %v146 = vsel %vm38, %v108, 0
  %v149 = vsel %vm38, %v109, 0
  %v152 = vsel %vm38, %v110, 0
  %v155 = vsel %vm38, %v111, 0
  %v158 = vsel %vm38, %v112, 0
  %v161 = vsel %vm38, %v113, 0
  %v164 = vsel %vm38, %v114, 0
  %v167 = vsel %vm38, %v115, 0
  %169 = vmatpush.msra.mxu0 0.0
  %170 = vmatpush.msra.mxu0 0.0
  %171 = vmatpush.msra.mxu0 0.0
  %172 = vmatpush.msra.mxu0 0.0
  %173 = vmatpush.msra.mxu0 0.0
  %174 = vmatpush.msra.mxu0 0.0
  %175 = vmatpush.msra.mxu0 0.0
  %176 = vmatpush.msra.mxu0 0.0
  %177 = vmatpush.msra.mxu0 0.0
  %178 = vmatpush.msra.mxu0 0.0
  %179 = vmatpush.msra.mxu0 0.0
  %180 = vmatpush.msra.mxu0 0.0
  %181 = vmatpush.msra.mxu0 %v120
  %182 = vmatpush.msra.mxu0 %v119
  %183 = vmatpush.msra.mxu0 %v118
  %184 = vmatpush.msra.mxu0 %v117
  %185 = vmatmul.f32.gmra.mxu0 %v122
  %v186 = vpop.f32.mrf.mxu0
  %v187 = vadd.f32 0.0, %v186
  %188 = vmatmul.f32.gmra.mxu0 %v125
  %v189 = vpop.f32.mrf.mxu0
  %v190 = vadd.f32 0.0, %v189
  %191 = vmatmul.f32.gmra.mxu0 %v128
  %v192 = vpop.f32.mrf.mxu0
  %v193 = vadd.f32 0.0, %v192
  %194 = vmatmul.f32.gmra.mxu0 %v131
  %v195 = vpop.f32.mrf.mxu0
  %v196 = vadd.f32 0.0, %v195
  %197 = vmatmul.f32.gmra.mxu0 %v134
  %v198 = vpop.f32.mrf.mxu0
  %v199 = vadd.f32 0.0, %v198
  %200 = vmatmul.f32.gmra.mxu0 %v137
  %v201 = vpop.f32.mrf.mxu0
  %v202 = vadd.f32 0.0, %v201
  %203 = vmatmul.f32.gmra.mxu0 %v140
  %v204 = vpop.f32.mrf.mxu0
  %v205 = vadd.f32 0.0, %v204
  %206 = vmatmul.f32.gmra.mxu0 %v143
  %v207 = vpop.f32.mrf.mxu0
  %v208 = vadd.f32 0.0, %v207
  %209 = vmatmul.f32.gmra.mxu0 %v146
  %v210 = vpop.f32.mrf.mxu0
  %v211 = vadd.f32 0.0, %v210
  %212 = vmatmul.f32.gmra.mxu0 %v149
  %v213 = vpop.f32.mrf.mxu0
  %v214 = vadd.f32 0.0, %v213
  %215 = vmatmul.f32.gmra.mxu0 %v152
  %v216 = vpop.f32.mrf.mxu0
  %v217 = vadd.f32 0.0, %v216
  %218 = vmatmul.f32.gmra.mxu0 %v155
  %v219 = vpop.f32.mrf.mxu0
  %v220 = vadd.f32 0.0, %v219
  %221 = vmatmul.f32.gmra.mxu0 %v158
  %v222 = vpop.f32.mrf.mxu0
  %v223 = vadd.f32 0.0, %v222
  %224 = vmatmul.f32.gmra.mxu0 %v161
  %v225 = vpop.f32.mrf.mxu0
  %v226 = vadd.f32 0.0, %v225
  %227 = vmatmul.f32.gmra.mxu0 %v164
  %v228 = vpop.f32.mrf.mxu0
  %v229 = vadd.f32 0.0, %v228
  %230 = vmatmul.f32.gmra.mxu0 %v167
  %v231 = vpop.f32.mrf.mxu0
  %v232 = vadd.f32 0.0, %v231
  %233 = vdwg.mxu0
  %v235 = vsel %vm38, %v80, 0
  %v238 = vsel %vm38, %v81, 0
  %v241 = vsel %vm38, %v82, 0
  %v244 = vsel %vm38, %v83, 0
  %v247 = vsel %vm38, %v84, 0
  %v250 = vsel %vm38, %v85, 0
  %v253 = vsel %vm38, %v86, 0
  %v256 = vsel %vm38, %v87, 0
  %v259 = vsel %vm38, %v88, 0
  %v262 = vsel %vm38, %v89, 0
  %v265 = vsel %vm38, %v90, 0
  %v268 = vsel %vm38, %v91, 0
  %v271 = vsel %vm38, %v92, 0
  %v274 = vsel %vm38, %v93, 0
  %v277 = vsel %vm38, %v94, 0
  %v280 = vsel %vm38, %v95, 0
  %282 = vmatpush.msra.mxu0 0.0
  %283 = vmatpush.msra.mxu0 0.0
  %284 = vmatpush.msra.mxu0 0.0
  %285 = vmatpush.msra.mxu0 0.0
  %286 = vmatpush.msra.mxu0 0.0
  %287 = vmatpush.msra.mxu0 0.0
  %288 = vmatpush.msra.mxu0 0.0
  %289 = vmatpush.msra.mxu0 0.0
  %290 = vmatpush.msra.mxu0 0.0
  %291 = vmatpush.msra.mxu0 0.0
  %292 = vmatpush.msra.mxu0 0.0
  %293 = vmatpush.msra.mxu0 0.0
  %294 = vmatpush.msra.mxu0 %v99
  %295 = vmatpush.msra.mxu0 %v98
  %296 = vmatpush.msra.mxu0 %v97
  %297 = vmatpush.msra.mxu0 %v96
  %298 = vmatmul.f32.gmra.mxu0 %v235
  %v299 = vpop.f32.mrf.mxu0
  %v300 = vadd.f32 %v187, %v299
  %301 = vmatmul.f32.gmra.mxu0 %v238
  %v302 = vpop.f32.mrf.mxu0
  %v303 = vadd.f32 %v190, %v302
  %304 = vmatmul.f32.gmra.mxu0 %v241
  %v305 = vpop.f32.mrf.mxu0
  %v306 = vadd.f32 %v193, %v305
  %307 = vmatmul.f32.gmra.mxu0 %v244
  %v308 = vpop.f32.mrf.mxu0
  %v309 = vadd.f32 %v196, %v308
  %310 = vmatmul.f32.gmra.mxu0 %v247
  %v311 = vpop.f32.mrf.mxu0
  %v312 = vadd.f32 %v199, %v311
  %313 = vmatmul.f32.gmra.mxu0 %v250
  %v314 = vpop.f32.mrf.mxu0
  %v315 = vadd.f32 %v202, %v314
  %316 = vmatmul.f32.gmra.mxu0 %v253
  %v317 = vpop.f32.mrf.mxu0
  %v318 = vadd.f32 %v205, %v317
  %319 = vmatmul.f32.gmra.mxu0 %v256
  %v320 = vpop.f32.mrf.mxu0
  %v321 = vadd.f32 %v208, %v320
  %322 = vmatmul.f32.gmra.mxu0 %v259
  %v323 = vpop.f32.mrf.mxu0
  %v324 = vadd.f32 %v211, %v323
  %325 = vmatmul.f32.gmra.mxu0 %v262
  %v326 = vpop.f32.mrf.mxu0
  %v327 = vadd.f32 %v214, %v326
  %328 = vmatmul.f32.gmra.mxu0 %v265
  %v329 = vpop.f32.mrf.mxu0
  %v330 = vadd.f32 %v217, %v329
  %331 = vmatmul.f32.gmra.mxu0 %v268
  %v332 = vpop.f32.mrf.mxu0
  %v333 = vadd.f32 %v220, %v332
  %334 = vmatmul.f32.gmra.mxu0 %v271
  %v335 = vpop.f32.mrf.mxu0
  %v336 = vadd.f32 %v223, %v335
  %337 = vmatmul.f32.gmra.mxu0 %v274
  %v338 = vpop.f32.mrf.mxu0
  %v339 = vadd.f32 %v226, %v338
  %340 = vmatmul.f32.gmra.mxu0 %v277
  %v341 = vpop.f32.mrf.mxu0
  %v342 = vadd.f32 %v229, %v341
  %343 = vmatmul.f32.gmra.mxu0 %v280
  %v344 = vpop.f32.mrf.mxu0
  %v345 = vadd.f32 %v232, %v344
  %346 = vdwg.mxu0
  %v347 = vld [vmem:[%s0 + $0x2] sm:$0xff]
  %v348 = vld [vmem:[%s0 + $0x12] sm:$0xff]
  %v349 = vld [vmem:[%s0 + $0x22] sm:$0xff]
  %v350 = vld [vmem:[%s0 + $0x32] sm:$0xff]
  %v351 = vld [vmem:[%s0 + $0x42] sm:$0xff]
  %v352 = vld [vmem:[%s0 + $0x52] sm:$0xff]
  %v353 = vld [vmem:[%s0 + $0x62] sm:$0xff]
  %v354 = vld [vmem:[%s0 + $0x72] sm:$0xff]
  %v355 = vld [vmem:[%s0 + $0xa2] sm:$0xff]
  %v356 = vld [vmem:[%s0 + $0xb2] sm:$0xff]
  %v357 = vld [vmem:[%s0 + $0xc2] sm:$0xff]
  %v358 = vld [vmem:[%s0 + $0xd2] sm:$0xff]
  %v359 = vld [vmem:[%s0 + $0xe2] sm:$0xff]
  %v360 = vld [vmem:[%s0 + $0xf2] sm:$0xff]
  %v361 = vld [vmem:[%s0 + $0x102] sm:$0xff]
  %v362 = vld [vmem:[%s0 + $0x112] sm:$0xff]
  %s363 = scalar_lea.vmem %s2, 64
  %v364 = vld [vmem:[%s363] sm:$0xff]
  %v365 = vld [vmem:[%s363 + $0x8] sm:$0xff]
  %v366 = vld [vmem:[%s363 + $0x10] sm:$0xff]
  %v367 = vld [vmem:[%s363 + $0x18] sm:$0xff]
  %v369 = vsel %vm38, %v347, 0
  %v372 = vsel %vm38, %v348, 0
  %v375 = vsel %vm38, %v349, 0
  %v378 = vsel %vm38, %v350, 0
  %v381 = vsel %vm38, %v351, 0
  %v384 = vsel %vm38, %v352, 0
  %v387 = vsel %vm38, %v353, 0
  %v390 = vsel %vm38, %v354, 0
  %v393 = vsel %vm38, %v355, 0
  %v396 = vsel %vm38, %v356, 0
  %v399 = vsel %vm38, %v357, 0
  %v402 = vsel %vm38, %v358, 0
  %v405 = vsel %vm38, %v359, 0
  %v408 = vsel %vm38, %v360, 0
  %v411 = vsel %vm38, %v361, 0
  %v414 = vsel %vm38, %v362, 0
  %416 = vmatpush.msra.mxu0 0.0
  %417 = vmatpush.msra.mxu0 0.0
  %418 = vmatpush.msra.mxu0 0.0
  %419 = vmatpush.msra.mxu0 0.0
  %420 = vmatpush.msra.mxu0 0.0
  %421 = vmatpush.msra.mxu0 0.0
  %422 = vmatpush.msra.mxu0 0.0
  %423 = vmatpush.msra.mxu0 0.0
  %424 = vmatpush.msra.mxu0 0.0
  %425 = vmatpush.msra.mxu0 0.0
  %426 = vmatpush.msra.mxu0 0.0
  %427 = vmatpush.msra.mxu0 0.0
  %428 = vmatpush.msra.mxu0 %v367
  %429 = vmatpush.msra.mxu0 %v366
  %430 = vmatpush.msra.mxu0 %v365
  %431 = vmatpush.msra.mxu0 %v364
  %432 = vmatmul.f32.gmra.mxu0 %v369
  %v433 = vpop.f32.mrf.mxu0
  %v434 = vadd.f32 0.0, %v433
  %435 = vmatmul.f32.gmra.mxu0 %v372
  %v436 = vpop.f32.mrf.mxu0
  %v437 = vadd.f32 0.0, %v436
  %438 = vmatmul.f32.gmra.mxu0 %v375
  %v439 = vpop.f32.mrf.mxu0
  %v440 = vadd.f32 0.0, %v439
  %441 = vmatmul.f32.gmra.mxu0 %v378
  %v442 = vpop.f32.mrf.mxu0
  %v443 = vadd.f32 0.0, %v442
  %444 = vmatmul.f32.gmra.mxu0 %v381
  %v445 = vpop.f32.mrf.mxu0
  %v446 = vadd.f32 0.0, %v445
  %447 = vmatmul.f32.gmra.mxu0 %v384
  %v448 = vpop.f32.mrf.mxu0
  %v449 = vadd.f32 0.0, %v448
  %450 = vmatmul.f32.gmra.mxu0 %v387
  %v451 = vpop.f32.mrf.mxu0
  %v452 = vadd.f32 0.0, %v451
  %453 = vmatmul.f32.gmra.mxu0 %v390
  %v454 = vpop.f32.mrf.mxu0
  %v455 = vadd.f32 0.0, %v454
  %456 = vmatmul.f32.gmra.mxu0 %v393
  %v457 = vpop.f32.mrf.mxu0
  %v458 = vadd.f32 0.0, %v457
  %459 = vmatmul.f32.gmra.mxu0 %v396
  %v460 = vpop.f32.mrf.mxu0
  %v461 = vadd.f32 0.0, %v460
  %462 = vmatmul.f32.gmra.mxu0 %v399
  %v463 = vpop.f32.mrf.mxu0
  %v464 = vadd.f32 0.0, %v463
  %465 = vmatmul.f32.gmra.mxu0 %v402
  %v466 = vpop.f32.mrf.mxu0
  %v467 = vadd.f32 0.0, %v466
  %468 = vmatmul.f32.gmra.mxu0 %v405
  %v469 = vpop.f32.mrf.mxu0
  %v470 = vadd.f32 0.0, %v469
  %471 = vmatmul.f32.gmra.mxu0 %v408
  %v472 = vpop.f32.mrf.mxu0
  %v473 = vadd.f32 0.0, %v472
  %474 = vmatmul.f32.gmra.mxu0 %v411
  %v475 = vpop.f32.mrf.mxu0
  %v476 = vadd.f32 0.0, %v475
  %477 = vmatmul.f32.gmra.mxu0 %v414
  %v478 = vpop.f32.mrf.mxu0
  %v479 = vadd.f32 0.0, %v478
  %480 = vdwg.mxu0
  %v481 = vadd.f32 %v300, %v434
  %v482 = vadd.f32 %v303, %v437
  %v483 = vadd.f32 %v306, %v440
  %v484 = vadd.f32 %v309, %v443
  %v485 = vadd.f32 %v312, %v446
  %v486 = vadd.f32 %v315, %v449
  %v487 = vadd.f32 %v318, %v452
  %v488 = vadd.f32 %v321, %v455
  %v489 = vadd.f32 %v324, %v458
  %v490 = vadd.f32 %v327, %v461
  %v491 = vadd.f32 %v330, %v464
  %v492 = vadd.f32 %v333, %v467
  %v493 = vadd.f32 %v336, %v470
  %v494 = vadd.f32 %v339, %v473
  %v495 = vadd.f32 %v342, %v476
  %v496 = vadd.f32 %v345, %v479
  %s497 = scalar_lea.vmem %s0, 16
  %v498 = vld [vmem:[%s497] sm:$0xff]
  %v499 = vld [vmem:[%s497 + $0x10] sm:$0xff]
  %v500 = vld [vmem:[%s497 + $0x20] sm:$0xff]
  %v501 = vld [vmem:[%s497 + $0x30] sm:$0xff]
  %v502 = vld [vmem:[%s497 + $0x40] sm:$0xff]
  %v503 = vld [vmem:[%s497 + $0x50] sm:$0xff]
  %v504 = vld [vmem:[%s497 + $0x60] sm:$0xff]
  %v505 = vld [vmem:[%s497 + $0x70] sm:$0xff]
  %v506 = vld [vmem:[%s497 + $0xa0] sm:$0xff]
  %v507 = vld [vmem:[%s497 + $0xb0] sm:$0xff]
  %v508 = vld [vmem:[%s497 + $0xc0] sm:$0xff]
  %v509 = vld [vmem:[%s497 + $0xd0] sm:$0xff]
  %v510 = vld [vmem:[%s497 + $0xe0] sm:$0xff]
  %v511 = vld [vmem:[%s497 + $0xf0] sm:$0xff]
  %v512 = vld [vmem:[%s497 + $0x100] sm:$0xff]
  %v513 = vld [vmem:[%s497 + $0x110] sm:$0xff]
  %s514 = scalar_lea.vmem %s2, 96
  %v515 = vld [vmem:[%s514] sm:$0xff]
  %v516 = vld [vmem:[%s514 + $0x8] sm:$0xff]
  %v517 = vld [vmem:[%s514 + $0x10] sm:$0xff]
  %v518 = vld [vmem:[%s514 + $0x18] sm:$0xff]
  %v520 = vsel %vm38, %v498, 0
  %v523 = vsel %vm38, %v499, 0
  %v526 = vsel %vm38, %v500, 0
  %v529 = vsel %vm38, %v501, 0
  %v532 = vsel %vm38, %v502, 0
  %v535 = vsel %vm38, %v503, 0
  %v538 = vsel %vm38, %v504, 0
  %v541 = vsel %vm38, %v505, 0
  %v544 = vsel %vm38, %v506, 0
  %v547 = vsel %vm38, %v507, 0
  %v550 = vsel %vm38, %v508, 0
  %v553 = vsel %vm38, %v509, 0
  %v556 = vsel %vm38, %v510, 0
  %v559 = vsel %vm38, %v511, 0
  %v562 = vsel %vm38, %v512, 0
  %v565 = vsel %vm38, %v513, 0
  %567 = vmatpush.msra.mxu0 0.0
  %568 = vmatpush.msra.mxu0 0.0
  %569 = vmatpush.msra.mxu0 0.0
  %570 = vmatpush.msra.mxu0 0.0
  %571 = vmatpush.msra.mxu0 0.0
  %572 = vmatpush.msra.mxu0 0.0
  %573 = vmatpush.msra.mxu0 0.0
  %574 = vmatpush.msra.mxu0 0.0
  %575 = vmatpush.msra.mxu0 0.0
  %576 = vmatpush.msra.mxu0 0.0
  %577 = vmatpush.msra.mxu0 0.0
  %578 = vmatpush.msra.mxu0 0.0
  %579 = vmatpush.msra.mxu0 %v518
  %580 = vmatpush.msra.mxu0 %v517
  %581 = vmatpush.msra.mxu0 %v516
  %582 = vmatpush.msra.mxu0 %v515
  %583 = vmatmul.f32.gmra.mxu0 %v520
  %v584 = vpop.f32.mrf.mxu0
  %v585 = vadd.f32 0.0, %v584
  %586 = vmatmul.f32.gmra.mxu0 %v523
  %v587 = vpop.f32.mrf.mxu0
  %v588 = vadd.f32 0.0, %v587
  %589 = vmatmul.f32.gmra.mxu0 %v526
  %v590 = vpop.f32.mrf.mxu0
  %v591 = vadd.f32 0.0, %v590
  %592 = vmatmul.f32.gmra.mxu0 %v529
  %v593 = vpop.f32.mrf.mxu0
  %v594 = vadd.f32 0.0, %v593
  %595 = vmatmul.f32.gmra.mxu0 %v532
  %v596 = vpop.f32.mrf.mxu0
  %v597 = vadd.f32 0.0, %v596
  %598 = vmatmul.f32.gmra.mxu0 %v535
  %v599 = vpop.f32.mrf.mxu0
  %v600 = vadd.f32 0.0, %v599
  %601 = vmatmul.f32.gmra.mxu0 %v538
  %v602 = vpop.f32.mrf.mxu0
  %v603 = vadd.f32 0.0, %v602
  %604 = vmatmul.f32.gmra.mxu0 %v541
  %v605 = vpop.f32.mrf.mxu0
  %v606 = vadd.f32 0.0, %v605
  %607 = vmatmul.f32.gmra.mxu0 %v544
  %v608 = vpop.f32.mrf.mxu0
  %v609 = vadd.f32 0.0, %v608
  %610 = vmatmul.f32.gmra.mxu0 %v547
  %v611 = vpop.f32.mrf.mxu0
  %v612 = vadd.f32 0.0, %v611
  %613 = vmatmul.f32.gmra.mxu0 %v550
  %v614 = vpop.f32.mrf.mxu0
  %v615 = vadd.f32 0.0, %v614
  %616 = vmatmul.f32.gmra.mxu0 %v553
  %v617 = vpop.f32.mrf.mxu0
  %v618 = vadd.f32 0.0, %v617
  %619 = vmatmul.f32.gmra.mxu0 %v556
  %v620 = vpop.f32.mrf.mxu0
  %v621 = vadd.f32 0.0, %v620
  %622 = vmatmul.f32.gmra.mxu0 %v559
  %v623 = vpop.f32.mrf.mxu0
  %v624 = vadd.f32 0.0, %v623
  %625 = vmatmul.f32.gmra.mxu0 %v562
  %v626 = vpop.f32.mrf.mxu0
  %v627 = vadd.f32 0.0, %v626
  %628 = vmatmul.f32.gmra.mxu0 %v565
  %v629 = vpop.f32.mrf.mxu0
  %v630 = vadd.f32 0.0, %v629
  %631 = vdwg.mxu0
  %v632 = vadd.f32 %v481, %v585
  %v633 = vadd.f32 %v482, %v588
  %v634 = vadd.f32 %v483, %v591
  %v635 = vadd.f32 %v484, %v594
  %v636 = vadd.f32 %v485, %v597
  %v637 = vadd.f32 %v486, %v600
  %v638 = vadd.f32 %v487, %v603
  %v639 = vadd.f32 %v488, %v606
  %v640 = vadd.f32 %v489, %v609
  %v641 = vadd.f32 %v490, %v612
  %v642 = vadd.f32 %v491, %v615
  %v643 = vadd.f32 %v492, %v618
  %v644 = vadd.f32 %v493, %v621
  %v645 = vadd.f32 %v494, %v624
  %v646 = vadd.f32 %v495, %v627
  %v647 = vadd.f32 %v496, %v630
  %v648 = vld [vmem:[%s497 + $0x1] sm:$0xff]
  %v649 = vld [vmem:[%s497 + $0x11] sm:$0xff]
  %v650 = vld [vmem:[%s497 + $0x21] sm:$0xff]
  %v651 = vld [vmem:[%s497 + $0x31] sm:$0xff]
  %v652 = vld [vmem:[%s497 + $0x41] sm:$0xff]
  %v653 = vld [vmem:[%s497 + $0x51] sm:$0xff]
  %v654 = vld [vmem:[%s497 + $0x61] sm:$0xff]
  %v655 = vld [vmem:[%s497 + $0x71] sm:$0xff]
  %v656 = vld [vmem:[%s497 + $0xa1] sm:$0xff]
  %v657 = vld [vmem:[%s497 + $0xb1] sm:$0xff]
  %v658 = vld [vmem:[%s497 + $0xc1] sm:$0xff]
  %v659 = vld [vmem:[%s497 + $0xd1] sm:$0xff]
  %v660 = vld [vmem:[%s497 + $0xe1] sm:$0xff]
  %v661 = vld [vmem:[%s497 + $0xf1] sm:$0xff]
  %v662 = vld [vmem:[%s497 + $0x101] sm:$0xff]
  %v663 = vld [vmem:[%s497 + $0x111] sm:$0xff]
  %s664 = scalar_lea.vmem %s2, 128
  %v665 = vld [vmem:[%s664] sm:$0xff]
  %v666 = vld [vmem:[%s664 + $0x8] sm:$0xff]
  %v667 = vld [vmem:[%s664 + $0x10] sm:$0xff]
  %v668 = vld [vmem:[%s664 + $0x18] sm:$0xff]
  %v670 = vsel %vm38, %v648, 0
  %v673 = vsel %vm38, %v649, 0
  %v676 = vsel %vm38, %v650, 0
  %v679 = vsel %vm38, %v651, 0
  %v682 = vsel %vm38, %v652, 0
  %v685 = vsel %vm38, %v653, 0
  %v688 = vsel %vm38, %v654, 0
  %v691 = vsel %vm38, %v655, 0
  %v694 = vsel %vm38, %v656, 0
  %v697 = vsel %vm38, %v657, 0
  %v700 = vsel %vm38, %v658, 0
  %v703 = vsel %vm38, %v659, 0
  %v706 = vsel %vm38, %v660, 0
  %v709 = vsel %vm38, %v661, 0
  %v712 = vsel %vm38, %v662, 0
  %v715 = vsel %vm38, %v663, 0
  %717 = vmatpush.msra.mxu0 0.0
  %718 = vmatpush.msra.mxu0 0.0
  %719 = vmatpush.msra.mxu0 0.0
  %720 = vmatpush.msra.mxu0 0.0
  %721 = vmatpush.msra.mxu0 0.0
  %722 = vmatpush.msra.mxu0 0.0
  %723 = vmatpush.msra.mxu0 0.0
  %724 = vmatpush.msra.mxu0 0.0
  %725 = vmatpush.msra.mxu0 0.0
  %726 = vmatpush.msra.mxu0 0.0
  %727 = vmatpush.msra.mxu0 0.0
  %728 = vmatpush.msra.mxu0 0.0
  %729 = vmatpush.msra.mxu0 %v668
  %730 = vmatpush.msra.mxu0 %v667
  %731 = vmatpush.msra.mxu0 %v666
  %732 = vmatpush.msra.mxu0 %v665
  %733 = vmatmul.f32.gmra.mxu0 %v670
  %v734 = vpop.f32.mrf.mxu0
  %v735 = vadd.f32 0.0, %v734
  %736 = vmatmul.f32.gmra.mxu0 %v673
  %v737 = vpop.f32.mrf.mxu0
  %v738 = vadd.f32 0.0, %v737
  %739 = vmatmul.f32.gmra.mxu0 %v676
  %v740 = vpop.f32.mrf.mxu0
  %v741 = vadd.f32 0.0, %v740
  %742 = vmatmul.f32.gmra.mxu0 %v679
  %v743 = vpop.f32.mrf.mxu0
  %v744 = vadd.f32 0.0, %v743
  %745 = vmatmul.f32.gmra.mxu0 %v682
  %v746 = vpop.f32.mrf.mxu0
  %v747 = vadd.f32 0.0, %v746
  %748 = vmatmul.f32.gmra.mxu0 %v685
  %v749 = vpop.f32.mrf.mxu0
  %v750 = vadd.f32 0.0, %v749
  %751 = vmatmul.f32.gmra.mxu0 %v688
  %v752 = vpop.f32.mrf.mxu0
  %v753 = vadd.f32 0.0, %v752
  %754 = vmatmul.f32.gmra.mxu0 %v691
  %v755 = vpop.f32.mrf.mxu0
  %v756 = vadd.f32 0.0, %v755
  %757 = vmatmul.f32.gmra.mxu0 %v694
  %v758 = vpop.f32.mrf.mxu0
  %v759 = vadd.f32 0.0, %v758
  %760 = vmatmul.f32.gmra.mxu0 %v697
  %v761 = vpop.f32.mrf.mxu0
  %v762 = vadd.f32 0.0, %v761
  %763 = vmatmul.f32.gmra.mxu0 %v700
  %v764 = vpop.f32.mrf.mxu0
  %v765 = vadd.f32 0.0, %v764
  %766 = vmatmul.f32.gmra.mxu0 %v703
  %v767 = vpop.f32.mrf.mxu0
  %v768 = vadd.f32 0.0, %v767
  %769 = vmatmul.f32.gmra.mxu0 %v706
  %v770 = vpop.f32.mrf.mxu0
  %v771 = vadd.f32 0.0, %v770
  %772 = vmatmul.f32.gmra.mxu0 %v709
  %v773 = vpop.f32.mrf.mxu0
  %v774 = vadd.f32 0.0, %v773
  %775 = vmatmul.f32.gmra.mxu0 %v712
  %v776 = vpop.f32.mrf.mxu0
  %v777 = vadd.f32 0.0, %v776
  %778 = vmatmul.f32.gmra.mxu0 %v715
  %v779 = vpop.f32.mrf.mxu0
  %v780 = vadd.f32 0.0, %v779
  %781 = vdwg.mxu0
  %v782 = vadd.f32 %v632, %v735
  %v783 = vadd.f32 %v633, %v738
  %v784 = vadd.f32 %v634, %v741
  %v785 = vadd.f32 %v635, %v744
  %v786 = vadd.f32 %v636, %v747
  %v787 = vadd.f32 %v637, %v750
  %v788 = vadd.f32 %v638, %v753
  %v789 = vadd.f32 %v639, %v756
  %v790 = vadd.f32 %v640, %v759
  %v791 = vadd.f32 %v641, %v762
  %v792 = vadd.f32 %v642, %v765
  %v793 = vadd.f32 %v643, %v768
  %v794 = vadd.f32 %v644, %v771
  %v795 = vadd.f32 %v645, %v774
  %v796 = vadd.f32 %v646, %v777
  %v797 = vadd.f32 %v647, %v780
  %v798 = vld [vmem:[%s497 + $0x2] sm:$0xff]
  %v799 = vld [vmem:[%s497 + $0x12] sm:$0xff]
  %v800 = vld [vmem:[%s497 + $0x22] sm:$0xff]
  %v801 = vld [vmem:[%s497 + $0x32] sm:$0xff]
  %v802 = vld [vmem:[%s497 + $0x42] sm:$0xff]
  %v803 = vld [vmem:[%s497 + $0x52] sm:$0xff]
  %v804 = vld [vmem:[%s497 + $0x62] sm:$0xff]
  %v805 = vld [vmem:[%s497 + $0x72] sm:$0xff]
  %v806 = vld [vmem:[%s497 + $0xa2] sm:$0xff]
  %v807 = vld [vmem:[%s497 + $0xb2] sm:$0xff]
  %v808 = vld [vmem:[%s497 + $0xc2] sm:$0xff]
  %v809 = vld [vmem:[%s497 + $0xd2] sm:$0xff]
  %v810 = vld [vmem:[%s497 + $0xe2] sm:$0xff]
  %v811 = vld [vmem:[%s497 + $0xf2] sm:$0xff]
  %v812 = vld [vmem:[%s497 + $0x102] sm:$0xff]
  %v813 = vld [vmem:[%s497 + $0x112] sm:$0xff]
  %s814 = scalar_lea.vmem %s2, 160
  %v815 = vld [vmem:[%s814] sm:$0xff]
  %v816 = vld [vmem:[%s814 + $0x8] sm:$0xff]
  %v817 = vld [vmem:[%s814 + $0x10] sm:$0xff]
  %v818 = vld [vmem:[%s814 + $0x18] sm:$0xff]
  %v820 = vsel %vm38, %v798, 0
  %v823 = vsel %vm38, %v799, 0
  %v826 = vsel %vm38, %v800, 0
  %v829 = vsel %vm38, %v801, 0
  %v832 = vsel %vm38, %v802, 0
  %v835 = vsel %vm38, %v803, 0
  %v838 = vsel %vm38, %v804, 0
  %v841 = vsel %vm38, %v805, 0
  %v844 = vsel %vm38, %v806, 0
  %v847 = vsel %vm38, %v807, 0
  %v850 = vsel %vm38, %v808, 0
  %v853 = vsel %vm38, %v809, 0
  %v856 = vsel %vm38, %v810, 0
  %v859 = vsel %vm38, %v811, 0
  %v862 = vsel %vm38, %v812, 0
  %v865 = vsel %vm38, %v813, 0
  %867 = vmatpush.msra.mxu0 0.0
  %868 = vmatpush.msra.mxu0 0.0
  %869 = vmatpush.msra.mxu0 0.0
  %870 = vmatpush.msra.mxu0 0.0
  %871 = vmatpush.msra.mxu0 0.0
  %872 = vmatpush.msra.mxu0 0.0
  %873 = vmatpush.msra.mxu0 0.0
  %874 = vmatpush.msra.mxu0 0.0
  %875 = vmatpush.msra.mxu0 0.0
  %876 = vmatpush.msra.mxu0 0.0
  %877 = vmatpush.msra.mxu0 0.0
  %878 = vmatpush.msra.mxu0 0.0
  %879 = vmatpush.msra.mxu0 %v818
  %880 = vmatpush.msra.mxu0 %v817
  %881 = vmatpush.msra.mxu0 %v816
  %882 = vmatpush.msra.mxu0 %v815
  %883 = vmatmul.f32.gmra.mxu0 %v820
  %v884 = vpop.f32.mrf.mxu0
  %v885 = vadd.f32 0.0, %v884
  %886 = vmatmul.f32.gmra.mxu0 %v823
  %v887 = vpop.f32.mrf.mxu0
  %v888 = vadd.f32 0.0, %v887
  %889 = vmatmul.f32.gmra.mxu0 %v826
  %v890 = vpop.f32.mrf.mxu0
  %v891 = vadd.f32 0.0, %v890
  %892 = vmatmul.f32.gmra.mxu0 %v829
  %v893 = vpop.f32.mrf.mxu0
  %v894 = vadd.f32 0.0, %v893
  %895 = vmatmul.f32.gmra.mxu0 %v832
  %v896 = vpop.f32.mrf.mxu0
  %v897 = vadd.f32 0.0, %v896
  %898 = vmatmul.f32.gmra.mxu0 %v835
  %v899 = vpop.f32.mrf.mxu0
  %v900 = vadd.f32 0.0, %v899
  %901 = vmatmul.f32.gmra.mxu0 %v838
  %v902 = vpop.f32.mrf.mxu0
  %v903 = vadd.f32 0.0, %v902
  %904 = vmatmul.f32.gmra.mxu0 %v841
  %v905 = vpop.f32.mrf.mxu0
  %v906 = vadd.f32 0.0, %v905
  %907 = vmatmul.f32.gmra.mxu0 %v844
  %v908 = vpop.f32.mrf.mxu0
  %v909 = vadd.f32 0.0, %v908
  %910 = vmatmul.f32.gmra.mxu0 %v847
  %v911 = vpop.f32.mrf.mxu0
  %v912 = vadd.f32 0.0, %v911
  %913 = vmatmul.f32.gmra.mxu0 %v850
  %v914 = vpop.f32.mrf.mxu0
  %v915 = vadd.f32 0.0, %v914
  %916 = vmatmul.f32.gmra.mxu0 %v853
  %v917 = vpop.f32.mrf.mxu0
  %v918 = vadd.f32 0.0, %v917
  %919 = vmatmul.f32.gmra.mxu0 %v856
  %v920 = vpop.f32.mrf.mxu0
  %v921 = vadd.f32 0.0, %v920
  %922 = vmatmul.f32.gmra.mxu0 %v859
  %v923 = vpop.f32.mrf.mxu0
  %v924 = vadd.f32 0.0, %v923
  %925 = vmatmul.f32.gmra.mxu0 %v862
  %v926 = vpop.f32.mrf.mxu0
  %v927 = vadd.f32 0.0, %v926
  %928 = vmatmul.f32.gmra.mxu0 %v865
  %v929 = vpop.f32.mrf.mxu0
  %v930 = vadd.f32 0.0, %v929
  %931 = vdwg.mxu0
  %v932 = vadd.f32 %v782, %v885
  %v933 = vadd.f32 %v783, %v888
  %v934 = vadd.f32 %v784, %v891
  %v935 = vadd.f32 %v785, %v894
  %v936 = vadd.f32 %v786, %v897
  %v937 = vadd.f32 %v787, %v900
  %v938 = vadd.f32 %v788, %v903
  %v939 = vadd.f32 %v789, %v906
  %v940 = vadd.f32 %v790, %v909
  %v941 = vadd.f32 %v791, %v912
  %v942 = vadd.f32 %v792, %v915
  %v943 = vadd.f32 %v793, %v918
  %v944 = vadd.f32 %v794, %v921
  %v945 = vadd.f32 %v795, %v924
  %v946 = vadd.f32 %v796, %v927
  %v947 = vadd.f32 %v797, %v930
  %s948 = scalar_lea.vmem %s0, 32
  %v949 = vld [vmem:[%s948] sm:$0xff]
  %v950 = vld [vmem:[%s948 + $0x10] sm:$0xff]
  %v951 = vld [vmem:[%s948 + $0x20] sm:$0xff]
  %v952 = vld [vmem:[%s948 + $0x30] sm:$0xff]
  %v953 = vld [vmem:[%s948 + $0x40] sm:$0xff]
  %v954 = vld [vmem:[%s948 + $0x50] sm:$0xff]
  %v955 = vld [vmem:[%s948 + $0x60] sm:$0xff]
  %v956 = vld [vmem:[%s948 + $0x70] sm:$0xff]
  %v957 = vld [vmem:[%s948 + $0xa0] sm:$0xff]
  %v958 = vld [vmem:[%s948 + $0xb0] sm:$0xff]
  %v959 = vld [vmem:[%s948 + $0xc0] sm:$0xff]
  %v960 = vld [vmem:[%s948 + $0xd0] sm:$0xff]
  %v961 = vld [vmem:[%s948 + $0xe0] sm:$0xff]
  %v962 = vld [vmem:[%s948 + $0xf0] sm:$0xff]
  %v963 = vld [vmem:[%s948 + $0x100] sm:$0xff]
  %v964 = vld [vmem:[%s948 + $0x110] sm:$0xff]
  %s965 = scalar_lea.vmem %s2, 192
  %v966 = vld [vmem:[%s965] sm:$0xff]
  %v967 = vld [vmem:[%s965 + $0x8] sm:$0xff]
  %v968 = vld [vmem:[%s965 + $0x10] sm:$0xff]
  %v969 = vld [vmem:[%s965 + $0x18] sm:$0xff]
  %v971 = vsel %vm38, %v949, 0
  %v974 = vsel %vm38, %v950, 0
  %v977 = vsel %vm38, %v951, 0
  %v980 = vsel %vm38, %v952, 0
  %v983 = vsel %vm38, %v953, 0
  %v986 = vsel %vm38, %v954, 0
  %v989 = vsel %vm38, %v955, 0
  %v992 = vsel %vm38, %v956, 0
  %v995 = vsel %vm38, %v957, 0
  %v998 = vsel %vm38, %v958, 0
  %v1001 = vsel %vm38, %v959, 0
  %v1004 = vsel %vm38, %v960, 0
  %v1007 = vsel %vm38, %v961, 0
  %v1010 = vsel %vm38, %v962, 0
  %v1013 = vsel %vm38, %v963, 0
  %v1016 = vsel %vm38, %v964, 0
  %1018 = vmatpush.msra.mxu0 0.0
  %1019 = vmatpush.msra.mxu0 0.0
  %1020 = vmatpush.msra.mxu0 0.0
  %1021 = vmatpush.msra.mxu0 0.0
  %1022 = vmatpush.msra.mxu0 0.0
  %1023 = vmatpush.msra.mxu0 0.0
  %1024 = vmatpush.msra.mxu0 0.0
  %1025 = vmatpush.msra.mxu0 0.0
  %1026 = vmatpush.msra.mxu0 0.0
  %1027 = vmatpush.msra.mxu0 0.0
  %1028 = vmatpush.msra.mxu0 0.0
  %1029 = vmatpush.msra.mxu0 0.0
  %1030 = vmatpush.msra.mxu0 %v969
  %1031 = vmatpush.msra.mxu0 %v968
  %1032 = vmatpush.msra.mxu0 %v967
  %1033 = vmatpush.msra.mxu0 %v966
  %1034 = vmatmul.f32.gmra.mxu0 %v971
  %v1035 = vpop.f32.mrf.mxu0
  %v1036 = vadd.f32 0.0, %v1035
  %1037 = vmatmul.f32.gmra.mxu0 %v974
  %v1038 = vpop.f32.mrf.mxu0
  %v1039 = vadd.f32 0.0, %v1038
  %1040 = vmatmul.f32.gmra.mxu0 %v977
  %v1041 = vpop.f32.mrf.mxu0
  %v1042 = vadd.f32 0.0, %v1041
  %1043 = vmatmul.f32.gmra.mxu0 %v980
  %v1044 = vpop.f32.mrf.mxu0
  %v1045 = vadd.f32 0.0, %v1044
  %1046 = vmatmul.f32.gmra.mxu0 %v983
  %v1047 = vpop.f32.mrf.mxu0
  %v1048 = vadd.f32 0.0, %v1047
  %1049 = vmatmul.f32.gmra.mxu0 %v986
  %v1050 = vpop.f32.mrf.mxu0
  %v1051 = vadd.f32 0.0, %v1050
  %1052 = vmatmul.f32.gmra.mxu0 %v989
  %v1053 = vpop.f32.mrf.mxu0
  %v1054 = vadd.f32 0.0, %v1053
  %1055 = vmatmul.f32.gmra.mxu0 %v992
  %v1056 = vpop.f32.mrf.mxu0
  %v1057 = vadd.f32 0.0, %v1056
  %1058 = vmatmul.f32.gmra.mxu0 %v995
  %v1059 = vpop.f32.mrf.mxu0
  %v1060 = vadd.f32 0.0, %v1059
  %1061 = vmatmul.f32.gmra.mxu0 %v998
  %v1062 = vpop.f32.mrf.mxu0
  %v1063 = vadd.f32 0.0, %v1062
  %1064 = vmatmul.f32.gmra.mxu0 %v1001
  %v1065 = vpop.f32.mrf.mxu0
  %v1066 = vadd.f32 0.0, %v1065
  %1067 = vmatmul.f32.gmra.mxu0 %v1004
  %v1068 = vpop.f32.mrf.mxu0
  %v1069 = vadd.f32 0.0, %v1068
  %1070 = vmatmul.f32.gmra.mxu0 %v1007
  %v1071 = vpop.f32.mrf.mxu0
  %v1072 = vadd.f32 0.0, %v1071
  %1073 = vmatmul.f32.gmra.mxu0 %v1010
  %v1074 = vpop.f32.mrf.mxu0
  %v1075 = vadd.f32 0.0, %v1074
  %1076 = vmatmul.f32.gmra.mxu0 %v1013
  %v1077 = vpop.f32.mrf.mxu0
  %v1078 = vadd.f32 0.0, %v1077
  %1079 = vmatmul.f32.gmra.mxu0 %v1016
  %v1080 = vpop.f32.mrf.mxu0
  %v1081 = vadd.f32 0.0, %v1080
  %1082 = vdwg.mxu0
  %v1083 = vadd.f32 %v932, %v1036
  %v1084 = vadd.f32 %v933, %v1039
  %v1085 = vadd.f32 %v934, %v1042
  %v1086 = vadd.f32 %v935, %v1045
  %v1087 = vadd.f32 %v936, %v1048
  %v1088 = vadd.f32 %v937, %v1051
  %v1089 = vadd.f32 %v938, %v1054
  %v1090 = vadd.f32 %v939, %v1057
  %v1091 = vadd.f32 %v940, %v1060
  %v1092 = vadd.f32 %v941, %v1063
  %v1093 = vadd.f32 %v942, %v1066
  %v1094 = vadd.f32 %v943, %v1069
  %v1095 = vadd.f32 %v944, %v1072
  %v1096 = vadd.f32 %v945, %v1075
  %v1097 = vadd.f32 %v946, %v1078
  %v1098 = vadd.f32 %v947, %v1081
  %v1099 = vld [vmem:[%s948 + $0x1] sm:$0xff]
  %v1100 = vld [vmem:[%s948 + $0x11] sm:$0xff]
  %v1101 = vld [vmem:[%s948 + $0x21] sm:$0xff]
  %v1102 = vld [vmem:[%s948 + $0x31] sm:$0xff]
  %v1103 = vld [vmem:[%s948 + $0x41] sm:$0xff]
  %v1104 = vld [vmem:[%s948 + $0x51] sm:$0xff]
  %v1105 = vld [vmem:[%s948 + $0x61] sm:$0xff]
  %v1106 = vld [vmem:[%s948 + $0x71] sm:$0xff]
  %v1107 = vld [vmem:[%s948 + $0xa1] sm:$0xff]
  %v1108 = vld [vmem:[%s948 + $0xb1] sm:$0xff]
  %v1109 = vld [vmem:[%s948 + $0xc1] sm:$0xff]
  %v1110 = vld [vmem:[%s948 + $0xd1] sm:$0xff]
  %v1111 = vld [vmem:[%s948 + $0xe1] sm:$0xff]
  %v1112 = vld [vmem:[%s948 + $0xf1] sm:$0xff]
  %v1113 = vld [vmem:[%s948 + $0x101] sm:$0xff]
  %v1114 = vld [vmem:[%s948 + $0x111] sm:$0xff]
  %s1115 = scalar_lea.vmem %s2, 224
  %v1116 = vld [vmem:[%s1115] sm:$0xff]
  %v1117 = vld [vmem:[%s1115 + $0x8] sm:$0xff]
  %v1118 = vld [vmem:[%s1115 + $0x10] sm:$0xff]
  %v1119 = vld [vmem:[%s1115 + $0x18] sm:$0xff]
  %v1121 = vsel %vm38, %v1099, 0
  %v1124 = vsel %vm38, %v1100, 0
  %v1127 = vsel %vm38, %v1101, 0
  %v1130 = vsel %vm38, %v1102, 0
  %v1133 = vsel %vm38, %v1103, 0
  %v1136 = vsel %vm38, %v1104, 0
  %v1139 = vsel %vm38, %v1105, 0
  %v1142 = vsel %vm38, %v1106, 0
  %v1145 = vsel %vm38, %v1107, 0
  %v1148 = vsel %vm38, %v1108, 0
  %v1151 = vsel %vm38, %v1109, 0
  %v1154 = vsel %vm38, %v1110, 0
  %v1157 = vsel %vm38, %v1111, 0
  %v1160 = vsel %vm38, %v1112, 0
  %v1163 = vsel %vm38, %v1113, 0
  %v1166 = vsel %vm38, %v1114, 0
  %1168 = vmatpush.msra.mxu0 0.0
  %1169 = vmatpush.msra.mxu0 0.0
  %1170 = vmatpush.msra.mxu0 0.0
  %1171 = vmatpush.msra.mxu0 0.0
  %1172 = vmatpush.msra.mxu0 0.0
  %1173 = vmatpush.msra.mxu0 0.0
  %1174 = vmatpush.msra.mxu0 0.0
  %1175 = vmatpush.msra.mxu0 0.0
  %1176 = vmatpush.msra.mxu0 0.0
  %1177 = vmatpush.msra.mxu0 0.0
  %1178 = vmatpush.msra.mxu0 0.0
  %1179 = vmatpush.msra.mxu0 0.0
  %1180 = vmatpush.msra.mxu0 %v1119
  %1181 = vmatpush.msra.mxu0 %v1118
  %1182 = vmatpush.msra.mxu0 %v1117
  %1183 = vmatpush.msra.mxu0 %v1116
  %1184 = vmatmul.f32.gmra.mxu0 %v1121
  %v1185 = vpop.f32.mrf.mxu0
  %v1186 = vadd.f32 0.0, %v1185
  %1187 = vmatmul.f32.gmra.mxu0 %v1124
  %v1188 = vpop.f32.mrf.mxu0
  %v1189 = vadd.f32 0.0, %v1188
  %1190 = vmatmul.f32.gmra.mxu0 %v1127
  %v1191 = vpop.f32.mrf.mxu0
  %v1192 = vadd.f32 0.0, %v1191
  %1193 = vmatmul.f32.gmra.mxu0 %v1130
  %v1194 = vpop.f32.mrf.mxu0
  %v1195 = vadd.f32 0.0, %v1194
  %1196 = vmatmul.f32.gmra.mxu0 %v1133
  %v1197 = vpop.f32.mrf.mxu0
  %v1198 = vadd.f32 0.0, %v1197
  %1199 = vmatmul.f32.gmra.mxu0 %v1136
  %v1200 = vpop.f32.mrf.mxu0
  %v1201 = vadd.f32 0.0, %v1200
  %1202 = vmatmul.f32.gmra.mxu0 %v1139
  %v1203 = vpop.f32.mrf.mxu0
  %v1204 = vadd.f32 0.0, %v1203
  %1205 = vmatmul.f32.gmra.mxu0 %v1142
  %v1206 = vpop.f32.mrf.mxu0
  %v1207 = vadd.f32 0.0, %v1206
  %1208 = vmatmul.f32.gmra.mxu0 %v1145
  %v1209 = vpop.f32.mrf.mxu0
  %v1210 = vadd.f32 0.0, %v1209
  %1211 = vmatmul.f32.gmra.mxu0 %v1148
  %v1212 = vpop.f32.mrf.mxu0
  %v1213 = vadd.f32 0.0, %v1212
  %1214 = vmatmul.f32.gmra.mxu0 %v1151
  %v1215 = vpop.f32.mrf.mxu0
  %v1216 = vadd.f32 0.0, %v1215
  %1217 = vmatmul.f32.gmra.mxu0 %v1154
  %v1218 = vpop.f32.mrf.mxu0
  %v1219 = vadd.f32 0.0, %v1218
  %1220 = vmatmul.f32.gmra.mxu0 %v1157
  %v1221 = vpop.f32.mrf.mxu0
  %v1222 = vadd.f32 0.0, %v1221
  %1223 = vmatmul.f32.gmra.mxu0 %v1160
  %v1224 = vpop.f32.mrf.mxu0
  %v1225 = vadd.f32 0.0, %v1224
  %1226 = vmatmul.f32.gmra.mxu0 %v1163
  %v1227 = vpop.f32.mrf.mxu0
  %v1228 = vadd.f32 0.0, %v1227
  %1229 = vmatmul.f32.gmra.mxu0 %v1166
  %v1230 = vpop.f32.mrf.mxu0
  %v1231 = vadd.f32 0.0, %v1230
  %1232 = vdwg.mxu0
  %v1233 = vadd.f32 %v1083, %v1186
  %v1234 = vadd.f32 %v1084, %v1189
  %v1235 = vadd.f32 %v1085, %v1192
  %v1236 = vadd.f32 %v1086, %v1195
  %v1237 = vadd.f32 %v1087, %v1198
  %v1238 = vadd.f32 %v1088, %v1201
  %v1239 = vadd.f32 %v1089, %v1204
  %v1240 = vadd.f32 %v1090, %v1207
  %v1241 = vadd.f32 %v1091, %v1210
  %v1242 = vadd.f32 %v1092, %v1213
  %v1243 = vadd.f32 %v1093, %v1216
  %v1244 = vadd.f32 %v1094, %v1219
  %v1245 = vadd.f32 %v1095, %v1222
  %v1246 = vadd.f32 %v1096, %v1225
  %v1247 = vadd.f32 %v1097, %v1228
  %v1248 = vadd.f32 %v1098, %v1231
  %v1249 = vld [vmem:[%s948 + $0x2] sm:$0xff]
  %v1250 = vld [vmem:[%s948 + $0x12] sm:$0xff]
  %v1251 = vld [vmem:[%s948 + $0x22] sm:$0xff]
  %v1252 = vld [vmem:[%s948 + $0x32] sm:$0xff]
  %v1253 = vld [vmem:[%s948 + $0x42] sm:$0xff]
  %v1254 = vld [vmem:[%s948 + $0x52] sm:$0xff]
  %v1255 = vld [vmem:[%s948 + $0x62] sm:$0xff]
  %v1256 = vld [vmem:[%s948 + $0x72] sm:$0xff]
  %v1257 = vld [vmem:[%s948 + $0xa2] sm:$0xff]
  %v1258 = vld [vmem:[%s948 + $0xb2] sm:$0xff]
  %v1259 = vld [vmem:[%s948 + $0xc2] sm:$0xff]
  %v1260 = vld [vmem:[%s948 + $0xd2] sm:$0xff]
  %v1261 = vld [vmem:[%s948 + $0xe2] sm:$0xff]
  %v1262 = vld [vmem:[%s948 + $0xf2] sm:$0xff]
  %v1263 = vld [vmem:[%s948 + $0x102] sm:$0xff]
  %v1264 = vld [vmem:[%s948 + $0x112] sm:$0xff]
  %s1265 = scalar_lea.vmem %s2, 256
  %v1266 = vld [vmem:[%s1265] sm:$0xff]
  %v1267 = vld [vmem:[%s1265 + $0x8] sm:$0xff]
  %v1268 = vld [vmem:[%s1265 + $0x10] sm:$0xff]
  %v1269 = vld [vmem:[%s1265 + $0x18] sm:$0xff]
  %v1271 = vsel %vm38, %v1249, 0
  %v1274 = vsel %vm38, %v1250, 0
  %v1277 = vsel %vm38, %v1251, 0
  %v1280 = vsel %vm38, %v1252, 0
  %v1283 = vsel %vm38, %v1253, 0
  %v1286 = vsel %vm38, %v1254, 0
  %v1289 = vsel %vm38, %v1255, 0
  %v1292 = vsel %vm38, %v1256, 0
  %v1295 = vsel %vm38, %v1257, 0
  %v1298 = vsel %vm38, %v1258, 0
  %v1301 = vsel %vm38, %v1259, 0
  %v1304 = vsel %vm38, %v1260, 0
  %v1307 = vsel %vm38, %v1261, 0
  %v1310 = vsel %vm38, %v1262, 0
  %v1313 = vsel %vm38, %v1263, 0
  %v1316 = vsel %vm38, %v1264, 0
  %1318 = vmatpush.msra.mxu0 0.0
  %1319 = vmatpush.msra.mxu0 0.0
  %1320 = vmatpush.msra.mxu0 0.0
  %1321 = vmatpush.msra.mxu0 0.0
  %1322 = vmatpush.msra.mxu0 0.0
  %1323 = vmatpush.msra.mxu0 0.0
  %1324 = vmatpush.msra.mxu0 0.0
  %1325 = vmatpush.msra.mxu0 0.0
  %1326 = vmatpush.msra.mxu0 0.0
  %1327 = vmatpush.msra.mxu0 0.0
  %1328 = vmatpush.msra.mxu0 0.0
  %1329 = vmatpush.msra.mxu0 0.0
  %1330 = vmatpush.msra.mxu0 %v1269
  %1331 = vmatpush.msra.mxu0 %v1268
  %1332 = vmatpush.msra.mxu0 %v1267
  %1333 = vmatpush.msra.mxu0 %v1266
  %1334 = vmatmul.f32.gmra.mxu0 %v1271
  %v1335 = vpop.f32.mrf.mxu0
  %v1336 = vadd.f32 0.0, %v1335
  %1337 = vmatmul.f32.gmra.mxu0 %v1274
  %v1338 = vpop.f32.mrf.mxu0
  %v1339 = vadd.f32 0.0, %v1338
  %1340 = vmatmul.f32.gmra.mxu0 %v1277
  %v1341 = vpop.f32.mrf.mxu0
  %v1342 = vadd.f32 0.0, %v1341
  %1343 = vmatmul.f32.gmra.mxu0 %v1280
  %v1344 = vpop.f32.mrf.mxu0
  %v1345 = vadd.f32 0.0, %v1344
  %1346 = vmatmul.f32.gmra.mxu0 %v1283
  %v1347 = vpop.f32.mrf.mxu0
  %v1348 = vadd.f32 0.0, %v1347
  %1349 = vmatmul.f32.gmra.mxu0 %v1286
  %v1350 = vpop.f32.mrf.mxu0
  %v1351 = vadd.f32 0.0, %v1350
  %1352 = vmatmul.f32.gmra.mxu0 %v1289
  %v1353 = vpop.f32.mrf.mxu0
  %v1354 = vadd.f32 0.0, %v1353
  %1355 = vmatmul.f32.gmra.mxu0 %v1292
  %v1356 = vpop.f32.mrf.mxu0
  %v1357 = vadd.f32 0.0, %v1356
  %1358 = vmatmul.f32.gmra.mxu0 %v1295
  %v1359 = vpop.f32.mrf.mxu0
  %v1360 = vadd.f32 0.0, %v1359
  %1361 = vmatmul.f32.gmra.mxu0 %v1298
  %v1362 = vpop.f32.mrf.mxu0
  %v1363 = vadd.f32 0.0, %v1362
  %1364 = vmatmul.f32.gmra.mxu0 %v1301
  %v1365 = vpop.f32.mrf.mxu0
  %v1366 = vadd.f32 0.0, %v1365
  %1367 = vmatmul.f32.gmra.mxu0 %v1304
  %v1368 = vpop.f32.mrf.mxu0
  %v1369 = vadd.f32 0.0, %v1368
  %1370 = vmatmul.f32.gmra.mxu0 %v1307
  %v1371 = vpop.f32.mrf.mxu0
  %v1372 = vadd.f32 0.0, %v1371
  %1373 = vmatmul.f32.gmra.mxu0 %v1310
  %v1374 = vpop.f32.mrf.mxu0
  %v1375 = vadd.f32 0.0, %v1374
  %1376 = vmatmul.f32.gmra.mxu0 %v1313
  %v1377 = vpop.f32.mrf.mxu0
  %v1378 = vadd.f32 0.0, %v1377
  %1379 = vmatmul.f32.gmra.mxu0 %v1316
  %v1380 = vpop.f32.mrf.mxu0
  %v1381 = vadd.f32 0.0, %v1380
  %1382 = vdwg.mxu0
  %v1383 = vadd.f32 %v1233, %v1336
  %v1384 = vadd.f32 %v1234, %v1339
  %v1385 = vadd.f32 %v1235, %v1342
  %v1386 = vadd.f32 %v1236, %v1345
  %v1387 = vadd.f32 %v1237, %v1348
  %v1388 = vadd.f32 %v1238, %v1351
  %v1389 = vadd.f32 %v1239, %v1354
  %v1390 = vadd.f32 %v1240, %v1357
  %v1391 = vadd.f32 %v1241, %v1360
  %v1392 = vadd.f32 %v1242, %v1363
  %v1393 = vadd.f32 %v1243, %v1366
  %v1394 = vadd.f32 %v1244, %v1369
  %v1395 = vadd.f32 %v1245, %v1372
  %v1396 = vadd.f32 %v1246, %v1375
  %v1397 = vadd.f32 %v1247, %v1378
  %v1398 = vadd.f32 %v1248, %v1381
  %v1399 = vld [vmem:[%s9] sm:$0xff]
  %v1400 = vld [vmem:[%s9 + $0x8] sm:$0xff]
  %v1401 = vld [vmem:[%s9 + $0x10] sm:$0xff]
  %v1402 = vld [vmem:[%s9 + $0x18] sm:$0xff]
  %v1403 = vld [vmem:[%s10] sm:$0xf]
  %v1404 = vsel %vm38, %v1383, 0.0
  %v1405 = vsel %vm38, %v1384, 0.0
  %v1406 = vadd.f32 %v1404, %v1405
  %v1407 = vsel %vm38, %v1385, 0.0
  %v1408 = vadd.f32 %v1406, %v1407
  %v1409 = vsel %vm38, %v1386, 0.0
  %v1410 = vadd.f32 %v1408, %v1409
  %v1411 = vsel %vm38, %v1387, 0.0
  %v1412 = vadd.f32 %v1410, %v1411
  %v1413 = vsel %vm38, %v1388, 0.0
  %v1414 = vadd.f32 %v1412, %v1413
  %v1415 = vsel %vm38, %v1389, 0.0
  %v1416 = vadd.f32 %v1414, %v1415
  %v1417 = vsel %vm38, %v1390, 0.0
  %v1418 = vadd.f32 %v1416, %v1417
  %v1419 = vsel %vm38, %v1391, 0.0
  %v1420 = vadd.f32 %v1418, %v1419
  %v1421 = vsel %vm38, %v1392, 0.0
  %v1422 = vadd.f32 %v1420, %v1421
  %v1423 = vsel %vm38, %v1393, 0.0
  %v1424 = vadd.f32 %v1422, %v1423
  %v1425 = vsel %vm38, %v1394, 0.0
  %v1426 = vadd.f32 %v1424, %v1425
  %v1427 = vsel %vm38, %v1395, 0.0
  %v1428 = vadd.f32 %v1426, %v1427
  %v1429 = vsel %vm38, %v1396, 0.0
  %v1430 = vadd.f32 %v1428, %v1429
  %v1431 = vsel %vm38, %v1397, 0.0
  %v1432 = vadd.f32 %v1430, %v1431
  %v1433 = vsel %vm38, %v1398, 0.0
  %v1434 = vadd.f32 %v1432, %v1433
  %v1435 = vrot.slane %v1434, 4
  %v1436 = vadd.f32 %v1434, %v1435
  %v1437 = vrot.slane %v1436, 2
  %v1438 = vadd.f32 %v1436, %v1437
  %v1439 = vrot.slane %v1438, 1
  %v1440 = vadd.f32 %v1438, %v1439
  %v1442 = vsel %vm38, %v1440, 0
  %1444 = vmatpush.msra.mxu0 0.0
  %1445 = vmatpush.msra.mxu0 0.0
  %1446 = vmatpush.msra.mxu0 0.0
  %1447 = vmatpush.msra.mxu0 0.0
  %1448 = vmatpush.msra.mxu0 0.0
  %1449 = vmatpush.msra.mxu0 0.0
  %1450 = vmatpush.msra.mxu0 0.0
  %1451 = vmatpush.msra.mxu0 0.0
  %1452 = vmatpush.msra.mxu0 0.0
  %1453 = vmatpush.msra.mxu0 0.0
  %1454 = vmatpush.msra.mxu0 0.0
  %1455 = vmatpush.msra.mxu0 0.0
  %1456 = vmatpush.msra.mxu0 %v1402
  %1457 = vmatpush.msra.mxu0 %v1401
  %1458 = vmatpush.msra.mxu0 %v1400
  %1459 = vmatpush.msra.mxu0 %v1399
  %1460 = vmatmul.f32.gmra.mxu0 %v1442
  %v1461 = vpop.f32.mrf.mxu0
  %v1462 = vadd.f32 0.0, %v1461
  %1463 = vdwg.mxu0
  %v1464 = vrcp.pop 1024.0
  %v1465 = vmul.f32 1024.0, %v1464
  %v1466 = vsub.f32 1.0, %v1465
  %v1467 = vmul.f32 %v1464, %v1466
  %v1468 = vadd.f32 %v1464, %v1467
  %vm1469 = vweird.f32 %v1464
  %v1470 = vsel %vm1469, %v1464, %v1468
  %v1471 = vmul.f32 %v1462, %v1470
  %vm1472 = vcmask 31744
  %v1474 = vsel %vm1472, %v1471, 0
  %vm1476 = vcmask 1043456
  %v1478 = vsel %vm1476, %v1403, 0
  %1480 = vmatpush.msra.mxu0 0.0
  %1481 = vmatpush.msra.mxu0 0.0
  %1482 = vmatpush.msra.mxu0 0.0
  %1483 = vmatpush.msra.mxu0 0.0
  %1484 = vmatpush.msra.mxu0 0.0
  %1485 = vmatpush.msra.mxu0 0.0
  %1486 = vmatpush.msra.mxu0 0.0
  %1487 = vmatpush.msra.mxu0 0.0
  %1488 = vmatpush.msra.mxu0 0.0
  %1489 = vmatpush.msra.mxu0 0.0
  %1490 = vmatpush.msra.mxu0 0.0
  %1491 = vmatpush.msra.mxu0 0.0
  %1492 = vmatpush.msra.mxu0 0.0
  %1493 = vmatpush.msra.mxu0 0.0
  %1494 = vmatpush.msra.mxu0 0.0
  %1495 = vmatpush.msra.mxu0 %v1478
  %1496 = vmatmul.f32.gmra.mxu0 %v1474
  %v1497 = vpop.f32.mrf.mxu0
  %v1498 = vadd.f32 0.0, %v1497
  %1499 = vdwg.mxu0
  %v1500 = vperm.slane %v1498, 0
  %v1501 = vsub.f32 %v1383, %v1500
  %v1502 = vsub.f32 %v1384, %v1500
  %v1503 = vsub.f32 %v1385, %v1500
  %v1504 = vsub.f32 %v1386, %v1500
  %v1505 = vsub.f32 %v1387, %v1500
  %v1506 = vsub.f32 %v1388, %v1500
  %v1507 = vsub.f32 %v1389, %v1500
  %v1508 = vsub.f32 %v1390, %v1500
  %v1509 = vsub.f32 %v1391, %v1500
  %v1510 = vsub.f32 %v1392, %v1500
  %v1511 = vsub.f32 %v1393, %v1500
  %v1512 = vsub.f32 %v1394, %v1500
  %v1513 = vsub.f32 %v1395, %v1500
  %v1514 = vsub.f32 %v1396, %v1500
  %v1515 = vsub.f32 %v1397, %v1500
  %v1516 = vsub.f32 %v1398, %v1500
  %v1517 = vmul.f32 %v1501, %v1501
  %v1518 = vmul.f32 %v1502, %v1502
  %v1519 = vmul.f32 %v1503, %v1503
  %v1520 = vmul.f32 %v1504, %v1504
  %v1521 = vmul.f32 %v1505, %v1505
  %v1522 = vmul.f32 %v1506, %v1506
  %v1523 = vmul.f32 %v1507, %v1507
  %v1524 = vmul.f32 %v1508, %v1508
  %v1525 = vmul.f32 %v1509, %v1509
  %v1526 = vmul.f32 %v1510, %v1510
  %v1527 = vmul.f32 %v1511, %v1511
  %v1528 = vmul.f32 %v1512, %v1512
  %v1529 = vmul.f32 %v1513, %v1513
  %v1530 = vmul.f32 %v1514, %v1514
  %v1531 = vmul.f32 %v1515, %v1515
  %v1532 = vmul.f32 %v1516, %v1516
  %v1533 = vsel %vm38, %v1517, 0.0
  %v1534 = vsel %vm38, %v1518, 0.0
  %v1535 = vadd.f32 %v1533, %v1534
  %v1536 = vsel %vm38, %v1519, 0.0
  %v1537 = vadd.f32 %v1535, %v1536
  %v1538 = vsel %vm38, %v1520, 0.0
  %v1539 = vadd.f32 %v1537, %v1538
  %v1540 = vsel %vm38, %v1521, 0.0
  %v1541 = vadd.f32 %v1539, %v1540
  %v1542 = vsel %vm38, %v1522, 0.0
  %v1543 = vadd.f32 %v1541, %v1542
  %v1544 = vsel %vm38, %v1523, 0.0
  %v1545 = vadd.f32 %v1543, %v1544
  %v1546 = vsel %vm38, %v1524, 0.0
  %v1547 = vadd.f32 %v1545, %v1546
  %v1548 = vsel %vm38, %v1525, 0.0
  %v1549 = vadd.f32 %v1547, %v1548
  %v1550 = vsel %vm38, %v1526, 0.0
  %v1551 = vadd.f32 %v1549, %v1550
  %v1552 = vsel %vm38, %v1527, 0.0
  %v1553 = vadd.f32 %v1551, %v1552
  %v1554 = vsel %vm38, %v1528, 0.0
  %v1555 = vadd.f32 %v1553, %v1554
  %v1556 = vsel %vm38, %v1529, 0.0
  %v1557 = vadd.f32 %v1555, %v1556
  %v1558 = vsel %vm38, %v1530, 0.0
  %v1559 = vadd.f32 %v1557, %v1558
  %v1560 = vsel %vm38, %v1531, 0.0
  %v1561 = vadd.f32 %v1559, %v1560
  %v1562 = vsel %vm38, %v1532, 0.0
  %v1563 = vadd.f32 %v1561, %v1562
  %v1564 = vrot.slane %v1563, 4
  %v1565 = vadd.f32 %v1563, %v1564
  %v1566 = vrot.slane %v1565, 2
  %v1567 = vadd.f32 %v1565, %v1566
  %v1568 = vrot.slane %v1567, 1
  %v1569 = vadd.f32 %v1567, %v1568
  %v1571 = vsel %vm38, %v1569, 0
  %1573 = vmatpush.msra.mxu0 0.0
  %1574 = vmatpush.msra.mxu0 0.0
  %1575 = vmatpush.msra.mxu0 0.0
  %1576 = vmatpush.msra.mxu0 0.0
  %1577 = vmatpush.msra.mxu0 0.0
  %1578 = vmatpush.msra.mxu0 0.0
  %1579 = vmatpush.msra.mxu0 0.0
  %1580 = vmatpush.msra.mxu0 0.0
  %1581 = vmatpush.msra.mxu0 0.0
  %1582 = vmatpush.msra.mxu0 0.0
  %1583 = vmatpush.msra.mxu0 0.0
  %1584 = vmatpush.msra.mxu0 0.0
  %1585 = vmatpush.msra.mxu0 %v1402
  %1586 = vmatpush.msra.mxu0 %v1401
  %1587 = vmatpush.msra.mxu0 %v1400
  %1588 = vmatpush.msra.mxu0 %v1399
  %1589 = vmatmul.f32.gmra.mxu0 %v1571
  %v1590 = vpop.f32.mrf.mxu0
  %v1591 = vadd.f32 0.0, %v1590
  %1592 = vdwg.mxu0
  %v1593 = vmul.f32 %v1591, %v1470
  %v1594 = vld [vmem:[%s7] sm:$0x1]
  %v1595 = vadd.f32 %v1593, 1e-05
  %v1596 = vrsqrt.pop %v1595
  %v1597 = vmul.f32 %v1596, %v1595
  %v1598 = vmul.f32 %v1597, %v1596
  %v1599 = vmul.f32 0.5, %v1598
  %v1600 = vsub.f32 1.5, %v1599
  %v1601 = vmul.f32 %v1596, %v1600
  %vm1602 = vweird.f32 %v1595
  %vm1603 = vweird.f32 %v1596
  %vm1604 = vmor %vm1602, %vm1603
  %v1605 = vsel %vm1604, %v1596, %v1601
  %v1606 = vmul.f32 %v1594, %v1605
  %v1607 = vld [vmem:[%s8] sm:$0x1]
  %v1608 = vmul.f32 %v1471, %v1606
  %v1609 = vsub.f32 %v1607, %v1608
  %v1611 = vsel %vm1472, %v1606, 0
  %1613 = vmatpush.msra.mxu0 0.0
  %1614 = vmatpush.msra.mxu0 0.0
  %1615 = vmatpush.msra.mxu0 0.0
  %1616 = vmatpush.msra.mxu0 0.0
  %1617 = vmatpush.msra.mxu0 0.0
  %1618 = vmatpush.msra.mxu0 0.0
  %1619 = vmatpush.msra.mxu0 0.0
  %1620 = vmatpush.msra.mxu0 0.0
  %1621 = vmatpush.msra.mxu0 0.0
  %1622 = vmatpush.msra.mxu0 0.0
  %1623 = vmatpush.msra.mxu0 0.0
  %1624 = vmatpush.msra.mxu0 0.0
  %1625 = vmatpush.msra.mxu0 0.0
  %1626 = vmatpush.msra.mxu0 0.0
  %1627 = vmatpush.msra.mxu0 0.0
  %1628 = vmatpush.msra.mxu0 %v1478
  %1629 = vmatmul.f32.gmra.mxu0 %v1611
  %v1630 = vpop.f32.mrf.mxu0
  %v1631 = vadd.f32 0.0, %v1630
  %1632 = vdwg.mxu0
  %v1633 = vperm.slane %v1631, 0
  %v1634 = vmul.f32 %v1383, %v1633
  %v1635 = vmul.f32 %v1384, %v1633
  %v1636 = vmul.f32 %v1385, %v1633
  %v1637 = vmul.f32 %v1386, %v1633
  %v1638 = vmul.f32 %v1387, %v1633
  %v1639 = vmul.f32 %v1388, %v1633
  %v1640 = vmul.f32 %v1389, %v1633
  %v1641 = vmul.f32 %v1390, %v1633
  %v1642 = vmul.f32 %v1391, %v1633
  %v1643 = vmul.f32 %v1392, %v1633
  %v1644 = vmul.f32 %v1393, %v1633
  %v1645 = vmul.f32 %v1394, %v1633
  %v1646 = vmul.f32 %v1395, %v1633
  %v1647 = vmul.f32 %v1396, %v1633
  %v1648 = vmul.f32 %v1397, %v1633
  %v1649 = vmul.f32 %v1398, %v1633
  %v1651 = vsel %vm1472, %v1609, 0
  %1653 = vmatpush.msra.mxu0 0.0
  %1654 = vmatpush.msra.mxu0 0.0
  %1655 = vmatpush.msra.mxu0 0.0
  %1656 = vmatpush.msra.mxu0 0.0
  %1657 = vmatpush.msra.mxu0 0.0
  %1658 = vmatpush.msra.mxu0 0.0
  %1659 = vmatpush.msra.mxu0 0.0
  %1660 = vmatpush.msra.mxu0 0.0
  %1661 = vmatpush.msra.mxu0 0.0
  %1662 = vmatpush.msra.mxu0 0.0
  %1663 = vmatpush.msra.mxu0 0.0
  %1664 = vmatpush.msra.mxu0 0.0
  %1665 = vmatpush.msra.mxu0 0.0
  %1666 = vmatpush.msra.mxu0 0.0
  %1667 = vmatpush.msra.mxu0 0.0
  %1668 = vmatpush.msra.mxu0 %v1478
  %1669 = vmatmul.f32.gmra.mxu0 %v1651
  %v1670 = vpop.f32.mrf.mxu0
  %v1671 = vadd.f32 0.0, %v1670
  %1672 = vdwg.mxu0
  %v1673 = vperm.slane %v1671, 0
  %v1674 = vadd.f32 %v1634, %v1673
  %v1675 = vadd.f32 %v1635, %v1673
  %v1676 = vadd.f32 %v1636, %v1673
  %v1677 = vadd.f32 %v1637, %v1673
  %v1678 = vadd.f32 %v1638, %v1673
  %v1679 = vadd.f32 %v1639, %v1673
  %v1680 = vadd.f32 %v1640, %v1673
  %v1681 = vadd.f32 %v1641, %v1673
  %v1682 = vadd.f32 %v1642, %v1673
  %v1683 = vadd.f32 %v1643, %v1673
  %v1684 = vadd.f32 %v1644, %v1673
  %v1685 = vadd.f32 %v1645, %v1673
  %v1686 = vadd.f32 %v1646, %v1673
  %v1687 = vadd.f32 %v1647, %v1673
  %v1688 = vadd.f32 %v1648, %v1673
  %v1689 = vadd.f32 %v1649, %v1673
  %vm1690 = vcmp.ge.f32.partialorder %v1674, 0.0
  %vm1691 = vcmp.ge.f32.partialorder %v1675, 0.0
  %vm1692 = vcmp.ge.f32.partialorder %v1676, 0.0
  %vm1693 = vcmp.ge.f32.partialorder %v1677, 0.0
  %vm1694 = vcmp.ge.f32.partialorder %v1678, 0.0
  %vm1695 = vcmp.ge.f32.partialorder %v1679, 0.0
  %vm1696 = vcmp.ge.f32.partialorder %v1680, 0.0
  %vm1697 = vcmp.ge.f32.partialorder %v1681, 0.0
  %vm1698 = vcmp.ge.f32.partialorder %v1682, 0.0
  %vm1699 = vcmp.ge.f32.partialorder %v1683, 0.0
  %vm1700 = vcmp.ge.f32.partialorder %v1684, 0.0
  %vm1701 = vcmp.ge.f32.partialorder %v1685, 0.0
  %vm1702 = vcmp.ge.f32.partialorder %v1686, 0.0
  %vm1703 = vcmp.ge.f32.partialorder %v1687, 0.0
  %vm1704 = vcmp.ge.f32.partialorder %v1688, 0.0
  %vm1705 = vcmp.ge.f32.partialorder %v1689, 0.0
  %v1706 = vmul.f32 %v1674, 0.2
  %v1707 = vmul.f32 %v1675, 0.2
  %v1708 = vmul.f32 %v1676, 0.2
  %v1709 = vmul.f32 %v1677, 0.2
  %v1710 = vmul.f32 %v1678, 0.2
  %v1711 = vmul.f32 %v1679, 0.2
  %v1712 = vmul.f32 %v1680, 0.2
  %v1713 = vmul.f32 %v1681, 0.2
  %v1714 = vmul.f32 %v1682, 0.2
  %v1715 = vmul.f32 %v1683, 0.2
  %v1716 = vmul.f32 %v1684, 0.2
  %v1717 = vmul.f32 %v1685, 0.2
  %v1718 = vmul.f32 %v1686, 0.2
  %v1719 = vmul.f32 %v1687, 0.2
  %v1720 = vmul.f32 %v1688, 0.2
  %v1721 = vmul.f32 %v1689, 0.2
  %v1722 = vsel %vm1690, %v1674, %v1706
  %v1723 = vsel %vm1691, %v1675, %v1707
  %v1724 = vsel %vm1692, %v1676, %v1708
  %v1725 = vsel %vm1693, %v1677, %v1709
  %v1726 = vsel %vm1694, %v1678, %v1710
  %v1727 = vsel %vm1695, %v1679, %v1711
  %v1728 = vsel %vm1696, %v1680, %v1712
  %v1729 = vsel %vm1697, %v1681, %v1713
  %v1730 = vsel %vm1698, %v1682, %v1714
  %v1731 = vsel %vm1699, %v1683, %v1715
  %v1732 = vsel %vm1700, %v1684, %v1716
  %v1733 = vsel %vm1701, %v1685, %v1717
  %v1734 = vsel %vm1702, %v1686, %v1718
  %v1735 = vsel %vm1703, %v1687, %v1719
  %v1736 = vsel %vm1704, %v1688, %v1720
  %v1737 = vsel %vm1705, %v1689, %v1721
  %s1738 = scalar_lea.vmem [#allocation2], 16
  %1739 = vst.msk [vmem:[%s1738 + $0x1] sm:$0xff] %vm38, %v1722
  %1740 = vst.msk [vmem:[%s1738 + $0x11] sm:$0xff] %vm38, %v1723
  %1741 = vst.msk [vmem:[%s1738 + $0x21] sm:$0xff] %vm38, %v1724
  %1742 = vst.msk [vmem:[%s1738 + $0x31] sm:$0xff] %vm38, %v1725
  %1743 = vst.msk [vmem:[%s1738 + $0x41] sm:$0xff] %vm38, %v1726
  %1744 = vst.msk [vmem:[%s1738 + $0x51] sm:$0xff] %vm38, %v1727
  %1745 = vst.msk [vmem:[%s1738 + $0x61] sm:$0xff] %vm38, %v1728
  %1746 = vst.msk [vmem:[%s1738 + $0x71] sm:$0xff] %vm38, %v1729
  %1747 = vst.msk [vmem:[%s1738 + $0xa1] sm:$0xff] %vm38, %v1730
  %1748 = vst.msk [vmem:[%s1738 + $0xb1] sm:$0xff] %vm38, %v1731
  %1749 = vst.msk [vmem:[%s1738 + $0xc1] sm:$0xff] %vm38, %v1732
  %1750 = vst.msk [vmem:[%s1738 + $0xd1] sm:$0xff] %vm38, %v1733
  %1751 = vst.msk [vmem:[%s1738 + $0xe1] sm:$0xff] %vm38, %v1734
  %1752 = vst.msk [vmem:[%s1738 + $0xf1] sm:$0xff] %vm38, %v1735
  %1753 = vst.msk [vmem:[%s1738 + $0x101] sm:$0xff] %vm38, %v1736
  %1754 = vst.msk [vmem:[%s1738 + $0x111] sm:$0xff] %vm38, %v1737
  %v1755 = vld [vmem:[#allocation2] sm:$0xff]
  %v1756 = vld [vmem:[#allocation2 + $0x10] sm:$0xff]
  %v1757 = vld [vmem:[#allocation2 + $0x20] sm:$0xff]
  %v1758 = vld [vmem:[#allocation2 + $0x30] sm:$0xff]
  %v1759 = vld [vmem:[#allocation2 + $0x40] sm:$0xff]
  %v1760 = vld [vmem:[#allocation2 + $0x50] sm:$0xff]
  %v1761 = vld [vmem:[#allocation2 + $0x60] sm:$0xff]
  %v1762 = vld [vmem:[#allocation2 + $0x70] sm:$0xff]
  %v1763 = vld [vmem:[#allocation2 + $0xa0] sm:$0xff]
  %v1764 = vld [vmem:[#allocation2 + $0xb0] sm:$0xff]
  %v1765 = vld [vmem:[#allocation2 + $0xc0] sm:$0xff]
  %v1766 = vld [vmem:[#allocation2 + $0xd0] sm:$0xff]
  %v1767 = vld [vmem:[#allocation2 + $0xe0] sm:$0xff]
  %v1768 = vld [vmem:[#allocation2 + $0xf0] sm:$0xff]
  %v1769 = vld [vmem:[#allocation2 + $0x100] sm:$0xff]
  %v1770 = vld [vmem:[#allocation2 + $0x110] sm:$0xff]
  %v1771 = vld [vmem:[%s3] sm:$0xff]
  %v1772 = vld [vmem:[%s3 + $0x8] sm:$0xff]
  %v1773 = vld [vmem:[%s3 + $0x10] sm:$0xff]
  %v1774 = vld [vmem:[%s3 + $0x18] sm:$0xff]
  %v1775 = vld [vmem:[#allocation2 + $0x1] sm:$0xff]
  %v1776 = vld [vmem:[#allocation2 + $0x11] sm:$0xff]
  %v1777 = vld [vmem:[#allocation2 + $0x21] sm:$0xff]
  %v1778 = vld [vmem:[#allocation2 + $0x31] sm:$0xff]
  %v1779 = vld [vmem:[#allocation2 + $0x41] sm:$0xff]
  %v1780 = vld [vmem:[#allocation2 + $0x51] sm:$0xff]
  %v1781 = vld [vmem:[#allocation2 + $0x61] sm:$0xff]
  %v1782 = vld [vmem:[#allocation2 + $0x71] sm:$0xff]
  %v1783 = vld [vmem:[#allocation2 + $0xa1] sm:$0xff]
  %v1784 = vld [vmem:[#allocation2 + $0xb1] sm:$0xff]
  %v1785 = vld [vmem:[#allocation2 + $0xc1] sm:$0xff]
  %v1786 = vld [vmem:[#allocation2 + $0xd1] sm:$0xff]
  %v1787 = vld [vmem:[#allocation2 + $0xe1] sm:$0xff]
  %v1788 = vld [vmem:[#allocation2 + $0xf1] sm:$0xff]
  %v1789 = vld [vmem:[#allocation2 + $0x101] sm:$0xff]
  %v1790 = vld [vmem:[#allocation2 + $0x111] sm:$0xff]
  %s1791 = scalar_lea.vmem %s3, 32
  %v1792 = vld [vmem:[%s1791] sm:$0xff]
  %v1793 = vld [vmem:[%s1791 + $0x8] sm:$0xff]
  %v1794 = vld [vmem:[%s1791 + $0x10] sm:$0xff]
  %v1795 = vld [vmem:[%s1791 + $0x18] sm:$0xff]
  %v1797 = vsel %vm38, %v1775, 0
  %v1800 = vsel %vm38, %v1776, 0
  %v1803 = vsel %vm38, %v1777, 0
  %v1806 = vsel %vm38, %v1778, 0
  %v1809 = vsel %vm38, %v1779, 0
  %v1812 = vsel %vm38, %v1780, 0
  %v1815 = vsel %vm38, %v1781, 0
  %v1818 = vsel %vm38, %v1782, 0
  %v1821 = vsel %vm38, %v1783, 0
  %v1824 = vsel %vm38, %v1784, 0
  %v1827 = vsel %vm38, %v1785, 0
  %v1830 = vsel %vm38, %v1786, 0
  %v1833 = vsel %vm38, %v1787, 0
  %v1836 = vsel %vm38, %v1788, 0
  %v1839 = vsel %vm38, %v1789, 0
  %v1842 = vsel %vm38, %v1790, 0
  %1844 = vmatpush.msra.mxu0 0.0
  %1845 = vmatpush.msra.mxu0 0.0
  %1846 = vmatpush.msra.mxu0 0.0
  %1847 = vmatpush.msra.mxu0 0.0
  %1848 = vmatpush.msra.mxu0 0.0
  %1849 = vmatpush.msra.mxu0 0.0
  %1850 = vmatpush.msra.mxu0 0.0
  %1851 = vmatpush.msra.mxu0 0.0
  %1852 = vmatpush.msra.mxu0 0.0
  %1853 = vmatpush.msra.mxu0 0.0
  %1854 = vmatpush.msra.mxu0 0.0
  %1855 = vmatpush.msra.mxu0 0.0
  %1856 = vmatpush.msra.mxu0 %v1795
  %1857 = vmatpush.msra.mxu0 %v1794
  %1858 = vmatpush.msra.mxu0 %v1793
  %1859 = vmatpush.msra.mxu0 %v1792
  %1860 = vmatmul.f32.gmra.mxu0 %v1797
  %v1861 = vpop.f32.mrf.mxu0
  %v1862 = vadd.f32 0.0, %v1861
  %1863 = vmatmul.f32.gmra.mxu0 %v1800
  %v1864 = vpop.f32.mrf.mxu0
  %v1865 = vadd.f32 0.0, %v1864
  %1866 = vmatmul.f32.gmra.mxu0 %v1803
  %v1867 = vpop.f32.mrf.mxu0
  %v1868 = vadd.f32 0.0, %v1867
  %1869 = vmatmul.f32.gmra.mxu0 %v1806
  %v1870 = vpop.f32.mrf.mxu0
  %v1871 = vadd.f32 0.0, %v1870
  %1872 = vmatmul.f32.gmra.mxu0 %v1809
  %v1873 = vpop.f32.mrf.mxu0
  %v1874 = vadd.f32 0.0, %v1873
  %1875 = vmatmul.f32.gmra.mxu0 %v1812
  %v1876 = vpop.f32.mrf.mxu0
  %v1877 = vadd.f32 0.0, %v1876
  %1878 = vmatmul.f32.gmra.mxu0 %v1815
  %v1879 = vpop.f32.mrf.mxu0
  %v1880 = vadd.f32 0.0, %v1879
  %1881 = vmatmul.f32.gmra.mxu0 %v1818
  %v1882 = vpop.f32.mrf.mxu0
  %v1883 = vadd.f32 0.0, %v1882
  %1884 = vmatmul.f32.gmra.mxu0 %v1821
  %v1885 = vpop.f32.mrf.mxu0
  %v1886 = vadd.f32 0.0, %v1885
  %1887 = vmatmul.f32.gmra.mxu0 %v1824
  %v1888 = vpop.f32.mrf.mxu0
  %v1889 = vadd.f32 0.0, %v1888
  %1890 = vmatmul.f32.gmra.mxu0 %v1827
  %v1891 = vpop.f32.mrf.mxu0
  %v1892 = vadd.f32 0.0, %v1891
  %1893 = vmatmul.f32.gmra.mxu0 %v1830
  %v1894 = vpop.f32.mrf.mxu0
  %v1895 = vadd.f32 0.0, %v1894
  %1896 = vmatmul.f32.gmra.mxu0 %v1833
  %v1897 = vpop.f32.mrf.mxu0
  %v1898 = vadd.f32 0.0, %v1897
  %1899 = vmatmul.f32.gmra.mxu0 %v1836
  %v1900 = vpop.f32.mrf.mxu0
  %v1901 = vadd.f32 0.0, %v1900
  %1902 = vmatmul.f32.gmra.mxu0 %v1839
  %v1903 = vpop.f32.mrf.mxu0
  %v1904 = vadd.f32 0.0, %v1903
  %1905 = vmatmul.f32.gmra.mxu0 %v1842
  %v1906 = vpop.f32.mrf.mxu0
  %v1907 = vadd.f32 0.0, %v1906
  %1908 = vdwg.mxu0
  %v1910 = vsel %vm38, %v1755, 0
  %v1913 = vsel %vm38, %v1756, 0
  %v1916 = vsel %vm38, %v1757, 0
  %v1919 = vsel %vm38, %v1758, 0
  %v1922 = vsel %vm38, %v1759, 0
  %v1925 = vsel %vm38, %v1760, 0
  %v1928 = vsel %vm38, %v1761, 0
  %v1931 = vsel %vm38, %v1762, 0
  %v1934 = vsel %vm38, %v1763, 0
  %v1937 = vsel %vm38, %v1764, 0
  %v1940 = vsel %vm38, %v1765, 0
  %v1943 = vsel %vm38, %v1766, 0
  %v1946 = vsel %vm38, %v1767, 0
  %v1949 = vsel %vm38, %v1768, 0
  %v1952 = vsel %vm38, %v1769, 0
  %v1955 = vsel %vm38, %v1770, 0
  %1957 = vmatpush.msra.mxu0 0.0
  %1958 = vmatpush.msra.mxu0 0.0
  %1959 = vmatpush.msra.mxu0 0.0
  %1960 = vmatpush.msra.mxu0 0.0
  %1961 = vmatpush.msra.mxu0 0.0
  %1962 = vmatpush.msra.mxu0 0.0
  %1963 = vmatpush.msra.mxu0 0.0
  %1964 = vmatpush.msra.mxu0 0.0
  %1965 = vmatpush.msra.mxu0 0.0
  %1966 = vmatpush.msra.mxu0 0.0
  %1967 = vmatpush.msra.mxu0 0.0
  %1968 = vmatpush.msra.mxu0 0.0
  %1969 = vmatpush.msra.mxu0 %v1774
  %1970 = vmatpush.msra.mxu0 %v1773
  %1971 = vmatpush.msra.mxu0 %v1772
  %1972 = vmatpush.msra.mxu0 %v1771
  %1973 = vmatmul.f32.gmra.mxu0 %v1910
  %v1974 = vpop.f32.mrf.mxu0
  %v1975 = vadd.f32 %v1862, %v1974
  %1976 = vmatmul.f32.gmra.mxu0 %v1913
  %v1977 = vpop.f32.mrf.mxu0
  %v1978 = vadd.f32 %v1865, %v1977
  %1979 = vmatmul.f32.gmra.mxu0 %v1916
  %v1980 = vpop.f32.mrf.mxu0
  %v1981 = vadd.f32 %v1868, %v1980
  %1982 = vmatmul.f32.gmra.mxu0 %v1919
  %v1983 = vpop.f32.mrf.mxu0
  %v1984 = vadd.f32 %v1871, %v1983
  %1985 = vmatmul.f32.gmra.mxu0 %v1922
  %v1986 = vpop.f32.mrf.mxu0
  %v1987 = vadd.f32 %v1874, %v1986
  %1988 = vmatmul.f32.gmra.mxu0 %v1925
  %v1989 = vpop.f32.mrf.mxu0
  %v1990 = vadd.f32 %v1877, %v1989
  %1991 = vmatmul.f32.gmra.mxu0 %v1928
  %v1992 = vpop.f32.mrf.mxu0
  %v1993 = vadd.f32 %v1880, %v1992
  %1994 = vmatmul.f32.gmra.mxu0 %v1931
  %v1995 = vpop.f32.mrf.mxu0
  %v1996 = vadd.f32 %v1883, %v1995
  %1997 = vmatmul.f32.gmra.mxu0 %v1934
  %v1998 = vpop.f32.mrf.mxu0
  %v1999 = vadd.f32 %v1886, %v1998
  %2000 = vmatmul.f32.gmra.mxu0 %v1937
  %v2001 = vpop.f32.mrf.mxu0
  %v2002 = vadd.f32 %v1889, %v2001
  %2003 = vmatmul.f32.gmra.mxu0 %v1940
  %v2004 = vpop.f32.mrf.mxu0
  %v2005 = vadd.f32 %v1892, %v2004
  %2006 = vmatmul.f32.gmra.mxu0 %v1943
  %v2007 = vpop.f32.mrf.mxu0
  %v2008 = vadd.f32 %v1895, %v2007
  %2009 = vmatmul.f32.gmra.mxu0 %v1946
  %v2010 = vpop.f32.mrf.mxu0
  %v2011 = vadd.f32 %v1898, %v2010
  %2012 = vmatmul.f32.gmra.mxu0 %v1949
  %v2013 = vpop.f32.mrf.mxu0
  %v2014 = vadd.f32 %v1901, %v2013
  %2015 = vmatmul.f32.gmra.mxu0 %v1952
  %v2016 = vpop.f32.mrf.mxu0
  %v2017 = vadd.f32 %v1904, %v2016
  %2018 = vmatmul.f32.gmra.mxu0 %v1955
  %v2019 = vpop.f32.mrf.mxu0
  %v2020 = vadd.f32 %v1907, %v2019
  %2021 = vdwg.mxu0
  %v2022 = vld [vmem:[#allocation2 + $0x2] sm:$0xff]
  %v2023 = vld [vmem:[#allocation2 + $0x12] sm:$0xff]
  %v2024 = vld [vmem:[#allocation2 + $0x22] sm:$0xff]
  %v2025 = vld [vmem:[#allocation2 + $0x32] sm:$0xff]
  %v2026 = vld [vmem:[#allocation2 + $0x42] sm:$0xff]
  %v2027 = vld [vmem:[#allocation2 + $0x52] sm:$0xff]
  %v2028 = vld [vmem:[#allocation2 + $0x62] sm:$0xff]
  %v2029 = vld [vmem:[#allocation2 + $0x72] sm:$0xff]
  %v2030 = vld [vmem:[#allocation2 + $0xa2] sm:$0xff]
  %v2031 = vld [vmem:[#allocation2 + $0xb2] sm:$0xff]
  %v2032 = vld [vmem:[#allocation2 + $0xc2] sm:$0xff]
  %v2033 = vld [vmem:[#allocation2 + $0xd2] sm:$0xff]
  %v2034 = vld [vmem:[#allocation2 + $0xe2] sm:$0xff]
  %v2035 = vld [vmem:[#allocation2 + $0xf2] sm:$0xff]
  %v2036 = vld [vmem:[#allocation2 + $0x102] sm:$0xff]
  %v2037 = vld [vmem:[#allocation2 + $0x112] sm:$0xff]
  %s2038 = scalar_lea.vmem %s3, 64
  %v2039 = vld [vmem:[%s2038] sm:$0xff]
  %v2040 = vld [vmem:[%s2038 + $0x8] sm:$0xff]
  %v2041 = vld [vmem:[%s2038 + $0x10] sm:$0xff]
  %v2042 = vld [vmem:[%s2038 + $0x18] sm:$0xff]
  %v2044 = vsel %vm38, %v2022, 0
  %v2047 = vsel %vm38, %v2023, 0
  %v2050 = vsel %vm38, %v2024, 0
  %v2053 = vsel %vm38, %v2025, 0
  %v2056 = vsel %vm38, %v2026, 0
  %v2059 = vsel %vm38, %v2027, 0
  %v2062 = vsel %vm38, %v2028, 0
  %v2065 = vsel %vm38, %v2029, 0
  %v2068 = vsel %vm38, %v2030, 0
  %v2071 = vsel %vm38, %v2031, 0
  %v2074 = vsel %vm38, %v2032, 0
  %v2077 = vsel %vm38, %v2033, 0
  %v2080 = vsel %vm38, %v2034, 0
  %v2083 = vsel %vm38, %v2035, 0
  %v2086 = vsel %vm38, %v2036, 0
  %v2089 = vsel %vm38, %v2037, 0
  %2091 = vmatpush.msra.mxu0 0.0
  %2092 = vmatpush.msra.mxu0 0.0
  %2093 = vmatpush.msra.mxu0 0.0
  %2094 = vmatpush.msra.mxu0 0.0
  %2095 = vmatpush.msra.mxu0 0.0
  %2096 = vmatpush.msra.mxu0 0.0
  %2097 = vmatpush.msra.mxu0 0.0
  %2098 = vmatpush.msra.mxu0 0.0
  %2099 = vmatpush.msra.mxu0 0.0
  %2100 = vmatpush.msra.mxu0 0.0
  %2101 = vmatpush.msra.mxu0 0.0
  %2102 = vmatpush.msra.mxu0 0.0
  %2103 = vmatpush.msra.mxu0 %v2042
  %2104 = vmatpush.msra.mxu0 %v2041
  %2105 = vmatpush.msra.mxu0 %v2040
  %2106 = vmatpush.msra.mxu0 %v2039
  %2107 = vmatmul.f32.gmra.mxu0 %v2044
  %v2108 = vpop.f32.mrf.mxu0
  %v2109 = vadd.f32 0.0, %v2108
  %2110 = vmatmul.f32.gmra.mxu0 %v2047
  %v2111 = vpop.f32.mrf.mxu0
  %v2112 = vadd.f32 0.0, %v2111
  %2113 = vmatmul.f32.gmra.mxu0 %v2050
  %v2114 = vpop.f32.mrf.mxu0
  %v2115 = vadd.f32 0.0, %v2114
  %2116 = vmatmul.f32.gmra.mxu0 %v2053
  %v2117 = vpop.f32.mrf.mxu0
  %v2118 = vadd.f32 0.0, %v2117
  %2119 = vmatmul.f32.gmra.mxu0 %v2056
  %v2120 = vpop.f32.mrf.mxu0
  %v2121 = vadd.f32 0.0, %v2120
  %2122 = vmatmul.f32.gmra.mxu0 %v2059
  %v2123 = vpop.f32.mrf.mxu0
  %v2124 = vadd.f32 0.0, %v2123
  %2125 = vmatmul.f32.gmra.mxu0 %v2062
  %v2126 = vpop.f32.mrf.mxu0
  %v2127 = vadd.f32 0.0, %v2126
  %2128 = vmatmul.f32.gmra.mxu0 %v2065
  %v2129 = vpop.f32.mrf.mxu0
  %v2130 = vadd.f32 0.0, %v2129
  %2131 = vmatmul.f32.gmra.mxu0 %v2068
  %v2132 = vpop.f32.mrf.mxu0
  %v2133 = vadd.f32 0.0, %v2132
  %2134 = vmatmul.f32.gmra.mxu0 %v2071
  %v2135 = vpop.f32.mrf.mxu0
  %v2136 = vadd.f32 0.0, %v2135
  %2137 = vmatmul.f32.gmra.mxu0 %v2074
  %v2138 = vpop.f32.mrf.mxu0
  %v2139 = vadd.f32 0.0, %v2138
  %2140 = vmatmul.f32.gmra.mxu0 %v2077
  %v2141 = vpop.f32.mrf.mxu0
  %v2142 = vadd.f32 0.0, %v2141
  %2143 = vmatmul.f32.gmra.mxu0 %v2080
  %v2144 = vpop.f32.mrf.mxu0
  %v2145 = vadd.f32 0.0, %v2144
  %2146 = vmatmul.f32.gmra.mxu0 %v2083
  %v2147 = vpop.f32.mrf.mxu0
  %v2148 = vadd.f32 0.0, %v2147
  %2149 = vmatmul.f32.gmra.mxu0 %v2086
  %v2150 = vpop.f32.mrf.mxu0
  %v2151 = vadd.f32 0.0, %v2150
  %2152 = vmatmul.f32.gmra.mxu0 %v2089
  %v2153 = vpop.f32.mrf.mxu0
  %v2154 = vadd.f32 0.0, %v2153
  %2155 = vdwg.mxu0
  %v2156 = vadd.f32 %v1975, %v2109
  %v2157 = vadd.f32 %v1978, %v2112
  %v2158 = vadd.f32 %v1981, %v2115
  %v2159 = vadd.f32 %v1984, %v2118
  %v2160 = vadd.f32 %v1987, %v2121
  %v2161 = vadd.f32 %v1990, %v2124
  %v2162 = vadd.f32 %v1993, %v2127
  %v2163 = vadd.f32 %v1996, %v2130
  %v2164 = vadd.f32 %v1999, %v2133
  %v2165 = vadd.f32 %v2002, %v2136
  %v2166 = vadd.f32 %v2005, %v2139
  %v2167 = vadd.f32 %v2008, %v2142
  %v2168 = vadd.f32 %v2011, %v2145
  %v2169 = vadd.f32 %v2014, %v2148
  %v2170 = vadd.f32 %v2017, %v2151
  %v2171 = vadd.f32 %v2020, %v2154
  %v2172 = vld [vmem:[%s1738] sm:$0xff]
  %v2173 = vld [vmem:[%s1738 + $0x10] sm:$0xff]
  %v2174 = vld [vmem:[%s1738 + $0x20] sm:$0xff]
  %v2175 = vld [vmem:[%s1738 + $0x30] sm:$0xff]
  %v2176 = vld [vmem:[%s1738 + $0x40] sm:$0xff]
  %v2177 = vld [vmem:[%s1738 + $0x50] sm:$0xff]
  %v2178 = vld [vmem:[%s1738 + $0x60] sm:$0xff]
  %v2179 = vld [vmem:[%s1738 + $0x70] sm:$0xff]
  %v2180 = vld [vmem:[%s1738 + $0xa0] sm:$0xff]
  %v2181 = vld [vmem:[%s1738 + $0xb0] sm:$0xff]
  %v2182 = vld [vmem:[%s1738 + $0xc0] sm:$0xff]
  %v2183 = vld [vmem:[%s1738 + $0xd0] sm:$0xff]
  %v2184 = vld [vmem:[%s1738 + $0xe0] sm:$0xff]
  %v2185 = vld [vmem:[%s1738 + $0xf0] sm:$0xff]
  %v2186 = vld [vmem:[%s1738 + $0x100] sm:$0xff]
  %v2187 = vld [vmem:[%s1738 + $0x110] sm:$0xff]
  %s2188 = scalar_lea.vmem %s3, 96
  %v2189 = vld [vmem:[%s2188] sm:$0xff]
  %v2190 = vld [vmem:[%s2188 + $0x8] sm:$0xff]
  %v2191 = vld [vmem:[%s2188 + $0x10] sm:$0xff]
  %v2192 = vld [vmem:[%s2188 + $0x18] sm:$0xff]
  %v2194 = vsel %vm38, %v2172, 0
  %v2197 = vsel %vm38, %v2173, 0
  %v2200 = vsel %vm38, %v2174, 0
  %v2203 = vsel %vm38, %v2175, 0
  %v2206 = vsel %vm38, %v2176, 0
  %v2209 = vsel %vm38, %v2177, 0
  %v2212 = vsel %vm38, %v2178, 0
  %v2215 = vsel %vm38, %v2179, 0
  %v2218 = vsel %vm38, %v2180, 0
  %v2221 = vsel %vm38, %v2181, 0
  %v2224 = vsel %vm38, %v2182, 0
  %v2227 = vsel %vm38, %v2183, 0
  %v2230 = vsel %vm38, %v2184, 0
  %v2233 = vsel %vm38, %v2185, 0
  %v2236 = vsel %vm38, %v2186, 0
  %v2239 = vsel %vm38, %v2187, 0
  %2241 = vmatpush.msra.mxu0 0.0
  %2242 = vmatpush.msra.mxu0 0.0
  %2243 = vmatpush.msra.mxu0 0.0
  %2244 = vmatpush.msra.mxu0 0.0
  %2245 = vmatpush.msra.mxu0 0.0
  %2246 = vmatpush.msra.mxu0 0.0
  %2247 = vmatpush.msra.mxu0 0.0
  %2248 = vmatpush.msra.mxu0 0.0
  %2249 = vmatpush.msra.mxu0 0.0
  %2250 = vmatpush.msra.mxu0 0.0
  %2251 = vmatpush.msra.mxu0 0.0
  %2252 = vmatpush.msra.mxu0 0.0
  %2253 = vmatpush.msra.mxu0 %v2192
  %2254 = vmatpush.msra.mxu0 %v2191
  %2255 = vmatpush.msra.mxu0 %v2190
  %2256 = vmatpush.msra.mxu0 %v2189
  %2257 = vmatmul.f32.gmra.mxu0 %v2194
  %v2258 = vpop.f32.mrf.mxu0
  %v2259 = vadd.f32 0.0, %v2258
  %2260 = vmatmul.f32.gmra.mxu0 %v2197
  %v2261 = vpop.f32.mrf.mxu0
  %v2262 = vadd.f32 0.0, %v2261
  %2263 = vmatmul.f32.gmra.mxu0 %v2200
  %v2264 = vpop.f32.mrf.mxu0
  %v2265 = vadd.f32 0.0, %v2264
  %2266 = vmatmul.f32.gmra.mxu0 %v2203
  %v2267 = vpop.f32.mrf.mxu0
  %v2268 = vadd.f32 0.0, %v2267
  %2269 = vmatmul.f32.gmra.mxu0 %v2206
  %v2270 = vpop.f32.mrf.mxu0
  %v2271 = vadd.f32 0.0, %v2270
  %2272 = vmatmul.f32.gmra.mxu0 %v2209
  %v2273 = vpop.f32.mrf.mxu0
  %v2274 = vadd.f32 0.0, %v2273
  %2275 = vmatmul.f32.gmra.mxu0 %v2212
  %v2276 = vpop.f32.mrf.mxu0
  %v2277 = vadd.f32 0.0, %v2276
  %2278 = vmatmul.f32.gmra.mxu0 %v2215
  %v2279 = vpop.f32.mrf.mxu0
  %v2280 = vadd.f32 0.0, %v2279
  %2281 = vmatmul.f32.gmra.mxu0 %v2218
  %v2282 = vpop.f32.mrf.mxu0
  %v2283 = vadd.f32 0.0, %v2282
  %2284 = vmatmul.f32.gmra.mxu0 %v2221
  %v2285 = vpop.f32.mrf.mxu0
  %v2286 = vadd.f32 0.0, %v2285
  %2287 = vmatmul.f32.gmra.mxu0 %v2224
  %v2288 = vpop.f32.mrf.mxu0
  %v2289 = vadd.f32 0.0, %v2288
  %2290 = vmatmul.f32.gmra.mxu0 %v2227
  %v2291 = vpop.f32.mrf.mxu0
  %v2292 = vadd.f32 0.0, %v2291
  %2293 = vmatmul.f32.gmra.mxu0 %v2230
  %v2294 = vpop.f32.mrf.mxu0
  %v2295 = vadd.f32 0.0, %v2294
  %2296 = vmatmul.f32.gmra.mxu0 %v2233
  %v2297 = vpop.f32.mrf.mxu0
  %v2298 = vadd.f32 0.0, %v2297
  %2299 = vmatmul.f32.gmra.mxu0 %v2236
  %v2300 = vpop.f32.mrf.mxu0
  %v2301 = vadd.f32 0.0, %v2300
  %2302 = vmatmul.f32.gmra.mxu0 %v2239
  %v2303 = vpop.f32.mrf.mxu0
  %v2304 = vadd.f32 0.0, %v2303
  %2305 = vdwg.mxu0
  %v2306 = vadd.f32 %v2156, %v2259
  %v2307 = vadd.f32 %v2157, %v2262
  %v2308 = vadd.f32 %v2158, %v2265
  %v2309 = vadd.f32 %v2159, %v2268
  %v2310 = vadd.f32 %v2160, %v2271
  %v2311 = vadd.f32 %v2161, %v2274
  %v2312 = vadd.f32 %v2162, %v2277
  %v2313 = vadd.f32 %v2163, %v2280
  %v2314 = vadd.f32 %v2164, %v2283
  %v2315 = vadd.f32 %v2165, %v2286
  %v2316 = vadd.f32 %v2166, %v2289
  %v2317 = vadd.f32 %v2167, %v2292
  %v2318 = vadd.f32 %v2168, %v2295
  %v2319 = vadd.f32 %v2169, %v2298
  %v2320 = vadd.f32 %v2170, %v2301
  %v2321 = vadd.f32 %v2171, %v2304
  %v2322 = vld [vmem:[%s1738 + $0x1] sm:$0xff]
  %v2323 = vld [vmem:[%s1738 + $0x11] sm:$0xff]
  %v2324 = vld [vmem:[%s1738 + $0x21] sm:$0xff]
  %v2325 = vld [vmem:[%s1738 + $0x31] sm:$0xff]
  %v2326 = vld [vmem:[%s1738 + $0x41] sm:$0xff]
  %v2327 = vld [vmem:[%s1738 + $0x51] sm:$0xff]
  %v2328 = vld [vmem:[%s1738 + $0x61] sm:$0xff]
  %v2329 = vld [vmem:[%s1738 + $0x71] sm:$0xff]
  %v2330 = vld [vmem:[%s1738 + $0xa1] sm:$0xff]
  %v2331 = vld [vmem:[%s1738 + $0xb1] sm:$0xff]
  %v2332 = vld [vmem:[%s1738 + $0xc1] sm:$0xff]
  %v2333 = vld [vmem:[%s1738 + $0xd1] sm:$0xff]
  %v2334 = vld [vmem:[%s1738 + $0xe1] sm:$0xff]
  %v2335 = vld [vmem:[%s1738 + $0xf1] sm:$0xff]
  %v2336 = vld [vmem:[%s1738 + $0x101] sm:$0xff]
  %v2337 = vld [vmem:[%s1738 + $0x111] sm:$0xff]
  %s2338 = scalar_lea.vmem %s3, 128
  %v2339 = vld [vmem:[%s2338] sm:$0xff]
  %v2340 = vld [vmem:[%s2338 + $0x8] sm:$0xff]
  %v2341 = vld [vmem:[%s2338 + $0x10] sm:$0xff]
  %v2342 = vld [vmem:[%s2338 + $0x18] sm:$0xff]
  %v2344 = vsel %vm38, %v2322, 0
  %v2347 = vsel %vm38, %v2323, 0
  %v2350 = vsel %vm38, %v2324, 0
  %v2353 = vsel %vm38, %v2325, 0
  %v2356 = vsel %vm38, %v2326, 0
  %v2359 = vsel %vm38, %v2327, 0
  %v2362 = vsel %vm38, %v2328, 0
  %v2365 = vsel %vm38, %v2329, 0
  %v2368 = vsel %vm38, %v2330, 0
  %v2371 = vsel %vm38, %v2331, 0
  %v2374 = vsel %vm38, %v2332, 0
  %v2377 = vsel %vm38, %v2333, 0
  %v2380 = vsel %vm38, %v2334, 0
  %v2383 = vsel %vm38, %v2335, 0
  %v2386 = vsel %vm38, %v2336, 0
  %v2389 = vsel %vm38, %v2337, 0
  %2391 = vmatpush.msra.mxu0 0.0
  %2392 = vmatpush.msra.mxu0 0.0
  %2393 = vmatpush.msra.mxu0 0.0
  %2394 = vmatpush.msra.mxu0 0.0
  %2395 = vmatpush.msra.mxu0 0.0
  %2396 = vmatpush.msra.mxu0 0.0
  %2397 = vmatpush.msra.mxu0 0.0
  %2398 = vmatpush.msra.mxu0 0.0
  %2399 = vmatpush.msra.mxu0 0.0
  %2400 = vmatpush.msra.mxu0 0.0
  %2401 = vmatpush.msra.mxu0 0.0
  %2402 = vmatpush.msra.mxu0 0.0
  %2403 = vmatpush.msra.mxu0 %v2342
  %2404 = vmatpush.msra.mxu0 %v2341
  %2405 = vmatpush.msra.mxu0 %v2340
  %2406 = vmatpush.msra.mxu0 %v2339
  %2407 = vmatmul.f32.gmra.mxu0 %v2344
  %v2408 = vpop.f32.mrf.mxu0
  %v2409 = vadd.f32 0.0, %v2408
  %2410 = vmatmul.f32.gmra.mxu0 %v2347
  %v2411 = vpop.f32.mrf.mxu0
  %v2412 = vadd.f32 0.0, %v2411
  %2413 = vmatmul.f32.gmra.mxu0 %v2350
  %v2414 = vpop.f32.mrf.mxu0
  %v2415 = vadd.f32 0.0, %v2414
  %2416 = vmatmul.f32.gmra.mxu0 %v2353
  %v2417 = vpop.f32.mrf.mxu0
  %v2418 = vadd.f32 0.0, %v2417
  %2419 = vmatmul.f32.gmra.mxu0 %v2356
  %v2420 = vpop.f32.mrf.mxu0
  %v2421 = vadd.f32 0.0, %v2420
  %2422 = vmatmul.f32.gmra.mxu0 %v2359
  %v2423 = vpop.f32.mrf.mxu0
  %v2424 = vadd.f32 0.0, %v2423
  %2425 = vmatmul.f32.gmra.mxu0 %v2362
  %v2426 = vpop.f32.mrf.mxu0
  %v2427 = vadd.f32 0.0, %v2426
  %2428 = vmatmul.f32.gmra.mxu0 %v2365
  %v2429 = vpop.f32.mrf.mxu0
  %v2430 = vadd.f32 0.0, %v2429
  %2431 = vmatmul.f32.gmra.mxu0 %v2368
  %v2432 = vpop.f32.mrf.mxu0
  %v2433 = vadd.f32 0.0, %v2432
  %2434 = vmatmul.f32.gmra.mxu0 %v2371
  %v2435 = vpop.f32.mrf.mxu0
  %v2436 = vadd.f32 0.0, %v2435
  %2437 = vmatmul.f32.gmra.mxu0 %v2374
  %v2438 = vpop.f32.mrf.mxu0
  %v2439 = vadd.f32 0.0, %v2438
  %2440 = vmatmul.f32.gmra.mxu0 %v2377
  %v2441 = vpop.f32.mrf.mxu0
  %v2442 = vadd.f32 0.0, %v2441
  %2443 = vmatmul.f32.gmra.mxu0 %v2380
  %v2444 = vpop.f32.mrf.mxu0
  %v2445 = vadd.f32 0.0, %v2444
  %2446 = vmatmul.f32.gmra.mxu0 %v2383
  %v2447 = vpop.f32.mrf.mxu0
  %v2448 = vadd.f32 0.0, %v2447
  %2449 = vmatmul.f32.gmra.mxu0 %v2386
  %v2450 = vpop.f32.mrf.mxu0
  %v2451 = vadd.f32 0.0, %v2450
  %2452 = vmatmul.f32.gmra.mxu0 %v2389
  %v2453 = vpop.f32.mrf.mxu0
  %v2454 = vadd.f32 0.0, %v2453
  %2455 = vdwg.mxu0
  %v2456 = vadd.f32 %v2306, %v2409
  %v2457 = vadd.f32 %v2307, %v2412
  %v2458 = vadd.f32 %v2308, %v2415
  %v2459 = vadd.f32 %v2309, %v2418
  %v2460 = vadd.f32 %v2310, %v2421
  %v2461 = vadd.f32 %v2311, %v2424
  %v2462 = vadd.f32 %v2312, %v2427
  %v2463 = vadd.f32 %v2313, %v2430
  %v2464 = vadd.f32 %v2314, %v2433
  %v2465 = vadd.f32 %v2315, %v2436
  %v2466 = vadd.f32 %v2316, %v2439
  %v2467 = vadd.f32 %v2317, %v2442
  %v2468 = vadd.f32 %v2318, %v2445
  %v2469 = vadd.f32 %v2319, %v2448
  %v2470 = vadd.f32 %v2320, %v2451
  %v2471 = vadd.f32 %v2321, %v2454
  %v2472 = vld [vmem:[%s1738 + $0x2] sm:$0xff]
  %v2473 = vld [vmem:[%s1738 + $0x12] sm:$0xff]
  %v2474 = vld [vmem:[%s1738 + $0x22] sm:$0xff]
  %v2475 = vld [vmem:[%s1738 + $0x32] sm:$0xff]
  %v2476 = vld [vmem:[%s1738 + $0x42] sm:$0xff]
  %v2477 = vld [vmem:[%s1738 + $0x52] sm:$0xff]
  %v2478 = vld [vmem:[%s1738 + $0x62] sm:$0xff]
  %v2479 = vld [vmem:[%s1738 + $0x72] sm:$0xff]
  %v2480 = vld [vmem:[%s1738 + $0xa2] sm:$0xff]
  %v2481 = vld [vmem:[%s1738 + $0xb2] sm:$0xff]
  %v2482 = vld [vmem:[%s1738 + $0xc2] sm:$0xff]
  %v2483 = vld [vmem:[%s1738 + $0xd2] sm:$0xff]
  %v2484 = vld [vmem:[%s1738 + $0xe2] sm:$0xff]
  %v2485 = vld [vmem:[%s1738 + $0xf2] sm:$0xff]
  %v2486 = vld [vmem:[%s1738 + $0x102] sm:$0xff]
  %v2487 = vld [vmem:[%s1738 + $0x112] sm:$0xff]
  %s2488 = scalar_lea.vmem %s3, 160
  %v2489 = vld [vmem:[%s2488] sm:$0xff]
  %v2490 = vld [vmem:[%s2488 + $0x8] sm:$0xff]
  %v2491 = vld [vmem:[%s2488 + $0x10] sm:$0xff]
  %v2492 = vld [vmem:[%s2488 + $0x18] sm:$0xff]
  %v2494 = vsel %vm38, %v2472, 0
  %v2497 = vsel %vm38, %v2473, 0
  %v2500 = vsel %vm38, %v2474, 0
  %v2503 = vsel %vm38, %v2475, 0
  %v2506 = vsel %vm38, %v2476, 0
  %v2509 = vsel %vm38, %v2477, 0
  %v2512 = vsel %vm38, %v2478, 0
  %v2515 = vsel %vm38, %v2479, 0
  %v2518 = vsel %vm38, %v2480, 0
  %v2521 = vsel %vm38, %v2481, 0
  %v2524 = vsel %vm38, %v2482, 0
  %v2527 = vsel %vm38, %v2483, 0
  %v2530 = vsel %vm38, %v2484, 0
  %v2533 = vsel %vm38, %v2485, 0
  %v2536 = vsel %vm38, %v2486, 0
  %v2539 = vsel %vm38, %v2487, 0
  %2541 = vmatpush.msra.mxu0 0.0
  %2542 = vmatpush.msra.mxu0 0.0
  %2543 = vmatpush.msra.mxu0 0.0
  %2544 = vmatpush.msra.mxu0 0.0
  %2545 = vmatpush.msra.mxu0 0.0
  %2546 = vmatpush.msra.mxu0 0.0
  %2547 = vmatpush.msra.mxu0 0.0
  %2548 = vmatpush.msra.mxu0 0.0
  %2549 = vmatpush.msra.mxu0 0.0
  %2550 = vmatpush.msra.mxu0 0.0
  %2551 = vmatpush.msra.mxu0 0.0
  %2552 = vmatpush.msra.mxu0 0.0
  %2553 = vmatpush.msra.mxu0 %v2492
  %2554 = vmatpush.msra.mxu0 %v2491
  %2555 = vmatpush.msra.mxu0 %v2490
  %2556 = vmatpush.msra.mxu0 %v2489
  %2557 = vmatmul.f32.gmra.mxu0 %v2494
  %v2558 = vpop.f32.mrf.mxu0
  %v2559 = vadd.f32 0.0, %v2558
  %2560 = vmatmul.f32.gmra.mxu0 %v2497
  %v2561 = vpop.f32.mrf.mxu0
  %v2562 = vadd.f32 0.0, %v2561
  %2563 = vmatmul.f32.gmra.mxu0 %v2500
  %v2564 = vpop.f32.mrf.mxu0
  %v2565 = vadd.f32 0.0, %v2564
  %2566 = vmatmul.f32.gmra.mxu0 %v2503
  %v2567 = vpop.f32.mrf.mxu0
  %v2568 = vadd.f32 0.0, %v2567
  %2569 = vmatmul.f32.gmra.mxu0 %v2506
  %v2570 = vpop.f32.mrf.mxu0
  %v2571 = vadd.f32 0.0, %v2570
  %2572 = vmatmul.f32.gmra.mxu0 %v2509
  %v2573 = vpop.f32.mrf.mxu0
  %v2574 = vadd.f32 0.0, %v2573
  %2575 = vmatmul.f32.gmra.mxu0 %v2512
  %v2576 = vpop.f32.mrf.mxu0
  %v2577 = vadd.f32 0.0, %v2576
  %2578 = vmatmul.f32.gmra.mxu0 %v2515
  %v2579 = vpop.f32.mrf.mxu0
  %v2580 = vadd.f32 0.0, %v2579
  %2581 = vmatmul.f32.gmra.mxu0 %v2518
  %v2582 = vpop.f32.mrf.mxu0
  %v2583 = vadd.f32 0.0, %v2582
  %2584 = vmatmul.f32.gmra.mxu0 %v2521
  %v2585 = vpop.f32.mrf.mxu0
  %v2586 = vadd.f32 0.0, %v2585
  %2587 = vmatmul.f32.gmra.mxu0 %v2524
  %v2588 = vpop.f32.mrf.mxu0
  %v2589 = vadd.f32 0.0, %v2588
  %2590 = vmatmul.f32.gmra.mxu0 %v2527
  %v2591 = vpop.f32.mrf.mxu0
  %v2592 = vadd.f32 0.0, %v2591
  %2593 = vmatmul.f32.gmra.mxu0 %v2530
  %v2594 = vpop.f32.mrf.mxu0
  %v2595 = vadd.f32 0.0, %v2594
  %2596 = vmatmul.f32.gmra.mxu0 %v2533
  %v2597 = vpop.f32.mrf.mxu0
  %v2598 = vadd.f32 0.0, %v2597
  %2599 = vmatmul.f32.gmra.mxu0 %v2536
  %v2600 = vpop.f32.mrf.mxu0
  %v2601 = vadd.f32 0.0, %v2600
  %2602 = vmatmul.f32.gmra.mxu0 %v2539
  %v2603 = vpop.f32.mrf.mxu0
  %v2604 = vadd.f32 0.0, %v2603
  %2605 = vdwg.mxu0
  %v2606 = vadd.f32 %v2456, %v2559
  %v2607 = vadd.f32 %v2457, %v2562
  %v2608 = vadd.f32 %v2458, %v2565
  %v2609 = vadd.f32 %v2459, %v2568
  %v2610 = vadd.f32 %v2460, %v2571
  %v2611 = vadd.f32 %v2461, %v2574
  %v2612 = vadd.f32 %v2462, %v2577
  %v2613 = vadd.f32 %v2463, %v2580
  %v2614 = vadd.f32 %v2464, %v2583
  %v2615 = vadd.f32 %v2465, %v2586
  %v2616 = vadd.f32 %v2466, %v2589
  %v2617 = vadd.f32 %v2467, %v2592
  %v2618 = vadd.f32 %v2468, %v2595
  %v2619 = vadd.f32 %v2469, %v2598
  %v2620 = vadd.f32 %v2470, %v2601
  %v2621 = vadd.f32 %v2471, %v2604
  %s2622 = scalar_lea.vmem [#allocation2], 32
  %v2623 = vld [vmem:[%s2622] sm:$0xff]
  %v2624 = vld [vmem:[%s2622 + $0x10] sm:$0xff]
  %v2625 = vld [vmem:[%s2622 + $0x20] sm:$0xff]
  %v2626 = vld [vmem:[%s2622 + $0x30] sm:$0xff]
  %v2627 = vld [vmem:[%s2622 + $0x40] sm:$0xff]
  %v2628 = vld [vmem:[%s2622 + $0x50] sm:$0xff]
  %v2629 = vld [vmem:[%s2622 + $0x60] sm:$0xff]
  %v2630 = vld [vmem:[%s2622 + $0x70] sm:$0xff]
  %v2631 = vld [vmem:[%s2622 + $0xa0] sm:$0xff]
  %v2632 = vld [vmem:[%s2622 + $0xb0] sm:$0xff]
  %v2633 = vld [vmem:[%s2622 + $0xc0] sm:$0xff]
  %v2634 = vld [vmem:[%s2622 + $0xd0] sm:$0xff]
  %v2635 = vld [vmem:[%s2622 + $0xe0] sm:$0xff]
  %v2636 = vld [vmem:[%s2622 + $0xf0] sm:$0xff]
  %v2637 = vld [vmem:[%s2622 + $0x100] sm:$0xff]
  %v2638 = vld [vmem:[%s2622 + $0x110] sm:$0xff]
  %s2639 = scalar_lea.vmem %s3, 192
  %v2640 = vld [vmem:[%s2639] sm:$0xff]
  %v2641 = vld [vmem:[%s2639 + $0x8] sm:$0xff]
  %v2642 = vld [vmem:[%s2639 + $0x10] sm:$0xff]
  %v2643 = vld [vmem:[%s2639 + $0x18] sm:$0xff]
  %v2645 = vsel %vm38, %v2623, 0
  %v2648 = vsel %vm38, %v2624, 0
  %v2651 = vsel %vm38, %v2625, 0
  %v2654 = vsel %vm38, %v2626, 0
  %v2657 = vsel %vm38, %v2627, 0
  %v2660 = vsel %vm38, %v2628, 0
  %v2663 = vsel %vm38, %v2629, 0
  %v2666 = vsel %vm38, %v2630, 0
  %v2669 = vsel %vm38, %v2631, 0
  %v2672 = vsel %vm38, %v2632, 0
  %v2675 = vsel %vm38, %v2633, 0
  %v2678 = vsel %vm38, %v2634, 0
  %v2681 = vsel %vm38, %v2635, 0
  %v2684 = vsel %vm38, %v2636, 0
  %v2687 = vsel %vm38, %v2637, 0
  %v2690 = vsel %vm38, %v2638, 0
  %2692 = vmatpush.msra.mxu0 0.0
  %2693 = vmatpush.msra.mxu0 0.0
  %2694 = vmatpush.msra.mxu0 0.0
  %2695 = vmatpush.msra.mxu0 0.0
  %2696 = vmatpush.msra.mxu0 0.0
  %2697 = vmatpush.msra.mxu0 0.0
  %2698 = vmatpush.msra.mxu0 0.0
  %2699 = vmatpush.msra.mxu0 0.0
  %2700 = vmatpush.msra.mxu0 0.0
  %2701 = vmatpush.msra.mxu0 0.0
  %2702 = vmatpush.msra.mxu0 0.0
  %2703 = vmatpush.msra.mxu0 0.0
  %2704 = vmatpush.msra.mxu0 %v2643
  %2705 = vmatpush.msra.mxu0 %v2642
  %2706 = vmatpush.msra.mxu0 %v2641
  %2707 = vmatpush.msra.mxu0 %v2640
  %2708 = vmatmul.f32.gmra.mxu0 %v2645
  %v2709 = vpop.f32.mrf.mxu0
  %v2710 = vadd.f32 0.0, %v2709
  %2711 = vmatmul.f32.gmra.mxu0 %v2648
  %v2712 = vpop.f32.mrf.mxu0
  %v2713 = vadd.f32 0.0, %v2712
  %2714 = vmatmul.f32.gmra.mxu0 %v2651
  %v2715 = vpop.f32.mrf.mxu0
  %v2716 = vadd.f32 0.0, %v2715
  %2717 = vmatmul.f32.gmra.mxu0 %v2654
  %v2718 = vpop.f32.mrf.mxu0
  %v2719 = vadd.f32 0.0, %v2718
  %2720 = vmatmul.f32.gmra.mxu0 %v2657
  %v2721 = vpop.f32.mrf.mxu0
  %v2722 = vadd.f32 0.0, %v2721
  %2723 = vmatmul.f32.gmra.mxu0 %v2660
  %v2724 = vpop.f32.mrf.mxu0
  %v2725 = vadd.f32 0.0, %v2724
  %2726 = vmatmul.f32.gmra.mxu0 %v2663
  %v2727 = vpop.f32.mrf.mxu0
  %v2728 = vadd.f32 0.0, %v2727
  %2729 = vmatmul.f32.gmra.mxu0 %v2666
  %v2730 = vpop.f32.mrf.mxu0
  %v2731 = vadd.f32 0.0, %v2730
  %2732 = vmatmul.f32.gmra.mxu0 %v2669
  %v2733 = vpop.f32.mrf.mxu0
  %v2734 = vadd.f32 0.0, %v2733
  %2735 = vmatmul.f32.gmra.mxu0 %v2672
  %v2736 = vpop.f32.mrf.mxu0
  %v2737 = vadd.f32 0.0, %v2736
  %2738 = vmatmul.f32.gmra.mxu0 %v2675
  %v2739 = vpop.f32.mrf.mxu0
  %v2740 = vadd.f32 0.0, %v2739
  %2741 = vmatmul.f32.gmra.mxu0 %v2678
  %v2742 = vpop.f32.mrf.mxu0
  %v2743 = vadd.f32 0.0, %v2742
  %2744 = vmatmul.f32.gmra.mxu0 %v2681
  %v2745 = vpop.f32.mrf.mxu0
  %v2746 = vadd.f32 0.0, %v2745
  %2747 = vmatmul.f32.gmra.mxu0 %v2684
  %v2748 = vpop.f32.mrf.mxu0
  %v2749 = vadd.f32 0.0, %v2748
  %2750 = vmatmul.f32.gmra.mxu0 %v2687
  %v2751 = vpop.f32.mrf.mxu0
  %v2752 = vadd.f32 0.0, %v2751
  %2753 = vmatmul.f32.gmra.mxu0 %v2690
  %v2754 = vpop.f32.mrf.mxu0
  %v2755 = vadd.f32 0.0, %v2754
  %2756 = vdwg.mxu0
  %v2757 = vadd.f32 %v2606, %v2710
  %v2758 = vadd.f32 %v2607, %v2713
  %v2759 = vadd.f32 %v2608, %v2716
  %v2760 = vadd.f32 %v2609, %v2719
  %v2761 = vadd.f32 %v2610, %v2722
  %v2762 = vadd.f32 %v2611, %v2725
  %v2763 = vadd.f32 %v2612, %v2728
  %v2764 = vadd.f32 %v2613, %v2731
  %v2765 = vadd.f32 %v2614, %v2734
  %v2766 = vadd.f32 %v2615, %v2737
  %v2767 = vadd.f32 %v2616, %v2740
  %v2768 = vadd.f32 %v2617, %v2743
  %v2769 = vadd.f32 %v2618, %v2746
  %v2770 = vadd.f32 %v2619, %v2749
  %v2771 = vadd.f32 %v2620, %v2752
  %v2772 = vadd.f32 %v2621, %v2755
  %v2773 = vld [vmem:[%s2622 + $0x1] sm:$0xff]
  %v2774 = vld [vmem:[%s2622 + $0x11] sm:$0xff]
  %v2775 = vld [vmem:[%s2622 + $0x21] sm:$0xff]
  %v2776 = vld [vmem:[%s2622 + $0x31] sm:$0xff]
  %v2777 = vld [vmem:[%s2622 + $0x41] sm:$0xff]
  %v2778 = vld [vmem:[%s2622 + $0x51] sm:$0xff]
  %v2779 = vld [vmem:[%s2622 + $0x61] sm:$0xff]
  %v2780 = vld [vmem:[%s2622 + $0x71] sm:$0xff]
  %v2781 = vld [vmem:[%s2622 + $0xa1] sm:$0xff]
  %v2782 = vld [vmem:[%s2622 + $0xb1] sm:$0xff]
  %v2783 = vld [vmem:[%s2622 + $0xc1] sm:$0xff]
  %v2784 = vld [vmem:[%s2622 + $0xd1] sm:$0xff]
  %v2785 = vld [vmem:[%s2622 + $0xe1] sm:$0xff]
  %v2786 = vld [vmem:[%s2622 + $0xf1] sm:$0xff]
  %v2787 = vld [vmem:[%s2622 + $0x101] sm:$0xff]
  %v2788 = vld [vmem:[%s2622 + $0x111] sm:$0xff]
  %s2789 = scalar_lea.vmem %s3, 224
  %v2790 = vld [vmem:[%s2789] sm:$0xff]
  %v2791 = vld [vmem:[%s2789 + $0x8] sm:$0xff]
  %v2792 = vld [vmem:[%s2789 + $0x10] sm:$0xff]
  %v2793 = vld [vmem:[%s2789 + $0x18] sm:$0xff]
  %v2795 = vsel %vm38, %v2773, 0
  %v2798 = vsel %vm38, %v2774, 0
  %v2801 = vsel %vm38, %v2775, 0
  %v2804 = vsel %vm38, %v2776, 0
  %v2807 = vsel %vm38, %v2777, 0
  %v2810 = vsel %vm38, %v2778, 0
  %v2813 = vsel %vm38, %v2779, 0
  %v2816 = vsel %vm38, %v2780, 0
  %v2819 = vsel %vm38, %v2781, 0
  %v2822 = vsel %vm38, %v2782, 0
  %v2825 = vsel %vm38, %v2783, 0
  %v2828 = vsel %vm38, %v2784, 0
  %v2831 = vsel %vm38, %v2785, 0
  %v2834 = vsel %vm38, %v2786, 0
  %v2837 = vsel %vm38, %v2787, 0
  %v2840 = vsel %vm38, %v2788, 0
  %2842 = vmatpush.msra.mxu0 0.0
  %2843 = vmatpush.msra.mxu0 0.0
  %2844 = vmatpush.msra.mxu0 0.0
  %2845 = vmatpush.msra.mxu0 0.0
  %2846 = vmatpush.msra.mxu0 0.0
  %2847 = vmatpush.msra.mxu0 0.0
  %2848 = vmatpush.msra.mxu0 0.0
  %2849 = vmatpush.msra.mxu0 0.0
  %2850 = vmatpush.msra.mxu0 0.0
  %2851 = vmatpush.msra.mxu0 0.0
  %2852 = vmatpush.msra.mxu0 0.0
  %2853 = vmatpush.msra.mxu0 0.0
  %2854 = vmatpush.msra.mxu0 %v2793
  %2855 = vmatpush.msra.mxu0 %v2792
  %2856 = vmatpush.msra.mxu0 %v2791
  %2857 = vmatpush.msra.mxu0 %v2790
  %2858 = vmatmul.f32.gmra.mxu0 %v2795
  %v2859 = vpop.f32.mrf.mxu0
  %v2860 = vadd.f32 0.0, %v2859
  %2861 = vmatmul.f32.gmra.mxu0 %v2798
  %v2862 = vpop.f32.mrf.mxu0
  %v2863 = vadd.f32 0.0, %v2862
  %2864 = vmatmul.f32.gmra.mxu0 %v2801
  %v2865 = vpop.f32.mrf.mxu0
  %v2866 = vadd.f32 0.0, %v2865
  %2867 = vmatmul.f32.gmra.mxu0 %v2804
  %v2868 = vpop.f32.mrf.mxu0
  %v2869 = vadd.f32 0.0, %v2868
  %2870 = vmatmul.f32.gmra.mxu0 %v2807
  %v2871 = vpop.f32.mrf.mxu0
  %v2872 = vadd.f32 0.0, %v2871
  %2873 = vmatmul.f32.gmra.mxu0 %v2810
  %v2874 = vpop.f32.mrf.mxu0
  %v2875 = vadd.f32 0.0, %v2874
  %2876 = vmatmul.f32.gmra.mxu0 %v2813
  %v2877 = vpop.f32.mrf.mxu0
  %v2878 = vadd.f32 0.0, %v2877
  %2879 = vmatmul.f32.gmra.mxu0 %v2816
  %v2880 = vpop.f32.mrf.mxu0
  %v2881 = vadd.f32 0.0, %v2880
  %2882 = vmatmul.f32.gmra.mxu0 %v2819
  %v2883 = vpop.f32.mrf.mxu0
  %v2884 = vadd.f32 0.0, %v2883
  %2885 = vmatmul.f32.gmra.mxu0 %v2822
  %v2886 = vpop.f32.mrf.mxu0
  %v2887 = vadd.f32 0.0, %v2886
  %2888 = vmatmul.f32.gmra.mxu0 %v2825
  %v2889 = vpop.f32.mrf.mxu0
  %v2890 = vadd.f32 0.0, %v2889
  %2891 = vmatmul.f32.gmra.mxu0 %v2828
  %v2892 = vpop.f32.mrf.mxu0
  %v2893 = vadd.f32 0.0, %v2892
  %2894 = vmatmul.f32.gmra.mxu0 %v2831
  %v2895 = vpop.f32.mrf.mxu0
  %v2896 = vadd.f32 0.0, %v2895
  %2897 = vmatmul.f32.gmra.mxu0 %v2834
  %v2898 = vpop.f32.mrf.mxu0
  %v2899 = vadd.f32 0.0, %v2898
  %2900 = vmatmul.f32.gmra.mxu0 %v2837
  %v2901 = vpop.f32.mrf.mxu0
  %v2902 = vadd.f32 0.0, %v2901
  %2903 = vmatmul.f32.gmra.mxu0 %v2840
  %v2904 = vpop.f32.mrf.mxu0
  %v2905 = vadd.f32 0.0, %v2904
  %2906 = vdwg.mxu0
  %v2907 = vadd.f32 %v2757, %v2860
  %v2908 = vadd.f32 %v2758, %v2863
  %v2909 = vadd.f32 %v2759, %v2866
  %v2910 = vadd.f32 %v2760, %v2869
  %v2911 = vadd.f32 %v2761, %v2872
  %v2912 = vadd.f32 %v2762, %v2875
  %v2913 = vadd.f32 %v2763, %v2878
  %v2914 = vadd.f32 %v2764, %v2881
  %v2915 = vadd.f32 %v2765, %v2884
  %v2916 = vadd.f32 %v2766, %v2887
  %v2917 = vadd.f32 %v2767, %v2890
  %v2918 = vadd.f32 %v2768, %v2893
  %v2919 = vadd.f32 %v2769, %v2896
  %v2920 = vadd.f32 %v2770, %v2899
  %v2921 = vadd.f32 %v2771, %v2902
  %v2922 = vadd.f32 %v2772, %v2905
  %v2923 = vld [vmem:[%s2622 + $0x2] sm:$0xff]
  %v2924 = vld [vmem:[%s2622 + $0x12] sm:$0xff]
  %v2925 = vld [vmem:[%s2622 + $0x22] sm:$0xff]
  %v2926 = vld [vmem:[%s2622 + $0x32] sm:$0xff]
  %v2927 = vld [vmem:[%s2622 + $0x42] sm:$0xff]
  %v2928 = vld [vmem:[%s2622 + $0x52] sm:$0xff]
  %v2929 = vld [vmem:[%s2622 + $0x62] sm:$0xff]
  %v2930 = vld [vmem:[%s2622 + $0x72] sm:$0xff]
  %v2931 = vld [vmem:[%s2622 + $0xa2] sm:$0xff]
  %v2932 = vld [vmem:[%s2622 + $0xb2] sm:$0xff]
  %v2933 = vld [vmem:[%s2622 + $0xc2] sm:$0xff]
  %v2934 = vld [vmem:[%s2622 + $0xd2] sm:$0xff]
  %v2935 = vld [vmem:[%s2622 + $0xe2] sm:$0xff]
  %v2936 = vld [vmem:[%s2622 + $0xf2] sm:$0xff]
  %v2937 = vld [vmem:[%s2622 + $0x102] sm:$0xff]
  %v2938 = vld [vmem:[%s2622 + $0x112] sm:$0xff]
  %s2939 = scalar_lea.vmem %s3, 256
  %v2940 = vld [vmem:[%s2939] sm:$0xff]
  %v2941 = vld [vmem:[%s2939 + $0x8] sm:$0xff]
  %v2942 = vld [vmem:[%s2939 + $0x10] sm:$0xff]
  %v2943 = vld [vmem:[%s2939 + $0x18] sm:$0xff]
  %v2945 = vsel %vm38, %v2923, 0
  %v2948 = vsel %vm38, %v2924, 0
  %v2951 = vsel %vm38, %v2925, 0
  %v2954 = vsel %vm38, %v2926, 0
  %v2957 = vsel %vm38, %v2927, 0
  %v2960 = vsel %vm38, %v2928, 0
  %v2963 = vsel %vm38, %v2929, 0
  %v2966 = vsel %vm38, %v2930, 0
  %v2969 = vsel %vm38, %v2931, 0
  %v2972 = vsel %vm38, %v2932, 0
  %v2975 = vsel %vm38, %v2933, 0
  %v2978 = vsel %vm38, %v2934, 0
  %v2981 = vsel %vm38, %v2935, 0
  %v2984 = vsel %vm38, %v2936, 0
  %v2987 = vsel %vm38, %v2937, 0
  %v2990 = vsel %vm38, %v2938, 0
  %2992 = vmatpush.msra.mxu0 0.0
  %2993 = vmatpush.msra.mxu0 0.0
  %2994 = vmatpush.msra.mxu0 0.0
  %2995 = vmatpush.msra.mxu0 0.0
  %2996 = vmatpush.msra.mxu0 0.0
  %2997 = vmatpush.msra.mxu0 0.0
  %2998 = vmatpush.msra.mxu0 0.0
  %2999 = vmatpush.msra.mxu0 0.0
  %3000 = vmatpush.msra.mxu0 0.0
  %3001 = vmatpush.msra.mxu0 0.0
  %3002 = vmatpush.msra.mxu0 0.0
  %3003 = vmatpush.msra.mxu0 0.0
  %3004 = vmatpush.msra.mxu0 %v2943
  %3005 = vmatpush.msra.mxu0 %v2942
  %3006 = vmatpush.msra.mxu0 %v2941
  %3007 = vmatpush.msra.mxu0 %v2940
  %3008 = vmatmul.f32.gmra.mxu0 %v2945
  %v3009 = vpop.f32.mrf.mxu0
  %v3010 = vadd.f32 0.0, %v3009
  %3011 = vmatmul.f32.gmra.mxu0 %v2948
  %v3012 = vpop.f32.mrf.mxu0
  %v3013 = vadd.f32 0.0, %v3012
  %3014 = vmatmul.f32.gmra.mxu0 %v2951
  %v3015 = vpop.f32.mrf.mxu0
  %v3016 = vadd.f32 0.0, %v3015
  %3017 = vmatmul.f32.gmra.mxu0 %v2954
  %v3018 = vpop.f32.mrf.mxu0
  %v3019 = vadd.f32 0.0, %v3018
  %3020 = vmatmul.f32.gmra.mxu0 %v2957
  %v3021 = vpop.f32.mrf.mxu0
  %v3022 = vadd.f32 0.0, %v3021
  %3023 = vmatmul.f32.gmra.mxu0 %v2960
  %v3024 = vpop.f32.mrf.mxu0
  %v3025 = vadd.f32 0.0, %v3024
  %3026 = vmatmul.f32.gmra.mxu0 %v2963
  %v3027 = vpop.f32.mrf.mxu0
  %v3028 = vadd.f32 0.0, %v3027
  %3029 = vmatmul.f32.gmra.mxu0 %v2966
  %v3030 = vpop.f32.mrf.mxu0
  %v3031 = vadd.f32 0.0, %v3030
  %3032 = vmatmul.f32.gmra.mxu0 %v2969
  %v3033 = vpop.f32.mrf.mxu0
  %v3034 = vadd.f32 0.0, %v3033
  %3035 = vmatmul.f32.gmra.mxu0 %v2972
  %v3036 = vpop.f32.mrf.mxu0
  %v3037 = vadd.f32 0.0, %v3036
  %3038 = vmatmul.f32.gmra.mxu0 %v2975
  %v3039 = vpop.f32.mrf.mxu0
  %v3040 = vadd.f32 0.0, %v3039
  %3041 = vmatmul.f32.gmra.mxu0 %v2978
  %v3042 = vpop.f32.mrf.mxu0
  %v3043 = vadd.f32 0.0, %v3042
  %3044 = vmatmul.f32.gmra.mxu0 %v2981
  %v3045 = vpop.f32.mrf.mxu0
  %v3046 = vadd.f32 0.0, %v3045
  %3047 = vmatmul.f32.gmra.mxu0 %v2984
  %v3048 = vpop.f32.mrf.mxu0
  %v3049 = vadd.f32 0.0, %v3048
  %3050 = vmatmul.f32.gmra.mxu0 %v2987
  %v3051 = vpop.f32.mrf.mxu0
  %v3052 = vadd.f32 0.0, %v3051
  %3053 = vmatmul.f32.gmra.mxu0 %v2990
  %v3054 = vpop.f32.mrf.mxu0
  %v3055 = vadd.f32 0.0, %v3054
  %3056 = vdwg.mxu0
  %v3057 = vadd.f32 %v2907, %v3010
  %v3058 = vadd.f32 %v2908, %v3013
  %v3059 = vadd.f32 %v2909, %v3016
  %v3060 = vadd.f32 %v2910, %v3019
  %v3061 = vadd.f32 %v2911, %v3022
  %v3062 = vadd.f32 %v2912, %v3025
  %v3063 = vadd.f32 %v2913, %v3028
  %v3064 = vadd.f32 %v2914, %v3031
  %v3065 = vadd.f32 %v2915, %v3034
  %v3066 = vadd.f32 %v2916, %v3037
  %v3067 = vadd.f32 %v2917, %v3040
  %v3068 = vadd.f32 %v2918, %v3043
  %v3069 = vadd.f32 %v2919, %v3046
  %v3070 = vadd.f32 %v2920, %v3049
  %v3071 = vadd.f32 %v2921, %v3052
  %v3072 = vadd.f32 %v2922, %v3055
  %v3073 = vld [vmem:[%s9] sm:$0xff]
  %v3074 = vld [vmem:[%s9 + $0x8] sm:$0xff]
  %v3075 = vld [vmem:[%s9 + $0x10] sm:$0xff]
  %v3076 = vld [vmem:[%s9 + $0x18] sm:$0xff]
  %v3077 = vld [vmem:[%s10] sm:$0xf]
  %v3078 = vsel %vm38, %v3057, 0.0
  %v3079 = vsel %vm38, %v3058, 0.0
  %v3080 = vadd.f32 %v3078, %v3079
  %v3081 = vsel %vm38, %v3059, 0.0
  %v3082 = vadd.f32 %v3080, %v3081
  %v3083 = vsel %vm38, %v3060, 0.0
  %v3084 = vadd.f32 %v3082, %v3083
  %v3085 = vsel %vm38, %v3061, 0.0
  %v3086 = vadd.f32 %v3084, %v3085
  %v3087 = vsel %vm38, %v3062, 0.0
  %v3088 = vadd.f32 %v3086, %v3087
  %v3089 = vsel %vm38, %v3063, 0.0
  %v3090 = vadd.f32 %v3088, %v3089
  %v3091 = vsel %vm38, %v3064, 0.0
  %v3092 = vadd.f32 %v3090, %v3091
  %v3093 = vsel %vm38, %v3065, 0.0
  %v3094 = vadd.f32 %v3092, %v3093
  %v3095 = vsel %vm38, %v3066, 0.0
  %v3096 = vadd.f32 %v3094, %v3095
  %v3097 = vsel %vm38, %v3067, 0.0
  %v3098 = vadd.f32 %v3096, %v3097
  %v3099 = vsel %vm38, %v3068, 0.0
  %v3100 = vadd.f32 %v3098, %v3099
  %v3101 = vsel %vm38, %v3069, 0.0
  %v3102 = vadd.f32 %v3100, %v3101
  %v3103 = vsel %vm38, %v3070, 0.0
  %v3104 = vadd.f32 %v3102, %v3103
  %v3105 = vsel %vm38, %v3071, 0.0
  %v3106 = vadd.f32 %v3104, %v3105
  %v3107 = vsel %vm38, %v3072, 0.0
  %v3108 = vadd.f32 %v3106, %v3107
  %v3109 = vrot.slane %v3108, 4
  %v3110 = vadd.f32 %v3108, %v3109
  %v3111 = vrot.slane %v3110, 2
  %v3112 = vadd.f32 %v3110, %v3111
  %v3113 = vrot.slane %v3112, 1
  %v3114 = vadd.f32 %v3112, %v3113
  %v3116 = vsel %vm38, %v3114, 0
  %3118 = vmatpush.msra.mxu0 0.0
  %3119 = vmatpush.msra.mxu0 0.0
  %3120 = vmatpush.msra.mxu0 0.0
  %3121 = vmatpush.msra.mxu0 0.0
  %3122 = vmatpush.msra.mxu0 0.0
  %3123 = vmatpush.msra.mxu0 0.0
  %3124 = vmatpush.msra.mxu0 0.0
  %3125 = vmatpush.msra.mxu0 0.0
  %3126 = vmatpush.msra.mxu0 0.0
  %3127 = vmatpush.msra.mxu0 0.0
  %3128 = vmatpush.msra.mxu0 0.0
  %3129 = vmatpush.msra.mxu0 0.0
  %3130 = vmatpush.msra.mxu0 %v3076
  %3131 = vmatpush.msra.mxu0 %v3075
  %3132 = vmatpush.msra.mxu0 %v3074
  %3133 = vmatpush.msra.mxu0 %v3073
  %3134 = vmatmul.f32.gmra.mxu0 %v3116
  %v3135 = vpop.f32.mrf.mxu0
  %v3136 = vadd.f32 0.0, %v3135
  %3137 = vdwg.mxu0
  %v3138 = vmul.f32 %v3136, %v1470
  %v3140 = vsel %vm1472, %v3138, 0
  %v3143 = vsel %vm1476, %v3077, 0
  %3145 = vmatpush.msra.mxu0 0.0
  %3146 = vmatpush.msra.mxu0 0.0
  %3147 = vmatpush.msra.mxu0 0.0
  %3148 = vmatpush.msra.mxu0 0.0
  %3149 = vmatpush.msra.mxu0 0.0
  %3150 = vmatpush.msra.mxu0 0.0
  %3151 = vmatpush.msra.mxu0 0.0
  %3152 = vmatpush.msra.mxu0 0.0
  %3153 = vmatpush.msra.mxu0 0.0
  %3154 = vmatpush.msra.mxu0 0.0
  %3155 = vmatpush.msra.mxu0 0.0
  %3156 = vmatpush.msra.mxu0 0.0
  %3157 = vmatpush.msra.mxu0 0.0
  %3158 = vmatpush.msra.mxu0 0.0
  %3159 = vmatpush.msra.mxu0 0.0
  %3160 = vmatpush.msra.mxu0 %v3143
  %3161 = vmatmul.f32.gmra.mxu0 %v3140
  %v3162 = vpop.f32.mrf.mxu0
  %v3163 = vadd.f32 0.0, %v3162
  %3164 = vdwg.mxu0
  %v3165 = vperm.slane %v3163, 0
  %v3166 = vsub.f32 %v3057, %v3165
  %v3167 = vsub.f32 %v3058, %v3165
  %v3168 = vsub.f32 %v3059, %v3165
  %v3169 = vsub.f32 %v3060, %v3165
  %v3170 = vsub.f32 %v3061, %v3165
  %v3171 = vsub.f32 %v3062, %v3165
  %v3172 = vsub.f32 %v3063, %v3165
  %v3173 = vsub.f32 %v3064, %v3165
  %v3174 = vsub.f32 %v3065, %v3165
  %v3175 = vsub.f32 %v3066, %v3165
  %v3176 = vsub.f32 %v3067, %v3165
  %v3177 = vsub.f32 %v3068, %v3165
  %v3178 = vsub.f32 %v3069, %v3165
  %v3179 = vsub.f32 %v3070, %v3165
  %v3180 = vsub.f32 %v3071, %v3165
  %v3181 = vsub.f32 %v3072, %v3165
  %v3182 = vmul.f32 %v3166, %v3166
  %v3183 = vmul.f32 %v3167, %v3167
  %v3184 = vmul.f32 %v3168, %v3168
  %v3185 = vmul.f32 %v3169, %v3169
  %v3186 = vmul.f32 %v3170, %v3170
  %v3187 = vmul.f32 %v3171, %v3171
  %v3188 = vmul.f32 %v3172, %v3172
  %v3189 = vmul.f32 %v3173, %v3173
  %v3190 = vmul.f32 %v3174, %v3174
  %v3191 = vmul.f32 %v3175, %v3175
  %v3192 = vmul.f32 %v3176, %v3176
  %v3193 = vmul.f32 %v3177, %v3177
  %v3194 = vmul.f32 %v3178, %v3178
  %v3195 = vmul.f32 %v3179, %v3179
  %v3196 = vmul.f32 %v3180, %v3180
  %v3197 = vmul.f32 %v3181, %v3181
  %v3198 = vsel %vm38, %v3182, 0.0
  %v3199 = vsel %vm38, %v3183, 0.0
  %v3200 = vadd.f32 %v3198, %v3199
  %v3201 = vsel %vm38, %v3184, 0.0
  %v3202 = vadd.f32 %v3200, %v3201
  %v3203 = vsel %vm38, %v3185, 0.0
  %v3204 = vadd.f32 %v3202, %v3203
  %v3205 = vsel %vm38, %v3186, 0.0
  %v3206 = vadd.f32 %v3204, %v3205
  %v3207 = vsel %vm38, %v3187, 0.0
  %v3208 = vadd.f32 %v3206, %v3207
  %v3209 = vsel %vm38, %v3188, 0.0
  %v3210 = vadd.f32 %v3208, %v3209
  %v3211 = vsel %vm38, %v3189, 0.0
  %v3212 = vadd.f32 %v3210, %v3211
  %v3213 = vsel %vm38, %v3190, 0.0
  %v3214 = vadd.f32 %v3212, %v3213
  %v3215 = vsel %vm38, %v3191, 0.0
  %v3216 = vadd.f32 %v3214, %v3215
  %v3217 = vsel %vm38, %v3192, 0.0
  %v3218 = vadd.f32 %v3216, %v3217
  %v3219 = vsel %vm38, %v3193, 0.0
  %v3220 = vadd.f32 %v3218, %v3219
  %v3221 = vsel %vm38, %v3194, 0.0
  %v3222 = vadd.f32 %v3220, %v3221
  %v3223 = vsel %vm38, %v3195, 0.0
  %v3224 = vadd.f32 %v3222, %v3223
  %v3225 = vsel %vm38, %v3196, 0.0
  %v3226 = vadd.f32 %v3224, %v3225
  %v3227 = vsel %vm38, %v3197, 0.0
  %v3228 = vadd.f32 %v3226, %v3227
  %v3229 = vrot.slane %v3228, 4
  %v3230 = vadd.f32 %v3228, %v3229
  %v3231 = vrot.slane %v3230, 2
  %v3232 = vadd.f32 %v3230, %v3231
  %v3233 = vrot.slane %v3232, 1
  %v3234 = vadd.f32 %v3232, %v3233
  %v3236 = vsel %vm38, %v3234, 0
  %3238 = vmatpush.msra.mxu0 0.0
  %3239 = vmatpush.msra.mxu0 0.0
  %3240 = vmatpush.msra.mxu0 0.0
  %3241 = vmatpush.msra.mxu0 0.0
  %3242 = vmatpush.msra.mxu0 0.0
  %3243 = vmatpush.msra.mxu0 0.0
  %3244 = vmatpush.msra.mxu0 0.0
  %3245 = vmatpush.msra.mxu0 0.0
  %3246 = vmatpush.msra.mxu0 0.0
  %3247 = vmatpush.msra.mxu0 0.0
  %3248 = vmatpush.msra.mxu0 0.0
  %3249 = vmatpush.msra.mxu0 0.0
  %3250 = vmatpush.msra.mxu0 %v3076
  %3251 = vmatpush.msra.mxu0 %v3075
  %3252 = vmatpush.msra.mxu0 %v3074
  %3253 = vmatpush.msra.mxu0 %v3073
  %3254 = vmatmul.f32.gmra.mxu0 %v3236
  %v3255 = vpop.f32.mrf.mxu0
  %v3256 = vadd.f32 0.0, %v3255
  %3257 = vdwg.mxu0
  %v3258 = vmul.f32 %v3256, %v1470
  %s3259 = scalar_lea.vmem %s7, 1
  %v3260 = vld [vmem:[%s3259] sm:$0x1]
  %v3261 = vadd.f32 %v3258, 1e-05
  %v3262 = vrsqrt.pop %v3261
  %v3263 = vmul.f32 %v3262, %v3261
  %v3264 = vmul.f32 %v3263, %v3262
  %v3265 = vmul.f32 0.5, %v3264
  %v3266 = vsub.f32 1.5, %v3265
  %v3267 = vmul.f32 %v3262, %v3266
  %vm3268 = vweird.f32 %v3261
  %vm3269 = vweird.f32 %v3262
  %vm3270 = vmor %vm3268, %vm3269
  %v3271 = vsel %vm3270, %v3262, %v3267
  %v3272 = vmul.f32 %v3260, %v3271
  %s3273 = scalar_lea.vmem %s8, 1
  %v3274 = vld [vmem:[%s3273] sm:$0x1]
  %v3275 = vmul.f32 %v3138, %v3272
  %v3276 = vsub.f32 %v3274, %v3275
  %v3278 = vsel %vm1472, %v3272, 0
  %3280 = vmatpush.msra.mxu0 0.0
  %3281 = vmatpush.msra.mxu0 0.0
  %3282 = vmatpush.msra.mxu0 0.0
  %3283 = vmatpush.msra.mxu0 0.0
  %3284 = vmatpush.msra.mxu0 0.0
  %3285 = vmatpush.msra.mxu0 0.0
  %3286 = vmatpush.msra.mxu0 0.0
  %3287 = vmatpush.msra.mxu0 0.0
  %3288 = vmatpush.msra.mxu0 0.0
  %3289 = vmatpush.msra.mxu0 0.0
  %3290 = vmatpush.msra.mxu0 0.0
  %3291 = vmatpush.msra.mxu0 0.0
  %3292 = vmatpush.msra.mxu0 0.0
  %3293 = vmatpush.msra.mxu0 0.0
  %3294 = vmatpush.msra.mxu0 0.0
  %3295 = vmatpush.msra.mxu0 %v3143
  %3296 = vmatmul.f32.gmra.mxu0 %v3278
  %v3297 = vpop.f32.mrf.mxu0
  %v3298 = vadd.f32 0.0, %v3297
  %3299 = vdwg.mxu0
  %v3300 = vperm.slane %v3298, 0
  %v3301 = vmul.f32 %v3057, %v3300
  %v3302 = vmul.f32 %v3058, %v3300
  %v3303 = vmul.f32 %v3059, %v3300
  %v3304 = vmul.f32 %v3060, %v3300
  %v3305 = vmul.f32 %v3061, %v3300
  %v3306 = vmul.f32 %v3062, %v3300
  %v3307 = vmul.f32 %v3063, %v3300
  %v3308 = vmul.f32 %v3064, %v3300
  %v3309 = vmul.f32 %v3065, %v3300
  %v3310 = vmul.f32 %v3066, %v3300
  %v3311 = vmul.f32 %v3067, %v3300
  %v3312 = vmul.f32 %v3068, %v3300
  %v3313 = vmul.f32 %v3069, %v3300
  %v3314 = vmul.f32 %v3070, %v3300
  %v3315 = vmul.f32 %v3071, %v3300
  %v3316 = vmul.f32 %v3072, %v3300
  %v3318 = vsel %vm1472, %v3276, 0
  %3320 = vmatpush.msra.mxu0 0.0
  %3321 = vmatpush.msra.mxu0 0.0
  %3322 = vmatpush.msra.mxu0 0.0
  %3323 = vmatpush.msra.mxu0 0.0
  %3324 = vmatpush.msra.mxu0 0.0
  %3325 = vmatpush.msra.mxu0 0.0
  %3326 = vmatpush.msra.mxu0 0.0
  %3327 = vmatpush.msra.mxu0 0.0
  %3328 = vmatpush.msra.mxu0 0.0
  %3329 = vmatpush.msra.mxu0 0.0
  %3330 = vmatpush.msra.mxu0 0.0
  %3331 = vmatpush.msra.mxu0 0.0
  %3332 = vmatpush.msra.mxu0 0.0
  %3333 = vmatpush.msra.mxu0 0.0
  %3334 = vmatpush.msra.mxu0 0.0
  %3335 = vmatpush.msra.mxu0 %v3143
  %3336 = vmatmul.f32.gmra.mxu0 %v3318
  %v3337 = vpop.f32.mrf.mxu0
  %v3338 = vadd.f32 0.0, %v3337
  %3339 = vdwg.mxu0
  %v3340 = vperm.slane %v3338, 0
  %v3341 = vadd.f32 %v3301, %v3340
  %v3342 = vadd.f32 %v3302, %v3340
  %v3343 = vadd.f32 %v3303, %v3340
  %v3344 = vadd.f32 %v3304, %v3340
  %v3345 = vadd.f32 %v3305, %v3340
  %v3346 = vadd.f32 %v3306, %v3340
  %v3347 = vadd.f32 %v3307, %v3340
  %v3348 = vadd.f32 %v3308, %v3340
  %v3349 = vadd.f32 %v3309, %v3340
  %v3350 = vadd.f32 %v3310, %v3340
  %v3351 = vadd.f32 %v3311, %v3340
  %v3352 = vadd.f32 %v3312, %v3340
  %v3353 = vadd.f32 %v3313, %v3340
  %v3354 = vadd.f32 %v3314, %v3340
  %v3355 = vadd.f32 %v3315, %v3340
  %v3356 = vadd.f32 %v3316, %v3340
  %vm3357 = vcmp.ge.f32.partialorder %v3341, 0.0
  %vm3358 = vcmp.ge.f32.partialorder %v3342, 0.0
  %vm3359 = vcmp.ge.f32.partialorder %v3343, 0.0
  %vm3360 = vcmp.ge.f32.partialorder %v3344, 0.0
  %vm3361 = vcmp.ge.f32.partialorder %v3345, 0.0
  %vm3362 = vcmp.ge.f32.partialorder %v3346, 0.0
  %vm3363 = vcmp.ge.f32.partialorder %v3347, 0.0
  %vm3364 = vcmp.ge.f32.partialorder %v3348, 0.0
  %vm3365 = vcmp.ge.f32.partialorder %v3349, 0.0
  %vm3366 = vcmp.ge.f32.partialorder %v3350, 0.0
  %vm3367 = vcmp.ge.f32.partialorder %v3351, 0.0
  %vm3368 = vcmp.ge.f32.partialorder %v3352, 0.0
  %vm3369 = vcmp.ge.f32.partialorder %v3353, 0.0
  %vm3370 = vcmp.ge.f32.partialorder %v3354, 0.0
  %vm3371 = vcmp.ge.f32.partialorder %v3355, 0.0
  %vm3372 = vcmp.ge.f32.partialorder %v3356, 0.0
  %v3373 = vmul.f32 %v3341, 0.2
  %v3374 = vmul.f32 %v3342, 0.2
  %v3375 = vmul.f32 %v3343, 0.2
  %v3376 = vmul.f32 %v3344, 0.2
  %v3377 = vmul.f32 %v3345, 0.2
  %v3378 = vmul.f32 %v3346, 0.2
  %v3379 = vmul.f32 %v3347, 0.2
  %v3380 = vmul.f32 %v3348, 0.2
  %v3381 = vmul.f32 %v3349, 0.2
  %v3382 = vmul.f32 %v3350, 0.2
  %v3383 = vmul.f32 %v3351, 0.2
  %v3384 = vmul.f32 %v3352, 0.2
  %v3385 = vmul.f32 %v3353, 0.2
  %v3386 = vmul.f32 %v3354, 0.2
  %v3387 = vmul.f32 %v3355, 0.2
  %v3388 = vmul.f32 %v3356, 0.2
  %v3389 = vsel %vm3357, %v3341, %v3373
  %v3390 = vsel %vm3358, %v3342, %v3374
  %v3391 = vsel %vm3359, %v3343, %v3375
  %v3392 = vsel %vm3360, %v3344, %v3376
  %v3393 = vsel %vm3361, %v3345, %v3377
  %v3394 = vsel %vm3362, %v3346, %v3378
  %v3395 = vsel %vm3363, %v3347, %v3379
  %v3396 = vsel %vm3364, %v3348, %v3380
  %v3397 = vsel %vm3365, %v3349, %v3381
  %v3398 = vsel %vm3366, %v3350, %v3382
  %v3399 = vsel %vm3367, %v3351, %v3383
  %v3400 = vsel %vm3368, %v3352, %v3384
  %v3401 = vsel %vm3369, %v3353, %v3385
  %v3402 = vsel %vm3370, %v3354, %v3386
  %v3403 = vsel %vm3371, %v3355, %v3387
  %v3404 = vsel %vm3372, %v3356, %v3388
  %3405 = vst.msk [vmem:[%s1738 + $0x1] sm:$0xff] %vm38, %v3389
  %3406 = vst.msk [vmem:[%s1738 + $0x11] sm:$0xff] %vm38, %v3390
  %3407 = vst.msk [vmem:[%s1738 + $0x21] sm:$0xff] %vm38, %v3391
  %3408 = vst.msk [vmem:[%s1738 + $0x31] sm:$0xff] %vm38, %v3392
  %3409 = vst.msk [vmem:[%s1738 + $0x41] sm:$0xff] %vm38, %v3393
  %3410 = vst.msk [vmem:[%s1738 + $0x51] sm:$0xff] %vm38, %v3394
  %3411 = vst.msk [vmem:[%s1738 + $0x61] sm:$0xff] %vm38, %v3395
  %3412 = vst.msk [vmem:[%s1738 + $0x71] sm:$0xff] %vm38, %v3396
  %3413 = vst.msk [vmem:[%s1738 + $0xa1] sm:$0xff] %vm38, %v3397
  %3414 = vst.msk [vmem:[%s1738 + $0xb1] sm:$0xff] %vm38, %v3398
  %3415 = vst.msk [vmem:[%s1738 + $0xc1] sm:$0xff] %vm38, %v3399
  %3416 = vst.msk [vmem:[%s1738 + $0xd1] sm:$0xff] %vm38, %v3400
  %3417 = vst.msk [vmem:[%s1738 + $0xe1] sm:$0xff] %vm38, %v3401
  %3418 = vst.msk [vmem:[%s1738 + $0xf1] sm:$0xff] %vm38, %v3402
  %3419 = vst.msk [vmem:[%s1738 + $0x101] sm:$0xff] %vm38, %v3403
  %3420 = vst.msk [vmem:[%s1738 + $0x111] sm:$0xff] %vm38, %v3404
  %v3421 = vld [vmem:[#allocation2] sm:$0xff]
  %v3422 = vld [vmem:[#allocation2 + $0x10] sm:$0xff]
  %v3423 = vld [vmem:[#allocation2 + $0x20] sm:$0xff]
  %v3424 = vld [vmem:[#allocation2 + $0x30] sm:$0xff]
  %v3425 = vld [vmem:[#allocation2 + $0x40] sm:$0xff]
  %v3426 = vld [vmem:[#allocation2 + $0x50] sm:$0xff]
  %v3427 = vld [vmem:[#allocation2 + $0x60] sm:$0xff]
  %v3428 = vld [vmem:[#allocation2 + $0x70] sm:$0xff]
  %v3429 = vld [vmem:[#allocation2 + $0xa0] sm:$0xff]
  %v3430 = vld [vmem:[#allocation2 + $0xb0] sm:$0xff]
  %v3431 = vld [vmem:[#allocation2 + $0xc0] sm:$0xff]
  %v3432 = vld [vmem:[#allocation2 + $0xd0] sm:$0xff]
  %v3433 = vld [vmem:[#allocation2 + $0xe0] sm:$0xff]
  %v3434 = vld [vmem:[#allocation2 + $0xf0] sm:$0xff]
  %v3435 = vld [vmem:[#allocation2 + $0x100] sm:$0xff]
  %v3436 = vld [vmem:[#allocation2 + $0x110] sm:$0xff]
  %v3437 = vld [vmem:[%s4] sm:$0xff]
  %v3438 = vld [vmem:[%s4 + $0x8] sm:$0xff]
  %v3439 = vld [vmem:[%s4 + $0x10] sm:$0xff]
  %v3440 = vld [vmem:[%s4 + $0x18] sm:$0xff]
  %v3441 = vld [vmem:[#allocation2 + $0x1] sm:$0xff]
  %v3442 = vld [vmem:[#allocation2 + $0x11] sm:$0xff]
  %v3443 = vld [vmem:[#allocation2 + $0x21] sm:$0xff]
  %v3444 = vld [vmem:[#allocation2 + $0x31] sm:$0xff]
  %v3445 = vld [vmem:[#allocation2 + $0x41] sm:$0xff]
  %v3446 = vld [vmem:[#allocation2 + $0x51] sm:$0xff]
  %v3447 = vld [vmem:[#allocation2 + $0x61] sm:$0xff]
  %v3448 = vld [vmem:[#allocation2 + $0x71] sm:$0xff]
  %v3449 = vld [vmem:[#allocation2 + $0xa1] sm:$0xff]
  %v3450 = vld [vmem:[#allocation2 + $0xb1] sm:$0xff]
  %v3451 = vld [vmem:[#allocation2 + $0xc1] sm:$0xff]
  %v3452 = vld [vmem:[#allocation2 + $0xd1] sm:$0xff]
  %v3453 = vld [vmem:[#allocation2 + $0xe1] sm:$0xff]
  %v3454 = vld [vmem:[#allocation2 + $0xf1] sm:$0xff]
  %v3455 = vld [vmem:[#allocation2 + $0x101] sm:$0xff]
  %v3456 = vld [vmem:[#allocation2 + $0x111] sm:$0xff]
  %s3457 = scalar_lea.vmem %s4, 32
  %v3458 = vld [vmem:[%s3457] sm:$0xff]
  %v3459 = vld [vmem:[%s3457 + $0x8] sm:$0xff]
  %v3460 = vld [vmem:[%s3457 + $0x10] sm:$0xff]
  %v3461 = vld [vmem:[%s3457 + $0x18] sm:$0xff]
  %v3463 = vsel %vm38, %v3441, 0
  %v3466 = vsel %vm38, %v3442, 0
  %v3469 = vsel %vm38, %v3443, 0
  %v3472 = vsel %vm38, %v3444, 0
  %v3475 = vsel %vm38, %v3445, 0
  %v3478 = vsel %vm38, %v3446, 0
  %v3481 = vsel %vm38, %v3447, 0
  %v3484 = vsel %vm38, %v3448, 0
  %v3487 = vsel %vm38, %v3449, 0
  %v3490 = vsel %vm38, %v3450, 0
  %v3493 = vsel %vm38, %v3451, 0
  %v3496 = vsel %vm38, %v3452, 0
  %v3499 = vsel %vm38, %v3453, 0
  %v3502 = vsel %vm38, %v3454, 0
  %v3505 = vsel %vm38, %v3455, 0
  %v3508 = vsel %vm38, %v3456, 0
  %3510 = vmatpush.msra.mxu0 0.0
  %3511 = vmatpush.msra.mxu0 0.0
  %3512 = vmatpush.msra.mxu0 0.0
  %3513 = vmatpush.msra.mxu0 0.0
  %3514 = vmatpush.msra.mxu0 0.0
  %3515 = vmatpush.msra.mxu0 0.0
  %3516 = vmatpush.msra.mxu0 0.0
  %3517 = vmatpush.msra.mxu0 0.0
  %3518 = vmatpush.msra.mxu0 0.0
  %3519 = vmatpush.msra.mxu0 0.0
  %3520 = vmatpush.msra.mxu0 0.0
  %3521 = vmatpush.msra.mxu0 0.0
  %3522 = vmatpush.msra.mxu0 %v3461
  %3523 = vmatpush.msra.mxu0 %v3460
  %3524 = vmatpush.msra.mxu0 %v3459
  %3525 = vmatpush.msra.mxu0 %v3458
  %3526 = vmatmul.f32.gmra.mxu0 %v3463
  %v3527 = vpop.f32.mrf.mxu0
  %v3528 = vadd.f32 0.0, %v3527
  %3529 = vmatmul.f32.gmra.mxu0 %v3466
  %v3530 = vpop.f32.mrf.mxu0
  %v3531 = vadd.f32 0.0, %v3530
  %3532 = vmatmul.f32.gmra.mxu0 %v3469
  %v3533 = vpop.f32.mrf.mxu0
  %v3534 = vadd.f32 0.0, %v3533
  %3535 = vmatmul.f32.gmra.mxu0 %v3472
  %v3536 = vpop.f32.mrf.mxu0
  %v3537 = vadd.f32 0.0, %v3536
  %3538 = vmatmul.f32.gmra.mxu0 %v3475
  %v3539 = vpop.f32.mrf.mxu0
  %v3540 = vadd.f32 0.0, %v3539
  %3541 = vmatmul.f32.gmra.mxu0 %v3478
  %v3542 = vpop.f32.mrf.mxu0
  %v3543 = vadd.f32 0.0, %v3542
  %3544 = vmatmul.f32.gmra.mxu0 %v3481
  %v3545 = vpop.f32.mrf.mxu0
  %v3546 = vadd.f32 0.0, %v3545
  %3547 = vmatmul.f32.gmra.mxu0 %v3484
  %v3548 = vpop.f32.mrf.mxu0
  %v3549 = vadd.f32 0.0, %v3548
  %3550 = vmatmul.f32.gmra.mxu0 %v3487
  %v3551 = vpop.f32.mrf.mxu0
  %v3552 = vadd.f32 0.0, %v3551
  %3553 = vmatmul.f32.gmra.mxu0 %v3490
  %v3554 = vpop.f32.mrf.mxu0
  %v3555 = vadd.f32 0.0, %v3554
  %3556 = vmatmul.f32.gmra.mxu0 %v3493
  %v3557 = vpop.f32.mrf.mxu0
  %v3558 = vadd.f32 0.0, %v3557
  %3559 = vmatmul.f32.gmra.mxu0 %v3496
  %v3560 = vpop.f32.mrf.mxu0
  %v3561 = vadd.f32 0.0, %v3560
  %3562 = vmatmul.f32.gmra.mxu0 %v3499
  %v3563 = vpop.f32.mrf.mxu0
  %v3564 = vadd.f32 0.0, %v3563
  %3565 = vmatmul.f32.gmra.mxu0 %v3502
  %v3566 = vpop.f32.mrf.mxu0
  %v3567 = vadd.f32 0.0, %v3566
  %3568 = vmatmul.f32.gmra.mxu0 %v3505
  %v3569 = vpop.f32.mrf.mxu0
  %v3570 = vadd.f32 0.0, %v3569
  %3571 = vmatmul.f32.gmra.mxu0 %v3508
  %v3572 = vpop.f32.mrf.mxu0
  %v3573 = vadd.f32 0.0, %v3572
  %3574 = vdwg.mxu0
  %v3576 = vsel %vm38, %v3421, 0
  %v3579 = vsel %vm38, %v3422, 0
  %v3582 = vsel %vm38, %v3423, 0
  %v3585 = vsel %vm38, %v3424, 0
  %v3588 = vsel %vm38, %v3425, 0
  %v3591 = vsel %vm38, %v3426, 0
  %v3594 = vsel %vm38, %v3427, 0
  %v3597 = vsel %vm38, %v3428, 0
  %v3600 = vsel %vm38, %v3429, 0
  %v3603 = vsel %vm38, %v3430, 0
  %v3606 = vsel %vm38, %v3431, 0
  %v3609 = vsel %vm38, %v3432, 0
  %v3612 = vsel %vm38, %v3433, 0
  %v3615 = vsel %vm38, %v3434, 0
  %v3618 = vsel %vm38, %v3435, 0
  %v3621 = vsel %vm38, %v3436, 0
  %3623 = vmatpush.msra.mxu0 0.0
  %3624 = vmatpush.msra.mxu0 0.0
  %3625 = vmatpush.msra.mxu0 0.0
  %3626 = vmatpush.msra.mxu0 0.0
  %3627 = vmatpush.msra.mxu0 0.0
  %3628 = vmatpush.msra.mxu0 0.0
  %3629 = vmatpush.msra.mxu0 0.0
  %3630 = vmatpush.msra.mxu0 0.0
  %3631 = vmatpush.msra.mxu0 0.0
  %3632 = vmatpush.msra.mxu0 0.0
  %3633 = vmatpush.msra.mxu0 0.0
  %3634 = vmatpush.msra.mxu0 0.0
  %3635 = vmatpush.msra.mxu0 %v3440
  %3636 = vmatpush.msra.mxu0 %v3439
  %3637 = vmatpush.msra.mxu0 %v3438
  %3638 = vmatpush.msra.mxu0 %v3437
  %3639 = vmatmul.f32.gmra.mxu0 %v3576
  %v3640 = vpop.f32.mrf.mxu0
  %v3641 = vadd.f32 %v3528, %v3640
  %3642 = vmatmul.f32.gmra.mxu0 %v3579
  %v3643 = vpop.f32.mrf.mxu0
  %v3644 = vadd.f32 %v3531, %v3643
  %3645 = vmatmul.f32.gmra.mxu0 %v3582
  %v3646 = vpop.f32.mrf.mxu0
  %v3647 = vadd.f32 %v3534, %v3646
  %3648 = vmatmul.f32.gmra.mxu0 %v3585
  %v3649 = vpop.f32.mrf.mxu0
  %v3650 = vadd.f32 %v3537, %v3649
  %3651 = vmatmul.f32.gmra.mxu0 %v3588
  %v3652 = vpop.f32.mrf.mxu0
  %v3653 = vadd.f32 %v3540, %v3652
  %3654 = vmatmul.f32.gmra.mxu0 %v3591
  %v3655 = vpop.f32.mrf.mxu0
  %v3656 = vadd.f32 %v3543, %v3655
  %3657 = vmatmul.f32.gmra.mxu0 %v3594
  %v3658 = vpop.f32.mrf.mxu0
  %v3659 = vadd.f32 %v3546, %v3658
  %3660 = vmatmul.f32.gmra.mxu0 %v3597
  %v3661 = vpop.f32.mrf.mxu0
  %v3662 = vadd.f32 %v3549, %v3661
  %3663 = vmatmul.f32.gmra.mxu0 %v3600
  %v3664 = vpop.f32.mrf.mxu0
  %v3665 = vadd.f32 %v3552, %v3664
  %3666 = vmatmul.f32.gmra.mxu0 %v3603
  %v3667 = vpop.f32.mrf.mxu0
  %v3668 = vadd.f32 %v3555, %v3667
  %3669 = vmatmul.f32.gmra.mxu0 %v3606
  %v3670 = vpop.f32.mrf.mxu0
  %v3671 = vadd.f32 %v3558, %v3670
  %3672 = vmatmul.f32.gmra.mxu0 %v3609
  %v3673 = vpop.f32.mrf.mxu0
  %v3674 = vadd.f32 %v3561, %v3673
  %3675 = vmatmul.f32.gmra.mxu0 %v3612
  %v3676 = vpop.f32.mrf.mxu0
  %v3677 = vadd.f32 %v3564, %v3676
  %3678 = vmatmul.f32.gmra.mxu0 %v3615
  %v3679 = vpop.f32.mrf.mxu0
  %v3680 = vadd.f32 %v3567, %v3679
  %3681 = vmatmul.f32.gmra.mxu0 %v3618
  %v3682 = vpop.f32.mrf.mxu0
  %v3683 = vadd.f32 %v3570, %v3682
  %3684 = vmatmul.f32.gmra.mxu0 %v3621
  %v3685 = vpop.f32.mrf.mxu0
  %v3686 = vadd.f32 %v3573, %v3685
  %3687 = vdwg.mxu0
  %v3688 = vld [vmem:[#allocation2 + $0x2] sm:$0xff]
  %v3689 = vld [vmem:[#allocation2 + $0x12] sm:$0xff]
  %v3690 = vld [vmem:[#allocation2 + $0x22] sm:$0xff]
  %v3691 = vld [vmem:[#allocation2 + $0x32] sm:$0xff]
  %v3692 = vld [vmem:[#allocation2 + $0x42] sm:$0xff]
  %v3693 = vld [vmem:[#allocation2 + $0x52] sm:$0xff]
  %v3694 = vld [vmem:[#allocation2 + $0x62] sm:$0xff]
  %v3695 = vld [vmem:[#allocation2 + $0x72] sm:$0xff]
  %v3696 = vld [vmem:[#allocation2 + $0xa2] sm:$0xff]
  %v3697 = vld [vmem:[#allocation2 + $0xb2] sm:$0xff]
  %v3698 = vld [vmem:[#allocation2 + $0xc2] sm:$0xff]
  %v3699 = vld [vmem:[#allocation2 + $0xd2] sm:$0xff]
  %v3700 = vld [vmem:[#allocation2 + $0xe2] sm:$0xff]
  %v3701 = vld [vmem:[#allocation2 + $0xf2] sm:$0xff]
  %v3702 = vld [vmem:[#allocation2 + $0x102] sm:$0xff]
  %v3703 = vld [vmem:[#allocation2 + $0x112] sm:$0xff]
  %s3704 = scalar_lea.vmem %s4, 64
  %v3705 = vld [vmem:[%s3704] sm:$0xff]
  %v3706 = vld [vmem:[%s3704 + $0x8] sm:$0xff]
  %v3707 = vld [vmem:[%s3704 + $0x10] sm:$0xff]
  %v3708 = vld [vmem:[%s3704 + $0x18] sm:$0xff]
  %v3710 = vsel %vm38, %v3688, 0
  %v3713 = vsel %vm38, %v3689, 0
  %v3716 = vsel %vm38, %v3690, 0
  %v3719 = vsel %vm38, %v3691, 0
  %v3722 = vsel %vm38, %v3692, 0
  %v3725 = vsel %vm38, %v3693, 0
  %v3728 = vsel %vm38, %v3694, 0
  %v3731 = vsel %vm38, %v3695, 0
  %v3734 = vsel %vm38, %v3696, 0
  %v3737 = vsel %vm38, %v3697, 0
  %v3740 = vsel %vm38, %v3698, 0
  %v3743 = vsel %vm38, %v3699, 0
  %v3746 = vsel %vm38, %v3700, 0
  %v3749 = vsel %vm38, %v3701, 0
  %v3752 = vsel %vm38, %v3702, 0
  %v3755 = vsel %vm38, %v3703, 0
  %3757 = vmatpush.msra.mxu0 0.0
  %3758 = vmatpush.msra.mxu0 0.0
  %3759 = vmatpush.msra.mxu0 0.0
  %3760 = vmatpush.msra.mxu0 0.0
  %3761 = vmatpush.msra.mxu0 0.0
  %3762 = vmatpush.msra.mxu0 0.0
  %3763 = vmatpush.msra.mxu0 0.0
  %3764 = vmatpush.msra.mxu0 0.0
  %3765 = vmatpush.msra.mxu0 0.0
  %3766 = vmatpush.msra.mxu0 0.0
  %3767 = vmatpush.msra.mxu0 0.0
  %3768 = vmatpush.msra.mxu0 0.0
  %3769 = vmatpush.msra.mxu0 %v3708
  %3770 = vmatpush.msra.mxu0 %v3707
  %3771 = vmatpush.msra.mxu0 %v3706
  %3772 = vmatpush.msra.mxu0 %v3705
  %3773 = vmatmul.f32.gmra.mxu0 %v3710
  %v3774 = vpop.f32.mrf.mxu0
  %v3775 = vadd.f32 0.0, %v3774
  %3776 = vmatmul.f32.gmra.mxu0 %v3713
  %v3777 = vpop.f32.mrf.mxu0
  %v3778 = vadd.f32 0.0, %v3777
  %3779 = vmatmul.f32.gmra.mxu0 %v3716
  %v3780 = vpop.f32.mrf.mxu0
  %v3781 = vadd.f32 0.0, %v3780
  %3782 = vmatmul.f32.gmra.mxu0 %v3719
  %v3783 = vpop.f32.mrf.mxu0
  %v3784 = vadd.f32 0.0, %v3783
  %3785 = vmatmul.f32.gmra.mxu0 %v3722
  %v3786 = vpop.f32.mrf.mxu0
  %v3787 = vadd.f32 0.0, %v3786
  %3788 = vmatmul.f32.gmra.mxu0 %v3725
  %v3789 = vpop.f32.mrf.mxu0
  %v3790 = vadd.f32 0.0, %v3789
  %3791 = vmatmul.f32.gmra.mxu0 %v3728
  %v3792 = vpop.f32.mrf.mxu0
  %v3793 = vadd.f32 0.0, %v3792
  %3794 = vmatmul.f32.gmra.mxu0 %v3731
  %v3795 = vpop.f32.mrf.mxu0
  %v3796 = vadd.f32 0.0, %v3795
  %3797 = vmatmul.f32.gmra.mxu0 %v3734
  %v3798 = vpop.f32.mrf.mxu0
  %v3799 = vadd.f32 0.0, %v3798
  %3800 = vmatmul.f32.gmra.mxu0 %v3737
  %v3801 = vpop.f32.mrf.mxu0
  %v3802 = vadd.f32 0.0, %v3801
  %3803 = vmatmul.f32.gmra.mxu0 %v3740
  %v3804 = vpop.f32.mrf.mxu0
  %v3805 = vadd.f32 0.0, %v3804
  %3806 = vmatmul.f32.gmra.mxu0 %v3743
  %v3807 = vpop.f32.mrf.mxu0
  %v3808 = vadd.f32 0.0, %v3807
  %3809 = vmatmul.f32.gmra.mxu0 %v3746
  %v3810 = vpop.f32.mrf.mxu0
  %v3811 = vadd.f32 0.0, %v3810
  %3812 = vmatmul.f32.gmra.mxu0 %v3749
  %v3813 = vpop.f32.mrf.mxu0
  %v3814 = vadd.f32 0.0, %v3813
  %3815 = vmatmul.f32.gmra.mxu0 %v3752
  %v3816 = vpop.f32.mrf.mxu0
  %v3817 = vadd.f32 0.0, %v3816
  %3818 = vmatmul.f32.gmra.mxu0 %v3755
  %v3819 = vpop.f32.mrf.mxu0
  %v3820 = vadd.f32 0.0, %v3819
  %3821 = vdwg.mxu0
  %v3822 = vadd.f32 %v3641, %v3775
  %v3823 = vadd.f32 %v3644, %v3778
  %v3824 = vadd.f32 %v3647, %v3781
  %v3825 = vadd.f32 %v3650, %v3784
  %v3826 = vadd.f32 %v3653, %v3787
  %v3827 = vadd.f32 %v3656, %v3790
  %v3828 = vadd.f32 %v3659, %v3793
  %v3829 = vadd.f32 %v3662, %v3796
  %v3830 = vadd.f32 %v3665, %v3799
  %v3831 = vadd.f32 %v3668, %v3802
  %v3832 = vadd.f32 %v3671, %v3805
  %v3833 = vadd.f32 %v3674, %v3808
  %v3834 = vadd.f32 %v3677, %v3811
  %v3835 = vadd.f32 %v3680, %v3814
  %v3836 = vadd.f32 %v3683, %v3817
  %v3837 = vadd.f32 %v3686, %v3820
  %v3838 = vld [vmem:[%s1738] sm:$0xff]
  %v3839 = vld [vmem:[%s1738 + $0x10] sm:$0xff]
  %v3840 = vld [vmem:[%s1738 + $0x20] sm:$0xff]
  %v3841 = vld [vmem:[%s1738 + $0x30] sm:$0xff]
  %v3842 = vld [vmem:[%s1738 + $0x40] sm:$0xff]
  %v3843 = vld [vmem:[%s1738 + $0x50] sm:$0xff]
  %v3844 = vld [vmem:[%s1738 + $0x60] sm:$0xff]
  %v3845 = vld [vmem:[%s1738 + $0x70] sm:$0xff]
  %v3846 = vld [vmem:[%s1738 + $0xa0] sm:$0xff]
  %v3847 = vld [vmem:[%s1738 + $0xb0] sm:$0xff]
  %v3848 = vld [vmem:[%s1738 + $0xc0] sm:$0xff]
  %v3849 = vld [vmem:[%s1738 + $0xd0] sm:$0xff]
  %v3850 = vld [vmem:[%s1738 + $0xe0] sm:$0xff]
  %v3851 = vld [vmem:[%s1738 + $0xf0] sm:$0xff]
  %v3852 = vld [vmem:[%s1738 + $0x100] sm:$0xff]
  %v3853 = vld [vmem:[%s1738 + $0x110] sm:$0xff]
  %s3854 = scalar_lea.vmem %s4, 96
  %v3855 = vld [vmem:[%s3854] sm:$0xff]
  %v3856 = vld [vmem:[%s3854 + $0x8] sm:$0xff]
  %v3857 = vld [vmem:[%s3854 + $0x10] sm:$0xff]
  %v3858 = vld [vmem:[%s3854 + $0x18] sm:$0xff]
  %v3860 = vsel %vm38, %v3838, 0
  %v3863 = vsel %vm38, %v3839, 0
  %v3866 = vsel %vm38, %v3840, 0
  %v3869 = vsel %vm38, %v3841, 0
  %v3872 = vsel %vm38, %v3842, 0
  %v3875 = vsel %vm38, %v3843, 0
  %v3878 = vsel %vm38, %v3844, 0
  %v3881 = vsel %vm38, %v3845, 0
  %v3884 = vsel %vm38, %v3846, 0
  %v3887 = vsel %vm38, %v3847, 0
  %v3890 = vsel %vm38, %v3848, 0
  %v3893 = vsel %vm38, %v3849, 0
  %v3896 = vsel %vm38, %v3850, 0
  %v3899 = vsel %vm38, %v3851, 0
  %v3902 = vsel %vm38, %v3852, 0
  %v3905 = vsel %vm38, %v3853, 0
  %3907 = vmatpush.msra.mxu0 0.0
  %3908 = vmatpush.msra.mxu0 0.0
  %3909 = vmatpush.msra.mxu0 0.0
  %3910 = vmatpush.msra.mxu0 0.0
  %3911 = vmatpush.msra.mxu0 0.0
  %3912 = vmatpush.msra.mxu0 0.0
  %3913 = vmatpush.msra.mxu0 0.0
  %3914 = vmatpush.msra.mxu0 0.0
  %3915 = vmatpush.msra.mxu0 0.0
  %3916 = vmatpush.msra.mxu0 0.0
  %3917 = vmatpush.msra.mxu0 0.0
  %3918 = vmatpush.msra.mxu0 0.0
  %3919 = vmatpush.msra.mxu0 %v3858
  %3920 = vmatpush.msra.mxu0 %v3857
  %3921 = vmatpush.msra.mxu0 %v3856
  %3922 = vmatpush.msra.mxu0 %v3855
  %3923 = vmatmul.f32.gmra.mxu0 %v3860
  %v3924 = vpop.f32.mrf.mxu0
  %v3925 = vadd.f32 0.0, %v3924
  %3926 = vmatmul.f32.gmra.mxu0 %v3863
  %v3927 = vpop.f32.mrf.mxu0
  %v3928 = vadd.f32 0.0, %v3927
  %3929 = vmatmul.f32.gmra.mxu0 %v3866
  %v3930 = vpop.f32.mrf.mxu0
  %v3931 = vadd.f32 0.0, %v3930
  %3932 = vmatmul.f32.gmra.mxu0 %v3869
  %v3933 = vpop.f32.mrf.mxu0
  %v3934 = vadd.f32 0.0, %v3933
  %3935 = vmatmul.f32.gmra.mxu0 %v3872
  %v3936 = vpop.f32.mrf.mxu0
  %v3937 = vadd.f32 0.0, %v3936
  %3938 = vmatmul.f32.gmra.mxu0 %v3875
  %v3939 = vpop.f32.mrf.mxu0
  %v3940 = vadd.f32 0.0, %v3939
  %3941 = vmatmul.f32.gmra.mxu0 %v3878
  %v3942 = vpop.f32.mrf.mxu0
  %v3943 = vadd.f32 0.0, %v3942
  %3944 = vmatmul.f32.gmra.mxu0 %v3881
  %v3945 = vpop.f32.mrf.mxu0
  %v3946 = vadd.f32 0.0, %v3945
  %3947 = vmatmul.f32.gmra.mxu0 %v3884
  %v3948 = vpop.f32.mrf.mxu0
  %v3949 = vadd.f32 0.0, %v3948
  %3950 = vmatmul.f32.gmra.mxu0 %v3887
  %v3951 = vpop.f32.mrf.mxu0
  %v3952 = vadd.f32 0.0, %v3951
  %3953 = vmatmul.f32.gmra.mxu0 %v3890
  %v3954 = vpop.f32.mrf.mxu0
  %v3955 = vadd.f32 0.0, %v3954
  %3956 = vmatmul.f32.gmra.mxu0 %v3893
  %v3957 = vpop.f32.mrf.mxu0
  %v3958 = vadd.f32 0.0, %v3957
  %3959 = vmatmul.f32.gmra.mxu0 %v3896
  %v3960 = vpop.f32.mrf.mxu0
  %v3961 = vadd.f32 0.0, %v3960
  %3962 = vmatmul.f32.gmra.mxu0 %v3899
  %v3963 = vpop.f32.mrf.mxu0
  %v3964 = vadd.f32 0.0, %v3963
  %3965 = vmatmul.f32.gmra.mxu0 %v3902
  %v3966 = vpop.f32.mrf.mxu0
  %v3967 = vadd.f32 0.0, %v3966
  %3968 = vmatmul.f32.gmra.mxu0 %v3905
  %v3969 = vpop.f32.mrf.mxu0
  %v3970 = vadd.f32 0.0, %v3969
  %3971 = vdwg.mxu0
  %v3972 = vadd.f32 %v3822, %v3925
  %v3973 = vadd.f32 %v3823, %v3928
  %v3974 = vadd.f32 %v3824, %v3931
  %v3975 = vadd.f32 %v3825, %v3934
  %v3976 = vadd.f32 %v3826, %v3937
  %v3977 = vadd.f32 %v3827, %v3940
  %v3978 = vadd.f32 %v3828, %v3943
  %v3979 = vadd.f32 %v3829, %v3946
  %v3980 = vadd.f32 %v3830, %v3949
  %v3981 = vadd.f32 %v3831, %v3952
  %v3982 = vadd.f32 %v3832, %v3955
  %v3983 = vadd.f32 %v3833, %v3958
  %v3984 = vadd.f32 %v3834, %v3961
  %v3985 = vadd.f32 %v3835, %v3964
  %v3986 = vadd.f32 %v3836, %v3967
  %v3987 = vadd.f32 %v3837, %v3970
  %v3988 = vld [vmem:[%s1738 + $0x1] sm:$0xff]
  %v3989 = vld [vmem:[%s1738 + $0x11] sm:$0xff]
  %v3990 = vld [vmem:[%s1738 + $0x21] sm:$0xff]
  %v3991 = vld [vmem:[%s1738 + $0x31] sm:$0xff]
  %v3992 = vld [vmem:[%s1738 + $0x41] sm:$0xff]
  %v3993 = vld [vmem:[%s1738 + $0x51] sm:$0xff]
  %v3994 = vld [vmem:[%s1738 + $0x61] sm:$0xff]
  %v3995 = vld [vmem:[%s1738 + $0x71] sm:$0xff]
  %v3996 = vld [vmem:[%s1738 + $0xa1] sm:$0xff]
  %v3997 = vld [vmem:[%s1738 + $0xb1] sm:$0xff]
  %v3998 = vld [vmem:[%s1738 + $0xc1] sm:$0xff]
  %v3999 = vld [vmem:[%s1738 + $0xd1] sm:$0xff]
  %v4000 = vld [vmem:[%s1738 + $0xe1] sm:$0xff]
  %v4001 = vld [vmem:[%s1738 + $0xf1] sm:$0xff]
  %v4002 = vld [vmem:[%s1738 + $0x101] sm:$0xff]
  %v4003 = vld [vmem:[%s1738 + $0x111] sm:$0xff]
  %s4004 = scalar_lea.vmem %s4, 128
  %v4005 = vld [vmem:[%s4004] sm:$0xff]
  %v4006 = vld [vmem:[%s4004 + $0x8] sm:$0xff]
  %v4007 = vld [vmem:[%s4004 + $0x10] sm:$0xff]
  %v4008 = vld [vmem:[%s4004 + $0x18] sm:$0xff]
  %v4010 = vsel %vm38, %v3988, 0
  %v4013 = vsel %vm38, %v3989, 0
  %v4016 = vsel %vm38, %v3990, 0
  %v4019 = vsel %vm38, %v3991, 0
  %v4022 = vsel %vm38, %v3992, 0
  %v4025 = vsel %vm38, %v3993, 0
  %v4028 = vsel %vm38, %v3994, 0
  %v4031 = vsel %vm38, %v3995, 0
  %v4034 = vsel %vm38, %v3996, 0
  %v4037 = vsel %vm38, %v3997, 0
  %v4040 = vsel %vm38, %v3998, 0
  %v4043 = vsel %vm38, %v3999, 0
  %v4046 = vsel %vm38, %v4000, 0
  %v4049 = vsel %vm38, %v4001, 0
  %v4052 = vsel %vm38, %v4002, 0
  %v4055 = vsel %vm38, %v4003, 0
  %4057 = vmatpush.msra.mxu0 0.0
  %4058 = vmatpush.msra.mxu0 0.0
  %4059 = vmatpush.msra.mxu0 0.0
  %4060 = vmatpush.msra.mxu0 0.0
  %4061 = vmatpush.msra.mxu0 0.0
  %4062 = vmatpush.msra.mxu0 0.0
  %4063 = vmatpush.msra.mxu0 0.0
  %4064 = vmatpush.msra.mxu0 0.0
  %4065 = vmatpush.msra.mxu0 0.0
  %4066 = vmatpush.msra.mxu0 0.0
  %4067 = vmatpush.msra.mxu0 0.0
  %4068 = vmatpush.msra.mxu0 0.0
  %4069 = vmatpush.msra.mxu0 %v4008
  %4070 = vmatpush.msra.mxu0 %v4007
  %4071 = vmatpush.msra.mxu0 %v4006
  %4072 = vmatpush.msra.mxu0 %v4005
  %4073 = vmatmul.f32.gmra.mxu0 %v4010
  %v4074 = vpop.f32.mrf.mxu0
  %v4075 = vadd.f32 0.0, %v4074
  %4076 = vmatmul.f32.gmra.mxu0 %v4013
  %v4077 = vpop.f32.mrf.mxu0
  %v4078 = vadd.f32 0.0, %v4077
  %4079 = vmatmul.f32.gmra.mxu0 %v4016
  %v4080 = vpop.f32.mrf.mxu0
  %v4081 = vadd.f32 0.0, %v4080
  %4082 = vmatmul.f32.gmra.mxu0 %v4019
  %v4083 = vpop.f32.mrf.mxu0
  %v4084 = vadd.f32 0.0, %v4083
  %4085 = vmatmul.f32.gmra.mxu0 %v4022
  %v4086 = vpop.f32.mrf.mxu0
  %v4087 = vadd.f32 0.0, %v4086
  %4088 = vmatmul.f32.gmra.mxu0 %v4025
  %v4089 = vpop.f32.mrf.mxu0
  %v4090 = vadd.f32 0.0, %v4089
  %4091 = vmatmul.f32.gmra.mxu0 %v4028
  %v4092 = vpop.f32.mrf.mxu0
  %v4093 = vadd.f32 0.0, %v4092
  %4094 = vmatmul.f32.gmra.mxu0 %v4031
  %v4095 = vpop.f32.mrf.mxu0
  %v4096 = vadd.f32 0.0, %v4095
  %4097 = vmatmul.f32.gmra.mxu0 %v4034
  %v4098 = vpop.f32.mrf.mxu0
  %v4099 = vadd.f32 0.0, %v4098
  %4100 = vmatmul.f32.gmra.mxu0 %v4037
  %v4101 = vpop.f32.mrf.mxu0
  %v4102 = vadd.f32 0.0, %v4101
  %4103 = vmatmul.f32.gmra.mxu0 %v4040
  %v4104 = vpop.f32.mrf.mxu0
  %v4105 = vadd.f32 0.0, %v4104
  %4106 = vmatmul.f32.gmra.mxu0 %v4043
  %v4107 = vpop.f32.mrf.mxu0
  %v4108 = vadd.f32 0.0, %v4107
  %4109 = vmatmul.f32.gmra.mxu0 %v4046
  %v4110 = vpop.f32.mrf.mxu0
  %v4111 = vadd.f32 0.0, %v4110
  %4112 = vmatmul.f32.gmra.mxu0 %v4049
  %v4113 = vpop.f32.mrf.mxu0
  %v4114 = vadd.f32 0.0, %v4113
  %4115 = vmatmul.f32.gmra.mxu0 %v4052
  %v4116 = vpop.f32.mrf.mxu0
  %v4117 = vadd.f32 0.0, %v4116
  %4118 = vmatmul.f32.gmra.mxu0 %v4055
  %v4119 = vpop.f32.mrf.mxu0
  %v4120 = vadd.f32 0.0, %v4119
  %4121 = vdwg.mxu0
  %v4122 = vadd.f32 %v3972, %v4075
  %v4123 = vadd.f32 %v3973, %v4078
  %v4124 = vadd.f32 %v3974, %v4081
  %v4125 = vadd.f32 %v3975, %v4084
  %v4126 = vadd.f32 %v3976, %v4087
  %v4127 = vadd.f32 %v3977, %v4090
  %v4128 = vadd.f32 %v3978, %v4093
  %v4129 = vadd.f32 %v3979, %v4096
  %v4130 = vadd.f32 %v3980, %v4099
  %v4131 = vadd.f32 %v3981, %v4102
  %v4132 = vadd.f32 %v3982, %v4105
  %v4133 = vadd.f32 %v3983, %v4108
  %v4134 = vadd.f32 %v3984, %v4111
  %v4135 = vadd.f32 %v3985, %v4114
  %v4136 = vadd.f32 %v3986, %v4117
  %v4137 = vadd.f32 %v3987, %v4120
  %v4138 = vld [vmem:[%s1738 + $0x2] sm:$0xff]
  %v4139 = vld [vmem:[%s1738 + $0x12] sm:$0xff]
  %v4140 = vld [vmem:[%s1738 + $0x22] sm:$0xff]
  %v4141 = vld [vmem:[%s1738 + $0x32] sm:$0xff]
  %v4142 = vld [vmem:[%s1738 + $0x42] sm:$0xff]
  %v4143 = vld [vmem:[%s1738 + $0x52] sm:$0xff]
  %v4144 = vld [vmem:[%s1738 + $0x62] sm:$0xff]
  %v4145 = vld [vmem:[%s1738 + $0x72] sm:$0xff]
  %v4146 = vld [vmem:[%s1738 + $0xa2] sm:$0xff]
  %v4147 = vld [vmem:[%s1738 + $0xb2] sm:$0xff]
  %v4148 = vld [vmem:[%s1738 + $0xc2] sm:$0xff]
  %v4149 = vld [vmem:[%s1738 + $0xd2] sm:$0xff]
  %v4150 = vld [vmem:[%s1738 + $0xe2] sm:$0xff]
  %v4151 = vld [vmem:[%s1738 + $0xf2] sm:$0xff]
  %v4152 = vld [vmem:[%s1738 + $0x102] sm:$0xff]
  %v4153 = vld [vmem:[%s1738 + $0x112] sm:$0xff]
  %s4154 = scalar_lea.vmem %s4, 160
  %v4155 = vld [vmem:[%s4154] sm:$0xff]
  %v4156 = vld [vmem:[%s4154 + $0x8] sm:$0xff]
  %v4157 = vld [vmem:[%s4154 + $0x10] sm:$0xff]
  %v4158 = vld [vmem:[%s4154 + $0x18] sm:$0xff]
  %v4160 = vsel %vm38, %v4138, 0
  %v4163 = vsel %vm38, %v4139, 0
  %v4166 = vsel %vm38, %v4140, 0
  %v4169 = vsel %vm38, %v4141, 0
  %v4172 = vsel %vm38, %v4142, 0
  %v4175 = vsel %vm38, %v4143, 0
  %v4178 = vsel %vm38, %v4144, 0
  %v4181 = vsel %vm38, %v4145, 0
  %v4184 = vsel %vm38, %v4146, 0
  %v4187 = vsel %vm38, %v4147, 0
  %v4190 = vsel %vm38, %v4148, 0
  %v4193 = vsel %vm38, %v4149, 0
  %v4196 = vsel %vm38, %v4150, 0
  %v4199 = vsel %vm38, %v4151, 0
  %v4202 = vsel %vm38, %v4152, 0
  %v4205 = vsel %vm38, %v4153, 0
  %4207 = vmatpush.msra.mxu0 0.0
  %4208 = vmatpush.msra.mxu0 0.0
  %4209 = vmatpush.msra.mxu0 0.0
  %4210 = vmatpush.msra.mxu0 0.0
  %4211 = vmatpush.msra.mxu0 0.0
  %4212 = vmatpush.msra.mxu0 0.0
  %4213 = vmatpush.msra.mxu0 0.0
  %4214 = vmatpush.msra.mxu0 0.0
  %4215 = vmatpush.msra.mxu0 0.0
  %4216 = vmatpush.msra.mxu0 0.0
  %4217 = vmatpush.msra.mxu0 0.0
  %4218 = vmatpush.msra.mxu0 0.0
  %4219 = vmatpush.msra.mxu0 %v4158
  %4220 = vmatpush.msra.mxu0 %v4157
  %4221 = vmatpush.msra.mxu0 %v4156
  %4222 = vmatpush.msra.mxu0 %v4155
  %4223 = vmatmul.f32.gmra.mxu0 %v4160
  %v4224 = vpop.f32.mrf.mxu0
  %v4225 = vadd.f32 0.0, %v4224
  %4226 = vmatmul.f32.gmra.mxu0 %v4163
  %v4227 = vpop.f32.mrf.mxu0
  %v4228 = vadd.f32 0.0, %v4227
  %4229 = vmatmul.f32.gmra.mxu0 %v4166
  %v4230 = vpop.f32.mrf.mxu0
  %v4231 = vadd.f32 0.0, %v4230
  %4232 = vmatmul.f32.gmra.mxu0 %v4169
  %v4233 = vpop.f32.mrf.mxu0
  %v4234 = vadd.f32 0.0, %v4233
  %4235 = vmatmul.f32.gmra.mxu0 %v4172
  %v4236 = vpop.f32.mrf.mxu0
  %v4237 = vadd.f32 0.0, %v4236
  %4238 = vmatmul.f32.gmra.mxu0 %v4175
  %v4239 = vpop.f32.mrf.mxu0
  %v4240 = vadd.f32 0.0, %v4239
  %4241 = vmatmul.f32.gmra.mxu0 %v4178
  %v4242 = vpop.f32.mrf.mxu0
  %v4243 = vadd.f32 0.0, %v4242
  %4244 = vmatmul.f32.gmra.mxu0 %v4181
  %v4245 = vpop.f32.mrf.mxu0
  %v4246 = vadd.f32 0.0, %v4245
  %4247 = vmatmul.f32.gmra.mxu0 %v4184
  %v4248 = vpop.f32.mrf.mxu0
  %v4249 = vadd.f32 0.0, %v4248
  %4250 = vmatmul.f32.gmra.mxu0 %v4187
  %v4251 = vpop.f32.mrf.mxu0
  %v4252 = vadd.f32 0.0, %v4251
  %4253 = vmatmul.f32.gmra.mxu0 %v4190
  %v4254 = vpop.f32.mrf.mxu0
  %v4255 = vadd.f32 0.0, %v4254
  %4256 = vmatmul.f32.gmra.mxu0 %v4193
  %v4257 = vpop.f32.mrf.mxu0
  %v4258 = vadd.f32 0.0, %v4257
  %4259 = vmatmul.f32.gmra.mxu0 %v4196
  %v4260 = vpop.f32.mrf.mxu0
  %v4261 = vadd.f32 0.0, %v4260
  %4262 = vmatmul.f32.gmra.mxu0 %v4199
  %v4263 = vpop.f32.mrf.mxu0
  %v4264 = vadd.f32 0.0, %v4263
  %4265 = vmatmul.f32.gmra.mxu0 %v4202
  %v4266 = vpop.f32.mrf.mxu0
  %v4267 = vadd.f32 0.0, %v4266
  %4268 = vmatmul.f32.gmra.mxu0 %v4205
  %v4269 = vpop.f32.mrf.mxu0
  %v4270 = vadd.f32 0.0, %v4269
  %4271 = vdwg.mxu0
  %v4272 = vadd.f32 %v4122, %v4225
  %v4273 = vadd.f32 %v4123, %v4228
  %v4274 = vadd.f32 %v4124, %v4231
  %v4275 = vadd.f32 %v4125, %v4234
  %v4276 = vadd.f32 %v4126, %v4237
  %v4277 = vadd.f32 %v4127, %v4240
  %v4278 = vadd.f32 %v4128, %v4243
  %v4279 = vadd.f32 %v4129, %v4246
  %v4280 = vadd.f32 %v4130, %v4249
  %v4281 = vadd.f32 %v4131, %v4252
  %v4282 = vadd.f32 %v4132, %v4255
  %v4283 = vadd.f32 %v4133, %v4258
  %v4284 = vadd.f32 %v4134, %v4261
  %v4285 = vadd.f32 %v4135, %v4264
  %v4286 = vadd.f32 %v4136, %v4267
  %v4287 = vadd.f32 %v4137, %v4270
  %v4288 = vld [vmem:[%s2622] sm:$0xff]
  %v4289 = vld [vmem:[%s2622 + $0x10] sm:$0xff]
  %v4290 = vld [vmem:[%s2622 + $0x20] sm:$0xff]
  %v4291 = vld [vmem:[%s2622 + $0x30] sm:$0xff]
  %v4292 = vld [vmem:[%s2622 + $0x40] sm:$0xff]
  %v4293 = vld [vmem:[%s2622 + $0x50] sm:$0xff]
  %v4294 = vld [vmem:[%s2622 + $0x60] sm:$0xff]
  %v4295 = vld [vmem:[%s2622 + $0x70] sm:$0xff]
  %v4296 = vld [vmem:[%s2622 + $0xa0] sm:$0xff]
  %v4297 = vld [vmem:[%s2622 + $0xb0] sm:$0xff]
  %v4298 = vld [vmem:[%s2622 + $0xc0] sm:$0xff]
  %v4299 = vld [vmem:[%s2622 + $0xd0] sm:$0xff]
  %v4300 = vld [vmem:[%s2622 + $0xe0] sm:$0xff]
  %v4301 = vld [vmem:[%s2622 + $0xf0] sm:$0xff]
  %v4302 = vld [vmem:[%s2622 + $0x100] sm:$0xff]
  %v4303 = vld [vmem:[%s2622 + $0x110] sm:$0xff]
  %s4304 = scalar_lea.vmem %s4, 192
  %v4305 = vld [vmem:[%s4304] sm:$0xff]
  %v4306 = vld [vmem:[%s4304 + $0x8] sm:$0xff]
  %v4307 = vld [vmem:[%s4304 + $0x10] sm:$0xff]
  %v4308 = vld [vmem:[%s4304 + $0x18] sm:$0xff]
  %v4310 = vsel %vm38, %v4288, 0
  %v4313 = vsel %vm38, %v4289, 0
  %v4316 = vsel %vm38, %v4290, 0
  %v4319 = vsel %vm38, %v4291, 0
  %v4322 = vsel %vm38, %v4292, 0
  %v4325 = vsel %vm38, %v4293, 0
  %v4328 = vsel %vm38, %v4294, 0
  %v4331 = vsel %vm38, %v4295, 0
  %v4334 = vsel %vm38, %v4296, 0
  %v4337 = vsel %vm38, %v4297, 0
  %v4340 = vsel %vm38, %v4298, 0
  %v4343 = vsel %vm38, %v4299, 0
  %v4346 = vsel %vm38, %v4300, 0
  %v4349 = vsel %vm38, %v4301, 0
  %v4352 = vsel %vm38, %v4302, 0
  %v4355 = vsel %vm38, %v4303, 0
  %4357 = vmatpush.msra.mxu0 0.0
  %4358 = vmatpush.msra.mxu0 0.0
  %4359 = vmatpush.msra.mxu0 0.0
  %4360 = vmatpush.msra.mxu0 0.0
  %4361 = vmatpush.msra.mxu0 0.0
  %4362 = vmatpush.msra.mxu0 0.0
  %4363 = vmatpush.msra.mxu0 0.0
  %4364 = vmatpush.msra.mxu0 0.0
  %4365 = vmatpush.msra.mxu0 0.0
  %4366 = vmatpush.msra.mxu0 0.0
  %4367 = vmatpush.msra.mxu0 0.0
  %4368 = vmatpush.msra.mxu0 0.0
  %4369 = vmatpush.msra.mxu0 %v4308
  %4370 = vmatpush.msra.mxu0 %v4307
  %4371 = vmatpush.msra.mxu0 %v4306
  %4372 = vmatpush.msra.mxu0 %v4305
  %4373 = vmatmul.f32.gmra.mxu0 %v4310
  %v4374 = vpop.f32.mrf.mxu0
  %v4375 = vadd.f32 0.0, %v4374
  %4376 = vmatmul.f32.gmra.mxu0 %v4313
  %v4377 = vpop.f32.mrf.mxu0
  %v4378 = vadd.f32 0.0, %v4377
  %4379 = vmatmul.f32.gmra.mxu0 %v4316
  %v4380 = vpop.f32.mrf.mxu0
  %v4381 = vadd.f32 0.0, %v4380
  %4382 = vmatmul.f32.gmra.mxu0 %v4319
  %v4383 = vpop.f32.mrf.mxu0
  %v4384 = vadd.f32 0.0, %v4383
  %4385 = vmatmul.f32.gmra.mxu0 %v4322
  %v4386 = vpop.f32.mrf.mxu0
  %v4387 = vadd.f32 0.0, %v4386
  %4388 = vmatmul.f32.gmra.mxu0 %v4325
  %v4389 = vpop.f32.mrf.mxu0
  %v4390 = vadd.f32 0.0, %v4389
  %4391 = vmatmul.f32.gmra.mxu0 %v4328
  %v4392 = vpop.f32.mrf.mxu0
  %v4393 = vadd.f32 0.0, %v4392
  %4394 = vmatmul.f32.gmra.mxu0 %v4331
  %v4395 = vpop.f32.mrf.mxu0
  %v4396 = vadd.f32 0.0, %v4395
  %4397 = vmatmul.f32.gmra.mxu0 %v4334
  %v4398 = vpop.f32.mrf.mxu0
  %v4399 = vadd.f32 0.0, %v4398
  %4400 = vmatmul.f32.gmra.mxu0 %v4337
  %v4401 = vpop.f32.mrf.mxu0
  %v4402 = vadd.f32 0.0, %v4401
  %4403 = vmatmul.f32.gmra.mxu0 %v4340
  %v4404 = vpop.f32.mrf.mxu0
  %v4405 = vadd.f32 0.0, %v4404
  %4406 = vmatmul.f32.gmra.mxu0 %v4343
  %v4407 = vpop.f32.mrf.mxu0
  %v4408 = vadd.f32 0.0, %v4407
  %4409 = vmatmul.f32.gmra.mxu0 %v4346
  %v4410 = vpop.f32.mrf.mxu0
  %v4411 = vadd.f32 0.0, %v4410
  %4412 = vmatmul.f32.gmra.mxu0 %v4349
  %v4413 = vpop.f32.mrf.mxu0
  %v4414 = vadd.f32 0.0, %v4413
  %4415 = vmatmul.f32.gmra.mxu0 %v4352
  %v4416 = vpop.f32.mrf.mxu0
  %v4417 = vadd.f32 0.0, %v4416
  %4418 = vmatmul.f32.gmra.mxu0 %v4355
  %v4419 = vpop.f32.mrf.mxu0
  %v4420 = vadd.f32 0.0, %v4419
  %4421 = vdwg.mxu0
  %v4422 = vadd.f32 %v4272, %v4375
  %v4423 = vadd.f32 %v4273, %v4378
  %v4424 = vadd.f32 %v4274, %v4381
  %v4425 = vadd.f32 %v4275, %v4384
  %v4426 = vadd.f32 %v4276, %v4387
  %v4427 = vadd.f32 %v4277, %v4390
  %v4428 = vadd.f32 %v4278, %v4393
  %v4429 = vadd.f32 %v4279, %v4396
  %v4430 = vadd.f32 %v4280, %v4399
  %v4431 = vadd.f32 %v4281, %v4402
  %v4432 = vadd.f32 %v4282, %v4405
  %v4433 = vadd.f32 %v4283, %v4408
  %v4434 = vadd.f32 %v4284, %v4411
  %v4435 = vadd.f32 %v4285, %v4414
  %v4436 = vadd.f32 %v4286, %v4417
  %v4437 = vadd.f32 %v4287, %v4420
  %v4438 = vld [vmem:[%s2622 + $0x1] sm:$0xff]
  %v4439 = vld [vmem:[%s2622 + $0x11] sm:$0xff]
  %v4440 = vld [vmem:[%s2622 + $0x21] sm:$0xff]
  %v4441 = vld [vmem:[%s2622 + $0x31] sm:$0xff]
  %v4442 = vld [vmem:[%s2622 + $0x41] sm:$0xff]
  %v4443 = vld [vmem:[%s2622 + $0x51] sm:$0xff]
  %v4444 = vld [vmem:[%s2622 + $0x61] sm:$0xff]
  %v4445 = vld [vmem:[%s2622 + $0x71] sm:$0xff]
  %v4446 = vld [vmem:[%s2622 + $0xa1] sm:$0xff]
  %v4447 = vld [vmem:[%s2622 + $0xb1] sm:$0xff]
  %v4448 = vld [vmem:[%s2622 + $0xc1] sm:$0xff]
  %v4449 = vld [vmem:[%s2622 + $0xd1] sm:$0xff]
  %v4450 = vld [vmem:[%s2622 + $0xe1] sm:$0xff]
  %v4451 = vld [vmem:[%s2622 + $0xf1] sm:$0xff]
  %v4452 = vld [vmem:[%s2622 + $0x101] sm:$0xff]
  %v4453 = vld [vmem:[%s2622 + $0x111] sm:$0xff]
  %s4454 = scalar_lea.vmem %s4, 224
  %v4455 = vld [vmem:[%s4454] sm:$0xff]
  %v4456 = vld [vmem:[%s4454 + $0x8] sm:$0xff]
  %v4457 = vld [vmem:[%s4454 + $0x10] sm:$0xff]
  %v4458 = vld [vmem:[%s4454 + $0x18] sm:$0xff]
  %v4460 = vsel %vm38, %v4438, 0
  %v4463 = vsel %vm38, %v4439, 0
  %v4466 = vsel %vm38, %v4440, 0
  %v4469 = vsel %vm38, %v4441, 0
  %v4472 = vsel %vm38, %v4442, 0
  %v4475 = vsel %vm38, %v4443, 0
  %v4478 = vsel %vm38, %v4444, 0
  %v4481 = vsel %vm38, %v4445, 0
  %v4484 = vsel %vm38, %v4446, 0
  %v4487 = vsel %vm38, %v4447, 0
  %v4490 = vsel %vm38, %v4448, 0
  %v4493 = vsel %vm38, %v4449, 0
  %v4496 = vsel %vm38, %v4450, 0
  %v4499 = vsel %vm38, %v4451, 0
  %v4502 = vsel %vm38, %v4452, 0
  %v4505 = vsel %vm38, %v4453, 0
  %4507 = vmatpush.msra.mxu0 0.0
  %4508 = vmatpush.msra.mxu0 0.0
  %4509 = vmatpush.msra.mxu0 0.0
  %4510 = vmatpush.msra.mxu0 0.0
  %4511 = vmatpush.msra.mxu0 0.0
  %4512 = vmatpush.msra.mxu0 0.0
  %4513 = vmatpush.msra.mxu0 0.0
  %4514 = vmatpush.msra.mxu0 0.0
  %4515 = vmatpush.msra.mxu0 0.0
  %4516 = vmatpush.msra.mxu0 0.0
  %4517 = vmatpush.msra.mxu0 0.0
  %4518 = vmatpush.msra.mxu0 0.0
  %4519 = vmatpush.msra.mxu0 %v4458
  %4520 = vmatpush.msra.mxu0 %v4457
  %4521 = vmatpush.msra.mxu0 %v4456
  %4522 = vmatpush.msra.mxu0 %v4455
  %4523 = vmatmul.f32.gmra.mxu0 %v4460
  %v4524 = vpop.f32.mrf.mxu0
  %v4525 = vadd.f32 0.0, %v4524
  %4526 = vmatmul.f32.gmra.mxu0 %v4463
  %v4527 = vpop.f32.mrf.mxu0
  %v4528 = vadd.f32 0.0, %v4527
  %4529 = vmatmul.f32.gmra.mxu0 %v4466
  %v4530 = vpop.f32.mrf.mxu0
  %v4531 = vadd.f32 0.0, %v4530
  %4532 = vmatmul.f32.gmra.mxu0 %v4469
  %v4533 = vpop.f32.mrf.mxu0
  %v4534 = vadd.f32 0.0, %v4533
  %4535 = vmatmul.f32.gmra.mxu0 %v4472
  %v4536 = vpop.f32.mrf.mxu0
  %v4537 = vadd.f32 0.0, %v4536
  %4538 = vmatmul.f32.gmra.mxu0 %v4475
  %v4539 = vpop.f32.mrf.mxu0
  %v4540 = vadd.f32 0.0, %v4539
  %4541 = vmatmul.f32.gmra.mxu0 %v4478
  %v4542 = vpop.f32.mrf.mxu0
  %v4543 = vadd.f32 0.0, %v4542
  %4544 = vmatmul.f32.gmra.mxu0 %v4481
  %v4545 = vpop.f32.mrf.mxu0
  %v4546 = vadd.f32 0.0, %v4545
  %4547 = vmatmul.f32.gmra.mxu0 %v4484
  %v4548 = vpop.f32.mrf.mxu0
  %v4549 = vadd.f32 0.0, %v4548
  %4550 = vmatmul.f32.gmra.mxu0 %v4487
  %v4551 = vpop.f32.mrf.mxu0
  %v4552 = vadd.f32 0.0, %v4551
  %4553 = vmatmul.f32.gmra.mxu0 %v4490
  %v4554 = vpop.f32.mrf.mxu0
  %v4555 = vadd.f32 0.0, %v4554
  %4556 = vmatmul.f32.gmra.mxu0 %v4493
  %v4557 = vpop.f32.mrf.mxu0
  %v4558 = vadd.f32 0.0, %v4557
  %4559 = vmatmul.f32.gmra.mxu0 %v4496
  %v4560 = vpop.f32.mrf.mxu0
  %v4561 = vadd.f32 0.0, %v4560
  %4562 = vmatmul.f32.gmra.mxu0 %v4499
  %v4563 = vpop.f32.mrf.mxu0
  %v4564 = vadd.f32 0.0, %v4563
  %4565 = vmatmul.f32.gmra.mxu0 %v4502
  %v4566 = vpop.f32.mrf.mxu0
  %v4567 = vadd.f32 0.0, %v4566
  %4568 = vmatmul.f32.gmra.mxu0 %v4505
  %v4569 = vpop.f32.mrf.mxu0
  %v4570 = vadd.f32 0.0, %v4569
  %4571 = vdwg.mxu0
  %v4572 = vadd.f32 %v4422, %v4525
  %v4573 = vadd.f32 %v4423, %v4528
  %v4574 = vadd.f32 %v4424, %v4531
  %v4575 = vadd.f32 %v4425, %v4534
  %v4576 = vadd.f32 %v4426, %v4537
  %v4577 = vadd.f32 %v4427, %v4540
  %v4578 = vadd.f32 %v4428, %v4543
  %v4579 = vadd.f32 %v4429, %v4546
  %v4580 = vadd.f32 %v4430, %v4549
  %v4581 = vadd.f32 %v4431, %v4552
  %v4582 = vadd.f32 %v4432, %v4555
  %v4583 = vadd.f32 %v4433, %v4558
  %v4584 = vadd.f32 %v4434, %v4561
  %v4585 = vadd.f32 %v4435, %v4564
  %v4586 = vadd.f32 %v4436, %v4567
  %v4587 = vadd.f32 %v4437, %v4570
  %v4588 = vld [vmem:[%s2622 + $0x2] sm:$0xff]
  %v4589 = vld [vmem:[%s2622 + $0x12] sm:$0xff]
  %v4590 = vld [vmem:[%s2622 + $0x22] sm:$0xff]
  %v4591 = vld [vmem:[%s2622 + $0x32] sm:$0xff]
  %v4592 = vld [vmem:[%s2622 + $0x42] sm:$0xff]
  %v4593 = vld [vmem:[%s2622 + $0x52] sm:$0xff]
  %v4594 = vld [vmem:[%s2622 + $0x62] sm:$0xff]
  %v4595 = vld [vmem:[%s2622 + $0x72] sm:$0xff]
  %v4596 = vld [vmem:[%s2622 + $0xa2] sm:$0xff]
  %v4597 = vld [vmem:[%s2622 + $0xb2] sm:$0xff]
  %v4598 = vld [vmem:[%s2622 + $0xc2] sm:$0xff]
  %v4599 = vld [vmem:[%s2622 + $0xd2] sm:$0xff]
  %v4600 = vld [vmem:[%s2622 + $0xe2] sm:$0xff]
  %v4601 = vld [vmem:[%s2622 + $0xf2] sm:$0xff]
  %v4602 = vld [vmem:[%s2622 + $0x102] sm:$0xff]
  %v4603 = vld [vmem:[%s2622 + $0x112] sm:$0xff]
  %s4604 = scalar_lea.vmem %s4, 256
  %v4605 = vld [vmem:[%s4604] sm:$0xff]
  %v4606 = vld [vmem:[%s4604 + $0x8] sm:$0xff]
  %v4607 = vld [vmem:[%s4604 + $0x10] sm:$0xff]
  %v4608 = vld [vmem:[%s4604 + $0x18] sm:$0xff]
  %v4610 = vsel %vm38, %v4588, 0
  %v4613 = vsel %vm38, %v4589, 0
  %v4616 = vsel %vm38, %v4590, 0
  %v4619 = vsel %vm38, %v4591, 0
  %v4622 = vsel %vm38, %v4592, 0
  %v4625 = vsel %vm38, %v4593, 0
  %v4628 = vsel %vm38, %v4594, 0
  %v4631 = vsel %vm38, %v4595, 0
  %v4634 = vsel %vm38, %v4596, 0
  %v4637 = vsel %vm38, %v4597, 0
  %v4640 = vsel %vm38, %v4598, 0
  %v4643 = vsel %vm38, %v4599, 0
  %v4646 = vsel %vm38, %v4600, 0
  %v4649 = vsel %vm38, %v4601, 0
  %v4652 = vsel %vm38, %v4602, 0
  %v4655 = vsel %vm38, %v4603, 0
  %4657 = vmatpush.msra.mxu0 0.0
  %4658 = vmatpush.msra.mxu0 0.0
  %4659 = vmatpush.msra.mxu0 0.0
  %4660 = vmatpush.msra.mxu0 0.0
  %4661 = vmatpush.msra.mxu0 0.0
  %4662 = vmatpush.msra.mxu0 0.0
  %4663 = vmatpush.msra.mxu0 0.0
  %4664 = vmatpush.msra.mxu0 0.0
  %4665 = vmatpush.msra.mxu0 0.0
  %4666 = vmatpush.msra.mxu0 0.0
  %4667 = vmatpush.msra.mxu0 0.0
  %4668 = vmatpush.msra.mxu0 0.0
  %4669 = vmatpush.msra.mxu0 %v4608
  %4670 = vmatpush.msra.mxu0 %v4607
  %4671 = vmatpush.msra.mxu0 %v4606
  %4672 = vmatpush.msra.mxu0 %v4605
  %4673 = vmatmul.f32.gmra.mxu0 %v4610
  %v4674 = vpop.f32.mrf.mxu0
  %v4675 = vadd.f32 0.0, %v4674
  %4676 = vmatmul.f32.gmra.mxu0 %v4613
  %v4677 = vpop.f32.mrf.mxu0
  %v4678 = vadd.f32 0.0, %v4677
  %4679 = vmatmul.f32.gmra.mxu0 %v4616
  %v4680 = vpop.f32.mrf.mxu0
  %v4681 = vadd.f32 0.0, %v4680
  %4682 = vmatmul.f32.gmra.mxu0 %v4619
  %v4683 = vpop.f32.mrf.mxu0
  %v4684 = vadd.f32 0.0, %v4683
  %4685 = vmatmul.f32.gmra.mxu0 %v4622
  %v4686 = vpop.f32.mrf.mxu0
  %v4687 = vadd.f32 0.0, %v4686
  %4688 = vmatmul.f32.gmra.mxu0 %v4625
  %v4689 = vpop.f32.mrf.mxu0
  %v4690 = vadd.f32 0.0, %v4689
  %4691 = vmatmul.f32.gmra.mxu0 %v4628
  %v4692 = vpop.f32.mrf.mxu0
  %v4693 = vadd.f32 0.0, %v4692
  %4694 = vmatmul.f32.gmra.mxu0 %v4631
  %v4695 = vpop.f32.mrf.mxu0
  %v4696 = vadd.f32 0.0, %v4695
  %4697 = vmatmul.f32.gmra.mxu0 %v4634
  %v4698 = vpop.f32.mrf.mxu0
  %v4699 = vadd.f32 0.0, %v4698
  %4700 = vmatmul.f32.gmra.mxu0 %v4637
  %v4701 = vpop.f32.mrf.mxu0
  %v4702 = vadd.f32 0.0, %v4701
  %4703 = vmatmul.f32.gmra.mxu0 %v4640
  %v4704 = vpop.f32.mrf.mxu0
  %v4705 = vadd.f32 0.0, %v4704
  %4706 = vmatmul.f32.gmra.mxu0 %v4643
  %v4707 = vpop.f32.mrf.mxu0
  %v4708 = vadd.f32 0.0, %v4707
  %4709 = vmatmul.f32.gmra.mxu0 %v4646
  %v4710 = vpop.f32.mrf.mxu0
  %v4711 = vadd.f32 0.0, %v4710
  %4712 = vmatmul.f32.gmra.mxu0 %v4649
  %v4713 = vpop.f32.mrf.mxu0
  %v4714 = vadd.f32 0.0, %v4713
  %4715 = vmatmul.f32.gmra.mxu0 %v4652
  %v4716 = vpop.f32.mrf.mxu0
  %v4717 = vadd.f32 0.0, %v4716
  %4718 = vmatmul.f32.gmra.mxu0 %v4655
  %v4719 = vpop.f32.mrf.mxu0
  %v4720 = vadd.f32 0.0, %v4719
  %4721 = vdwg.mxu0
  %v4722 = vadd.f32 %v4572, %v4675
  %v4723 = vadd.f32 %v4573, %v4678
  %v4724 = vadd.f32 %v4574, %v4681
  %v4725 = vadd.f32 %v4575, %v4684
  %v4726 = vadd.f32 %v4576, %v4687
  %v4727 = vadd.f32 %v4577, %v4690
  %v4728 = vadd.f32 %v4578, %v4693
  %v4729 = vadd.f32 %v4579, %v4696
  %v4730 = vadd.f32 %v4580, %v4699
  %v4731 = vadd.f32 %v4581, %v4702
  %v4732 = vadd.f32 %v4582, %v4705
  %v4733 = vadd.f32 %v4583, %v4708
  %v4734 = vadd.f32 %v4584, %v4711
  %v4735 = vadd.f32 %v4585, %v4714
  %v4736 = vadd.f32 %v4586, %v4717
  %v4737 = vadd.f32 %v4587, %v4720
  %v4738 = vld [vmem:[%s1] sm:$0xff]
  %v4739 = vld [vmem:[%s1 + $0x10] sm:$0xff]
  %v4740 = vld [vmem:[%s1 + $0x20] sm:$0xff]
  %v4741 = vld [vmem:[%s1 + $0x30] sm:$0xff]
  %v4742 = vld [vmem:[%s1 + $0x40] sm:$0xff]
  %v4743 = vld [vmem:[%s1 + $0x50] sm:$0xff]
  %v4744 = vld [vmem:[%s1 + $0x60] sm:$0xff]
  %v4745 = vld [vmem:[%s1 + $0x70] sm:$0xff]
  %v4746 = vld [vmem:[%s1 + $0xa0] sm:$0xff]
  %v4747 = vld [vmem:[%s1 + $0xb0] sm:$0xff]
  %v4748 = vld [vmem:[%s1 + $0xc0] sm:$0xff]
  %v4749 = vld [vmem:[%s1 + $0xd0] sm:$0xff]
  %v4750 = vld [vmem:[%s1 + $0xe0] sm:$0xff]
  %v4751 = vld [vmem:[%s1 + $0xf0] sm:$0xff]
  %v4752 = vld [vmem:[%s1 + $0x100] sm:$0xff]
  %v4753 = vld [vmem:[%s1 + $0x110] sm:$0xff]
  %v4754 = vld [vmem:[%s5] sm:$0xff]
  %v4755 = vld [vmem:[%s5 + $0x8] sm:$0xff]
  %v4756 = vld [vmem:[%s5 + $0x10] sm:$0xff]
  %v4757 = vld [vmem:[%s5 + $0x18] sm:$0xff]
  %v4758 = vld [vmem:[%s1 + $0x1] sm:$0xff]
  %v4759 = vld [vmem:[%s1 + $0x11] sm:$0xff]
  %v4760 = vld [vmem:[%s1 + $0x21] sm:$0xff]
  %v4761 = vld [vmem:[%s1 + $0x31] sm:$0xff]
  %v4762 = vld [vmem:[%s1 + $0x41] sm:$0xff]
  %v4763 = vld [vmem:[%s1 + $0x51] sm:$0xff]
  %v4764 = vld [vmem:[%s1 + $0x61] sm:$0xff]
  %v4765 = vld [vmem:[%s1 + $0x71] sm:$0xff]
  %v4766 = vld [vmem:[%s1 + $0xa1] sm:$0xff]
  %v4767 = vld [vmem:[%s1 + $0xb1] sm:$0xff]
  %v4768 = vld [vmem:[%s1 + $0xc1] sm:$0xff]
  %v4769 = vld [vmem:[%s1 + $0xd1] sm:$0xff]
  %v4770 = vld [vmem:[%s1 + $0xe1] sm:$0xff]
  %v4771 = vld [vmem:[%s1 + $0xf1] sm:$0xff]
  %v4772 = vld [vmem:[%s1 + $0x101] sm:$0xff]
  %v4773 = vld [vmem:[%s1 + $0x111] sm:$0xff]
  %s4774 = scalar_lea.vmem %s5, 32
  %v4775 = vld [vmem:[%s4774] sm:$0xff]
  %v4776 = vld [vmem:[%s4774 + $0x8] sm:$0xff]
  %v4777 = vld [vmem:[%s4774 + $0x10] sm:$0xff]
  %v4778 = vld [vmem:[%s4774 + $0x18] sm:$0xff]
  %v4780 = vsel %vm38, %v4758, 0
  %v4783 = vsel %vm38, %v4759, 0
  %v4786 = vsel %vm38, %v4760, 0
  %v4789 = vsel %vm38, %v4761, 0
  %v4792 = vsel %vm38, %v4762, 0
  %v4795 = vsel %vm38, %v4763, 0
  %v4798 = vsel %vm38, %v4764, 0
  %v4801 = vsel %vm38, %v4765, 0
  %v4804 = vsel %vm38, %v4766, 0
  %v4807 = vsel %vm38, %v4767, 0
  %v4810 = vsel %vm38, %v4768, 0
  %v4813 = vsel %vm38, %v4769, 0
  %v4816 = vsel %vm38, %v4770, 0
  %v4819 = vsel %vm38, %v4771, 0
  %v4822 = vsel %vm38, %v4772, 0
  %v4825 = vsel %vm38, %v4773, 0
  %4827 = vmatpush.msra.mxu0 0.0
  %4828 = vmatpush.msra.mxu0 0.0
  %4829 = vmatpush.msra.mxu0 0.0
  %4830 = vmatpush.msra.mxu0 0.0
  %4831 = vmatpush.msra.mxu0 0.0
  %4832 = vmatpush.msra.mxu0 0.0
  %4833 = vmatpush.msra.mxu0 0.0
  %4834 = vmatpush.msra.mxu0 0.0
  %4835 = vmatpush.msra.mxu0 0.0
  %4836 = vmatpush.msra.mxu0 0.0
  %4837 = vmatpush.msra.mxu0 0.0
  %4838 = vmatpush.msra.mxu0 0.0
  %4839 = vmatpush.msra.mxu0 %v4778
  %4840 = vmatpush.msra.mxu0 %v4777
  %4841 = vmatpush.msra.mxu0 %v4776
  %4842 = vmatpush.msra.mxu0 %v4775
  %4843 = vmatmul.f32.gmra.mxu0 %v4780
  %v4844 = vpop.f32.mrf.mxu0
  %v4845 = vadd.f32 0.0, %v4844
  %4846 = vmatmul.f32.gmra.mxu0 %v4783
  %v4847 = vpop.f32.mrf.mxu0
  %v4848 = vadd.f32 0.0, %v4847
  %4849 = vmatmul.f32.gmra.mxu0 %v4786
  %v4850 = vpop.f32.mrf.mxu0
  %v4851 = vadd.f32 0.0, %v4850
  %4852 = vmatmul.f32.gmra.mxu0 %v4789
  %v4853 = vpop.f32.mrf.mxu0
  %v4854 = vadd.f32 0.0, %v4853
  %4855 = vmatmul.f32.gmra.mxu0 %v4792
  %v4856 = vpop.f32.mrf.mxu0
  %v4857 = vadd.f32 0.0, %v4856
  %4858 = vmatmul.f32.gmra.mxu0 %v4795
  %v4859 = vpop.f32.mrf.mxu0
  %v4860 = vadd.f32 0.0, %v4859
  %4861 = vmatmul.f32.gmra.mxu0 %v4798
  %v4862 = vpop.f32.mrf.mxu0
  %v4863 = vadd.f32 0.0, %v4862
  %4864 = vmatmul.f32.gmra.mxu0 %v4801
  %v4865 = vpop.f32.mrf.mxu0
  %v4866 = vadd.f32 0.0, %v4865
  %4867 = vmatmul.f32.gmra.mxu0 %v4804
  %v4868 = vpop.f32.mrf.mxu0
  %v4869 = vadd.f32 0.0, %v4868
  %4870 = vmatmul.f32.gmra.mxu0 %v4807
  %v4871 = vpop.f32.mrf.mxu0
  %v4872 = vadd.f32 0.0, %v4871
  %4873 = vmatmul.f32.gmra.mxu0 %v4810
  %v4874 = vpop.f32.mrf.mxu0
  %v4875 = vadd.f32 0.0, %v4874
  %4876 = vmatmul.f32.gmra.mxu0 %v4813
  %v4877 = vpop.f32.mrf.mxu0
  %v4878 = vadd.f32 0.0, %v4877
  %4879 = vmatmul.f32.gmra.mxu0 %v4816
  %v4880 = vpop.f32.mrf.mxu0
  %v4881 = vadd.f32 0.0, %v4880
  %4882 = vmatmul.f32.gmra.mxu0 %v4819
  %v4883 = vpop.f32.mrf.mxu0
  %v4884 = vadd.f32 0.0, %v4883
  %4885 = vmatmul.f32.gmra.mxu0 %v4822
  %v4886 = vpop.f32.mrf.mxu0
  %v4887 = vadd.f32 0.0, %v4886
  %4888 = vmatmul.f32.gmra.mxu0 %v4825
  %v4889 = vpop.f32.mrf.mxu0
  %v4890 = vadd.f32 0.0, %v4889
  %4891 = vdwg.mxu0
  %v4893 = vsel %vm38, %v4738, 0
  %v4896 = vsel %vm38, %v4739, 0
  %v4899 = vsel %vm38, %v4740, 0
  %v4902 = vsel %vm38, %v4741, 0
  %v4905 = vsel %vm38, %v4742, 0
  %v4908 = vsel %vm38, %v4743, 0
  %v4911 = vsel %vm38, %v4744, 0
  %v4914 = vsel %vm38, %v4745, 0
  %v4917 = vsel %vm38, %v4746, 0
  %v4920 = vsel %vm38, %v4747, 0
  %v4923 = vsel %vm38, %v4748, 0
  %v4926 = vsel %vm38, %v4749, 0
  %v4929 = vsel %vm38, %v4750, 0
  %v4932 = vsel %vm38, %v4751, 0
  %v4935 = vsel %vm38, %v4752, 0
  %v4938 = vsel %vm38, %v4753, 0
  %4940 = vmatpush.msra.mxu0 0.0
  %4941 = vmatpush.msra.mxu0 0.0
  %4942 = vmatpush.msra.mxu0 0.0
  %4943 = vmatpush.msra.mxu0 0.0
  %4944 = vmatpush.msra.mxu0 0.0
  %4945 = vmatpush.msra.mxu0 0.0
  %4946 = vmatpush.msra.mxu0 0.0
  %4947 = vmatpush.msra.mxu0 0.0
  %4948 = vmatpush.msra.mxu0 0.0
  %4949 = vmatpush.msra.mxu0 0.0
  %4950 = vmatpush.msra.mxu0 0.0
  %4951 = vmatpush.msra.mxu0 0.0
  %4952 = vmatpush.msra.mxu0 %v4757
  %4953 = vmatpush.msra.mxu0 %v4756
  %4954 = vmatpush.msra.mxu0 %v4755
  %4955 = vmatpush.msra.mxu0 %v4754
  %4956 = vmatmul.f32.gmra.mxu0 %v4893
  %v4957 = vpop.f32.mrf.mxu0
  %v4958 = vadd.f32 %v4845, %v4957
  %4959 = vmatmul.f32.gmra.mxu0 %v4896
  %v4960 = vpop.f32.mrf.mxu0
  %v4961 = vadd.f32 %v4848, %v4960
  %4962 = vmatmul.f32.gmra.mxu0 %v4899
  %v4963 = vpop.f32.mrf.mxu0
  %v4964 = vadd.f32 %v4851, %v4963
  %4965 = vmatmul.f32.gmra.mxu0 %v4902
  %v4966 = vpop.f32.mrf.mxu0
  %v4967 = vadd.f32 %v4854, %v4966
  %4968 = vmatmul.f32.gmra.mxu0 %v4905
  %v4969 = vpop.f32.mrf.mxu0
  %v4970 = vadd.f32 %v4857, %v4969
  %4971 = vmatmul.f32.gmra.mxu0 %v4908
  %v4972 = vpop.f32.mrf.mxu0
  %v4973 = vadd.f32 %v4860, %v4972
  %4974 = vmatmul.f32.gmra.mxu0 %v4911
  %v4975 = vpop.f32.mrf.mxu0
  %v4976 = vadd.f32 %v4863, %v4975
  %4977 = vmatmul.f32.gmra.mxu0 %v4914
  %v4978 = vpop.f32.mrf.mxu0
  %v4979 = vadd.f32 %v4866, %v4978
  %4980 = vmatmul.f32.gmra.mxu0 %v4917
  %v4981 = vpop.f32.mrf.mxu0
  %v4982 = vadd.f32 %v4869, %v4981
  %4983 = vmatmul.f32.gmra.mxu0 %v4920
  %v4984 = vpop.f32.mrf.mxu0
  %v4985 = vadd.f32 %v4872, %v4984
  %4986 = vmatmul.f32.gmra.mxu0 %v4923
  %v4987 = vpop.f32.mrf.mxu0
  %v4988 = vadd.f32 %v4875, %v4987
  %4989 = vmatmul.f32.gmra.mxu0 %v4926
  %v4990 = vpop.f32.mrf.mxu0
  %v4991 = vadd.f32 %v4878, %v4990
  %4992 = vmatmul.f32.gmra.mxu0 %v4929
  %v4993 = vpop.f32.mrf.mxu0
  %v4994 = vadd.f32 %v4881, %v4993
  %4995 = vmatmul.f32.gmra.mxu0 %v4932
  %v4996 = vpop.f32.mrf.mxu0
  %v4997 = vadd.f32 %v4884, %v4996
  %4998 = vmatmul.f32.gmra.mxu0 %v4935
  %v4999 = vpop.f32.mrf.mxu0
  %v5000 = vadd.f32 %v4887, %v4999
  %5001 = vmatmul.f32.gmra.mxu0 %v4938
  %v5002 = vpop.f32.mrf.mxu0
  %v5003 = vadd.f32 %v4890, %v5002
  %5004 = vdwg.mxu0
  %v5005 = vld [vmem:[%s1 + $0x2] sm:$0xff]
  %v5006 = vld [vmem:[%s1 + $0x12] sm:$0xff]
  %v5007 = vld [vmem:[%s1 + $0x22] sm:$0xff]
  %v5008 = vld [vmem:[%s1 + $0x32] sm:$0xff]
  %v5009 = vld [vmem:[%s1 + $0x42] sm:$0xff]
  %v5010 = vld [vmem:[%s1 + $0x52] sm:$0xff]
  %v5011 = vld [vmem:[%s1 + $0x62] sm:$0xff]
  %v5012 = vld [vmem:[%s1 + $0x72] sm:$0xff]
  %v5013 = vld [vmem:[%s1 + $0xa2] sm:$0xff]
  %v5014 = vld [vmem:[%s1 + $0xb2] sm:$0xff]
  %v5015 = vld [vmem:[%s1 + $0xc2] sm:$0xff]
  %v5016 = vld [vmem:[%s1 + $0xd2] sm:$0xff]
  %v5017 = vld [vmem:[%s1 + $0xe2] sm:$0xff]
  %v5018 = vld [vmem:[%s1 + $0xf2] sm:$0xff]
  %v5019 = vld [vmem:[%s1 + $0x102] sm:$0xff]
  %v5020 = vld [vmem:[%s1 + $0x112] sm:$0xff]
  %s5021 = scalar_lea.vmem %s5, 64
  %v5022 = vld [vmem:[%s5021] sm:$0xff]
  %v5023 = vld [vmem:[%s5021 + $0x8] sm:$0xff]
  %v5024 = vld [vmem:[%s5021 + $0x10] sm:$0xff]
  %v5025 = vld [vmem:[%s5021 + $0x18] sm:$0xff]
  %v5027 = vsel %vm38, %v5005, 0
  %v5030 = vsel %vm38, %v5006, 0
  %v5033 = vsel %vm38, %v5007, 0
  %v5036 = vsel %vm38, %v5008, 0
  %v5039 = vsel %vm38, %v5009, 0
  %v5042 = vsel %vm38, %v5010, 0
  %v5045 = vsel %vm38, %v5011, 0
  %v5048 = vsel %vm38, %v5012, 0
  %v5051 = vsel %vm38, %v5013, 0
  %v5054 = vsel %vm38, %v5014, 0
  %v5057 = vsel %vm38, %v5015, 0
  %v5060 = vsel %vm38, %v5016, 0
  %v5063 = vsel %vm38, %v5017, 0
  %v5066 = vsel %vm38, %v5018, 0
  %v5069 = vsel %vm38, %v5019, 0
  %v5072 = vsel %vm38, %v5020, 0
  %5074 = vmatpush.msra.mxu0 0.0
  %5075 = vmatpush.msra.mxu0 0.0
  %5076 = vmatpush.msra.mxu0 0.0
  %5077 = vmatpush.msra.mxu0 0.0
  %5078 = vmatpush.msra.mxu0 0.0
  %5079 = vmatpush.msra.mxu0 0.0
  %5080 = vmatpush.msra.mxu0 0.0
  %5081 = vmatpush.msra.mxu0 0.0
  %5082 = vmatpush.msra.mxu0 0.0
  %5083 = vmatpush.msra.mxu0 0.0
  %5084 = vmatpush.msra.mxu0 0.0
  %5085 = vmatpush.msra.mxu0 0.0
  %5086 = vmatpush.msra.mxu0 %v5025
  %5087 = vmatpush.msra.mxu0 %v5024
  %5088 = vmatpush.msra.mxu0 %v5023
  %5089 = vmatpush.msra.mxu0 %v5022
  %5090 = vmatmul.f32.gmra.mxu0 %v5027
  %v5091 = vpop.f32.mrf.mxu0
  %v5092 = vadd.f32 0.0, %v5091
  %5093 = vmatmul.f32.gmra.mxu0 %v5030
  %v5094 = vpop.f32.mrf.mxu0
  %v5095 = vadd.f32 0.0, %v5094
  %5096 = vmatmul.f32.gmra.mxu0 %v5033
  %v5097 = vpop.f32.mrf.mxu0
  %v5098 = vadd.f32 0.0, %v5097
  %5099 = vmatmul.f32.gmra.mxu0 %v5036
  %v5100 = vpop.f32.mrf.mxu0
  %v5101 = vadd.f32 0.0, %v5100
  %5102 = vmatmul.f32.gmra.mxu0 %v5039
  %v5103 = vpop.f32.mrf.mxu0
  %v5104 = vadd.f32 0.0, %v5103
  %5105 = vmatmul.f32.gmra.mxu0 %v5042
  %v5106 = vpop.f32.mrf.mxu0
  %v5107 = vadd.f32 0.0, %v5106
  %5108 = vmatmul.f32.gmra.mxu0 %v5045
  %v5109 = vpop.f32.mrf.mxu0
  %v5110 = vadd.f32 0.0, %v5109
  %5111 = vmatmul.f32.gmra.mxu0 %v5048
  %v5112 = vpop.f32.mrf.mxu0
  %v5113 = vadd.f32 0.0, %v5112
  %5114 = vmatmul.f32.gmra.mxu0 %v5051
  %v5115 = vpop.f32.mrf.mxu0
  %v5116 = vadd.f32 0.0, %v5115
  %5117 = vmatmul.f32.gmra.mxu0 %v5054
  %v5118 = vpop.f32.mrf.mxu0
  %v5119 = vadd.f32 0.0, %v5118
  %5120 = vmatmul.f32.gmra.mxu0 %v5057
  %v5121 = vpop.f32.mrf.mxu0
  %v5122 = vadd.f32 0.0, %v5121
  %5123 = vmatmul.f32.gmra.mxu0 %v5060
  %v5124 = vpop.f32.mrf.mxu0
  %v5125 = vadd.f32 0.0, %v5124
  %5126 = vmatmul.f32.gmra.mxu0 %v5063
  %v5127 = vpop.f32.mrf.mxu0
  %v5128 = vadd.f32 0.0, %v5127
  %5129 = vmatmul.f32.gmra.mxu0 %v5066
  %v5130 = vpop.f32.mrf.mxu0
  %v5131 = vadd.f32 0.0, %v5130
  %5132 = vmatmul.f32.gmra.mxu0 %v5069
  %v5133 = vpop.f32.mrf.mxu0
  %v5134 = vadd.f32 0.0, %v5133
  %5135 = vmatmul.f32.gmra.mxu0 %v5072
  %v5136 = vpop.f32.mrf.mxu0
  %v5137 = vadd.f32 0.0, %v5136
  %5138 = vdwg.mxu0
  %v5139 = vadd.f32 %v4958, %v5092
  %v5140 = vadd.f32 %v4961, %v5095
  %v5141 = vadd.f32 %v4964, %v5098
  %v5142 = vadd.f32 %v4967, %v5101
  %v5143 = vadd.f32 %v4970, %v5104
  %v5144 = vadd.f32 %v4973, %v5107
  %v5145 = vadd.f32 %v4976, %v5110
  %v5146 = vadd.f32 %v4979, %v5113
  %v5147 = vadd.f32 %v4982, %v5116
  %v5148 = vadd.f32 %v4985, %v5119
  %v5149 = vadd.f32 %v4988, %v5122
  %v5150 = vadd.f32 %v4991, %v5125
  %v5151 = vadd.f32 %v4994, %v5128
  %v5152 = vadd.f32 %v4997, %v5131
  %v5153 = vadd.f32 %v5000, %v5134
  %v5154 = vadd.f32 %v5003, %v5137
  %s5155 = scalar_lea.vmem %s1, 16
  %v5156 = vld [vmem:[%s5155] sm:$0xff]
  %v5157 = vld [vmem:[%s5155 + $0x10] sm:$0xff]
  %v5158 = vld [vmem:[%s5155 + $0x20] sm:$0xff]
  %v5159 = vld [vmem:[%s5155 + $0x30] sm:$0xff]
  %v5160 = vld [vmem:[%s5155 + $0x40] sm:$0xff]
  %v5161 = vld [vmem:[%s5155 + $0x50] sm:$0xff]
  %v5162 = vld [vmem:[%s5155 + $0x60] sm:$0xff]
  %v5163 = vld [vmem:[%s5155 + $0x70] sm:$0xff]
  %v5164 = vld [vmem:[%s5155 + $0xa0] sm:$0xff]
  %v5165 = vld [vmem:[%s5155 + $0xb0] sm:$0xff]
  %v5166 = vld [vmem:[%s5155 + $0xc0] sm:$0xff]
  %v5167 = vld [vmem:[%s5155 + $0xd0] sm:$0xff]
  %v5168 = vld [vmem:[%s5155 + $0xe0] sm:$0xff]
  %v5169 = vld [vmem:[%s5155 + $0xf0] sm:$0xff]
  %v5170 = vld [vmem:[%s5155 + $0x100] sm:$0xff]
  %v5171 = vld [vmem:[%s5155 + $0x110] sm:$0xff]
  %s5172 = scalar_lea.vmem %s5, 96
  %v5173 = vld [vmem:[%s5172] sm:$0xff]
  %v5174 = vld [vmem:[%s5172 + $0x8] sm:$0xff]
  %v5175 = vld [vmem:[%s5172 + $0x10] sm:$0xff]
  %v5176 = vld [vmem:[%s5172 + $0x18] sm:$0xff]
  %v5178 = vsel %vm38, %v5156, 0
  %v5181 = vsel %vm38, %v5157, 0
  %v5184 = vsel %vm38, %v5158, 0
  %v5187 = vsel %vm38, %v5159, 0
  %v5190 = vsel %vm38, %v5160, 0
  %v5193 = vsel %vm38, %v5161, 0
  %v5196 = vsel %vm38, %v5162, 0
  %v5199 = vsel %vm38, %v5163, 0
  %v5202 = vsel %vm38, %v5164, 0
  %v5205 = vsel %vm38, %v5165, 0
  %v5208 = vsel %vm38, %v5166, 0
  %v5211 = vsel %vm38, %v5167, 0
  %v5214 = vsel %vm38, %v5168, 0
  %v5217 = vsel %vm38, %v5169, 0
  %v5220 = vsel %vm38, %v5170, 0
  %v5223 = vsel %vm38, %v5171, 0
  %5225 = vmatpush.msra.mxu0 0.0
  %5226 = vmatpush.msra.mxu0 0.0
  %5227 = vmatpush.msra.mxu0 0.0
  %5228 = vmatpush.msra.mxu0 0.0
  %5229 = vmatpush.msra.mxu0 0.0
  %5230 = vmatpush.msra.mxu0 0.0
  %5231 = vmatpush.msra.mxu0 0.0
  %5232 = vmatpush.msra.mxu0 0.0
  %5233 = vmatpush.msra.mxu0 0.0
  %5234 = vmatpush.msra.mxu0 0.0
  %5235 = vmatpush.msra.mxu0 0.0
  %5236 = vmatpush.msra.mxu0 0.0
  %5237 = vmatpush.msra.mxu0 %v5176
  %5238 = vmatpush.msra.mxu0 %v5175
  %5239 = vmatpush.msra.mxu0 %v5174
  %5240 = vmatpush.msra.mxu0 %v5173
  %5241 = vmatmul.f32.gmra.mxu0 %v5178
  %v5242 = vpop.f32.mrf.mxu0
  %v5243 = vadd.f32 0.0, %v5242
  %5244 = vmatmul.f32.gmra.mxu0 %v5181
  %v5245 = vpop.f32.mrf.mxu0
  %v5246 = vadd.f32 0.0, %v5245
  %5247 = vmatmul.f32.gmra.mxu0 %v5184
  %v5248 = vpop.f32.mrf.mxu0
  %v5249 = vadd.f32 0.0, %v5248
  %5250 = vmatmul.f32.gmra.mxu0 %v5187
  %v5251 = vpop.f32.mrf.mxu0
  %v5252 = vadd.f32 0.0, %v5251
  %5253 = vmatmul.f32.gmra.mxu0 %v5190
  %v5254 = vpop.f32.mrf.mxu0
  %v5255 = vadd.f32 0.0, %v5254
  %5256 = vmatmul.f32.gmra.mxu0 %v5193
  %v5257 = vpop.f32.mrf.mxu0
  %v5258 = vadd.f32 0.0, %v5257
  %5259 = vmatmul.f32.gmra.mxu0 %v5196
  %v5260 = vpop.f32.mrf.mxu0
  %v5261 = vadd.f32 0.0, %v5260
  %5262 = vmatmul.f32.gmra.mxu0 %v5199
  %v5263 = vpop.f32.mrf.mxu0
  %v5264 = vadd.f32 0.0, %v5263
  %5265 = vmatmul.f32.gmra.mxu0 %v5202
  %v5266 = vpop.f32.mrf.mxu0
  %v5267 = vadd.f32 0.0, %v5266
  %5268 = vmatmul.f32.gmra.mxu0 %v5205
  %v5269 = vpop.f32.mrf.mxu0
  %v5270 = vadd.f32 0.0, %v5269
  %5271 = vmatmul.f32.gmra.mxu0 %v5208
  %v5272 = vpop.f32.mrf.mxu0
  %v5273 = vadd.f32 0.0, %v5272
  %5274 = vmatmul.f32.gmra.mxu0 %v5211
  %v5275 = vpop.f32.mrf.mxu0
  %v5276 = vadd.f32 0.0, %v5275
  %5277 = vmatmul.f32.gmra.mxu0 %v5214
  %v5278 = vpop.f32.mrf.mxu0
  %v5279 = vadd.f32 0.0, %v5278
  %5280 = vmatmul.f32.gmra.mxu0 %v5217
  %v5281 = vpop.f32.mrf.mxu0
  %v5282 = vadd.f32 0.0, %v5281
  %5283 = vmatmul.f32.gmra.mxu0 %v5220
  %v5284 = vpop.f32.mrf.mxu0
  %v5285 = vadd.f32 0.0, %v5284
  %5286 = vmatmul.f32.gmra.mxu0 %v5223
  %v5287 = vpop.f32.mrf.mxu0
  %v5288 = vadd.f32 0.0, %v5287
  %5289 = vdwg.mxu0
  %v5290 = vadd.f32 %v5139, %v5243
  %v5291 = vadd.f32 %v5140, %v5246
  %v5292 = vadd.f32 %v5141, %v5249
  %v5293 = vadd.f32 %v5142, %v5252
  %v5294 = vadd.f32 %v5143, %v5255
  %v5295 = vadd.f32 %v5144, %v5258
  %v5296 = vadd.f32 %v5145, %v5261
  %v5297 = vadd.f32 %v5146, %v5264
  %v5298 = vadd.f32 %v5147, %v5267
  %v5299 = vadd.f32 %v5148, %v5270
  %v5300 = vadd.f32 %v5149, %v5273
  %v5301 = vadd.f32 %v5150, %v5276
  %v5302 = vadd.f32 %v5151, %v5279
  %v5303 = vadd.f32 %v5152, %v5282
  %v5304 = vadd.f32 %v5153, %v5285
  %v5305 = vadd.f32 %v5154, %v5288
  %v5306 = vld [vmem:[%s5155 + $0x1] sm:$0xff]
  %v5307 = vld [vmem:[%s5155 + $0x11] sm:$0xff]
  %v5308 = vld [vmem:[%s5155 + $0x21] sm:$0xff]
  %v5309 = vld [vmem:[%s5155 + $0x31] sm:$0xff]
  %v5310 = vld [vmem:[%s5155 + $0x41] sm:$0xff]
  %v5311 = vld [vmem:[%s5155 + $0x51] sm:$0xff]
  %v5312 = vld [vmem:[%s5155 + $0x61] sm:$0xff]
  %v5313 = vld [vmem:[%s5155 + $0x71] sm:$0xff]
  %v5314 = vld [vmem:[%s5155 + $0xa1] sm:$0xff]
  %v5315 = vld [vmem:[%s5155 + $0xb1] sm:$0xff]
  %v5316 = vld [vmem:[%s5155 + $0xc1] sm:$0xff]
  %v5317 = vld [vmem:[%s5155 + $0xd1] sm:$0xff]
  %v5318 = vld [vmem:[%s5155 + $0xe1] sm:$0xff]
  %v5319 = vld [vmem:[%s5155 + $0xf1] sm:$0xff]
  %v5320 = vld [vmem:[%s5155 + $0x101] sm:$0xff]
  %v5321 = vld [vmem:[%s5155 + $0x111] sm:$0xff]
  %s5322 = scalar_lea.vmem %s5, 128
  %v5323 = vld [vmem:[%s5322] sm:$0xff]
  %v5324 = vld [vmem:[%s5322 + $0x8] sm:$0xff]
  %v5325 = vld [vmem:[%s5322 + $0x10] sm:$0xff]
  %v5326 = vld [vmem:[%s5322 + $0x18] sm:$0xff]
  %v5328 = vsel %vm38, %v5306, 0
  %v5331 = vsel %vm38, %v5307, 0
  %v5334 = vsel %vm38, %v5308, 0
  %v5337 = vsel %vm38, %v5309, 0
  %v5340 = vsel %vm38, %v5310, 0
  %v5343 = vsel %vm38, %v5311, 0
  %v5346 = vsel %vm38, %v5312, 0
  %v5349 = vsel %vm38, %v5313, 0
  %v5352 = vsel %vm38, %v5314, 0
  %v5355 = vsel %vm38, %v5315, 0
  %v5358 = vsel %vm38, %v5316, 0
  %v5361 = vsel %vm38, %v5317, 0
  %v5364 = vsel %vm38, %v5318, 0
  %v5367 = vsel %vm38, %v5319, 0
  %v5370 = vsel %vm38, %v5320, 0
  %v5373 = vsel %vm38, %v5321, 0
  %5375 = vmatpush.msra.mxu0 0.0
  %5376 = vmatpush.msra.mxu0 0.0
  %5377 = vmatpush.msra.mxu0 0.0
  %5378 = vmatpush.msra.mxu0 0.0
  %5379 = vmatpush.msra.mxu0 0.0
  %5380 = vmatpush.msra.mxu0 0.0
  %5381 = vmatpush.msra.mxu0 0.0
  %5382 = vmatpush.msra.mxu0 0.0
  %5383 = vmatpush.msra.mxu0 0.0
  %5384 = vmatpush.msra.mxu0 0.0
  %5385 = vmatpush.msra.mxu0 0.0
  %5386 = vmatpush.msra.mxu0 0.0
  %5387 = vmatpush.msra.mxu0 %v5326
  %5388 = vmatpush.msra.mxu0 %v5325
  %5389 = vmatpush.msra.mxu0 %v5324
  %5390 = vmatpush.msra.mxu0 %v5323
  %5391 = vmatmul.f32.gmra.mxu0 %v5328
  %v5392 = vpop.f32.mrf.mxu0
  %v5393 = vadd.f32 0.0, %v5392
  %5394 = vmatmul.f32.gmra.mxu0 %v5331
  %v5395 = vpop.f32.mrf.mxu0
  %v5396 = vadd.f32 0.0, %v5395
  %5397 = vmatmul.f32.gmra.mxu0 %v5334
  %v5398 = vpop.f32.mrf.mxu0
  %v5399 = vadd.f32 0.0, %v5398
  %5400 = vmatmul.f32.gmra.mxu0 %v5337
  %v5401 = vpop.f32.mrf.mxu0
  %v5402 = vadd.f32 0.0, %v5401
  %5403 = vmatmul.f32.gmra.mxu0 %v5340
  %v5404 = vpop.f32.mrf.mxu0
  %v5405 = vadd.f32 0.0, %v5404
  %5406 = vmatmul.f32.gmra.mxu0 %v5343
  %v5407 = vpop.f32.mrf.mxu0
  %v5408 = vadd.f32 0.0, %v5407
  %5409 = vmatmul.f32.gmra.mxu0 %v5346
  %v5410 = vpop.f32.mrf.mxu0
  %v5411 = vadd.f32 0.0, %v5410
  %5412 = vmatmul.f32.gmra.mxu0 %v5349
  %v5413 = vpop.f32.mrf.mxu0
  %v5414 = vadd.f32 0.0, %v5413
  %5415 = vmatmul.f32.gmra.mxu0 %v5352
  %v5416 = vpop.f32.mrf.mxu0
  %v5417 = vadd.f32 0.0, %v5416
  %5418 = vmatmul.f32.gmra.mxu0 %v5355
  %v5419 = vpop.f32.mrf.mxu0
  %v5420 = vadd.f32 0.0, %v5419
  %5421 = vmatmul.f32.gmra.mxu0 %v5358
  %v5422 = vpop.f32.mrf.mxu0
  %v5423 = vadd.f32 0.0, %v5422
  %5424 = vmatmul.f32.gmra.mxu0 %v5361
  %v5425 = vpop.f32.mrf.mxu0
  %v5426 = vadd.f32 0.0, %v5425
  %5427 = vmatmul.f32.gmra.mxu0 %v5364
  %v5428 = vpop.f32.mrf.mxu0
  %v5429 = vadd.f32 0.0, %v5428
  %5430 = vmatmul.f32.gmra.mxu0 %v5367
  %v5431 = vpop.f32.mrf.mxu0
  %v5432 = vadd.f32 0.0, %v5431
  %5433 = vmatmul.f32.gmra.mxu0 %v5370
  %v5434 = vpop.f32.mrf.mxu0
  %v5435 = vadd.f32 0.0, %v5434
  %5436 = vmatmul.f32.gmra.mxu0 %v5373
  %v5437 = vpop.f32.mrf.mxu0
  %v5438 = vadd.f32 0.0, %v5437
  %5439 = vdwg.mxu0
  %v5440 = vadd.f32 %v5290, %v5393
  %v5441 = vadd.f32 %v5291, %v5396
  %v5442 = vadd.f32 %v5292, %v5399
  %v5443 = vadd.f32 %v5293, %v5402
  %v5444 = vadd.f32 %v5294, %v5405
  %v5445 = vadd.f32 %v5295, %v5408
  %v5446 = vadd.f32 %v5296, %v5411
  %v5447 = vadd.f32 %v5297, %v5414
  %v5448 = vadd.f32 %v5298, %v5417
  %v5449 = vadd.f32 %v5299, %v5420
  %v5450 = vadd.f32 %v5300, %v5423
  %v5451 = vadd.f32 %v5301, %v5426
  %v5452 = vadd.f32 %v5302, %v5429
  %v5453 = vadd.f32 %v5303, %v5432
  %v5454 = vadd.f32 %v5304, %v5435
  %v5455 = vadd.f32 %v5305, %v5438
  %v5456 = vld [vmem:[%s5155 + $0x2] sm:$0xff]
  %v5457 = vld [vmem:[%s5155 + $0x12] sm:$0xff]
  %v5458 = vld [vmem:[%s5155 + $0x22] sm:$0xff]
  %v5459 = vld [vmem:[%s5155 + $0x32] sm:$0xff]
  %v5460 = vld [vmem:[%s5155 + $0x42] sm:$0xff]
  %v5461 = vld [vmem:[%s5155 + $0x52] sm:$0xff]
  %v5462 = vld [vmem:[%s5155 + $0x62] sm:$0xff]
  %v5463 = vld [vmem:[%s5155 + $0x72] sm:$0xff]
  %v5464 = vld [vmem:[%s5155 + $0xa2] sm:$0xff]
  %v5465 = vld [vmem:[%s5155 + $0xb2] sm:$0xff]
  %v5466 = vld [vmem:[%s5155 + $0xc2] sm:$0xff]
  %v5467 = vld [vmem:[%s5155 + $0xd2] sm:$0xff]
  %v5468 = vld [vmem:[%s5155 + $0xe2] sm:$0xff]
  %v5469 = vld [vmem:[%s5155 + $0xf2] sm:$0xff]
  %v5470 = vld [vmem:[%s5155 + $0x102] sm:$0xff]
  %v5471 = vld [vmem:[%s5155 + $0x112] sm:$0xff]
  %s5472 = scalar_lea.vmem %s5, 160
  %v5473 = vld [vmem:[%s5472] sm:$0xff]
  %v5474 = vld [vmem:[%s5472 + $0x8] sm:$0xff]
  %v5475 = vld [vmem:[%s5472 + $0x10] sm:$0xff]
  %v5476 = vld [vmem:[%s5472 + $0x18] sm:$0xff]
  %v5478 = vsel %vm38, %v5456, 0
  %v5481 = vsel %vm38, %v5457, 0
  %v5484 = vsel %vm38, %v5458, 0
  %v5487 = vsel %vm38, %v5459, 0
  %v5490 = vsel %vm38, %v5460, 0
  %v5493 = vsel %vm38, %v5461, 0
  %v5496 = vsel %vm38, %v5462, 0
  %v5499 = vsel %vm38, %v5463, 0
  %v5502 = vsel %vm38, %v5464, 0
  %v5505 = vsel %vm38, %v5465, 0
  %v5508 = vsel %vm38, %v5466, 0
  %v5511 = vsel %vm38, %v5467, 0
  %v5514 = vsel %vm38, %v5468, 0
  %v5517 = vsel %vm38, %v5469, 0
  %v5520 = vsel %vm38, %v5470, 0
  %v5523 = vsel %vm38, %v5471, 0
  %5525 = vmatpush.msra.mxu0 0.0
  %5526 = vmatpush.msra.mxu0 0.0
  %5527 = vmatpush.msra.mxu0 0.0
  %5528 = vmatpush.msra.mxu0 0.0
  %5529 = vmatpush.msra.mxu0 0.0
  %5530 = vmatpush.msra.mxu0 0.0
  %5531 = vmatpush.msra.mxu0 0.0
  %5532 = vmatpush.msra.mxu0 0.0
  %5533 = vmatpush.msra.mxu0 0.0
  %5534 = vmatpush.msra.mxu0 0.0
  %5535 = vmatpush.msra.mxu0 0.0
  %5536 = vmatpush.msra.mxu0 0.0
  %5537 = vmatpush.msra.mxu0 %v5476
  %5538 = vmatpush.msra.mxu0 %v5475
  %5539 = vmatpush.msra.mxu0 %v5474
  %5540 = vmatpush.msra.mxu0 %v5473
  %5541 = vmatmul.f32.gmra.mxu0 %v5478
  %v5542 = vpop.f32.mrf.mxu0
  %v5543 = vadd.f32 0.0, %v5542
  %5544 = vmatmul.f32.gmra.mxu0 %v5481
  %v5545 = vpop.f32.mrf.mxu0
  %v5546 = vadd.f32 0.0, %v5545
  %5547 = vmatmul.f32.gmra.mxu0 %v5484
  %v5548 = vpop.f32.mrf.mxu0
  %v5549 = vadd.f32 0.0, %v5548
  %5550 = vmatmul.f32.gmra.mxu0 %v5487
  %v5551 = vpop.f32.mrf.mxu0
  %v5552 = vadd.f32 0.0, %v5551
  %5553 = vmatmul.f32.gmra.mxu0 %v5490
  %v5554 = vpop.f32.mrf.mxu0
  %v5555 = vadd.f32 0.0, %v5554
  %5556 = vmatmul.f32.gmra.mxu0 %v5493
  %v5557 = vpop.f32.mrf.mxu0
  %v5558 = vadd.f32 0.0, %v5557
  %5559 = vmatmul.f32.gmra.mxu0 %v5496
  %v5560 = vpop.f32.mrf.mxu0
  %v5561 = vadd.f32 0.0, %v5560
  %5562 = vmatmul.f32.gmra.mxu0 %v5499
  %v5563 = vpop.f32.mrf.mxu0
  %v5564 = vadd.f32 0.0, %v5563
  %5565 = vmatmul.f32.gmra.mxu0 %v5502
  %v5566 = vpop.f32.mrf.mxu0
  %v5567 = vadd.f32 0.0, %v5566
  %5568 = vmatmul.f32.gmra.mxu0 %v5505
  %v5569 = vpop.f32.mrf.mxu0
  %v5570 = vadd.f32 0.0, %v5569
  %5571 = vmatmul.f32.gmra.mxu0 %v5508
  %v5572 = vpop.f32.mrf.mxu0
  %v5573 = vadd.f32 0.0, %v5572
  %5574 = vmatmul.f32.gmra.mxu0 %v5511
  %v5575 = vpop.f32.mrf.mxu0
  %v5576 = vadd.f32 0.0, %v5575
  %5577 = vmatmul.f32.gmra.mxu0 %v5514
  %v5578 = vpop.f32.mrf.mxu0
  %v5579 = vadd.f32 0.0, %v5578
  %5580 = vmatmul.f32.gmra.mxu0 %v5517
  %v5581 = vpop.f32.mrf.mxu0
  %v5582 = vadd.f32 0.0, %v5581
  %5583 = vmatmul.f32.gmra.mxu0 %v5520
  %v5584 = vpop.f32.mrf.mxu0
  %v5585 = vadd.f32 0.0, %v5584
  %5586 = vmatmul.f32.gmra.mxu0 %v5523
  %v5587 = vpop.f32.mrf.mxu0
  %v5588 = vadd.f32 0.0, %v5587
  %5589 = vdwg.mxu0
  %v5590 = vadd.f32 %v5440, %v5543
  %v5591 = vadd.f32 %v5441, %v5546
  %v5592 = vadd.f32 %v5442, %v5549
  %v5593 = vadd.f32 %v5443, %v5552
  %v5594 = vadd.f32 %v5444, %v5555
  %v5595 = vadd.f32 %v5445, %v5558
  %v5596 = vadd.f32 %v5446, %v5561
  %v5597 = vadd.f32 %v5447, %v5564
  %v5598 = vadd.f32 %v5448, %v5567
  %v5599 = vadd.f32 %v5449, %v5570
  %v5600 = vadd.f32 %v5450, %v5573
  %v5601 = vadd.f32 %v5451, %v5576
  %v5602 = vadd.f32 %v5452, %v5579
  %v5603 = vadd.f32 %v5453, %v5582
  %v5604 = vadd.f32 %v5454, %v5585
  %v5605 = vadd.f32 %v5455, %v5588
  %s5606 = scalar_lea.vmem %s1, 32
  %v5607 = vld [vmem:[%s5606] sm:$0xff]
  %v5608 = vld [vmem:[%s5606 + $0x10] sm:$0xff]
  %v5609 = vld [vmem:[%s5606 + $0x20] sm:$0xff]
  %v5610 = vld [vmem:[%s5606 + $0x30] sm:$0xff]
  %v5611 = vld [vmem:[%s5606 + $0x40] sm:$0xff]
  %v5612 = vld [vmem:[%s5606 + $0x50] sm:$0xff]
  %v5613 = vld [vmem:[%s5606 + $0x60] sm:$0xff]
  %v5614 = vld [vmem:[%s5606 + $0x70] sm:$0xff]
  %v5615 = vld [vmem:[%s5606 + $0xa0] sm:$0xff]
  %v5616 = vld [vmem:[%s5606 + $0xb0] sm:$0xff]
  %v5617 = vld [vmem:[%s5606 + $0xc0] sm:$0xff]
  %v5618 = vld [vmem:[%s5606 + $0xd0] sm:$0xff]
  %v5619 = vld [vmem:[%s5606 + $0xe0] sm:$0xff]
  %v5620 = vld [vmem:[%s5606 + $0xf0] sm:$0xff]
  %v5621 = vld [vmem:[%s5606 + $0x100] sm:$0xff]
  %v5622 = vld [vmem:[%s5606 + $0x110] sm:$0xff]
  %s5623 = scalar_lea.vmem %s5, 192
  %v5624 = vld [vmem:[%s5623] sm:$0xff]
  %v5625 = vld [vmem:[%s5623 + $0x8] sm:$0xff]
  %v5626 = vld [vmem:[%s5623 + $0x10] sm:$0xff]
  %v5627 = vld [vmem:[%s5623 + $0x18] sm:$0xff]
  %v5629 = vsel %vm38, %v5607, 0
  %v5632 = vsel %vm38, %v5608, 0
  %v5635 = vsel %vm38, %v5609, 0
  %v5638 = vsel %vm38, %v5610, 0
  %v5641 = vsel %vm38, %v5611, 0
  %v5644 = vsel %vm38, %v5612, 0
  %v5647 = vsel %vm38, %v5613, 0
  %v5650 = vsel %vm38, %v5614, 0
  %v5653 = vsel %vm38, %v5615, 0
  %v5656 = vsel %vm38, %v5616, 0
  %v5659 = vsel %vm38, %v5617, 0
  %v5662 = vsel %vm38, %v5618, 0
  %v5665 = vsel %vm38, %v5619, 0
  %v5668 = vsel %vm38, %v5620, 0
  %v5671 = vsel %vm38, %v5621, 0
  %v5674 = vsel %vm38, %v5622, 0
  %5676 = vmatpush.msra.mxu0 0.0
  %5677 = vmatpush.msra.mxu0 0.0
  %5678 = vmatpush.msra.mxu0 0.0
  %5679 = vmatpush.msra.mxu0 0.0
  %5680 = vmatpush.msra.mxu0 0.0
  %5681 = vmatpush.msra.mxu0 0.0
  %5682 = vmatpush.msra.mxu0 0.0
  %5683 = vmatpush.msra.mxu0 0.0
  %5684 = vmatpush.msra.mxu0 0.0
  %5685 = vmatpush.msra.mxu0 0.0
  %5686 = vmatpush.msra.mxu0 0.0
  %5687 = vmatpush.msra.mxu0 0.0
  %5688 = vmatpush.msra.mxu0 %v5627
  %5689 = vmatpush.msra.mxu0 %v5626
  %5690 = vmatpush.msra.mxu0 %v5625
  %5691 = vmatpush.msra.mxu0 %v5624
  %5692 = vmatmul.f32.gmra.mxu0 %v5629
  %v5693 = vpop.f32.mrf.mxu0
  %v5694 = vadd.f32 0.0, %v5693
  %5695 = vmatmul.f32.gmra.mxu0 %v5632
  %v5696 = vpop.f32.mrf.mxu0
  %v5697 = vadd.f32 0.0, %v5696
  %5698 = vmatmul.f32.gmra.mxu0 %v5635
  %v5699 = vpop.f32.mrf.mxu0
  %v5700 = vadd.f32 0.0, %v5699
  %5701 = vmatmul.f32.gmra.mxu0 %v5638
  %v5702 = vpop.f32.mrf.mxu0
  %v5703 = vadd.f32 0.0, %v5702
  %5704 = vmatmul.f32.gmra.mxu0 %v5641
  %v5705 = vpop.f32.mrf.mxu0
  %v5706 = vadd.f32 0.0, %v5705
  %5707 = vmatmul.f32.gmra.mxu0 %v5644
  %v5708 = vpop.f32.mrf.mxu0
  %v5709 = vadd.f32 0.0, %v5708
  %5710 = vmatmul.f32.gmra.mxu0 %v5647
  %v5711 = vpop.f32.mrf.mxu0
  %v5712 = vadd.f32 0.0, %v5711
  %5713 = vmatmul.f32.gmra.mxu0 %v5650
  %v5714 = vpop.f32.mrf.mxu0
  %v5715 = vadd.f32 0.0, %v5714
  %5716 = vmatmul.f32.gmra.mxu0 %v5653
  %v5717 = vpop.f32.mrf.mxu0
  %v5718 = vadd.f32 0.0, %v5717
  %5719 = vmatmul.f32.gmra.mxu0 %v5656
  %v5720 = vpop.f32.mrf.mxu0
  %v5721 = vadd.f32 0.0, %v5720
  %5722 = vmatmul.f32.gmra.mxu0 %v5659
  %v5723 = vpop.f32.mrf.mxu0
  %v5724 = vadd.f32 0.0, %v5723
  %5725 = vmatmul.f32.gmra.mxu0 %v5662
  %v5726 = vpop.f32.mrf.mxu0
  %v5727 = vadd.f32 0.0, %v5726
  %5728 = vmatmul.f32.gmra.mxu0 %v5665
  %v5729 = vpop.f32.mrf.mxu0
  %v5730 = vadd.f32 0.0, %v5729
  %5731 = vmatmul.f32.gmra.mxu0 %v5668
  %v5732 = vpop.f32.mrf.mxu0
  %v5733 = vadd.f32 0.0, %v5732
  %5734 = vmatmul.f32.gmra.mxu0 %v5671
  %v5735 = vpop.f32.mrf.mxu0
  %v5736 = vadd.f32 0.0, %v5735
  %5737 = vmatmul.f32.gmra.mxu0 %v5674
  %v5738 = vpop.f32.mrf.mxu0
  %v5739 = vadd.f32 0.0, %v5738
  %5740 = vdwg.mxu0
  %v5741 = vadd.f32 %v5590, %v5694
  %v5742 = vadd.f32 %v5591, %v5697
  %v5743 = vadd.f32 %v5592, %v5700
  %v5744 = vadd.f32 %v5593, %v5703
  %v5745 = vadd.f32 %v5594, %v5706
  %v5746 = vadd.f32 %v5595, %v5709
  %v5747 = vadd.f32 %v5596, %v5712
  %v5748 = vadd.f32 %v5597, %v5715
  %v5749 = vadd.f32 %v5598, %v5718
  %v5750 = vadd.f32 %v5599, %v5721
  %v5751 = vadd.f32 %v5600, %v5724
  %v5752 = vadd.f32 %v5601, %v5727
  %v5753 = vadd.f32 %v5602, %v5730
  %v5754 = vadd.f32 %v5603, %v5733
  %v5755 = vadd.f32 %v5604, %v5736
  %v5756 = vadd.f32 %v5605, %v5739
  %v5757 = vld [vmem:[%s5606 + $0x1] sm:$0xff]
  %v5758 = vld [vmem:[%s5606 + $0x11] sm:$0xff]
  %v5759 = vld [vmem:[%s5606 + $0x21] sm:$0xff]
  %v5760 = vld [vmem:[%s5606 + $0x31] sm:$0xff]
  %v5761 = vld [vmem:[%s5606 + $0x41] sm:$0xff]
  %v5762 = vld [vmem:[%s5606 + $0x51] sm:$0xff]
  %v5763 = vld [vmem:[%s5606 + $0x61] sm:$0xff]
  %v5764 = vld [vmem:[%s5606 + $0x71] sm:$0xff]
  %v5765 = vld [vmem:[%s5606 + $0xa1] sm:$0xff]
  %v5766 = vld [vmem:[%s5606 + $0xb1] sm:$0xff]
  %v5767 = vld [vmem:[%s5606 + $0xc1] sm:$0xff]
  %v5768 = vld [vmem:[%s5606 + $0xd1] sm:$0xff]
  %v5769 = vld [vmem:[%s5606 + $0xe1] sm:$0xff]
  %v5770 = vld [vmem:[%s5606 + $0xf1] sm:$0xff]
  %v5771 = vld [vmem:[%s5606 + $0x101] sm:$0xff]
  %v5772 = vld [vmem:[%s5606 + $0x111] sm:$0xff]
  %s5773 = scalar_lea.vmem %s5, 224
  %v5774 = vld [vmem:[%s5773] sm:$0xff]
  %v5775 = vld [vmem:[%s5773 + $0x8] sm:$0xff]
  %v5776 = vld [vmem:[%s5773 + $0x10] sm:$0xff]
  %v5777 = vld [vmem:[%s5773 + $0x18] sm:$0xff]
  %v5779 = vsel %vm38, %v5757, 0
  %v5782 = vsel %vm38, %v5758, 0
  %v5785 = vsel %vm38, %v5759, 0
  %v5788 = vsel %vm38, %v5760, 0
  %v5791 = vsel %vm38, %v5761, 0
  %v5794 = vsel %vm38, %v5762, 0
  %v5797 = vsel %vm38, %v5763, 0
  %v5800 = vsel %vm38, %v5764, 0
  %v5803 = vsel %vm38, %v5765, 0
  %v5806 = vsel %vm38, %v5766, 0
  %v5809 = vsel %vm38, %v5767, 0
  %v5812 = vsel %vm38, %v5768, 0
  %v5815 = vsel %vm38, %v5769, 0
  %v5818 = vsel %vm38, %v5770, 0
  %v5821 = vsel %vm38, %v5771, 0
  %v5824 = vsel %vm38, %v5772, 0
  %5826 = vmatpush.msra.mxu0 0.0
  %5827 = vmatpush.msra.mxu0 0.0
  %5828 = vmatpush.msra.mxu0 0.0
  %5829 = vmatpush.msra.mxu0 0.0
  %5830 = vmatpush.msra.mxu0 0.0
  %5831 = vmatpush.msra.mxu0 0.0
  %5832 = vmatpush.msra.mxu0 0.0
  %5833 = vmatpush.msra.mxu0 0.0
  %5834 = vmatpush.msra.mxu0 0.0
  %5835 = vmatpush.msra.mxu0 0.0
  %5836 = vmatpush.msra.mxu0 0.0
  %5837 = vmatpush.msra.mxu0 0.0
  %5838 = vmatpush.msra.mxu0 %v5777
  %5839 = vmatpush.msra.mxu0 %v5776
  %5840 = vmatpush.msra.mxu0 %v5775
  %5841 = vmatpush.msra.mxu0 %v5774
  %5842 = vmatmul.f32.gmra.mxu0 %v5779
  %v5843 = vpop.f32.mrf.mxu0
  %v5844 = vadd.f32 0.0, %v5843
  %5845 = vmatmul.f32.gmra.mxu0 %v5782
  %v5846 = vpop.f32.mrf.mxu0
  %v5847 = vadd.f32 0.0, %v5846
  %5848 = vmatmul.f32.gmra.mxu0 %v5785
  %v5849 = vpop.f32.mrf.mxu0
  %v5850 = vadd.f32 0.0, %v5849
  %5851 = vmatmul.f32.gmra.mxu0 %v5788
  %v5852 = vpop.f32.mrf.mxu0
  %v5853 = vadd.f32 0.0, %v5852
  %5854 = vmatmul.f32.gmra.mxu0 %v5791
  %v5855 = vpop.f32.mrf.mxu0
  %v5856 = vadd.f32 0.0, %v5855
  %5857 = vmatmul.f32.gmra.mxu0 %v5794
  %v5858 = vpop.f32.mrf.mxu0
  %v5859 = vadd.f32 0.0, %v5858
  %5860 = vmatmul.f32.gmra.mxu0 %v5797
  %v5861 = vpop.f32.mrf.mxu0
  %v5862 = vadd.f32 0.0, %v5861
  %5863 = vmatmul.f32.gmra.mxu0 %v5800
  %v5864 = vpop.f32.mrf.mxu0
  %v5865 = vadd.f32 0.0, %v5864
  %5866 = vmatmul.f32.gmra.mxu0 %v5803
  %v5867 = vpop.f32.mrf.mxu0
  %v5868 = vadd.f32 0.0, %v5867
  %5869 = vmatmul.f32.gmra.mxu0 %v5806
  %v5870 = vpop.f32.mrf.mxu0
  %v5871 = vadd.f32 0.0, %v5870
  %5872 = vmatmul.f32.gmra.mxu0 %v5809
  %v5873 = vpop.f32.mrf.mxu0
  %v5874 = vadd.f32 0.0, %v5873
  %5875 = vmatmul.f32.gmra.mxu0 %v5812
  %v5876 = vpop.f32.mrf.mxu0
  %v5877 = vadd.f32 0.0, %v5876
  %5878 = vmatmul.f32.gmra.mxu0 %v5815
  %v5879 = vpop.f32.mrf.mxu0
  %v5880 = vadd.f32 0.0, %v5879
  %5881 = vmatmul.f32.gmra.mxu0 %v5818
  %v5882 = vpop.f32.mrf.mxu0
  %v5883 = vadd.f32 0.0, %v5882
  %5884 = vmatmul.f32.gmra.mxu0 %v5821
  %v5885 = vpop.f32.mrf.mxu0
  %v5886 = vadd.f32 0.0, %v5885
  %5887 = vmatmul.f32.gmra.mxu0 %v5824
  %v5888 = vpop.f32.mrf.mxu0
  %v5889 = vadd.f32 0.0, %v5888
  %5890 = vdwg.mxu0
  %v5891 = vadd.f32 %v5741, %v5844
  %v5892 = vadd.f32 %v5742, %v5847
  %v5893 = vadd.f32 %v5743, %v5850
  %v5894 = vadd.f32 %v5744, %v5853
  %v5895 = vadd.f32 %v5745, %v5856
  %v5896 = vadd.f32 %v5746, %v5859
  %v5897 = vadd.f32 %v5747, %v5862
  %v5898 = vadd.f32 %v5748, %v5865
  %v5899 = vadd.f32 %v5749, %v5868
  %v5900 = vadd.f32 %v5750, %v5871
  %v5901 = vadd.f32 %v5751, %v5874
  %v5902 = vadd.f32 %v5752, %v5877
  %v5903 = vadd.f32 %v5753, %v5880
  %v5904 = vadd.f32 %v5754, %v5883
  %v5905 = vadd.f32 %v5755, %v5886
  %v5906 = vadd.f32 %v5756, %v5889
  %v5907 = vld [vmem:[%s5606 + $0x2] sm:$0xff]
  %v5908 = vld [vmem:[%s5606 + $0x12] sm:$0xff]
  %v5909 = vld [vmem:[%s5606 + $0x22] sm:$0xff]
  %v5910 = vld [vmem:[%s5606 + $0x32] sm:$0xff]
  %v5911 = vld [vmem:[%s5606 + $0x42] sm:$0xff]
  %v5912 = vld [vmem:[%s5606 + $0x52] sm:$0xff]
  %v5913 = vld [vmem:[%s5606 + $0x62] sm:$0xff]
  %v5914 = vld [vmem:[%s5606 + $0x72] sm:$0xff]
  %v5915 = vld [vmem:[%s5606 + $0xa2] sm:$0xff]
  %v5916 = vld [vmem:[%s5606 + $0xb2] sm:$0xff]
  %v5917 = vld [vmem:[%s5606 + $0xc2] sm:$0xff]
  %v5918 = vld [vmem:[%s5606 + $0xd2] sm:$0xff]
  %v5919 = vld [vmem:[%s5606 + $0xe2] sm:$0xff]
  %v5920 = vld [vmem:[%s5606 + $0xf2] sm:$0xff]
  %v5921 = vld [vmem:[%s5606 + $0x102] sm:$0xff]
  %v5922 = vld [vmem:[%s5606 + $0x112] sm:$0xff]
  %s5923 = scalar_lea.vmem %s5, 256
  %v5924 = vld [vmem:[%s5923] sm:$0xff]
  %v5925 = vld [vmem:[%s5923 + $0x8] sm:$0xff]
  %v5926 = vld [vmem:[%s5923 + $0x10] sm:$0xff]
  %v5927 = vld [vmem:[%s5923 + $0x18] sm:$0xff]
  %v5929 = vsel %vm38, %v5907, 0
  %v5932 = vsel %vm38, %v5908, 0
  %v5935 = vsel %vm38, %v5909, 0
  %v5938 = vsel %vm38, %v5910, 0
  %v5941 = vsel %vm38, %v5911, 0
  %v5944 = vsel %vm38, %v5912, 0
  %v5947 = vsel %vm38, %v5913, 0
  %v5950 = vsel %vm38, %v5914, 0
  %v5953 = vsel %vm38, %v5915, 0
  %v5956 = vsel %vm38, %v5916, 0
  %v5959 = vsel %vm38, %v5917, 0
  %v5962 = vsel %vm38, %v5918, 0
  %v5965 = vsel %vm38, %v5919, 0
  %v5968 = vsel %vm38, %v5920, 0
  %v5971 = vsel %vm38, %v5921, 0
  %v5974 = vsel %vm38, %v5922, 0
  %5976 = vmatpush.msra.mxu0 0.0
  %5977 = vmatpush.msra.mxu0 0.0
  %5978 = vmatpush.msra.mxu0 0.0
  %5979 = vmatpush.msra.mxu0 0.0
  %5980 = vmatpush.msra.mxu0 0.0
  %5981 = vmatpush.msra.mxu0 0.0
  %5982 = vmatpush.msra.mxu0 0.0
  %5983 = vmatpush.msra.mxu0 0.0
  %5984 = vmatpush.msra.mxu0 0.0
  %5985 = vmatpush.msra.mxu0 0.0
  %5986 = vmatpush.msra.mxu0 0.0
  %5987 = vmatpush.msra.mxu0 0.0
  %5988 = vmatpush.msra.mxu0 %v5927
  %5989 = vmatpush.msra.mxu0 %v5926
  %5990 = vmatpush.msra.mxu0 %v5925
  %5991 = vmatpush.msra.mxu0 %v5924
  %5992 = vmatmul.f32.gmra.mxu0 %v5929
  %v5993 = vpop.f32.mrf.mxu0
  %v5994 = vadd.f32 0.0, %v5993
  %5995 = vmatmul.f32.gmra.mxu0 %v5932
  %v5996 = vpop.f32.mrf.mxu0
  %v5997 = vadd.f32 0.0, %v5996
  %5998 = vmatmul.f32.gmra.mxu0 %v5935
  %v5999 = vpop.f32.mrf.mxu0
  %v6000 = vadd.f32 0.0, %v5999
  %6001 = vmatmul.f32.gmra.mxu0 %v5938
  %v6002 = vpop.f32.mrf.mxu0
  %v6003 = vadd.f32 0.0, %v6002
  %6004 = vmatmul.f32.gmra.mxu0 %v5941
  %v6005 = vpop.f32.mrf.mxu0
  %v6006 = vadd.f32 0.0, %v6005
  %6007 = vmatmul.f32.gmra.mxu0 %v5944
  %v6008 = vpop.f32.mrf.mxu0
  %v6009 = vadd.f32 0.0, %v6008
  %6010 = vmatmul.f32.gmra.mxu0 %v5947
  %v6011 = vpop.f32.mrf.mxu0
  %v6012 = vadd.f32 0.0, %v6011
  %6013 = vmatmul.f32.gmra.mxu0 %v5950
  %v6014 = vpop.f32.mrf.mxu0
  %v6015 = vadd.f32 0.0, %v6014
  %6016 = vmatmul.f32.gmra.mxu0 %v5953
  %v6017 = vpop.f32.mrf.mxu0
  %v6018 = vadd.f32 0.0, %v6017
  %6019 = vmatmul.f32.gmra.mxu0 %v5956
  %v6020 = vpop.f32.mrf.mxu0
  %v6021 = vadd.f32 0.0, %v6020
  %6022 = vmatmul.f32.gmra.mxu0 %v5959
  %v6023 = vpop.f32.mrf.mxu0
  %v6024 = vadd.f32 0.0, %v6023
  %6025 = vmatmul.f32.gmra.mxu0 %v5962
  %v6026 = vpop.f32.mrf.mxu0
  %v6027 = vadd.f32 0.0, %v6026
  %6028 = vmatmul.f32.gmra.mxu0 %v5965
  %v6029 = vpop.f32.mrf.mxu0
  %v6030 = vadd.f32 0.0, %v6029
  %6031 = vmatmul.f32.gmra.mxu0 %v5968
  %v6032 = vpop.f32.mrf.mxu0
  %v6033 = vadd.f32 0.0, %v6032
  %6034 = vmatmul.f32.gmra.mxu0 %v5971
  %v6035 = vpop.f32.mrf.mxu0
  %v6036 = vadd.f32 0.0, %v6035
  %6037 = vmatmul.f32.gmra.mxu0 %v5974
  %v6038 = vpop.f32.mrf.mxu0
  %v6039 = vadd.f32 0.0, %v6038
  %6040 = vdwg.mxu0
  %v6041 = vadd.f32 %v5891, %v5994
  %v6042 = vadd.f32 %v5892, %v5997
  %v6043 = vadd.f32 %v5893, %v6000
  %v6044 = vadd.f32 %v5894, %v6003
  %v6045 = vadd.f32 %v5895, %v6006
  %v6046 = vadd.f32 %v5896, %v6009
  %v6047 = vadd.f32 %v5897, %v6012
  %v6048 = vadd.f32 %v5898, %v6015
  %v6049 = vadd.f32 %v5899, %v6018
  %v6050 = vadd.f32 %v5900, %v6021
  %v6051 = vadd.f32 %v5901, %v6024
  %v6052 = vadd.f32 %v5902, %v6027
  %v6053 = vadd.f32 %v5903, %v6030
  %v6054 = vadd.f32 %v5904, %v6033
  %v6055 = vadd.f32 %v5905, %v6036
  %v6056 = vadd.f32 %v5906, %v6039
  %v6057 = vadd.f32 %v4722, %v6041
  %v6058 = vadd.f32 %v4723, %v6042
  %v6059 = vadd.f32 %v4724, %v6043
  %v6060 = vadd.f32 %v4725, %v6044
  %v6061 = vadd.f32 %v4726, %v6045
  %v6062 = vadd.f32 %v4727, %v6046
  %v6063 = vadd.f32 %v4728, %v6047
  %v6064 = vadd.f32 %v4729, %v6048
  %v6065 = vadd.f32 %v4730, %v6049
  %v6066 = vadd.f32 %v4731, %v6050
  %v6067 = vadd.f32 %v4732, %v6051
  %v6068 = vadd.f32 %v4733, %v6052
  %v6069 = vadd.f32 %v4734, %v6053
  %v6070 = vadd.f32 %v4735, %v6054
  %v6071 = vadd.f32 %v4736, %v6055
  %v6072 = vadd.f32 %v4737, %v6056
  %v6073 = vld [vmem:[%s9] sm:$0xff]
  %v6074 = vld [vmem:[%s9 + $0x8] sm:$0xff]
  %v6075 = vld [vmem:[%s9 + $0x10] sm:$0xff]
  %v6076 = vld [vmem:[%s9 + $0x18] sm:$0xff]
  %v6077 = vld [vmem:[%s10] sm:$0xf]
  %v6078 = vsel %vm38, %v6057, 0.0
  %v6079 = vsel %vm38, %v6058, 0.0
  %v6080 = vadd.f32 %v6078, %v6079
  %v6081 = vsel %vm38, %v6059, 0.0
  %v6082 = vadd.f32 %v6080, %v6081
  %v6083 = vsel %vm38, %v6060, 0.0
  %v6084 = vadd.f32 %v6082, %v6083
  %v6085 = vsel %vm38, %v6061, 0.0
  %v6086 = vadd.f32 %v6084, %v6085
  %v6087 = vsel %vm38, %v6062, 0.0
  %v6088 = vadd.f32 %v6086, %v6087
  %v6089 = vsel %vm38, %v6063, 0.0
  %v6090 = vadd.f32 %v6088, %v6089
  %v6091 = vsel %vm38, %v6064, 0.0
  %v6092 = vadd.f32 %v6090, %v6091
  %v6093 = vsel %vm38, %v6065, 0.0
  %v6094 = vadd.f32 %v6092, %v6093
  %v6095 = vsel %vm38, %v6066, 0.0
  %v6096 = vadd.f32 %v6094, %v6095
  %v6097 = vsel %vm38, %v6067, 0.0
  %v6098 = vadd.f32 %v6096, %v6097
  %v6099 = vsel %vm38, %v6068, 0.0
  %v6100 = vadd.f32 %v6098, %v6099
  %v6101 = vsel %vm38, %v6069, 0.0
  %v6102 = vadd.f32 %v6100, %v6101
  %v6103 = vsel %vm38, %v6070, 0.0
  %v6104 = vadd.f32 %v6102, %v6103
  %v6105 = vsel %vm38, %v6071, 0.0
  %v6106 = vadd.f32 %v6104, %v6105
  %v6107 = vsel %vm38, %v6072, 0.0
  %v6108 = vadd.f32 %v6106, %v6107
  %v6109 = vrot.slane %v6108, 4
  %v6110 = vadd.f32 %v6108, %v6109
  %v6111 = vrot.slane %v6110, 2
  %v6112 = vadd.f32 %v6110, %v6111
  %v6113 = vrot.slane %v6112, 1
  %v6114 = vadd.f32 %v6112, %v6113
  %v6116 = vsel %vm38, %v6114, 0
  %6118 = vmatpush.msra.mxu0 0.0
  %6119 = vmatpush.msra.mxu0 0.0
  %6120 = vmatpush.msra.mxu0 0.0
  %6121 = vmatpush.msra.mxu0 0.0
  %6122 = vmatpush.msra.mxu0 0.0
  %6123 = vmatpush.msra.mxu0 0.0
  %6124 = vmatpush.msra.mxu0 0.0
  %6125 = vmatpush.msra.mxu0 0.0
  %6126 = vmatpush.msra.mxu0 0.0
  %6127 = vmatpush.msra.mxu0 0.0
  %6128 = vmatpush.msra.mxu0 0.0
  %6129 = vmatpush.msra.mxu0 0.0
  %6130 = vmatpush.msra.mxu0 %v6076
  %6131 = vmatpush.msra.mxu0 %v6075
  %6132 = vmatpush.msra.mxu0 %v6074
  %6133 = vmatpush.msra.mxu0 %v6073
  %6134 = vmatmul.f32.gmra.mxu0 %v6116
  %v6135 = vpop.f32.mrf.mxu0
  %v6136 = vadd.f32 0.0, %v6135
  %6137 = vdwg.mxu0
  %v6138 = vmul.f32 %v6136, %v1470
  %v6140 = vsel %vm1472, %v6138, 0
  %v6143 = vsel %vm1476, %v6077, 0
  %6145 = vmatpush.msra.mxu0 0.0
  %6146 = vmatpush.msra.mxu0 0.0
  %6147 = vmatpush.msra.mxu0 0.0
  %6148 = vmatpush.msra.mxu0 0.0
  %6149 = vmatpush.msra.mxu0 0.0
  %6150 = vmatpush.msra.mxu0 0.0
  %6151 = vmatpush.msra.mxu0 0.0
  %6152 = vmatpush.msra.mxu0 0.0
  %6153 = vmatpush.msra.mxu0 0.0
  %6154 = vmatpush.msra.mxu0 0.0
  %6155 = vmatpush.msra.mxu0 0.0
  %6156 = vmatpush.msra.mxu0 0.0
  %6157 = vmatpush.msra.mxu0 0.0
  %6158 = vmatpush.msra.mxu0 0.0
  %6159 = vmatpush.msra.mxu0 0.0
  %6160 = vmatpush.msra.mxu0 %v6143
  %6161 = vmatmul.f32.gmra.mxu0 %v6140
  %v6162 = vpop.f32.mrf.mxu0
  %v6163 = vadd.f32 0.0, %v6162
  %6164 = vdwg.mxu0
  %v6165 = vperm.slane %v6163, 0
  %v6166 = vsub.f32 %v6057, %v6165
  %v6167 = vsub.f32 %v6058, %v6165
  %v6168 = vsub.f32 %v6059, %v6165
  %v6169 = vsub.f32 %v6060, %v6165
  %v6170 = vsub.f32 %v6061, %v6165
  %v6171 = vsub.f32 %v6062, %v6165
  %v6172 = vsub.f32 %v6063, %v6165
  %v6173 = vsub.f32 %v6064, %v6165
  %v6174 = vsub.f32 %v6065, %v6165
  %v6175 = vsub.f32 %v6066, %v6165
  %v6176 = vsub.f32 %v6067, %v6165
  %v6177 = vsub.f32 %v6068, %v6165
  %v6178 = vsub.f32 %v6069, %v6165
  %v6179 = vsub.f32 %v6070, %v6165
  %v6180 = vsub.f32 %v6071, %v6165
  %v6181 = vsub.f32 %v6072, %v6165
  %v6182 = vmul.f32 %v6166, %v6166
  %v6183 = vmul.f32 %v6167, %v6167
  %v6184 = vmul.f32 %v6168, %v6168
  %v6185 = vmul.f32 %v6169, %v6169
  %v6186 = vmul.f32 %v6170, %v6170
  %v6187 = vmul.f32 %v6171, %v6171
  %v6188 = vmul.f32 %v6172, %v6172
  %v6189 = vmul.f32 %v6173, %v6173
  %v6190 = vmul.f32 %v6174, %v6174
  %v6191 = vmul.f32 %v6175, %v6175
  %v6192 = vmul.f32 %v6176, %v6176
  %v6193 = vmul.f32 %v6177, %v6177
  %v6194 = vmul.f32 %v6178, %v6178
  %v6195 = vmul.f32 %v6179, %v6179
  %v6196 = vmul.f32 %v6180, %v6180
  %v6197 = vmul.f32 %v6181, %v6181
  %v6198 = vsel %vm38, %v6182, 0.0
  %v6199 = vsel %vm38, %v6183, 0.0
  %v6200 = vadd.f32 %v6198, %v6199
  %v6201 = vsel %vm38, %v6184, 0.0
  %v6202 = vadd.f32 %v6200, %v6201
  %v6203 = vsel %vm38, %v6185, 0.0
  %v6204 = vadd.f32 %v6202, %v6203
  %v6205 = vsel %vm38, %v6186, 0.0
  %v6206 = vadd.f32 %v6204, %v6205
  %v6207 = vsel %vm38, %v6187, 0.0
  %v6208 = vadd.f32 %v6206, %v6207
  %v6209 = vsel %vm38, %v6188, 0.0
  %v6210 = vadd.f32 %v6208, %v6209
  %v6211 = vsel %vm38, %v6189, 0.0
  %v6212 = vadd.f32 %v6210, %v6211
  %v6213 = vsel %vm38, %v6190, 0.0
  %v6214 = vadd.f32 %v6212, %v6213
  %v6215 = vsel %vm38, %v6191, 0.0
  %v6216 = vadd.f32 %v6214, %v6215
  %v6217 = vsel %vm38, %v6192, 0.0
  %v6218 = vadd.f32 %v6216, %v6217
  %v6219 = vsel %vm38, %v6193, 0.0
  %v6220 = vadd.f32 %v6218, %v6219
  %v6221 = vsel %vm38, %v6194, 0.0
  %v6222 = vadd.f32 %v6220, %v6221
  %v6223 = vsel %vm38, %v6195, 0.0
  %v6224 = vadd.f32 %v6222, %v6223
  %v6225 = vsel %vm38, %v6196, 0.0
  %v6226 = vadd.f32 %v6224, %v6225
  %v6227 = vsel %vm38, %v6197, 0.0
  %v6228 = vadd.f32 %v6226, %v6227
  %v6229 = vrot.slane %v6228, 4
  %v6230 = vadd.f32 %v6228, %v6229
  %v6231 = vrot.slane %v6230, 2
  %v6232 = vadd.f32 %v6230, %v6231
  %v6233 = vrot.slane %v6232, 1
  %v6234 = vadd.f32 %v6232, %v6233
  %v6236 = vsel %vm38, %v6234, 0
  %6238 = vmatpush.msra.mxu0 0.0
  %6239 = vmatpush.msra.mxu0 0.0
  %6240 = vmatpush.msra.mxu0 0.0
  %6241 = vmatpush.msra.mxu0 0.0
  %6242 = vmatpush.msra.mxu0 0.0
  %6243 = vmatpush.msra.mxu0 0.0
  %6244 = vmatpush.msra.mxu0 0.0
  %6245 = vmatpush.msra.mxu0 0.0
  %6246 = vmatpush.msra.mxu0 0.0
  %6247 = vmatpush.msra.mxu0 0.0
  %6248 = vmatpush.msra.mxu0 0.0
  %6249 = vmatpush.msra.mxu0 0.0
  %6250 = vmatpush.msra.mxu0 %v6076
  %6251 = vmatpush.msra.mxu0 %v6075
  %6252 = vmatpush.msra.mxu0 %v6074
  %6253 = vmatpush.msra.mxu0 %v6073
  %6254 = vmatmul.f32.gmra.mxu0 %v6236
  %v6255 = vpop.f32.mrf.mxu0
  %v6256 = vadd.f32 0.0, %v6255
  %6257 = vdwg.mxu0
  %v6258 = vmul.f32 %v6256, %v1470
  %s6259 = scalar_lea.vmem %s7, 2
  %v6260 = vld [vmem:[%s6259] sm:$0x1]
  %v6261 = vadd.f32 %v6258, 1e-05
  %v6262 = vrsqrt.pop %v6261
  %v6263 = vmul.f32 %v6262, %v6261
  %v6264 = vmul.f32 %v6263, %v6262
  %v6265 = vmul.f32 0.5, %v6264
  %v6266 = vsub.f32 1.5, %v6265
  %v6267 = vmul.f32 %v6262, %v6266
  %vm6268 = vweird.f32 %v6261
  %vm6269 = vweird.f32 %v6262
  %vm6270 = vmor %vm6268, %vm6269
  %v6271 = vsel %vm6270, %v6262, %v6267
  %v6272 = vmul.f32 %v6260, %v6271
  %s6273 = scalar_lea.vmem %s8, 2
  %v6274 = vld [vmem:[%s6273] sm:$0x1]
  %v6275 = vmul.f32 %v6138, %v6272
  %v6276 = vsub.f32 %v6274, %v6275
  %v6278 = vsel %vm1472, %v6272, 0
  %6280 = vmatpush.msra.mxu0 0.0
  %6281 = vmatpush.msra.mxu0 0.0
  %6282 = vmatpush.msra.mxu0 0.0
  %6283 = vmatpush.msra.mxu0 0.0
  %6284 = vmatpush.msra.mxu0 0.0
  %6285 = vmatpush.msra.mxu0 0.0
  %6286 = vmatpush.msra.mxu0 0.0
  %6287 = vmatpush.msra.mxu0 0.0
  %6288 = vmatpush.msra.mxu0 0.0
  %6289 = vmatpush.msra.mxu0 0.0
  %6290 = vmatpush.msra.mxu0 0.0
  %6291 = vmatpush.msra.mxu0 0.0
  %6292 = vmatpush.msra.mxu0 0.0
  %6293 = vmatpush.msra.mxu0 0.0
  %6294 = vmatpush.msra.mxu0 0.0
  %6295 = vmatpush.msra.mxu0 %v6143
  %6296 = vmatmul.f32.gmra.mxu0 %v6278
  %v6297 = vpop.f32.mrf.mxu0
  %v6298 = vadd.f32 0.0, %v6297
  %6299 = vdwg.mxu0
  %v6300 = vperm.slane %v6298, 0
  %v6301 = vmul.f32 %v6057, %v6300
  %v6302 = vmul.f32 %v6058, %v6300
  %v6303 = vmul.f32 %v6059, %v6300
  %v6304 = vmul.f32 %v6060, %v6300
  %v6305 = vmul.f32 %v6061, %v6300
  %v6306 = vmul.f32 %v6062, %v6300
  %v6307 = vmul.f32 %v6063, %v6300
  %v6308 = vmul.f32 %v6064, %v6300
  %v6309 = vmul.f32 %v6065, %v6300
  %v6310 = vmul.f32 %v6066, %v6300
  %v6311 = vmul.f32 %v6067, %v6300
  %v6312 = vmul.f32 %v6068, %v6300
  %v6313 = vmul.f32 %v6069, %v6300
  %v6314 = vmul.f32 %v6070, %v6300
  %v6315 = vmul.f32 %v6071, %v6300
  %v6316 = vmul.f32 %v6072, %v6300
  %v6318 = vsel %vm1472, %v6276, 0
  %6320 = vmatpush.msra.mxu0 0.0
  %6321 = vmatpush.msra.mxu0 0.0
  %6322 = vmatpush.msra.mxu0 0.0
  %6323 = vmatpush.msra.mxu0 0.0
  %6324 = vmatpush.msra.mxu0 0.0
  %6325 = vmatpush.msra.mxu0 0.0
  %6326 = vmatpush.msra.mxu0 0.0
  %6327 = vmatpush.msra.mxu0 0.0
  %6328 = vmatpush.msra.mxu0 0.0
  %6329 = vmatpush.msra.mxu0 0.0
  %6330 = vmatpush.msra.mxu0 0.0
  %6331 = vmatpush.msra.mxu0 0.0
  %6332 = vmatpush.msra.mxu0 0.0
  %6333 = vmatpush.msra.mxu0 0.0
  %6334 = vmatpush.msra.mxu0 0.0
  %6335 = vmatpush.msra.mxu0 %v6143
  %6336 = vmatmul.f32.gmra.mxu0 %v6318
  %v6337 = vpop.f32.mrf.mxu0
  %v6338 = vadd.f32 0.0, %v6337
  %6339 = vdwg.mxu0
  %v6340 = vperm.slane %v6338, 0
  %v6341 = vadd.f32 %v6301, %v6340
  %v6342 = vadd.f32 %v6302, %v6340
  %v6343 = vadd.f32 %v6303, %v6340
  %v6344 = vadd.f32 %v6304, %v6340
  %v6345 = vadd.f32 %v6305, %v6340
  %v6346 = vadd.f32 %v6306, %v6340
  %v6347 = vadd.f32 %v6307, %v6340
  %v6348 = vadd.f32 %v6308, %v6340
  %v6349 = vadd.f32 %v6309, %v6340
  %v6350 = vadd.f32 %v6310, %v6340
  %v6351 = vadd.f32 %v6311, %v6340
  %v6352 = vadd.f32 %v6312, %v6340
  %v6353 = vadd.f32 %v6313, %v6340
  %v6354 = vadd.f32 %v6314, %v6340
  %v6355 = vadd.f32 %v6315, %v6340
  %v6356 = vadd.f32 %v6316, %v6340
  %vm6357 = vcmp.ge.f32.partialorder %v6341, 0.0
  %vm6358 = vcmp.ge.f32.partialorder %v6342, 0.0
  %vm6359 = vcmp.ge.f32.partialorder %v6343, 0.0
  %vm6360 = vcmp.ge.f32.partialorder %v6344, 0.0
  %vm6361 = vcmp.ge.f32.partialorder %v6345, 0.0
  %vm6362 = vcmp.ge.f32.partialorder %v6346, 0.0
  %vm6363 = vcmp.ge.f32.partialorder %v6347, 0.0
  %vm6364 = vcmp.ge.f32.partialorder %v6348, 0.0
  %vm6365 = vcmp.ge.f32.partialorder %v6349, 0.0
  %vm6366 = vcmp.ge.f32.partialorder %v6350, 0.0
  %vm6367 = vcmp.ge.f32.partialorder %v6351, 0.0
  %vm6368 = vcmp.ge.f32.partialorder %v6352, 0.0
  %vm6369 = vcmp.ge.f32.partialorder %v6353, 0.0
  %vm6370 = vcmp.ge.f32.partialorder %v6354, 0.0
  %vm6371 = vcmp.ge.f32.partialorder %v6355, 0.0
  %vm6372 = vcmp.ge.f32.partialorder %v6356, 0.0
  %v6373 = vmul.f32 %v6341, 0.2
  %v6374 = vmul.f32 %v6342, 0.2
  %v6375 = vmul.f32 %v6343, 0.2
  %v6376 = vmul.f32 %v6344, 0.2
  %v6377 = vmul.f32 %v6345, 0.2
  %v6378 = vmul.f32 %v6346, 0.2
  %v6379 = vmul.f32 %v6347, 0.2
  %v6380 = vmul.f32 %v6348, 0.2
  %v6381 = vmul.f32 %v6349, 0.2
  %v6382 = vmul.f32 %v6350, 0.2
  %v6383 = vmul.f32 %v6351, 0.2
  %v6384 = vmul.f32 %v6352, 0.2
  %v6385 = vmul.f32 %v6353, 0.2
  %v6386 = vmul.f32 %v6354, 0.2
  %v6387 = vmul.f32 %v6355, 0.2
  %v6388 = vmul.f32 %v6356, 0.2
  %v6389 = vsel %vm6357, %v6341, %v6373
  %v6390 = vsel %vm6358, %v6342, %v6374
  %v6391 = vsel %vm6359, %v6343, %v6375
  %v6392 = vsel %vm6360, %v6344, %v6376
  %v6393 = vsel %vm6361, %v6345, %v6377
  %v6394 = vsel %vm6362, %v6346, %v6378
  %v6395 = vsel %vm6363, %v6347, %v6379
  %v6396 = vsel %vm6364, %v6348, %v6380
  %v6397 = vsel %vm6365, %v6349, %v6381
  %v6398 = vsel %vm6366, %v6350, %v6382
  %v6399 = vsel %vm6367, %v6351, %v6383
  %v6400 = vsel %vm6368, %v6352, %v6384
  %v6401 = vsel %vm6369, %v6353, %v6385
  %v6402 = vsel %vm6370, %v6354, %v6386
  %v6403 = vsel %vm6371, %v6355, %v6387
  %v6404 = vsel %vm6372, %v6356, %v6388
  %6405 = vst.msk [vmem:[%s1738 + $0x1] sm:$0xff] %vm38, %v6389
  %6406 = vst.msk [vmem:[%s1738 + $0x11] sm:$0xff] %vm38, %v6390
  %6407 = vst.msk [vmem:[%s1738 + $0x21] sm:$0xff] %vm38, %v6391
  %6408 = vst.msk [vmem:[%s1738 + $0x31] sm:$0xff] %vm38, %v6392
  %6409 = vst.msk [vmem:[%s1738 + $0x41] sm:$0xff] %vm38, %v6393
  %6410 = vst.msk [vmem:[%s1738 + $0x51] sm:$0xff] %vm38, %v6394
  %6411 = vst.msk [vmem:[%s1738 + $0x61] sm:$0xff] %vm38, %v6395
  %6412 = vst.msk [vmem:[%s1738 + $0x71] sm:$0xff] %vm38, %v6396
  %6413 = vst.msk [vmem:[%s1738 + $0xa1] sm:$0xff] %vm38, %v6397
  %6414 = vst.msk [vmem:[%s1738 + $0xb1] sm:$0xff] %vm38, %v6398
  %6415 = vst.msk [vmem:[%s1738 + $0xc1] sm:$0xff] %vm38, %v6399
  %6416 = vst.msk [vmem:[%s1738 + $0xd1] sm:$0xff] %vm38, %v6400
  %6417 = vst.msk [vmem:[%s1738 + $0xe1] sm:$0xff] %vm38, %v6401
  %6418 = vst.msk [vmem:[%s1738 + $0xf1] sm:$0xff] %vm38, %v6402
  %6419 = vst.msk [vmem:[%s1738 + $0x101] sm:$0xff] %vm38, %v6403
  %6420 = vst.msk [vmem:[%s1738 + $0x111] sm:$0xff] %vm38, %v6404
  %v6421 = vld [vmem:[#allocation2] sm:$0xff]
  %v6422 = vld [vmem:[#allocation2 + $0x10] sm:$0xff]
  %v6423 = vld [vmem:[#allocation2 + $0x20] sm:$0xff]
  %v6424 = vld [vmem:[#allocation2 + $0x30] sm:$0xff]
  %v6425 = vld [vmem:[#allocation2 + $0x40] sm:$0xff]
  %v6426 = vld [vmem:[#allocation2 + $0x50] sm:$0xff]
  %v6427 = vld [vmem:[#allocation2 + $0x60] sm:$0xff]
  %v6428 = vld [vmem:[#allocation2 + $0x70] sm:$0xff]
  %v6429 = vld [vmem:[#allocation2 + $0xa0] sm:$0xff]
  %v6430 = vld [vmem:[#allocation2 + $0xb0] sm:$0xff]
  %v6431 = vld [vmem:[#allocation2 + $0xc0] sm:$0xff]
  %v6432 = vld [vmem:[#allocation2 + $0xd0] sm:$0xff]
  %v6433 = vld [vmem:[#allocation2 + $0xe0] sm:$0xff]
  %v6434 = vld [vmem:[#allocation2 + $0xf0] sm:$0xff]
  %v6435 = vld [vmem:[#allocation2 + $0x100] sm:$0xff]
  %v6436 = vld [vmem:[#allocation2 + $0x110] sm:$0xff]
  %v6437 = vld [vmem:[%s6] sm:$0xff]
  %v6438 = vld [vmem:[%s6 + $0x8] sm:$0xff]
  %v6439 = vld [vmem:[%s6 + $0x10] sm:$0xff]
  %v6440 = vld [vmem:[%s6 + $0x18] sm:$0xff]
  %v6441 = vld [vmem:[#allocation2 + $0x1] sm:$0xff]
  %v6442 = vld [vmem:[#allocation2 + $0x11] sm:$0xff]
  %v6443 = vld [vmem:[#allocation2 + $0x21] sm:$0xff]
  %v6444 = vld [vmem:[#allocation2 + $0x31] sm:$0xff]
  %v6445 = vld [vmem:[#allocation2 + $0x41] sm:$0xff]
  %v6446 = vld [vmem:[#allocation2 + $0x51] sm:$0xff]
  %v6447 = vld [vmem:[#allocation2 + $0x61] sm:$0xff]
  %v6448 = vld [vmem:[#allocation2 + $0x71] sm:$0xff]
  %v6449 = vld [vmem:[#allocation2 + $0xa1] sm:$0xff]
  %v6450 = vld [vmem:[#allocation2 + $0xb1] sm:$0xff]
  %v6451 = vld [vmem:[#allocation2 + $0xc1] sm:$0xff]
  %v6452 = vld [vmem:[#allocation2 + $0xd1] sm:$0xff]
  %v6453 = vld [vmem:[#allocation2 + $0xe1] sm:$0xff]
  %v6454 = vld [vmem:[#allocation2 + $0xf1] sm:$0xff]
  %v6455 = vld [vmem:[#allocation2 + $0x101] sm:$0xff]
  %v6456 = vld [vmem:[#allocation2 + $0x111] sm:$0xff]
  %s6457 = scalar_lea.vmem %s6, 32
  %v6458 = vld [vmem:[%s6457] sm:$0xff]
  %v6459 = vld [vmem:[%s6457 + $0x8] sm:$0xff]
  %v6460 = vld [vmem:[%s6457 + $0x10] sm:$0xff]
  %v6461 = vld [vmem:[%s6457 + $0x18] sm:$0xff]
  %v6463 = vsel %vm38, %v6441, 0
  %v6466 = vsel %vm38, %v6442, 0
  %v6469 = vsel %vm38, %v6443, 0
  %v6472 = vsel %vm38, %v6444, 0
  %v6475 = vsel %vm38, %v6445, 0
  %v6478 = vsel %vm38, %v6446, 0
  %v6481 = vsel %vm38, %v6447, 0
  %v6484 = vsel %vm38, %v6448, 0
  %v6487 = vsel %vm38, %v6449, 0
  %v6490 = vsel %vm38, %v6450, 0
  %v6493 = vsel %vm38, %v6451, 0
  %v6496 = vsel %vm38, %v6452, 0
  %v6499 = vsel %vm38, %v6453, 0
  %v6502 = vsel %vm38, %v6454, 0
  %v6505 = vsel %vm38, %v6455, 0
  %v6508 = vsel %vm38, %v6456, 0
  %6510 = vmatpush.msra.mxu0 0.0
  %6511 = vmatpush.msra.mxu0 0.0
  %6512 = vmatpush.msra.mxu0 0.0
  %6513 = vmatpush.msra.mxu0 0.0
  %6514 = vmatpush.msra.mxu0 0.0
  %6515 = vmatpush.msra.mxu0 0.0
  %6516 = vmatpush.msra.mxu0 0.0
  %6517 = vmatpush.msra.mxu0 0.0
  %6518 = vmatpush.msra.mxu0 0.0
  %6519 = vmatpush.msra.mxu0 0.0
  %6520 = vmatpush.msra.mxu0 0.0
  %6521 = vmatpush.msra.mxu0 0.0
  %6522 = vmatpush.msra.mxu0 %v6461
  %6523 = vmatpush.msra.mxu0 %v6460
  %6524 = vmatpush.msra.mxu0 %v6459
  %6525 = vmatpush.msra.mxu0 %v6458
  %6526 = vmatmul.f32.gmra.mxu0 %v6463
  %v6527 = vpop.f32.mrf.mxu0
  %v6528 = vadd.f32 0.0, %v6527
  %6529 = vmatmul.f32.gmra.mxu0 %v6466
  %v6530 = vpop.f32.mrf.mxu0
  %v6531 = vadd.f32 0.0, %v6530
  %6532 = vmatmul.f32.gmra.mxu0 %v6469
  %v6533 = vpop.f32.mrf.mxu0
  %v6534 = vadd.f32 0.0, %v6533
  %6535 = vmatmul.f32.gmra.mxu0 %v6472
  %v6536 = vpop.f32.mrf.mxu0
  %v6537 = vadd.f32 0.0, %v6536
  %6538 = vmatmul.f32.gmra.mxu0 %v6475
  %v6539 = vpop.f32.mrf.mxu0
  %v6540 = vadd.f32 0.0, %v6539
  %6541 = vmatmul.f32.gmra.mxu0 %v6478
  %v6542 = vpop.f32.mrf.mxu0
  %v6543 = vadd.f32 0.0, %v6542
  %6544 = vmatmul.f32.gmra.mxu0 %v6481
  %v6545 = vpop.f32.mrf.mxu0
  %v6546 = vadd.f32 0.0, %v6545
  %6547 = vmatmul.f32.gmra.mxu0 %v6484
  %v6548 = vpop.f32.mrf.mxu0
  %v6549 = vadd.f32 0.0, %v6548
  %6550 = vmatmul.f32.gmra.mxu0 %v6487
  %v6551 = vpop.f32.mrf.mxu0
  %v6552 = vadd.f32 0.0, %v6551
  %6553 = vmatmul.f32.gmra.mxu0 %v6490
  %v6554 = vpop.f32.mrf.mxu0
  %v6555 = vadd.f32 0.0, %v6554
  %6556 = vmatmul.f32.gmra.mxu0 %v6493
  %v6557 = vpop.f32.mrf.mxu0
  %v6558 = vadd.f32 0.0, %v6557
  %6559 = vmatmul.f32.gmra.mxu0 %v6496
  %v6560 = vpop.f32.mrf.mxu0
  %v6561 = vadd.f32 0.0, %v6560
  %6562 = vmatmul.f32.gmra.mxu0 %v6499
  %v6563 = vpop.f32.mrf.mxu0
  %v6564 = vadd.f32 0.0, %v6563
  %6565 = vmatmul.f32.gmra.mxu0 %v6502
  %v6566 = vpop.f32.mrf.mxu0
  %v6567 = vadd.f32 0.0, %v6566
  %6568 = vmatmul.f32.gmra.mxu0 %v6505
  %v6569 = vpop.f32.mrf.mxu0
  %v6570 = vadd.f32 0.0, %v6569
  %6571 = vmatmul.f32.gmra.mxu0 %v6508
  %v6572 = vpop.f32.mrf.mxu0
  %v6573 = vadd.f32 0.0, %v6572
  %6574 = vdwg.mxu0
  %v6576 = vsel %vm38, %v6421, 0
  %v6579 = vsel %vm38, %v6422, 0
  %v6582 = vsel %vm38, %v6423, 0
  %v6585 = vsel %vm38, %v6424, 0
  %v6588 = vsel %vm38, %v6425, 0
  %v6591 = vsel %vm38, %v6426, 0
  %v6594 = vsel %vm38, %v6427, 0
  %v6597 = vsel %vm38, %v6428, 0
  %v6600 = vsel %vm38, %v6429, 0
  %v6603 = vsel %vm38, %v6430, 0
  %v6606 = vsel %vm38, %v6431, 0
  %v6609 = vsel %vm38, %v6432, 0
  %v6612 = vsel %vm38, %v6433, 0
  %v6615 = vsel %vm38, %v6434, 0
  %v6618 = vsel %vm38, %v6435, 0
  %v6621 = vsel %vm38, %v6436, 0
  %6623 = vmatpush.msra.mxu0 0.0
  %6624 = vmatpush.msra.mxu0 0.0
  %6625 = vmatpush.msra.mxu0 0.0
  %6626 = vmatpush.msra.mxu0 0.0
  %6627 = vmatpush.msra.mxu0 0.0
  %6628 = vmatpush.msra.mxu0 0.0
  %6629 = vmatpush.msra.mxu0 0.0
  %6630 = vmatpush.msra.mxu0 0.0
  %6631 = vmatpush.msra.mxu0 0.0
  %6632 = vmatpush.msra.mxu0 0.0
  %6633 = vmatpush.msra.mxu0 0.0
  %6634 = vmatpush.msra.mxu0 0.0
  %6635 = vmatpush.msra.mxu0 %v6440
  %6636 = vmatpush.msra.mxu0 %v6439
  %6637 = vmatpush.msra.mxu0 %v6438
  %6638 = vmatpush.msra.mxu0 %v6437
  %6639 = vmatmul.f32.gmra.mxu0 %v6576
  %v6640 = vpop.f32.mrf.mxu0
  %v6641 = vadd.f32 %v6528, %v6640
  %6642 = vmatmul.f32.gmra.mxu0 %v6579
  %v6643 = vpop.f32.mrf.mxu0
  %v6644 = vadd.f32 %v6531, %v6643
  %6645 = vmatmul.f32.gmra.mxu0 %v6582
  %v6646 = vpop.f32.mrf.mxu0
  %v6647 = vadd.f32 %v6534, %v6646
  %6648 = vmatmul.f32.gmra.mxu0 %v6585
  %v6649 = vpop.f32.mrf.mxu0
  %v6650 = vadd.f32 %v6537, %v6649
  %6651 = vmatmul.f32.gmra.mxu0 %v6588
  %v6652 = vpop.f32.mrf.mxu0
  %v6653 = vadd.f32 %v6540, %v6652
  %6654 = vmatmul.f32.gmra.mxu0 %v6591
  %v6655 = vpop.f32.mrf.mxu0
  %v6656 = vadd.f32 %v6543, %v6655
  %6657 = vmatmul.f32.gmra.mxu0 %v6594
  %v6658 = vpop.f32.mrf.mxu0
  %v6659 = vadd.f32 %v6546, %v6658
  %6660 = vmatmul.f32.gmra.mxu0 %v6597
  %v6661 = vpop.f32.mrf.mxu0
  %v6662 = vadd.f32 %v6549, %v6661
  %6663 = vmatmul.f32.gmra.mxu0 %v6600
  %v6664 = vpop.f32.mrf.mxu0
  %v6665 = vadd.f32 %v6552, %v6664
  %6666 = vmatmul.f32.gmra.mxu0 %v6603
  %v6667 = vpop.f32.mrf.mxu0
  %v6668 = vadd.f32 %v6555, %v6667
  %6669 = vmatmul.f32.gmra.mxu0 %v6606
  %v6670 = vpop.f32.mrf.mxu0
  %v6671 = vadd.f32 %v6558, %v6670
  %6672 = vmatmul.f32.gmra.mxu0 %v6609
  %v6673 = vpop.f32.mrf.mxu0
  %v6674 = vadd.f32 %v6561, %v6673
  %6675 = vmatmul.f32.gmra.mxu0 %v6612
  %v6676 = vpop.f32.mrf.mxu0
  %v6677 = vadd.f32 %v6564, %v6676
  %6678 = vmatmul.f32.gmra.mxu0 %v6615
  %v6679 = vpop.f32.mrf.mxu0
  %v6680 = vadd.f32 %v6567, %v6679
  %6681 = vmatmul.f32.gmra.mxu0 %v6618
  %v6682 = vpop.f32.mrf.mxu0
  %v6683 = vadd.f32 %v6570, %v6682
  %6684 = vmatmul.f32.gmra.mxu0 %v6621
  %v6685 = vpop.f32.mrf.mxu0
  %v6686 = vadd.f32 %v6573, %v6685
  %6687 = vdwg.mxu0
  %v6688 = vld [vmem:[#allocation2 + $0x2] sm:$0xff]
  %v6689 = vld [vmem:[#allocation2 + $0x12] sm:$0xff]
  %v6690 = vld [vmem:[#allocation2 + $0x22] sm:$0xff]
  %v6691 = vld [vmem:[#allocation2 + $0x32] sm:$0xff]
  %v6692 = vld [vmem:[#allocation2 + $0x42] sm:$0xff]
  %v6693 = vld [vmem:[#allocation2 + $0x52] sm:$0xff]
  %v6694 = vld [vmem:[#allocation2 + $0x62] sm:$0xff]
  %v6695 = vld [vmem:[#allocation2 + $0x72] sm:$0xff]
  %v6696 = vld [vmem:[#allocation2 + $0xa2] sm:$0xff]
  %v6697 = vld [vmem:[#allocation2 + $0xb2] sm:$0xff]
  %v6698 = vld [vmem:[#allocation2 + $0xc2] sm:$0xff]
  %v6699 = vld [vmem:[#allocation2 + $0xd2] sm:$0xff]
  %v6700 = vld [vmem:[#allocation2 + $0xe2] sm:$0xff]
  %v6701 = vld [vmem:[#allocation2 + $0xf2] sm:$0xff]
  %v6702 = vld [vmem:[#allocation2 + $0x102] sm:$0xff]
  %v6703 = vld [vmem:[#allocation2 + $0x112] sm:$0xff]
  %s6704 = scalar_lea.vmem %s6, 64
  %v6705 = vld [vmem:[%s6704] sm:$0xff]
  %v6706 = vld [vmem:[%s6704 + $0x8] sm:$0xff]
  %v6707 = vld [vmem:[%s6704 + $0x10] sm:$0xff]
  %v6708 = vld [vmem:[%s6704 + $0x18] sm:$0xff]
  %v6710 = vsel %vm38, %v6688, 0
  %v6713 = vsel %vm38, %v6689, 0
  %v6716 = vsel %vm38, %v6690, 0
  %v6719 = vsel %vm38, %v6691, 0
  %v6722 = vsel %vm38, %v6692, 0
  %v6725 = vsel %vm38, %v6693, 0
  %v6728 = vsel %vm38, %v6694, 0
  %v6731 = vsel %vm38, %v6695, 0
  %v6734 = vsel %vm38, %v6696, 0
  %v6737 = vsel %vm38, %v6697, 0
  %v6740 = vsel %vm38, %v6698, 0
  %v6743 = vsel %vm38, %v6699, 0
  %v6746 = vsel %vm38, %v6700, 0
  %v6749 = vsel %vm38, %v6701, 0
  %v6752 = vsel %vm38, %v6702, 0
  %v6755 = vsel %vm38, %v6703, 0
  %6757 = vmatpush.msra.mxu0 0.0
  %6758 = vmatpush.msra.mxu0 0.0
  %6759 = vmatpush.msra.mxu0 0.0
  %6760 = vmatpush.msra.mxu0 0.0
  %6761 = vmatpush.msra.mxu0 0.0
  %6762 = vmatpush.msra.mxu0 0.0
  %6763 = vmatpush.msra.mxu0 0.0
  %6764 = vmatpush.msra.mxu0 0.0
  %6765 = vmatpush.msra.mxu0 0.0
  %6766 = vmatpush.msra.mxu0 0.0
  %6767 = vmatpush.msra.mxu0 0.0
  %6768 = vmatpush.msra.mxu0 0.0
  %6769 = vmatpush.msra.mxu0 %v6708
  %6770 = vmatpush.msra.mxu0 %v6707
  %6771 = vmatpush.msra.mxu0 %v6706
  %6772 = vmatpush.msra.mxu0 %v6705
  %6773 = vmatmul.f32.gmra.mxu0 %v6710
  %v6774 = vpop.f32.mrf.mxu0
  %v6775 = vadd.f32 0.0, %v6774
  %6776 = vmatmul.f32.gmra.mxu0 %v6713
  %v6777 = vpop.f32.mrf.mxu0
  %v6778 = vadd.f32 0.0, %v6777
  %6779 = vmatmul.f32.gmra.mxu0 %v6716
  %v6780 = vpop.f32.mrf.mxu0
  %v6781 = vadd.f32 0.0, %v6780
  %6782 = vmatmul.f32.gmra.mxu0 %v6719
  %v6783 = vpop.f32.mrf.mxu0
  %v6784 = vadd.f32 0.0, %v6783
  %6785 = vmatmul.f32.gmra.mxu0 %v6722
  %v6786 = vpop.f32.mrf.mxu0
  %v6787 = vadd.f32 0.0, %v6786
  %6788 = vmatmul.f32.gmra.mxu0 %v6725
  %v6789 = vpop.f32.mrf.mxu0
  %v6790 = vadd.f32 0.0, %v6789
  %6791 = vmatmul.f32.gmra.mxu0 %v6728
  %v6792 = vpop.f32.mrf.mxu0
  %v6793 = vadd.f32 0.0, %v6792
  %6794 = vmatmul.f32.gmra.mxu0 %v6731
  %v6795 = vpop.f32.mrf.mxu0
  %v6796 = vadd.f32 0.0, %v6795
  %6797 = vmatmul.f32.gmra.mxu0 %v6734
  %v6798 = vpop.f32.mrf.mxu0
  %v6799 = vadd.f32 0.0, %v6798
  %6800 = vmatmul.f32.gmra.mxu0 %v6737
  %v6801 = vpop.f32.mrf.mxu0
  %v6802 = vadd.f32 0.0, %v6801
  %6803 = vmatmul.f32.gmra.mxu0 %v6740
  %v6804 = vpop.f32.mrf.mxu0
  %v6805 = vadd.f32 0.0, %v6804
  %6806 = vmatmul.f32.gmra.mxu0 %v6743
  %v6807 = vpop.f32.mrf.mxu0
  %v6808 = vadd.f32 0.0, %v6807
  %6809 = vmatmul.f32.gmra.mxu0 %v6746
  %v6810 = vpop.f32.mrf.mxu0
  %v6811 = vadd.f32 0.0, %v6810
  %6812 = vmatmul.f32.gmra.mxu0 %v6749
  %v6813 = vpop.f32.mrf.mxu0
  %v6814 = vadd.f32 0.0, %v6813
  %6815 = vmatmul.f32.gmra.mxu0 %v6752
  %v6816 = vpop.f32.mrf.mxu0
  %v6817 = vadd.f32 0.0, %v6816
  %6818 = vmatmul.f32.gmra.mxu0 %v6755
  %v6819 = vpop.f32.mrf.mxu0
  %v6820 = vadd.f32 0.0, %v6819
  %6821 = vdwg.mxu0
  %v6822 = vadd.f32 %v6641, %v6775
  %v6823 = vadd.f32 %v6644, %v6778
  %v6824 = vadd.f32 %v6647, %v6781
  %v6825 = vadd.f32 %v6650, %v6784
  %v6826 = vadd.f32 %v6653, %v6787
  %v6827 = vadd.f32 %v6656, %v6790
  %v6828 = vadd.f32 %v6659, %v6793
  %v6829 = vadd.f32 %v6662, %v6796
  %v6830 = vadd.f32 %v6665, %v6799
  %v6831 = vadd.f32 %v6668, %v6802
  %v6832 = vadd.f32 %v6671, %v6805
  %v6833 = vadd.f32 %v6674, %v6808
  %v6834 = vadd.f32 %v6677, %v6811
  %v6835 = vadd.f32 %v6680, %v6814
  %v6836 = vadd.f32 %v6683, %v6817
  %v6837 = vadd.f32 %v6686, %v6820
  %v6838 = vld [vmem:[%s1738] sm:$0xff]
  %v6839 = vld [vmem:[%s1738 + $0x10] sm:$0xff]
  %v6840 = vld [vmem:[%s1738 + $0x20] sm:$0xff]
  %v6841 = vld [vmem:[%s1738 + $0x30] sm:$0xff]
  %v6842 = vld [vmem:[%s1738 + $0x40] sm:$0xff]
  %v6843 = vld [vmem:[%s1738 + $0x50] sm:$0xff]
  %v6844 = vld [vmem:[%s1738 + $0x60] sm:$0xff]
  %v6845 = vld [vmem:[%s1738 + $0x70] sm:$0xff]
  %v6846 = vld [vmem:[%s1738 + $0xa0] sm:$0xff]
  %v6847 = vld [vmem:[%s1738 + $0xb0] sm:$0xff]
  %v6848 = vld [vmem:[%s1738 + $0xc0] sm:$0xff]
  %v6849 = vld [vmem:[%s1738 + $0xd0] sm:$0xff]
  %v6850 = vld [vmem:[%s1738 + $0xe0] sm:$0xff]
  %v6851 = vld [vmem:[%s1738 + $0xf0] sm:$0xff]
  %v6852 = vld [vmem:[%s1738 + $0x100] sm:$0xff]
  %v6853 = vld [vmem:[%s1738 + $0x110] sm:$0xff]
  %s6854 = scalar_lea.vmem %s6, 96
  %v6855 = vld [vmem:[%s6854] sm:$0xff]
  %v6856 = vld [vmem:[%s6854 + $0x8] sm:$0xff]
  %v6857 = vld [vmem:[%s6854 + $0x10] sm:$0xff]
  %v6858 = vld [vmem:[%s6854 + $0x18] sm:$0xff]
  %v6860 = vsel %vm38, %v6838, 0
  %v6863 = vsel %vm38, %v6839, 0
  %v6866 = vsel %vm38, %v6840, 0
  %v6869 = vsel %vm38, %v6841, 0
  %v6872 = vsel %vm38, %v6842, 0
  %v6875 = vsel %vm38, %v6843, 0
  %v6878 = vsel %vm38, %v6844, 0
  %v6881 = vsel %vm38, %v6845, 0
  %v6884 = vsel %vm38, %v6846, 0
  %v6887 = vsel %vm38, %v6847, 0
  %v6890 = vsel %vm38, %v6848, 0
  %v6893 = vsel %vm38, %v6849, 0
  %v6896 = vsel %vm38, %v6850, 0
  %v6899 = vsel %vm38, %v6851, 0
  %v6902 = vsel %vm38, %v6852, 0
  %v6905 = vsel %vm38, %v6853, 0
  %6907 = vmatpush.msra.mxu0 0.0
  %6908 = vmatpush.msra.mxu0 0.0
  %6909 = vmatpush.msra.mxu0 0.0
  %6910 = vmatpush.msra.mxu0 0.0
  %6911 = vmatpush.msra.mxu0 0.0
  %6912 = vmatpush.msra.mxu0 0.0
  %6913 = vmatpush.msra.mxu0 0.0
  %6914 = vmatpush.msra.mxu0 0.0
  %6915 = vmatpush.msra.mxu0 0.0
  %6916 = vmatpush.msra.mxu0 0.0
  %6917 = vmatpush.msra.mxu0 0.0
  %6918 = vmatpush.msra.mxu0 0.0
  %6919 = vmatpush.msra.mxu0 %v6858
  %6920 = vmatpush.msra.mxu0 %v6857
  %6921 = vmatpush.msra.mxu0 %v6856
  %6922 = vmatpush.msra.mxu0 %v6855
  %6923 = vmatmul.f32.gmra.mxu0 %v6860
  %v6924 = vpop.f32.mrf.mxu0
  %v6925 = vadd.f32 0.0, %v6924
  %6926 = vmatmul.f32.gmra.mxu0 %v6863
  %v6927 = vpop.f32.mrf.mxu0
  %v6928 = vadd.f32 0.0, %v6927
  %6929 = vmatmul.f32.gmra.mxu0 %v6866
  %v6930 = vpop.f32.mrf.mxu0
  %v6931 = vadd.f32 0.0, %v6930
  %6932 = vmatmul.f32.gmra.mxu0 %v6869
  %v6933 = vpop.f32.mrf.mxu0
  %v6934 = vadd.f32 0.0, %v6933
  %6935 = vmatmul.f32.gmra.mxu0 %v6872
  %v6936 = vpop.f32.mrf.mxu0
  %v6937 = vadd.f32 0.0, %v6936
  %6938 = vmatmul.f32.gmra.mxu0 %v6875
  %v6939 = vpop.f32.mrf.mxu0
  %v6940 = vadd.f32 0.0, %v6939
  %6941 = vmatmul.f32.gmra.mxu0 %v6878
  %v6942 = vpop.f32.mrf.mxu0
  %v6943 = vadd.f32 0.0, %v6942
  %6944 = vmatmul.f32.gmra.mxu0 %v6881
  %v6945 = vpop.f32.mrf.mxu0
  %v6946 = vadd.f32 0.0, %v6945
  %6947 = vmatmul.f32.gmra.mxu0 %v6884
  %v6948 = vpop.f32.mrf.mxu0
  %v6949 = vadd.f32 0.0, %v6948
  %6950 = vmatmul.f32.gmra.mxu0 %v6887
  %v6951 = vpop.f32.mrf.mxu0
  %v6952 = vadd.f32 0.0, %v6951
  %6953 = vmatmul.f32.gmra.mxu0 %v6890
  %v6954 = vpop.f32.mrf.mxu0
  %v6955 = vadd.f32 0.0, %v6954
  %6956 = vmatmul.f32.gmra.mxu0 %v6893
  %v6957 = vpop.f32.mrf.mxu0
  %v6958 = vadd.f32 0.0, %v6957
  %6959 = vmatmul.f32.gmra.mxu0 %v6896
  %v6960 = vpop.f32.mrf.mxu0
  %v6961 = vadd.f32 0.0, %v6960
  %6962 = vmatmul.f32.gmra.mxu0 %v6899
  %v6963 = vpop.f32.mrf.mxu0
  %v6964 = vadd.f32 0.0, %v6963
  %6965 = vmatmul.f32.gmra.mxu0 %v6902
  %v6966 = vpop.f32.mrf.mxu0
  %v6967 = vadd.f32 0.0, %v6966
  %6968 = vmatmul.f32.gmra.mxu0 %v6905
  %v6969 = vpop.f32.mrf.mxu0
  %v6970 = vadd.f32 0.0, %v6969
  %6971 = vdwg.mxu0
  %v6972 = vadd.f32 %v6822, %v6925
  %v6973 = vadd.f32 %v6823, %v6928
  %v6974 = vadd.f32 %v6824, %v6931
  %v6975 = vadd.f32 %v6825, %v6934
  %v6976 = vadd.f32 %v6826, %v6937
  %v6977 = vadd.f32 %v6827, %v6940
  %v6978 = vadd.f32 %v6828, %v6943
  %v6979 = vadd.f32 %v6829, %v6946
  %v6980 = vadd.f32 %v6830, %v6949
  %v6981 = vadd.f32 %v6831, %v6952
  %v6982 = vadd.f32 %v6832, %v6955
  %v6983 = vadd.f32 %v6833, %v6958
  %v6984 = vadd.f32 %v6834, %v6961
  %v6985 = vadd.f32 %v6835, %v6964
  %v6986 = vadd.f32 %v6836, %v6967
  %v6987 = vadd.f32 %v6837, %v6970
  %v6988 = vld [vmem:[%s1738 + $0x1] sm:$0xff]
  %v6989 = vld [vmem:[%s1738 + $0x11] sm:$0xff]
  %v6990 = vld [vmem:[%s1738 + $0x21] sm:$0xff]
  %v6991 = vld [vmem:[%s1738 + $0x31] sm:$0xff]
  %v6992 = vld [vmem:[%s1738 + $0x41] sm:$0xff]
  %v6993 = vld [vmem:[%s1738 + $0x51] sm:$0xff]
  %v6994 = vld [vmem:[%s1738 + $0x61] sm:$0xff]
  %v6995 = vld [vmem:[%s1738 + $0x71] sm:$0xff]
  %v6996 = vld [vmem:[%s1738 + $0xa1] sm:$0xff]
  %v6997 = vld [vmem:[%s1738 + $0xb1] sm:$0xff]
  %v6998 = vld [vmem:[%s1738 + $0xc1] sm:$0xff]
  %v6999 = vld [vmem:[%s1738 + $0xd1] sm:$0xff]
  %v7000 = vld [vmem:[%s1738 + $0xe1] sm:$0xff]
  %v7001 = vld [vmem:[%s1738 + $0xf1] sm:$0xff]
  %v7002 = vld [vmem:[%s1738 + $0x101] sm:$0xff]
  %v7003 = vld [vmem:[%s1738 + $0x111] sm:$0xff]
  %s7004 = scalar_lea.vmem %s6, 128
  %v7005 = vld [vmem:[%s7004] sm:$0xff]
  %v7006 = vld [vmem:[%s7004 + $0x8] sm:$0xff]
  %v7007 = vld [vmem:[%s7004 + $0x10] sm:$0xff]
  %v7008 = vld [vmem:[%s7004 + $0x18] sm:$0xff]
  %v7010 = vsel %vm38, %v6988, 0
  %v7013 = vsel %vm38, %v6989, 0
  %v7016 = vsel %vm38, %v6990, 0
  %v7019 = vsel %vm38, %v6991, 0
  %v7022 = vsel %vm38, %v6992, 0
  %v7025 = vsel %vm38, %v6993, 0
  %v7028 = vsel %vm38, %v6994, 0
  %v7031 = vsel %vm38, %v6995, 0
  %v7034 = vsel %vm38, %v6996, 0
  %v7037 = vsel %vm38, %v6997, 0
  %v7040 = vsel %vm38, %v6998, 0
  %v7043 = vsel %vm38, %v6999, 0
  %v7046 = vsel %vm38, %v7000, 0
  %v7049 = vsel %vm38, %v7001, 0
  %v7052 = vsel %vm38, %v7002, 0
  %v7055 = vsel %vm38, %v7003, 0
  %7057 = vmatpush.msra.mxu0 0.0
  %7058 = vmatpush.msra.mxu0 0.0
  %7059 = vmatpush.msra.mxu0 0.0
  %7060 = vmatpush.msra.mxu0 0.0
  %7061 = vmatpush.msra.mxu0 0.0
  %7062 = vmatpush.msra.mxu0 0.0
  %7063 = vmatpush.msra.mxu0 0.0
  %7064 = vmatpush.msra.mxu0 0.0
  %7065 = vmatpush.msra.mxu0 0.0
  %7066 = vmatpush.msra.mxu0 0.0
  %7067 = vmatpush.msra.mxu0 0.0
  %7068 = vmatpush.msra.mxu0 0.0
  %7069 = vmatpush.msra.mxu0 %v7008
  %7070 = vmatpush.msra.mxu0 %v7007
  %7071 = vmatpush.msra.mxu0 %v7006
  %7072 = vmatpush.msra.mxu0 %v7005
  %7073 = vmatmul.f32.gmra.mxu0 %v7010
  %v7074 = vpop.f32.mrf.mxu0
  %v7075 = vadd.f32 0.0, %v7074
  %7076 = vmatmul.f32.gmra.mxu0 %v7013
  %v7077 = vpop.f32.mrf.mxu0
  %v7078 = vadd.f32 0.0, %v7077
  %7079 = vmatmul.f32.gmra.mxu0 %v7016
  %v7080 = vpop.f32.mrf.mxu0
  %v7081 = vadd.f32 0.0, %v7080
  %7082 = vmatmul.f32.gmra.mxu0 %v7019
  %v7083 = vpop.f32.mrf.mxu0
  %v7084 = vadd.f32 0.0, %v7083
  %7085 = vmatmul.f32.gmra.mxu0 %v7022
  %v7086 = vpop.f32.mrf.mxu0
  %v7087 = vadd.f32 0.0, %v7086
  %7088 = vmatmul.f32.gmra.mxu0 %v7025
  %v7089 = vpop.f32.mrf.mxu0
  %v7090 = vadd.f32 0.0, %v7089
  %7091 = vmatmul.f32.gmra.mxu0 %v7028
  %v7092 = vpop.f32.mrf.mxu0
  %v7093 = vadd.f32 0.0, %v7092
  %7094 = vmatmul.f32.gmra.mxu0 %v7031
  %v7095 = vpop.f32.mrf.mxu0
  %v7096 = vadd.f32 0.0, %v7095
  %7097 = vmatmul.f32.gmra.mxu0 %v7034
  %v7098 = vpop.f32.mrf.mxu0
  %v7099 = vadd.f32 0.0, %v7098
  %7100 = vmatmul.f32.gmra.mxu0 %v7037
  %v7101 = vpop.f32.mrf.mxu0
  %v7102 = vadd.f32 0.0, %v7101
  %7103 = vmatmul.f32.gmra.mxu0 %v7040
  %v7104 = vpop.f32.mrf.mxu0
  %v7105 = vadd.f32 0.0, %v7104
  %7106 = vmatmul.f32.gmra.mxu0 %v7043
  %v7107 = vpop.f32.mrf.mxu0
  %v7108 = vadd.f32 0.0, %v7107
  %7109 = vmatmul.f32.gmra.mxu0 %v7046
  %v7110 = vpop.f32.mrf.mxu0
  %v7111 = vadd.f32 0.0, %v7110
  %7112 = vmatmul.f32.gmra.mxu0 %v7049
  %v7113 = vpop.f32.mrf.mxu0
  %v7114 = vadd.f32 0.0, %v7113
  %7115 = vmatmul.f32.gmra.mxu0 %v7052
  %v7116 = vpop.f32.mrf.mxu0
  %v7117 = vadd.f32 0.0, %v7116
  %7118 = vmatmul.f32.gmra.mxu0 %v7055
  %v7119 = vpop.f32.mrf.mxu0
  %v7120 = vadd.f32 0.0, %v7119
  %7121 = vdwg.mxu0
  %v7122 = vadd.f32 %v6972, %v7075
  %v7123 = vadd.f32 %v6973, %v7078
  %v7124 = vadd.f32 %v6974, %v7081
  %v7125 = vadd.f32 %v6975, %v7084
  %v7126 = vadd.f32 %v6976, %v7087
  %v7127 = vadd.f32 %v6977, %v7090
  %v7128 = vadd.f32 %v6978, %v7093
  %v7129 = vadd.f32 %v6979, %v7096
  %v7130 = vadd.f32 %v6980, %v7099
  %v7131 = vadd.f32 %v6981, %v7102
  %v7132 = vadd.f32 %v6982, %v7105
  %v7133 = vadd.f32 %v6983, %v7108
  %v7134 = vadd.f32 %v6984, %v7111
  %v7135 = vadd.f32 %v6985, %v7114
  %v7136 = vadd.f32 %v6986, %v7117
  %v7137 = vadd.f32 %v6987, %v7120
  %v7138 = vld [vmem:[%s1738 + $0x2] sm:$0xff]
  %v7139 = vld [vmem:[%s1738 + $0x12] sm:$0xff]
  %v7140 = vld [vmem:[%s1738 + $0x22] sm:$0xff]
  %v7141 = vld [vmem:[%s1738 + $0x32] sm:$0xff]
  %v7142 = vld [vmem:[%s1738 + $0x42] sm:$0xff]
  %v7143 = vld [vmem:[%s1738 + $0x52] sm:$0xff]
  %v7144 = vld [vmem:[%s1738 + $0x62] sm:$0xff]
  %v7145 = vld [vmem:[%s1738 + $0x72] sm:$0xff]
  %v7146 = vld [vmem:[%s1738 + $0xa2] sm:$0xff]
  %v7147 = vld [vmem:[%s1738 + $0xb2] sm:$0xff]
  %v7148 = vld [vmem:[%s1738 + $0xc2] sm:$0xff]
  %v7149 = vld [vmem:[%s1738 + $0xd2] sm:$0xff]
  %v7150 = vld [vmem:[%s1738 + $0xe2] sm:$0xff]
  %v7151 = vld [vmem:[%s1738 + $0xf2] sm:$0xff]
  %v7152 = vld [vmem:[%s1738 + $0x102] sm:$0xff]
  %v7153 = vld [vmem:[%s1738 + $0x112] sm:$0xff]
  %s7154 = scalar_lea.vmem %s6, 160
  %v7155 = vld [vmem:[%s7154] sm:$0xff]
  %v7156 = vld [vmem:[%s7154 + $0x8] sm:$0xff]
  %v7157 = vld [vmem:[%s7154 + $0x10] sm:$0xff]
  %v7158 = vld [vmem:[%s7154 + $0x18] sm:$0xff]
  %v7160 = vsel %vm38, %v7138, 0
  %v7163 = vsel %vm38, %v7139, 0
  %v7166 = vsel %vm38, %v7140, 0
  %v7169 = vsel %vm38, %v7141, 0
  %v7172 = vsel %vm38, %v7142, 0
  %v7175 = vsel %vm38, %v7143, 0
  %v7178 = vsel %vm38, %v7144, 0
  %v7181 = vsel %vm38, %v7145, 0
  %v7184 = vsel %vm38, %v7146, 0
  %v7187 = vsel %vm38, %v7147, 0
  %v7190 = vsel %vm38, %v7148, 0
  %v7193 = vsel %vm38, %v7149, 0
  %v7196 = vsel %vm38, %v7150, 0
  %v7199 = vsel %vm38, %v7151, 0
  %v7202 = vsel %vm38, %v7152, 0
  %v7205 = vsel %vm38, %v7153, 0
  %7207 = vmatpush.msra.mxu0 0.0
  %7208 = vmatpush.msra.mxu0 0.0
  %7209 = vmatpush.msra.mxu0 0.0
  %7210 = vmatpush.msra.mxu0 0.0
  %7211 = vmatpush.msra.mxu0 0.0
  %7212 = vmatpush.msra.mxu0 0.0
  %7213 = vmatpush.msra.mxu0 0.0
  %7214 = vmatpush.msra.mxu0 0.0
  %7215 = vmatpush.msra.mxu0 0.0
  %7216 = vmatpush.msra.mxu0 0.0
  %7217 = vmatpush.msra.mxu0 0.0
  %7218 = vmatpush.msra.mxu0 0.0
  %7219 = vmatpush.msra.mxu0 %v7158
  %7220 = vmatpush.msra.mxu0 %v7157
  %7221 = vmatpush.msra.mxu0 %v7156
  %7222 = vmatpush.msra.mxu0 %v7155
  %7223 = vmatmul.f32.gmra.mxu0 %v7160
  %v7224 = vpop.f32.mrf.mxu0
  %v7225 = vadd.f32 0.0, %v7224
  %7226 = vmatmul.f32.gmra.mxu0 %v7163
  %v7227 = vpop.f32.mrf.mxu0
  %v7228 = vadd.f32 0.0, %v7227
  %7229 = vmatmul.f32.gmra.mxu0 %v7166
  %v7230 = vpop.f32.mrf.mxu0
  %v7231 = vadd.f32 0.0, %v7230
  %7232 = vmatmul.f32.gmra.mxu0 %v7169
  %v7233 = vpop.f32.mrf.mxu0
  %v7234 = vadd.f32 0.0, %v7233
  %7235 = vmatmul.f32.gmra.mxu0 %v7172
  %v7236 = vpop.f32.mrf.mxu0
  %v7237 = vadd.f32 0.0, %v7236
  %7238 = vmatmul.f32.gmra.mxu0 %v7175
  %v7239 = vpop.f32.mrf.mxu0
  %v7240 = vadd.f32 0.0, %v7239
  %7241 = vmatmul.f32.gmra.mxu0 %v7178
  %v7242 = vpop.f32.mrf.mxu0
  %v7243 = vadd.f32 0.0, %v7242
  %7244 = vmatmul.f32.gmra.mxu0 %v7181
  %v7245 = vpop.f32.mrf.mxu0
  %v7246 = vadd.f32 0.0, %v7245
  %7247 = vmatmul.f32.gmra.mxu0 %v7184
  %v7248 = vpop.f32.mrf.mxu0
  %v7249 = vadd.f32 0.0, %v7248
  %7250 = vmatmul.f32.gmra.mxu0 %v7187
  %v7251 = vpop.f32.mrf.mxu0
  %v7252 = vadd.f32 0.0, %v7251
  %7253 = vmatmul.f32.gmra.mxu0 %v7190
  %v7254 = vpop.f32.mrf.mxu0
  %v7255 = vadd.f32 0.0, %v7254
  %7256 = vmatmul.f32.gmra.mxu0 %v7193
  %v7257 = vpop.f32.mrf.mxu0
  %v7258 = vadd.f32 0.0, %v7257
  %7259 = vmatmul.f32.gmra.mxu0 %v7196
  %v7260 = vpop.f32.mrf.mxu0
  %v7261 = vadd.f32 0.0, %v7260
  %7262 = vmatmul.f32.gmra.mxu0 %v7199
  %v7263 = vpop.f32.mrf.mxu0
  %v7264 = vadd.f32 0.0, %v7263
  %7265 = vmatmul.f32.gmra.mxu0 %v7202
  %v7266 = vpop.f32.mrf.mxu0
  %v7267 = vadd.f32 0.0, %v7266
  %7268 = vmatmul.f32.gmra.mxu0 %v7205
  %v7269 = vpop.f32.mrf.mxu0
  %v7270 = vadd.f32 0.0, %v7269
  %7271 = vdwg.mxu0
  %v7272 = vadd.f32 %v7122, %v7225
  %v7273 = vadd.f32 %v7123, %v7228
  %v7274 = vadd.f32 %v7124, %v7231
  %v7275 = vadd.f32 %v7125, %v7234
  %v7276 = vadd.f32 %v7126, %v7237
  %v7277 = vadd.f32 %v7127, %v7240
  %v7278 = vadd.f32 %v7128, %v7243
  %v7279 = vadd.f32 %v7129, %v7246
  %v7280 = vadd.f32 %v7130, %v7249
  %v7281 = vadd.f32 %v7131, %v7252
  %v7282 = vadd.f32 %v7132, %v7255
  %v7283 = vadd.f32 %v7133, %v7258
  %v7284 = vadd.f32 %v7134, %v7261
  %v7285 = vadd.f32 %v7135, %v7264
  %v7286 = vadd.f32 %v7136, %v7267
  %v7287 = vadd.f32 %v7137, %v7270
  %v7288 = vld [vmem:[%s2622] sm:$0xff]
  %v7289 = vld [vmem:[%s2622 + $0x10] sm:$0xff]
  %v7290 = vld [vmem:[%s2622 + $0x20] sm:$0xff]
  %v7291 = vld [vmem:[%s2622 + $0x30] sm:$0xff]
  %v7292 = vld [vmem:[%s2622 + $0x40] sm:$0xff]
  %v7293 = vld [vmem:[%s2622 + $0x50] sm:$0xff]
  %v7294 = vld [vmem:[%s2622 + $0x60] sm:$0xff]
  %v7295 = vld [vmem:[%s2622 + $0x70] sm:$0xff]
  %v7296 = vld [vmem:[%s2622 + $0xa0] sm:$0xff]
  %v7297 = vld [vmem:[%s2622 + $0xb0] sm:$0xff]
  %v7298 = vld [vmem:[%s2622 + $0xc0] sm:$0xff]
  %v7299 = vld [vmem:[%s2622 + $0xd0] sm:$0xff]
  %v7300 = vld [vmem:[%s2622 + $0xe0] sm:$0xff]
  %v7301 = vld [vmem:[%s2622 + $0xf0] sm:$0xff]
  %v7302 = vld [vmem:[%s2622 + $0x100] sm:$0xff]
  %v7303 = vld [vmem:[%s2622 + $0x110] sm:$0xff]
  %s7304 = scalar_lea.vmem %s6, 192
  %v7305 = vld [vmem:[%s7304] sm:$0xff]
  %v7306 = vld [vmem:[%s7304 + $0x8] sm:$0xff]
  %v7307 = vld [vmem:[%s7304 + $0x10] sm:$0xff]
  %v7308 = vld [vmem:[%s7304 + $0x18] sm:$0xff]
  %v7310 = vsel %vm38, %v7288, 0
  %v7313 = vsel %vm38, %v7289, 0
  %v7316 = vsel %vm38, %v7290, 0
  %v7319 = vsel %vm38, %v7291, 0
  %v7322 = vsel %vm38, %v7292, 0
  %v7325 = vsel %vm38, %v7293, 0
  %v7328 = vsel %vm38, %v7294, 0
  %v7331 = vsel %vm38, %v7295, 0
  %v7334 = vsel %vm38, %v7296, 0
  %v7337 = vsel %vm38, %v7297, 0
  %v7340 = vsel %vm38, %v7298, 0
  %v7343 = vsel %vm38, %v7299, 0
  %v7346 = vsel %vm38, %v7300, 0
  %v7349 = vsel %vm38, %v7301, 0
  %v7352 = vsel %vm38, %v7302, 0
  %v7355 = vsel %vm38, %v7303, 0
  %7357 = vmatpush.msra.mxu0 0.0
  %7358 = vmatpush.msra.mxu0 0.0
  %7359 = vmatpush.msra.mxu0 0.0
  %7360 = vmatpush.msra.mxu0 0.0
  %7361 = vmatpush.msra.mxu0 0.0
  %7362 = vmatpush.msra.mxu0 0.0
  %7363 = vmatpush.msra.mxu0 0.0
  %7364 = vmatpush.msra.mxu0 0.0
  %7365 = vmatpush.msra.mxu0 0.0
  %7366 = vmatpush.msra.mxu0 0.0
  %7367 = vmatpush.msra.mxu0 0.0
  %7368 = vmatpush.msra.mxu0 0.0
  %7369 = vmatpush.msra.mxu0 %v7308
  %7370 = vmatpush.msra.mxu0 %v7307
  %7371 = vmatpush.msra.mxu0 %v7306
  %7372 = vmatpush.msra.mxu0 %v7305
  %7373 = vmatmul.f32.gmra.mxu0 %v7310
  %v7374 = vpop.f32.mrf.mxu0
  %v7375 = vadd.f32 0.0, %v7374
  %7376 = vmatmul.f32.gmra.mxu0 %v7313
  %v7377 = vpop.f32.mrf.mxu0
  %v7378 = vadd.f32 0.0, %v7377
  %7379 = vmatmul.f32.gmra.mxu0 %v7316
  %v7380 = vpop.f32.mrf.mxu0
  %v7381 = vadd.f32 0.0, %v7380
  %7382 = vmatmul.f32.gmra.mxu0 %v7319
  %v7383 = vpop.f32.mrf.mxu0
  %v7384 = vadd.f32 0.0, %v7383
  %7385 = vmatmul.f32.gmra.mxu0 %v7322
  %v7386 = vpop.f32.mrf.mxu0
  %v7387 = vadd.f32 0.0, %v7386
  %7388 = vmatmul.f32.gmra.mxu0 %v7325
  %v7389 = vpop.f32.mrf.mxu0
  %v7390 = vadd.f32 0.0, %v7389
  %7391 = vmatmul.f32.gmra.mxu0 %v7328
  %v7392 = vpop.f32.mrf.mxu0
  %v7393 = vadd.f32 0.0, %v7392
  %7394 = vmatmul.f32.gmra.mxu0 %v7331
  %v7395 = vpop.f32.mrf.mxu0
  %v7396 = vadd.f32 0.0, %v7395
  %7397 = vmatmul.f32.gmra.mxu0 %v7334
  %v7398 = vpop.f32.mrf.mxu0
  %v7399 = vadd.f32 0.0, %v7398
  %7400 = vmatmul.f32.gmra.mxu0 %v7337
  %v7401 = vpop.f32.mrf.mxu0
  %v7402 = vadd.f32 0.0, %v7401
  %7403 = vmatmul.f32.gmra.mxu0 %v7340
  %v7404 = vpop.f32.mrf.mxu0
  %v7405 = vadd.f32 0.0, %v7404
  %7406 = vmatmul.f32.gmra.mxu0 %v7343
  %v7407 = vpop.f32.mrf.mxu0
  %v7408 = vadd.f32 0.0, %v7407
  %7409 = vmatmul.f32.gmra.mxu0 %v7346
  %v7410 = vpop.f32.mrf.mxu0
  %v7411 = vadd.f32 0.0, %v7410
  %7412 = vmatmul.f32.gmra.mxu0 %v7349
  %v7413 = vpop.f32.mrf.mxu0
  %v7414 = vadd.f32 0.0, %v7413
  %7415 = vmatmul.f32.gmra.mxu0 %v7352
  %v7416 = vpop.f32.mrf.mxu0
  %v7417 = vadd.f32 0.0, %v7416
  %7418 = vmatmul.f32.gmra.mxu0 %v7355
  %v7419 = vpop.f32.mrf.mxu0
  %v7420 = vadd.f32 0.0, %v7419
  %7421 = vdwg.mxu0
  %v7422 = vadd.f32 %v7272, %v7375
  %v7423 = vadd.f32 %v7273, %v7378
  %v7424 = vadd.f32 %v7274, %v7381
  %v7425 = vadd.f32 %v7275, %v7384
  %v7426 = vadd.f32 %v7276, %v7387
  %v7427 = vadd.f32 %v7277, %v7390
  %v7428 = vadd.f32 %v7278, %v7393
  %v7429 = vadd.f32 %v7279, %v7396
  %v7430 = vadd.f32 %v7280, %v7399
  %v7431 = vadd.f32 %v7281, %v7402
  %v7432 = vadd.f32 %v7282, %v7405
  %v7433 = vadd.f32 %v7283, %v7408
  %v7434 = vadd.f32 %v7284, %v7411
  %v7435 = vadd.f32 %v7285, %v7414
  %v7436 = vadd.f32 %v7286, %v7417
  %v7437 = vadd.f32 %v7287, %v7420
  %v7438 = vld [vmem:[%s2622 + $0x1] sm:$0xff]
  %v7439 = vld [vmem:[%s2622 + $0x11] sm:$0xff]
  %v7440 = vld [vmem:[%s2622 + $0x21] sm:$0xff]
  %v7441 = vld [vmem:[%s2622 + $0x31] sm:$0xff]
  %v7442 = vld [vmem:[%s2622 + $0x41] sm:$0xff]
  %v7443 = vld [vmem:[%s2622 + $0x51] sm:$0xff]
  %v7444 = vld [vmem:[%s2622 + $0x61] sm:$0xff]
  %v7445 = vld [vmem:[%s2622 + $0x71] sm:$0xff]
  %v7446 = vld [vmem:[%s2622 + $0xa1] sm:$0xff]
  %v7447 = vld [vmem:[%s2622 + $0xb1] sm:$0xff]
  %v7448 = vld [vmem:[%s2622 + $0xc1] sm:$0xff]
  %v7449 = vld [vmem:[%s2622 + $0xd1] sm:$0xff]
  %v7450 = vld [vmem:[%s2622 + $0xe1] sm:$0xff]
  %v7451 = vld [vmem:[%s2622 + $0xf1] sm:$0xff]
  %v7452 = vld [vmem:[%s2622 + $0x101] sm:$0xff]
  %v7453 = vld [vmem:[%s2622 + $0x111] sm:$0xff]
  %s7454 = scalar_lea.vmem %s6, 224
  %v7455 = vld [vmem:[%s7454] sm:$0xff]
  %v7456 = vld [vmem:[%s7454 + $0x8] sm:$0xff]
  %v7457 = vld [vmem:[%s7454 + $0x10] sm:$0xff]
  %v7458 = vld [vmem:[%s7454 + $0x18] sm:$0xff]
  %v7460 = vsel %vm38, %v7438, 0
  %v7463 = vsel %vm38, %v7439, 0
  %v7466 = vsel %vm38, %v7440, 0
  %v7469 = vsel %vm38, %v7441, 0
  %v7472 = vsel %vm38, %v7442, 0
  %v7475 = vsel %vm38, %v7443, 0
  %v7478 = vsel %vm38, %v7444, 0
  %v7481 = vsel %vm38, %v7445, 0
  %v7484 = vsel %vm38, %v7446, 0
  %v7487 = vsel %vm38, %v7447, 0
  %v7490 = vsel %vm38, %v7448, 0
  %v7493 = vsel %vm38, %v7449, 0
  %v7496 = vsel %vm38, %v7450, 0
  %v7499 = vsel %vm38, %v7451, 0
  %v7502 = vsel %vm38, %v7452, 0
  %v7505 = vsel %vm38, %v7453, 0
  %7507 = vmatpush.msra.mxu0 0.0
  %7508 = vmatpush.msra.mxu0 0.0
  %7509 = vmatpush.msra.mxu0 0.0
  %7510 = vmatpush.msra.mxu0 0.0
  %7511 = vmatpush.msra.mxu0 0.0
  %7512 = vmatpush.msra.mxu0 0.0
  %7513 = vmatpush.msra.mxu0 0.0
  %7514 = vmatpush.msra.mxu0 0.0
  %7515 = vmatpush.msra.mxu0 0.0
  %7516 = vmatpush.msra.mxu0 0.0
  %7517 = vmatpush.msra.mxu0 0.0
  %7518 = vmatpush.msra.mxu0 0.0
  %7519 = vmatpush.msra.mxu0 %v7458
  %7520 = vmatpush.msra.mxu0 %v7457
  %7521 = vmatpush.msra.mxu0 %v7456
  %7522 = vmatpush.msra.mxu0 %v7455
  %7523 = vmatmul.f32.gmra.mxu0 %v7460
  %v7524 = vpop.f32.mrf.mxu0
  %v7525 = vadd.f32 0.0, %v7524
  %7526 = vmatmul.f32.gmra.mxu0 %v7463
  %v7527 = vpop.f32.mrf.mxu0
  %v7528 = vadd.f32 0.0, %v7527
  %7529 = vmatmul.f32.gmra.mxu0 %v7466
  %v7530 = vpop.f32.mrf.mxu0
  %v7531 = vadd.f32 0.0, %v7530
  %7532 = vmatmul.f32.gmra.mxu0 %v7469
  %v7533 = vpop.f32.mrf.mxu0
  %v7534 = vadd.f32 0.0, %v7533
  %7535 = vmatmul.f32.gmra.mxu0 %v7472
  %v7536 = vpop.f32.mrf.mxu0
  %v7537 = vadd.f32 0.0, %v7536
  %7538 = vmatmul.f32.gmra.mxu0 %v7475
  %v7539 = vpop.f32.mrf.mxu0
  %v7540 = vadd.f32 0.0, %v7539
  %7541 = vmatmul.f32.gmra.mxu0 %v7478
  %v7542 = vpop.f32.mrf.mxu0
  %v7543 = vadd.f32 0.0, %v7542
  %7544 = vmatmul.f32.gmra.mxu0 %v7481
  %v7545 = vpop.f32.mrf.mxu0
  %v7546 = vadd.f32 0.0, %v7545
  %7547 = vmatmul.f32.gmra.mxu0 %v7484
  %v7548 = vpop.f32.mrf.mxu0
  %v7549 = vadd.f32 0.0, %v7548
  %7550 = vmatmul.f32.gmra.mxu0 %v7487
  %v7551 = vpop.f32.mrf.mxu0
  %v7552 = vadd.f32 0.0, %v7551
  %7553 = vmatmul.f32.gmra.mxu0 %v7490
  %v7554 = vpop.f32.mrf.mxu0
  %v7555 = vadd.f32 0.0, %v7554
  %7556 = vmatmul.f32.gmra.mxu0 %v7493
  %v7557 = vpop.f32.mrf.mxu0
  %v7558 = vadd.f32 0.0, %v7557
  %7559 = vmatmul.f32.gmra.mxu0 %v7496
  %v7560 = vpop.f32.mrf.mxu0
  %v7561 = vadd.f32 0.0, %v7560
  %7562 = vmatmul.f32.gmra.mxu0 %v7499
  %v7563 = vpop.f32.mrf.mxu0
  %v7564 = vadd.f32 0.0, %v7563
  %7565 = vmatmul.f32.gmra.mxu0 %v7502
  %v7566 = vpop.f32.mrf.mxu0
  %v7567 = vadd.f32 0.0, %v7566
  %7568 = vmatmul.f32.gmra.mxu0 %v7505
  %v7569 = vpop.f32.mrf.mxu0
  %v7570 = vadd.f32 0.0, %v7569
  %7571 = vdwg.mxu0
  %v7572 = vadd.f32 %v7422, %v7525
  %v7573 = vadd.f32 %v7423, %v7528
  %v7574 = vadd.f32 %v7424, %v7531
  %v7575 = vadd.f32 %v7425, %v7534
  %v7576 = vadd.f32 %v7426, %v7537
  %v7577 = vadd.f32 %v7427, %v7540
  %v7578 = vadd.f32 %v7428, %v7543
  %v7579 = vadd.f32 %v7429, %v7546
  %v7580 = vadd.f32 %v7430, %v7549
  %v7581 = vadd.f32 %v7431, %v7552
  %v7582 = vadd.f32 %v7432, %v7555
  %v7583 = vadd.f32 %v7433, %v7558
  %v7584 = vadd.f32 %v7434, %v7561
  %v7585 = vadd.f32 %v7435, %v7564
  %v7586 = vadd.f32 %v7436, %v7567
  %v7587 = vadd.f32 %v7437, %v7570
  %v7588 = vld [vmem:[%s2622 + $0x2] sm:$0xff]
  %v7589 = vld [vmem:[%s2622 + $0x12] sm:$0xff]
  %v7590 = vld [vmem:[%s2622 + $0x22] sm:$0xff]
  %v7591 = vld [vmem:[%s2622 + $0x32] sm:$0xff]
  %v7592 = vld [vmem:[%s2622 + $0x42] sm:$0xff]
  %v7593 = vld [vmem:[%s2622 + $0x52] sm:$0xff]
  %v7594 = vld [vmem:[%s2622 + $0x62] sm:$0xff]
  %v7595 = vld [vmem:[%s2622 + $0x72] sm:$0xff]
  %v7596 = vld [vmem:[%s2622 + $0xa2] sm:$0xff]
  %v7597 = vld [vmem:[%s2622 + $0xb2] sm:$0xff]
  %v7598 = vld [vmem:[%s2622 + $0xc2] sm:$0xff]
  %v7599 = vld [vmem:[%s2622 + $0xd2] sm:$0xff]
  %v7600 = vld [vmem:[%s2622 + $0xe2] sm:$0xff]
  %v7601 = vld [vmem:[%s2622 + $0xf2] sm:$0xff]
  %v7602 = vld [vmem:[%s2622 + $0x102] sm:$0xff]
  %v7603 = vld [vmem:[%s2622 + $0x112] sm:$0xff]
  %s7604 = scalar_lea.vmem %s6, 256
  %v7605 = vld [vmem:[%s7604] sm:$0xff]
  %v7606 = vld [vmem:[%s7604 + $0x8] sm:$0xff]
  %v7607 = vld [vmem:[%s7604 + $0x10] sm:$0xff]
  %v7608 = vld [vmem:[%s7604 + $0x18] sm:$0xff]
  %v7610 = vsel %vm38, %v7588, 0
  %v7613 = vsel %vm38, %v7589, 0
  %v7616 = vsel %vm38, %v7590, 0
  %v7619 = vsel %vm38, %v7591, 0
  %v7622 = vsel %vm38, %v7592, 0
  %v7625 = vsel %vm38, %v7593, 0
  %v7628 = vsel %vm38, %v7594, 0
  %v7631 = vsel %vm38, %v7595, 0
  %v7634 = vsel %vm38, %v7596, 0
  %v7637 = vsel %vm38, %v7597, 0
  %v7640 = vsel %vm38, %v7598, 0
  %v7643 = vsel %vm38, %v7599, 0
  %v7646 = vsel %vm38, %v7600, 0
  %v7649 = vsel %vm38, %v7601, 0
  %v7652 = vsel %vm38, %v7602, 0
  %v7655 = vsel %vm38, %v7603, 0
  %7657 = vmatpush.msra.mxu0 0.0
  %7658 = vmatpush.msra.mxu0 0.0
  %7659 = vmatpush.msra.mxu0 0.0
  %7660 = vmatpush.msra.mxu0 0.0
  %7661 = vmatpush.msra.mxu0 0.0
  %7662 = vmatpush.msra.mxu0 0.0
  %7663 = vmatpush.msra.mxu0 0.0
  %7664 = vmatpush.msra.mxu0 0.0
  %7665 = vmatpush.msra.mxu0 0.0
  %7666 = vmatpush.msra.mxu0 0.0
  %7667 = vmatpush.msra.mxu0 0.0
  %7668 = vmatpush.msra.mxu0 0.0
  %7669 = vmatpush.msra.mxu0 %v7608
  %7670 = vmatpush.msra.mxu0 %v7607
  %7671 = vmatpush.msra.mxu0 %v7606
  %7672 = vmatpush.msra.mxu0 %v7605
  %7673 = vmatmul.f32.gmra.mxu0 %v7610
  %v7674 = vpop.f32.mrf.mxu0
  %v7675 = vadd.f32 0.0, %v7674
  %7676 = vmatmul.f32.gmra.mxu0 %v7613
  %v7677 = vpop.f32.mrf.mxu0
  %v7678 = vadd.f32 0.0, %v7677
  %7679 = vmatmul.f32.gmra.mxu0 %v7616
  %v7680 = vpop.f32.mrf.mxu0
  %v7681 = vadd.f32 0.0, %v7680
  %7682 = vmatmul.f32.gmra.mxu0 %v7619
  %v7683 = vpop.f32.mrf.mxu0
  %v7684 = vadd.f32 0.0, %v7683
  %7685 = vmatmul.f32.gmra.mxu0 %v7622
  %v7686 = vpop.f32.mrf.mxu0
  %v7687 = vadd.f32 0.0, %v7686
  %7688 = vmatmul.f32.gmra.mxu0 %v7625
  %v7689 = vpop.f32.mrf.mxu0
  %v7690 = vadd.f32 0.0, %v7689
  %7691 = vmatmul.f32.gmra.mxu0 %v7628
  %v7692 = vpop.f32.mrf.mxu0
  %v7693 = vadd.f32 0.0, %v7692
  %7694 = vmatmul.f32.gmra.mxu0 %v7631
  %v7695 = vpop.f32.mrf.mxu0
  %v7696 = vadd.f32 0.0, %v7695
  %7697 = vmatmul.f32.gmra.mxu0 %v7634
  %v7698 = vpop.f32.mrf.mxu0
  %v7699 = vadd.f32 0.0, %v7698
  %7700 = vmatmul.f32.gmra.mxu0 %v7637
  %v7701 = vpop.f32.mrf.mxu0
  %v7702 = vadd.f32 0.0, %v7701
  %7703 = vmatmul.f32.gmra.mxu0 %v7640
  %v7704 = vpop.f32.mrf.mxu0
  %v7705 = vadd.f32 0.0, %v7704
  %7706 = vmatmul.f32.gmra.mxu0 %v7643
  %v7707 = vpop.f32.mrf.mxu0
  %v7708 = vadd.f32 0.0, %v7707
  %7709 = vmatmul.f32.gmra.mxu0 %v7646
  %v7710 = vpop.f32.mrf.mxu0
  %v7711 = vadd.f32 0.0, %v7710
  %7712 = vmatmul.f32.gmra.mxu0 %v7649
  %v7713 = vpop.f32.mrf.mxu0
  %v7714 = vadd.f32 0.0, %v7713
  %7715 = vmatmul.f32.gmra.mxu0 %v7652
  %v7716 = vpop.f32.mrf.mxu0
  %v7717 = vadd.f32 0.0, %v7716
  %7718 = vmatmul.f32.gmra.mxu0 %v7655
  %v7719 = vpop.f32.mrf.mxu0
  %v7720 = vadd.f32 0.0, %v7719
  %7721 = vdwg.mxu0
  %v7722 = vadd.f32 %v7572, %v7675
  %v7723 = vadd.f32 %v7573, %v7678
  %v7724 = vadd.f32 %v7574, %v7681
  %v7725 = vadd.f32 %v7575, %v7684
  %v7726 = vadd.f32 %v7576, %v7687
  %v7727 = vadd.f32 %v7577, %v7690
  %v7728 = vadd.f32 %v7578, %v7693
  %v7729 = vadd.f32 %v7579, %v7696
  %v7730 = vadd.f32 %v7580, %v7699
  %v7731 = vadd.f32 %v7581, %v7702
  %v7732 = vadd.f32 %v7582, %v7705
  %v7733 = vadd.f32 %v7583, %v7708
  %v7734 = vadd.f32 %v7584, %v7711
  %v7735 = vadd.f32 %v7585, %v7714
  %v7736 = vadd.f32 %v7586, %v7717
  %v7737 = vadd.f32 %v7587, %v7720
  %v7738 = vld [vmem:[%s9] sm:$0xff]
  %v7739 = vld [vmem:[%s9 + $0x8] sm:$0xff]
  %v7740 = vld [vmem:[%s9 + $0x10] sm:$0xff]
  %v7741 = vld [vmem:[%s9 + $0x18] sm:$0xff]
  %v7742 = vld [vmem:[%s10] sm:$0xf]
  %v7743 = vsel %vm38, %v7722, 0.0
  %v7744 = vsel %vm38, %v7723, 0.0
  %v7745 = vadd.f32 %v7743, %v7744
  %v7746 = vsel %vm38, %v7724, 0.0
  %v7747 = vadd.f32 %v7745, %v7746
  %v7748 = vsel %vm38, %v7725, 0.0
  %v7749 = vadd.f32 %v7747, %v7748
  %v7750 = vsel %vm38, %v7726, 0.0
  %v7751 = vadd.f32 %v7749, %v7750
  %v7752 = vsel %vm38, %v7727, 0.0
  %v7753 = vadd.f32 %v7751, %v7752
  %v7754 = vsel %vm38, %v7728, 0.0
  %v7755 = vadd.f32 %v7753, %v7754
  %v7756 = vsel %vm38, %v7729, 0.0
  %v7757 = vadd.f32 %v7755, %v7756
  %v7758 = vsel %vm38, %v7730, 0.0
  %v7759 = vadd.f32 %v7757, %v7758
  %v7760 = vsel %vm38, %v7731, 0.0
  %v7761 = vadd.f32 %v7759, %v7760
  %v7762 = vsel %vm38, %v7732, 0.0
  %v7763 = vadd.f32 %v7761, %v7762
  %v7764 = vsel %vm38, %v7733, 0.0
  %v7765 = vadd.f32 %v7763, %v7764
  %v7766 = vsel %vm38, %v7734, 0.0
  %v7767 = vadd.f32 %v7765, %v7766
  %v7768 = vsel %vm38, %v7735, 0.0
  %v7769 = vadd.f32 %v7767, %v7768
  %v7770 = vsel %vm38, %v7736, 0.0
  %v7771 = vadd.f32 %v7769, %v7770
  %v7772 = vsel %vm38, %v7737, 0.0
  %v7773 = vadd.f32 %v7771, %v7772
  %v7774 = vrot.slane %v7773, 4
  %v7775 = vadd.f32 %v7773, %v7774
  %v7776 = vrot.slane %v7775, 2
  %v7777 = vadd.f32 %v7775, %v7776
  %v7778 = vrot.slane %v7777, 1
  %v7779 = vadd.f32 %v7777, %v7778
  %v7781 = vsel %vm38, %v7779, 0
  %7783 = vmatpush.msra.mxu0 0.0
  %7784 = vmatpush.msra.mxu0 0.0
  %7785 = vmatpush.msra.mxu0 0.0
  %7786 = vmatpush.msra.mxu0 0.0
  %7787 = vmatpush.msra.mxu0 0.0
  %7788 = vmatpush.msra.mxu0 0.0
  %7789 = vmatpush.msra.mxu0 0.0
  %7790 = vmatpush.msra.mxu0 0.0
  %7791 = vmatpush.msra.mxu0 0.0
  %7792 = vmatpush.msra.mxu0 0.0
  %7793 = vmatpush.msra.mxu0 0.0
  %7794 = vmatpush.msra.mxu0 0.0
  %7795 = vmatpush.msra.mxu0 %v7741
  %7796 = vmatpush.msra.mxu0 %v7740
  %7797 = vmatpush.msra.mxu0 %v7739
  %7798 = vmatpush.msra.mxu0 %v7738
  %7799 = vmatmul.f32.gmra.mxu0 %v7781
  %v7800 = vpop.f32.mrf.mxu0
  %v7801 = vadd.f32 0.0, %v7800
  %7802 = vdwg.mxu0
  %v7803 = vmul.f32 %v7801, %v1470
  %v7805 = vsel %vm1472, %v7803, 0
  %v7808 = vsel %vm1476, %v7742, 0
  %7810 = vmatpush.msra.mxu0 0.0
  %7811 = vmatpush.msra.mxu0 0.0
  %7812 = vmatpush.msra.mxu0 0.0
  %7813 = vmatpush.msra.mxu0 0.0
  %7814 = vmatpush.msra.mxu0 0.0
  %7815 = vmatpush.msra.mxu0 0.0
  %7816 = vmatpush.msra.mxu0 0.0
  %7817 = vmatpush.msra.mxu0 0.0
  %7818 = vmatpush.msra.mxu0 0.0
  %7819 = vmatpush.msra.mxu0 0.0
  %7820 = vmatpush.msra.mxu0 0.0
  %7821 = vmatpush.msra.mxu0 0.0
  %7822 = vmatpush.msra.mxu0 0.0
  %7823 = vmatpush.msra.mxu0 0.0
  %7824 = vmatpush.msra.mxu0 0.0
  %7825 = vmatpush.msra.mxu0 %v7808
  %7826 = vmatmul.f32.gmra.mxu0 %v7805
  %v7827 = vpop.f32.mrf.mxu0
  %v7828 = vadd.f32 0.0, %v7827
  %7829 = vdwg.mxu0
  %v7830 = vperm.slane %v7828, 0
  %v7831 = vsub.f32 %v7722, %v7830
  %v7832 = vsub.f32 %v7723, %v7830
  %v7833 = vsub.f32 %v7724, %v7830
  %v7834 = vsub.f32 %v7725, %v7830
  %v7835 = vsub.f32 %v7726, %v7830
  %v7836 = vsub.f32 %v7727, %v7830
  %v7837 = vsub.f32 %v7728, %v7830
  %v7838 = vsub.f32 %v7729, %v7830
  %v7839 = vsub.f32 %v7730, %v7830
  %v7840 = vsub.f32 %v7731, %v7830
  %v7841 = vsub.f32 %v7732, %v7830
  %v7842 = vsub.f32 %v7733, %v7830
  %v7843 = vsub.f32 %v7734, %v7830
  %v7844 = vsub.f32 %v7735, %v7830
  %v7845 = vsub.f32 %v7736, %v7830
  %v7846 = vsub.f32 %v7737, %v7830
  %v7847 = vmul.f32 %v7831, %v7831
  %v7848 = vmul.f32 %v7832, %v7832
  %v7849 = vmul.f32 %v7833, %v7833
  %v7850 = vmul.f32 %v7834, %v7834
  %v7851 = vmul.f32 %v7835, %v7835
  %v7852 = vmul.f32 %v7836, %v7836
  %v7853 = vmul.f32 %v7837, %v7837
  %v7854 = vmul.f32 %v7838, %v7838
  %v7855 = vmul.f32 %v7839, %v7839
  %v7856 = vmul.f32 %v7840, %v7840
  %v7857 = vmul.f32 %v7841, %v7841
  %v7858 = vmul.f32 %v7842, %v7842
  %v7859 = vmul.f32 %v7843, %v7843
  %v7860 = vmul.f32 %v7844, %v7844
  %v7861 = vmul.f32 %v7845, %v7845
  %v7862 = vmul.f32 %v7846, %v7846
  %v7863 = vsel %vm38, %v7847, 0.0
  %v7864 = vsel %vm38, %v7848, 0.0
  %v7865 = vadd.f32 %v7863, %v7864
  %v7866 = vsel %vm38, %v7849, 0.0
  %v7867 = vadd.f32 %v7865, %v7866
  %v7868 = vsel %vm38, %v7850, 0.0
  %v7869 = vadd.f32 %v7867, %v7868
  %v7870 = vsel %vm38, %v7851, 0.0
  %v7871 = vadd.f32 %v7869, %v7870
  %v7872 = vsel %vm38, %v7852, 0.0
  %v7873 = vadd.f32 %v7871, %v7872
  %v7874 = vsel %vm38, %v7853, 0.0
  %v7875 = vadd.f32 %v7873, %v7874
  %v7876 = vsel %vm38, %v7854, 0.0
  %v7877 = vadd.f32 %v7875, %v7876
  %v7878 = vsel %vm38, %v7855, 0.0
  %v7879 = vadd.f32 %v7877, %v7878
  %v7880 = vsel %vm38, %v7856, 0.0
  %v7881 = vadd.f32 %v7879, %v7880
  %v7882 = vsel %vm38, %v7857, 0.0
  %v7883 = vadd.f32 %v7881, %v7882
  %v7884 = vsel %vm38, %v7858, 0.0
  %v7885 = vadd.f32 %v7883, %v7884
  %v7886 = vsel %vm38, %v7859, 0.0
  %v7887 = vadd.f32 %v7885, %v7886
  %v7888 = vsel %vm38, %v7860, 0.0
  %v7889 = vadd.f32 %v7887, %v7888
  %v7890 = vsel %vm38, %v7861, 0.0
  %v7891 = vadd.f32 %v7889, %v7890
  %v7892 = vsel %vm38, %v7862, 0.0
  %v7893 = vadd.f32 %v7891, %v7892
  %v7894 = vrot.slane %v7893, 4
  %v7895 = vadd.f32 %v7893, %v7894
  %v7896 = vrot.slane %v7895, 2
  %v7897 = vadd.f32 %v7895, %v7896
  %v7898 = vrot.slane %v7897, 1
  %v7899 = vadd.f32 %v7897, %v7898
  %v7901 = vsel %vm38, %v7899, 0
  %7903 = vmatpush.msra.mxu0 0.0
  %7904 = vmatpush.msra.mxu0 0.0
  %7905 = vmatpush.msra.mxu0 0.0
  %7906 = vmatpush.msra.mxu0 0.0
  %7907 = vmatpush.msra.mxu0 0.0
  %7908 = vmatpush.msra.mxu0 0.0
  %7909 = vmatpush.msra.mxu0 0.0
  %7910 = vmatpush.msra.mxu0 0.0
  %7911 = vmatpush.msra.mxu0 0.0
  %7912 = vmatpush.msra.mxu0 0.0
  %7913 = vmatpush.msra.mxu0 0.0
  %7914 = vmatpush.msra.mxu0 0.0
  %7915 = vmatpush.msra.mxu0 %v7741
  %7916 = vmatpush.msra.mxu0 %v7740
  %7917 = vmatpush.msra.mxu0 %v7739
  %7918 = vmatpush.msra.mxu0 %v7738
  %7919 = vmatmul.f32.gmra.mxu0 %v7901
  %v7920 = vpop.f32.mrf.mxu0
  %v7921 = vadd.f32 0.0, %v7920
  %7922 = vdwg.mxu0
  %v7923 = vmul.f32 %v7921, %v1470
  %s7924 = scalar_lea.vmem %s7, 3
  %v7925 = vld [vmem:[%s7924] sm:$0x1]
  %v7926 = vadd.f32 %v7923, 1e-05
  %v7927 = vrsqrt.pop %v7926
  %v7928 = vmul.f32 %v7927, %v7926
  %v7929 = vmul.f32 %v7928, %v7927
  %v7930 = vmul.f32 0.5, %v7929
  %v7931 = vsub.f32 1.5, %v7930
  %v7932 = vmul.f32 %v7927, %v7931
  %vm7933 = vweird.f32 %v7926
  %vm7934 = vweird.f32 %v7927
  %vm7935 = vmor %vm7933, %vm7934
  %v7936 = vsel %vm7935, %v7927, %v7932
  %v7937 = vmul.f32 %v7925, %v7936
  %s7938 = scalar_lea.vmem %s8, 3
  %v7939 = vld [vmem:[%s7938] sm:$0x1]
  %v7940 = vmul.f32 %v7803, %v7937
  %v7941 = vsub.f32 %v7939, %v7940
  %v7943 = vsel %vm1472, %v7937, 0
  %7945 = vmatpush.msra.mxu0 0.0
  %7946 = vmatpush.msra.mxu0 0.0
  %7947 = vmatpush.msra.mxu0 0.0
  %7948 = vmatpush.msra.mxu0 0.0
  %7949 = vmatpush.msra.mxu0 0.0
  %7950 = vmatpush.msra.mxu0 0.0
  %7951 = vmatpush.msra.mxu0 0.0
  %7952 = vmatpush.msra.mxu0 0.0
  %7953 = vmatpush.msra.mxu0 0.0
  %7954 = vmatpush.msra.mxu0 0.0
  %7955 = vmatpush.msra.mxu0 0.0
  %7956 = vmatpush.msra.mxu0 0.0
  %7957 = vmatpush.msra.mxu0 0.0
  %7958 = vmatpush.msra.mxu0 0.0
  %7959 = vmatpush.msra.mxu0 0.0
  %7960 = vmatpush.msra.mxu0 %v7808
  %7961 = vmatmul.f32.gmra.mxu0 %v7943
  %v7962 = vpop.f32.mrf.mxu0
  %v7963 = vadd.f32 0.0, %v7962
  %7964 = vdwg.mxu0
  %v7965 = vperm.slane %v7963, 0
  %v7966 = vmul.f32 %v7722, %v7965
  %v7967 = vmul.f32 %v7723, %v7965
  %v7968 = vmul.f32 %v7724, %v7965
  %v7969 = vmul.f32 %v7725, %v7965
  %v7970 = vmul.f32 %v7726, %v7965
  %v7971 = vmul.f32 %v7727, %v7965
  %v7972 = vmul.f32 %v7728, %v7965
  %v7973 = vmul.f32 %v7729, %v7965
  %v7974 = vmul.f32 %v7730, %v7965
  %v7975 = vmul.f32 %v7731, %v7965
  %v7976 = vmul.f32 %v7732, %v7965
  %v7977 = vmul.f32 %v7733, %v7965
  %v7978 = vmul.f32 %v7734, %v7965
  %v7979 = vmul.f32 %v7735, %v7965
  %v7980 = vmul.f32 %v7736, %v7965
  %v7981 = vmul.f32 %v7737, %v7965
  %v7983 = vsel %vm1472, %v7941, 0
  %7985 = vmatpush.msra.mxu0 0.0
  %7986 = vmatpush.msra.mxu0 0.0
  %7987 = vmatpush.msra.mxu0 0.0
  %7988 = vmatpush.msra.mxu0 0.0
  %7989 = vmatpush.msra.mxu0 0.0
  %7990 = vmatpush.msra.mxu0 0.0
  %7991 = vmatpush.msra.mxu0 0.0
  %7992 = vmatpush.msra.mxu0 0.0
  %7993 = vmatpush.msra.mxu0 0.0
  %7994 = vmatpush.msra.mxu0 0.0
  %7995 = vmatpush.msra.mxu0 0.0
  %7996 = vmatpush.msra.mxu0 0.0
  %7997 = vmatpush.msra.mxu0 0.0
  %7998 = vmatpush.msra.mxu0 0.0
  %7999 = vmatpush.msra.mxu0 0.0
  %8000 = vmatpush.msra.mxu0 %v7808
  %8001 = vmatmul.f32.gmra.mxu0 %v7983
  %v8002 = vpop.f32.mrf.mxu0
  %v8003 = vadd.f32 0.0, %v8002
  %8004 = vdwg.mxu0
  %v8005 = vperm.slane %v8003, 0
  %v8006 = vadd.f32 %v7966, %v8005
  %v8007 = vadd.f32 %v7967, %v8005
  %v8008 = vadd.f32 %v7968, %v8005
  %v8009 = vadd.f32 %v7969, %v8005
  %v8010 = vadd.f32 %v7970, %v8005
  %v8011 = vadd.f32 %v7971, %v8005
  %v8012 = vadd.f32 %v7972, %v8005
  %v8013 = vadd.f32 %v7973, %v8005
  %v8014 = vadd.f32 %v7974, %v8005
  %v8015 = vadd.f32 %v7975, %v8005
  %v8016 = vadd.f32 %v7976, %v8005
  %v8017 = vadd.f32 %v7977, %v8005
  %v8018 = vadd.f32 %v7978, %v8005
  %v8019 = vadd.f32 %v7979, %v8005
  %v8020 = vadd.f32 %v7980, %v8005
  %v8021 = vadd.f32 %v7981, %v8005
  %vm8022 = vcmp.ge.f32.partialorder %v8006, 0.0
  %vm8023 = vcmp.ge.f32.partialorder %v8007, 0.0
  %vm8024 = vcmp.ge.f32.partialorder %v8008, 0.0
  %vm8025 = vcmp.ge.f32.partialorder %v8009, 0.0
  %vm8026 = vcmp.ge.f32.partialorder %v8010, 0.0
  %vm8027 = vcmp.ge.f32.partialorder %v8011, 0.0
  %vm8028 = vcmp.ge.f32.partialorder %v8012, 0.0
  %vm8029 = vcmp.ge.f32.partialorder %v8013, 0.0
  %vm8030 = vcmp.ge.f32.partialorder %v8014, 0.0
  %vm8031 = vcmp.ge.f32.partialorder %v8015, 0.0
  %vm8032 = vcmp.ge.f32.partialorder %v8016, 0.0
  %vm8033 = vcmp.ge.f32.partialorder %v8017, 0.0
  %vm8034 = vcmp.ge.f32.partialorder %v8018, 0.0
  %vm8035 = vcmp.ge.f32.partialorder %v8019, 0.0
  %vm8036 = vcmp.ge.f32.partialorder %v8020, 0.0
  %vm8037 = vcmp.ge.f32.partialorder %v8021, 0.0
  %v8038 = vmul.f32 %v8006, 0.2
  %v8039 = vmul.f32 %v8007, 0.2
  %v8040 = vmul.f32 %v8008, 0.2
  %v8041 = vmul.f32 %v8009, 0.2
  %v8042 = vmul.f32 %v8010, 0.2
  %v8043 = vmul.f32 %v8011, 0.2
  %v8044 = vmul.f32 %v8012, 0.2
  %v8045 = vmul.f32 %v8013, 0.2
  %v8046 = vmul.f32 %v8014, 0.2
  %v8047 = vmul.f32 %v8015, 0.2
  %v8048 = vmul.f32 %v8016, 0.2
  %v8049 = vmul.f32 %v8017, 0.2
  %v8050 = vmul.f32 %v8018, 0.2
  %v8051 = vmul.f32 %v8019, 0.2
  %v8052 = vmul.f32 %v8020, 0.2
  %v8053 = vmul.f32 %v8021, 0.2
  %v8054 = vsel %vm8022, %v8006, %v8038
  %v8055 = vsel %vm8023, %v8007, %v8039
  %v8056 = vsel %vm8024, %v8008, %v8040
  %v8057 = vsel %vm8025, %v8009, %v8041
  %v8058 = vsel %vm8026, %v8010, %v8042
  %v8059 = vsel %vm8027, %v8011, %v8043
  %v8060 = vsel %vm8028, %v8012, %v8044
  %v8061 = vsel %vm8029, %v8013, %v8045
  %v8062 = vsel %vm8030, %v8014, %v8046
  %v8063 = vsel %vm8031, %v8015, %v8047
  %v8064 = vsel %vm8032, %v8016, %v8048
  %v8065 = vsel %vm8033, %v8017, %v8049
  %v8066 = vsel %vm8034, %v8018, %v8050
  %v8067 = vsel %vm8035, %v8019, %v8051
  %v8068 = vsel %vm8036, %v8020, %v8052
  %v8069 = vsel %vm8037, %v8021, %v8053
  %8070 = vst.msk [vmem:[%s11] sm:$0xff] %vm38, %v8054
  %8071 = vst.msk [vmem:[%s11 + $0x8] sm:$0xff] %vm38, %v8055
  %8072 = vst.msk [vmem:[%s11 + $0x10] sm:$0xff] %vm38, %v8056
  %8073 = vst.msk [vmem:[%s11 + $0x18] sm:$0xff] %vm38, %v8057
  %8074 = vst.msk [vmem:[%s11 + $0x20] sm:$0xff] %vm38, %v8058
  %8075 = vst.msk [vmem:[%s11 + $0x28] sm:$0xff] %vm38, %v8059
  %8076 = vst.msk [vmem:[%s11 + $0x30] sm:$0xff] %vm38, %v8060
  %8077 = vst.msk [vmem:[%s11 + $0x38] sm:$0xff] %vm38, %v8061
  %8078 = vst.msk [vmem:[%s11 + $0x40] sm:$0xff] %vm38, %v8062
  %8079 = vst.msk [vmem:[%s11 + $0x48] sm:$0xff] %vm38, %v8063
  %8080 = vst.msk [vmem:[%s11 + $0x50] sm:$0xff] %vm38, %v8064
  %8081 = vst.msk [vmem:[%s11 + $0x58] sm:$0xff] %vm38, %v8065
  %8082 = vst.msk [vmem:[%s11 + $0x60] sm:$0xff] %vm38, %v8066
  %8083 = vst.msk [vmem:[%s11 + $0x68] sm:$0xff] %vm38, %v8067
  %8084 = vst.msk [vmem:[%s11 + $0x70] sm:$0xff] %vm38, %v8068
  %8085 = vst.msk [vmem:[%s11 + $0x78] sm:$0xff] %vm38, %v8069
  // Predicated region
  $region46: #{upblock_forward.3} parent=0 // pred_check
    _
  $region47: #{upblock_forward.3} parent=0 // pred_check_branch
    %8087 = sbr.rel (0) target = $region49
  $region48: #{upblock_forward.3} parent=0 // pred_region
    _
  $region49: #{upblock_forward.3} parent=0 // pred_fallthru
    _
  // Predicated region
  $region50: #{upblock_forward.3} parent=0 // pred_check
    _
  $region51: #{upblock_forward.3} parent=0 // pred_check_branch
    %8089 = sbr.rel (0) target = $region53
  $region52: #{upblock_forward.3} parent=0 // pred_region
    _
  $region53: #{upblock_forward.3} parent=0 // pred_fallthru
    _

</llo_original>
